<compile_context>
chip_gen: v7x
topology: tpu7x:2x2x1
jax: 0.10.0
libtpu: 0.0.40
codegen_flags: <defaults>
</compile_context>

<pallas_src>
import functools

import jax
import jax.numpy as jnp
from jax.experimental import pallas as pl
from jax.experimental.pallas import tpu as pltpu

# --- model hyper-parameters (from the reference module) ---
n_embed = 384
n_head = 6
head_size = n_embed // n_head      # 64
n_layer = 6
block_size = 256
LN_EPS = 1e-5                      # PyTorch nn.LayerNorm default eps
MASK_NEG = -1e30                   # additive causal bias ("-inf")


def _layernorm(x, g, b):
    mu = jnp.mean(x, axis=-1, keepdims=True)
    var = jnp.mean((x - mu) ** 2, axis=-1, keepdims=True)
    return (x - mu) * jax.lax.rsqrt(var + LN_EPS) * g + b


# ---------------------------------------------------------------------------
# Fused whole-network kernel.
# Grid = (batch_group, layer).  The residual stream for the current batch group
# lives in the `resid_ref` VMEM scratch across the layer axis; per-layer
# weights are streamed by the layer grid index (auto double-buffered, so layer
# l+1 weight DMA hides behind layer l compute).  At the last layer the final
# LayerNorm + lm_head are applied and only the (padded) logits are written out.
# ---------------------------------------------------------------------------
def gpt_kernel(x_ref, mask_ref,
               ln1_g_ref, ln1_b_ref, wqkv_ref, wo_ref, bo_ref,
               ln2_g_ref, ln2_b_ref, w1_ref, b1_ref, w2_ref, b2_ref,
               lnf_g_ref, lnf_b_ref, wlm_ref, blm_ref,
               o_ref, resid_ref):
    layer = pl.program_id(1)
    Bb, T, C = resid_ref.shape
    N = Bb * T

    @pl.when(layer == 0)
    def _():
        resid_ref[...] = x_ref[...]          # load residual once per batch group

    x = resid_ref[...].reshape(N, C)         # (N, C) f32 residual carry

    # ---- multi-head causal self-attention on LN1(x) ----
    xn = _layernorm(x, ln1_g_ref[0], ln1_b_ref[0])
    # fused Q/K/V projection (attention scale pre-folded into Q weights);
    # one cast to bf16 right after the matmul.
    qkv = jnp.dot(xn.astype(jnp.bfloat16), wqkv_ref[0],
                  preferred_element_type=jnp.float32).astype(jnp.bfloat16)  # (N,3C)

    mask = mask_ref[...]                     # (T, T) additive causal bias (0 / -1e30)

    head_outs = []
    for h in range(n_head):                  # static unrolled; each head batched over Bb
        lo = h * head_size
        qh = qkv[:, lo:lo + head_size].reshape(Bb, T, head_size)
        kh = qkv[:, C + lo:C + lo + head_size].reshape(Bb, T, head_size)
        vh = qkv[:, 2 * C + lo:2 * C + lo + head_size].reshape(Bb, T, head_size)
        s = jnp.einsum('bqd,bkd->bqk', qh, kh,
                       preferred_element_type=jnp.float32)       # (Bb, T, T)
        s = s + mask                                             # causal bias
        s = s - jnp.max(s, axis=-1, keepdims=True)               # diag never masked
        p = jnp.exp(s)
        p = p * pl.reciprocal(jnp.sum(p, axis=-1, keepdims=True), approx=True)
        oh = jnp.einsum('bqk,bkd->bqd', p.astype(jnp.bfloat16), vh,
                        preferred_element_type=jnp.float32)      # (Bb, T, hs)
        head_outs.append(oh.astype(jnp.bfloat16))

    att = jnp.concatenate(head_outs, axis=-1).reshape(N, C)      # (N, C) bf16
    sa = jnp.dot(att, wo_ref[0], preferred_element_type=jnp.float32) + bo_ref[0]
    # dropout after proj is identity in eval mode
    x = x + sa

    # ---- feed-forward on LN2(x) ----
    xn2 = _layernorm(x, ln2_g_ref[0], ln2_b_ref[0])
    h1 = jnp.dot(xn2.astype(jnp.bfloat16), w1_ref[0],
                 preferred_element_type=jnp.float32) + b1_ref[0]
    h1 = jnp.maximum(h1, 0.0)                                    # ReLU
    ff = jnp.dot(h1.astype(jnp.bfloat16), w2_ref[0],
                 preferred_element_type=jnp.float32) + b2_ref[0]
    # dropout after second linear is identity in eval mode
    x = x + ff
    resid_ref[...] = x.reshape(Bb, T, C)

    # ---- fused final LayerNorm + lm_head (only at the last layer) ----
    @pl.when(layer == n_layer - 1)
    def _():
        xf = _layernorm(x, lnf_g_ref[...], lnf_b_ref[...])
        logits = jnp.dot(xf.astype(jnp.bfloat16), wlm_ref[...],
                         preferred_element_type=jnp.float32) + blm_ref[...]
        o_ref[...] = logits.reshape(Bb, T, o_ref.shape[-1])


# ---------------------------------------------------------------------------
# pallas_call wrapper
# ---------------------------------------------------------------------------
def run_model(x, mask, p):
    B, T, C = x.shape
    H = 4 * C
    Vp = p["w_lm"].shape[1]                  # padded vocab (multiple of 128)

    # batch-group size: whole batch for small B, else <=8 and dividing B
    Bb = B
    if B > 8:
        Bb = 8
        while B % Bb:
            Bb -= 1

    grid = (B // Bb, n_layer)
    xspec = pl.BlockSpec((Bb, T, C), lambda b, l: (b, 0, 0))

    def wspec(shape):                        # per-layer streamed weights
        return pl.BlockSpec((1,) + shape, lambda b, l: (l,) + (0,) * len(shape))

    def cspec(shape):                        # constant-index resident inputs
        return pl.BlockSpec(shape, lambda b, l: (0,) * len(shape))

    call = pl.pallas_call(
        gpt_kernel,
        grid=grid,
        in_specs=[
            xspec,
            cspec((T, T)),                                       # causal bias
            wspec((1, C)), wspec((1, C)),                        # ln1 g/b
            wspec((C, 3 * C)),                                   # wqkv (fused, Q pre-scaled)
            wspec((C, C)), wspec((1, C)),                        # wo, bo
            wspec((1, C)), wspec((1, C)),                        # ln2 g/b
            wspec((C, H)), wspec((1, H)),                        # w1, b1
            wspec((H, C)), wspec((1, C)),                        # w2, b2
            cspec((1, C)), cspec((1, C)),                        # ln_f g/b
            cspec((C, Vp)), cspec((1, Vp)),                      # lm_head w/b
        ],
        out_specs=pl.BlockSpec((Bb, T, Vp), lambda b, l: (b, 0, 0)),
        out_shape=jax.ShapeDtypeStruct((B, T, Vp), jnp.float32),
        scratch_shapes=[pltpu.VMEM((Bb, T, C), jnp.float32)],    # residual carry
        compiler_params=pltpu.CompilerParams(
            dimension_semantics=("parallel", "arbitrary"),
            vmem_limit_bytes=48 * 1024 * 1024),                  # v7x-safe (<64 MiB)
    )
    return call(x, mask,
                p["ln1_g"], p["ln1_b"], p["wqkv"], p["wo"], p["bo"],
                p["ln2_g"], p["ln2_b"], p["w1"], p["b1"], p["w2"], p["b2"],
                p["ln_f_g"], p["ln_f_b"], p["w_lm"], p["b_lm"])


# ---------------------------------------------------------------------------
# Parameters + forward (glue in plain JAX: embedding gather, mask, un-pad)
# ---------------------------------------------------------------------------
def init_params(key, vocab_size):
    C, H = n_embed, 4 * n_embed
    Vp = ((vocab_size + 127) // 128) * 128                       # lane-dense lm_head
    ks = jax.random.split(key, 8)

    def w(k, shape, scale=0.02):
        return jax.random.normal(k, shape, jnp.float32) * scale

    # fused QKV weight; fold the attention scale (n_embed**-0.5, faithful to the
    # reference's C**-0.5 with C = n_embed) into the Q output columns.
    wqkv = w(ks[3], (n_layer, C, 3 * C))
    wqkv = wqkv.at[:, :, :C].multiply(float(n_embed) ** -0.5)

    w_lm = jnp.zeros((C, Vp), jnp.float32).at[:, :vocab_size].set(
        w(ks[2], (C, vocab_size)))

    return {
        "tok_emb": w(ks[0], (vocab_size, C)),
        "pos_emb": w(ks[1], (block_size, C)),
        "ln_f_g": jnp.ones((1, C), jnp.float32),
        "ln_f_b": jnp.zeros((1, C), jnp.float32),
        "w_lm": w_lm.astype(jnp.bfloat16),
        "b_lm": jnp.zeros((1, Vp), jnp.float32),
        # stacked per-layer parameters (leading n_layer axis), matmul weights bf16
        "ln1_g": jnp.ones((n_layer, 1, C), jnp.float32),
        "ln1_b": jnp.zeros((n_layer, 1, C), jnp.float32),
        "wqkv": wqkv.astype(jnp.bfloat16),
        "wo": w(ks[4], (n_layer, C, C)).astype(jnp.bfloat16),
        "bo": jnp.zeros((n_layer, 1, C), jnp.float32),
        "ln2_g": jnp.ones((n_layer, 1, C), jnp.float32),
        "ln2_b": jnp.zeros((n_layer, 1, C), jnp.float32),
        "w1": w(ks[5], (n_layer, C, H)).astype(jnp.bfloat16),
        "b1": jnp.zeros((n_layer, 1, H), jnp.float32),
        "w2": w(ks[6], (n_layer, H, C)).astype(jnp.bfloat16),
        "b2": jnp.zeros((n_layer, 1, C), jnp.float32),
    }


def forward(idx, params, vocab_size):
    """Equivalent of BigramLanguageModel.forward(idx, targets=None) -> logits."""
    B, T = idx.shape
    # TODO(synk): embedding lookups are a dynamic gather; done in plain JAX glue.
    tok_emb = params["tok_emb"][idx]                 # (B, T, C)
    pos_emb = params["pos_emb"][:T]                  # (T, C)
    x = (tok_emb + pos_emb[None, :, :]).astype(jnp.float32)

    r = jnp.arange(T)
    mask = jnp.where(r[None, :] <= r[:, None], 0.0, MASK_NEG).astype(jnp.float32)

    logits = run_model(x, mask, params)              # one fused call, all 6 blocks + head
    # targets is None -> loss is None (cross-entropy path not exercised)
    return logits[:, :, :vocab_size]                 # drop lane padding


if __name__ == "__main__":
    vocab_size = 65            # e.g. tiny-shakespeare char vocab
    B, T = 2, 16               # small shapes; T <= block_size, T % 8 == 0

    key = jax.random.PRNGKey(0)
    pkey, ikey = jax.random.split(key)
    params = init_params(pkey, vocab_size)
    idx = jax.random.randint(ikey, (B, T), 0, vocab_size, dtype=jnp.int32)

    fwd = jax.jit(functools.partial(forward, vocab_size=vocab_size))
    logits = fwd(idx, params)
    jax.block_until_ready(logits)
    assert logits.shape == (B, T, vocab_size), logits.shape
    assert bool(jnp.all(jnp.isfinite(logits)))
    print("KERNEL_OK")
</pallas_src>

<mosaic_0001>
module attributes {stable_mosaic.version = 11 : i64} {
  func.func @gpt_kernel(%arg0: i32, %arg1: i32, %arg2: memref<2x16x384xf32, #tpu.memory_space<vmem>>, %arg3: memref<16x16xf32, #tpu.memory_space<vmem>>, %arg4: memref<1x1x384xf32, #tpu.memory_space<vmem>>, %arg5: memref<1x1x384xf32, #tpu.memory_space<vmem>>, %arg6: memref<1x384x1152xbf16, #tpu.memory_space<vmem>>, %arg7: memref<1x384x384xbf16, #tpu.memory_space<vmem>>, %arg8: memref<1x1x384xf32, #tpu.memory_space<vmem>>, %arg9: memref<1x1x384xf32, #tpu.memory_space<vmem>>, %arg10: memref<1x1x384xf32, #tpu.memory_space<vmem>>, %arg11: memref<1x384x1536xbf16, #tpu.memory_space<vmem>>, %arg12: memref<1x1x1536xf32, #tpu.memory_space<vmem>>, %arg13: memref<1x1536x384xbf16, #tpu.memory_space<vmem>>, %arg14: memref<1x1x384xf32, #tpu.memory_space<vmem>>, %arg15: memref<1x384xf32, #tpu.memory_space<vmem>>, %arg16: memref<1x384xf32, #tpu.memory_space<vmem>>, %arg17: memref<384x128xbf16, #tpu.memory_space<vmem>>, %arg18: memref<1x128xf32, #tpu.memory_space<vmem>>, %arg19: memref<2x16x128xf32, #tpu.memory_space<vmem>>, %arg20: memref<2x16x384xf32, #tpu.memory_space<vmem>>) attributes {dimension_semantics = [#tpu.dimension_semantics<parallel>, #tpu.dimension_semantics<arbitrary>], iteration_bounds = array<i64: 1, 6>, scalar_prefetch = 0 : i64, scratch_operands = 1 : i64, tpu.core_type = #tpu.core_type<tc>, window_params = [{transform_indices = @transform_0, window_bounds = array<i64: 2, 16, 384>}, {pipeline_mode = #tpu.pipeline_mode<synchronous>, transform_indices = @transform_1, window_bounds = array<i64: 16, 16>}, {transform_indices = @transform_2, window_bounds = array<i64: 1, 1, 384>}, {transform_indices = @transform_3, window_bounds = array<i64: 1, 1, 384>}, {transform_indices = @transform_4, window_bounds = array<i64: 1, 384, 1152>}, {transform_indices = @transform_5, window_bounds = array<i64: 1, 384, 384>}, {transform_indices = @transform_6, window_bounds = array<i64: 1, 1, 384>}, {transform_indices = @transform_7, window_bounds = array<i64: 1, 1, 384>}, {transform_indices = @transform_8, window_bounds = array<i64: 1, 1, 384>}, {transform_indices = @transform_9, window_bounds = array<i64: 1, 384, 1536>}, {transform_indices = @transform_10, window_bounds = array<i64: 1, 1, 1536>}, {transform_indices = @transform_11, window_bounds = array<i64: 1, 1536, 384>}, {transform_indices = @transform_12, window_bounds = array<i64: 1, 1, 384>}, {pipeline_mode = #tpu.pipeline_mode<synchronous>, transform_indices = @transform_13, window_bounds = array<i64: 1, 384>}, {pipeline_mode = #tpu.pipeline_mode<synchronous>, transform_indices = @transform_14, window_bounds = array<i64: 1, 384>}, {pipeline_mode = #tpu.pipeline_mode<synchronous>, transform_indices = @transform_15, window_bounds = array<i64: 384, 128>}, {pipeline_mode = #tpu.pipeline_mode<synchronous>, transform_indices = @transform_16, window_bounds = array<i64: 1, 128>}, {transform_indices = @transform_17, window_bounds = array<i64: 2, 16, 128>}]} {
    %c0_i32 = arith.constant 0 : i32
    %0 = arith.cmpi eq, %arg1, %c0_i32 : i32
    %1 = arith.extui %0 : i1 to i32
    %c0_i32_0 = arith.constant 0 : i32
    %2 = arith.cmpi ne, %1, %c0_i32_0 : i32
    scf.if %2 {
      %c0_80 = arith.constant 0 : index
      %c0_81 = arith.constant 0 : index
      %c0_82 = arith.constant 0 : index
      %235 = vector.load %arg2[%c0_80, %c0_81, %c0_82] : memref<2x16x384xf32, #tpu.memory_space<vmem>>, vector<2x16x384xf32>
      %c0_83 = arith.constant 0 : index
      %c0_84 = arith.constant 0 : index
      %c0_85 = arith.constant 0 : index
      %236 = vector.load %arg20[%c0_83, %c0_84, %c0_85] : memref<2x16x384xf32, #tpu.memory_space<vmem>>, vector<2x16x384xf32>
      tpu.vector_store %arg20[%c0_83, %c0_84, %c0_85], %235 {strides = array<i32>} : memref<2x16x384xf32, #tpu.memory_space<vmem>>, vector<2x16x384xf32>,
    } else {
    }
    %c0 = arith.constant 0 : index
    %c0_1 = arith.constant 0 : index
    %c0_2 = arith.constant 0 : index
    %3 = vector.load %arg20[%c0, %c0_1, %c0_2] : memref<2x16x384xf32, #tpu.memory_space<vmem>>, vector<2x16x384xf32>
    %4 = vector.shape_cast %3 : vector<2x16x384xf32> to vector<32x384xf32>
    %c0_3 = arith.constant 0 : index
    %c0_4 = arith.constant 0 : index
    %c0_5 = arith.constant 0 : index
    %5 = vector.load %arg4[%c0_3, %c0_4, %c0_5] : memref<1x1x384xf32, #tpu.memory_space<vmem>>, vector<1x1x384xf32>
    %6 = vector.shape_cast %5 : vector<1x1x384xf32> to vector<1x384xf32>
    %c0_6 = arith.constant 0 : index
    %c0_7 = arith.constant 0 : index
    %c0_8 = arith.constant 0 : index
    %7 = vector.load %arg5[%c0_6, %c0_7, %c0_8] : memref<1x1x384xf32, #tpu.memory_space<vmem>>, vector<1x1x384xf32>
    %8 = vector.shape_cast %7 : vector<1x1x384xf32> to vector<1x384xf32>
    %cst = arith.constant dense<0.000000e+00> : vector<32xf32>
    %9 = vector.multi_reduction <add>, %4, %cst [1] : vector<32x384xf32> to vector<32xf32>
    %10 = vector.shape_cast %9 : vector<32xf32> to vector<32x1xf32>
    %cst_9 = arith.constant 3.840000e+02 : f32
    %11 = vector.broadcast %cst_9 : f32 to vector<32x1xf32>
    %12 = arith.divf %10, %11 : vector<32x1xf32>
    %13 = vector.broadcast %12 : vector<32x1xf32> to vector<32x384xf32>
    %14 = arith.subf %4, %13 : vector<32x384xf32>
    %15 = arith.mulf %14, %14 : vector<32x384xf32>
    %cst_10 = arith.constant dense<0.000000e+00> : vector<32xf32>
    %16 = vector.multi_reduction <add>, %15, %cst_10 [1] : vector<32x384xf32> to vector<32xf32>
    %17 = vector.shape_cast %16 : vector<32xf32> to vector<32x1xf32>
    %cst_11 = arith.constant 3.840000e+02 : f32
    %18 = vector.broadcast %cst_11 : f32 to vector<32x1xf32>
    %19 = arith.divf %17, %18 : vector<32x1xf32>
    %20 = vector.broadcast %12 : vector<32x1xf32> to vector<32x384xf32>
    %21 = arith.subf %4, %20 : vector<32x384xf32>
    %cst_12 = arith.constant 9.99999974E-6 : f32
    %22 = vector.broadcast %cst_12 : f32 to vector<32x1xf32>
    %23 = arith.addf %19, %22 : vector<32x1xf32>
    %24 = math.rsqrt %23 : vector<32x1xf32>
    %25 = vector.broadcast %24 : vector<32x1xf32> to vector<32x384xf32>
    %26 = arith.mulf %21, %25 : vector<32x384xf32>
    %27 = vector.broadcast %6 : vector<1x384xf32> to vector<32x384xf32>
    %28 = arith.mulf %26, %27 : vector<32x384xf32>
    %29 = vector.broadcast %8 : vector<1x384xf32> to vector<32x384xf32>
    %30 = arith.addf %28, %29 : vector<32x384xf32>
    %31 = arith.truncf %30 : vector<32x384xf32> to vector<32x384xbf16>
    %c0_13 = arith.constant 0 : index
    %c0_14 = arith.constant 0 : index
    %c0_15 = arith.constant 0 : index
    %32 = vector.load %arg6[%c0_13, %c0_14, %c0_15] : memref<1x384x1152xbf16, #tpu.memory_space<vmem>>, vector<1x384x1152xbf16>
    %33 = vector.shape_cast %32 : vector<1x384x1152xbf16> to vector<384x1152xbf16>
    %cst_16 = arith.constant dense<0.000000e+00> : vector<32x1152xf32>
    %34 = tpu.matmul %31, %33, %cst_16 {dimension_numbers = #tpu.dot_dimension_numbers<[1], [0], [0], [1], [0, 0, 1, 1], [], []>} : vector<32x384xbf16>, vector<384x1152xbf16>, vector<32x1152xf32> -> vector<32x1152xf32>
    %35 = arith.truncf %34 : vector<32x1152xf32> to vector<32x1152xbf16>
    %c0_17 = arith.constant 0 : index
    %c0_18 = arith.constant 0 : index
    %36 = vector.load %arg3[%c0_17, %c0_18] : memref<16x16xf32, #tpu.memory_space<vmem>>, vector<16x16xf32>
    %37 = vector.extract_strided_slice %35 {offsets = [0, 0], sizes = [32, 64], strides = [1, 1]} : vector<32x1152xbf16> to vector<32x64xbf16>
    %38 = vector.shape_cast %37 : vector<32x64xbf16> to vector<2x16x64xbf16>
    %39 = vector.extract_strided_slice %35 {offsets = [0, 384], sizes = [32, 64], strides = [1, 1]} : vector<32x1152xbf16> to vector<32x64xbf16>
    %40 = vector.shape_cast %39 : vector<32x64xbf16> to vector<2x16x64xbf16>
    %41 = vector.extract_strided_slice %35 {offsets = [0, 768], sizes = [32, 64], strides = [1, 1]} : vector<32x1152xbf16> to vector<32x64xbf16>
    %42 = vector.shape_cast %41 : vector<32x64xbf16> to vector<2x16x64xbf16>
    "tpu.trace_start"() <{level = 10 : i32, message = "bqd,bkd->bqk"}> : () -> ()
    %cst_19 = arith.constant dense<0.000000e+00> : vector<2x16x16xf32>
    %43 = tpu.matmul %38, %40, %cst_19 {dimension_numbers = #tpu.dot_dimension_numbers<[2], [2], [1], [1], [0, 0, 0, 1, 1, 1], [0], [0]>} : vector<2x16x64xbf16>, vector<2x16x64xbf16>, vector<2x16x16xf32> -> vector<2x16x16xf32>
    "tpu.trace_stop"() : () -> ()
    %44 = vector.shape_cast %36 : vector<16x16xf32> to vector<1x16x16xf32>
    %45 = vector.broadcast %44 : vector<1x16x16xf32> to vector<2x16x16xf32>
    %46 = arith.addf %43, %45 : vector<2x16x16xf32>
    %cst_20 = arith.constant dense<0xFF800000> : vector<2x16xf32>
    %47 = vector.multi_reduction <maximumf>, %46, %cst_20 [2] : vector<2x16x16xf32> to vector<2x16xf32>
    %48 = vector.shape_cast %47 : vector<2x16xf32> to vector<2x16x1xf32>
    %49 = vector.broadcast %48 : vector<2x16x1xf32> to vector<2x16x16xf32>
    %50 = arith.subf %46, %49 : vector<2x16x16xf32>
    %51 = math.exp %50 : vector<2x16x16xf32>
    %cst_21 = arith.constant dense<0.000000e+00> : vector<2x16xf32>
    %52 = vector.multi_reduction <add>, %51, %cst_21 [2] : vector<2x16x16xf32> to vector<2x16xf32>
    %53 = vector.shape_cast %52 : vector<2x16xf32> to vector<2x16x1xf32>
    %54 = tpu.reciprocal %53 {approx = true} : vector<2x16x1xf32> -> vector<2x16x1xf32>
    %55 = vector.broadcast %54 : vector<2x16x1xf32> to vector<2x16x16xf32>
    %56 = arith.mulf %51, %55 : vector<2x16x16xf32>
    %57 = arith.truncf %56 : vector<2x16x16xf32> to vector<2x16x16xbf16>
    "tpu.trace_start"() <{level = 10 : i32, message = "bqk,bkd->bqd"}> : () -> ()
    %cst_22 = arith.constant dense<0.000000e+00> : vector<2x16x64xf32>
    %58 = tpu.matmul %57, %42, %cst_22 {dimension_numbers = #tpu.dot_dimension_numbers<[2], [1], [1], [2], [0, 0, 0, 1, 1, 2], [0], [0]>} : vector<2x16x16xbf16>, vector<2x16x64xbf16>, vector<2x16x64xf32> -> vector<2x16x64xf32>
    "tpu.trace_stop"() : () -> ()
    %59 = arith.truncf %58 : vector<2x16x64xf32> to vector<2x16x64xbf16>
    %60 = vector.extract_strided_slice %35 {offsets = [0, 64], sizes = [32, 64], strides = [1, 1]} : vector<32x1152xbf16> to vector<32x64xbf16>
    %61 = vector.shape_cast %60 : vector<32x64xbf16> to vector<2x16x64xbf16>
    %62 = vector.extract_strided_slice %35 {offsets = [0, 448], sizes = [32, 64], strides = [1, 1]} : vector<32x1152xbf16> to vector<32x64xbf16>
    %63 = vector.shape_cast %62 : vector<32x64xbf16> to vector<2x16x64xbf16>
    %64 = vector.extract_strided_slice %35 {offsets = [0, 832], sizes = [32, 64], strides = [1, 1]} : vector<32x1152xbf16> to vector<32x64xbf16>
    %65 = vector.shape_cast %64 : vector<32x64xbf16> to vector<2x16x64xbf16>
    "tpu.trace_start"() <{level = 10 : i32, message = "bqd,bkd->bqk"}> : () -> ()
    %cst_23 = arith.constant dense<0.000000e+00> : vector<2x16x16xf32>
    %66 = tpu.matmul %61, %63, %cst_23 {dimension_numbers = #tpu.dot_dimension_numbers<[2], [2], [1], [1], [0, 0, 0, 1, 1, 1], [0], [0]>} : vector<2x16x64xbf16>, vector<2x16x64xbf16>, vector<2x16x16xf32> -> vector<2x16x16xf32>
    "tpu.trace_stop"() : () -> ()
    %67 = vector.shape_cast %36 : vector<16x16xf32> to vector<1x16x16xf32>
    %68 = vector.broadcast %67 : vector<1x16x16xf32> to vector<2x16x16xf32>
    %69 = arith.addf %66, %68 : vector<2x16x16xf32>
    %cst_24 = arith.constant dense<0xFF800000> : vector<2x16xf32>
    %70 = vector.multi_reduction <maximumf>, %69, %cst_24 [2] : vector<2x16x16xf32> to vector<2x16xf32>
    %71 = vector.shape_cast %70 : vector<2x16xf32> to vector<2x16x1xf32>
    %72 = vector.broadcast %71 : vector<2x16x1xf32> to vector<2x16x16xf32>
    %73 = arith.subf %69, %72 : vector<2x16x16xf32>
    %74 = math.exp %73 : vector<2x16x16xf32>
    %cst_25 = arith.constant dense<0.000000e+00> : vector<2x16xf32>
    %75 = vector.multi_reduction <add>, %74, %cst_25 [2] : vector<2x16x16xf32> to vector<2x16xf32>
    %76 = vector.shape_cast %75 : vector<2x16xf32> to vector<2x16x1xf32>
    %77 = tpu.reciprocal %76 {approx = true} : vector<2x16x1xf32> -> vector<2x16x1xf32>
    %78 = vector.broadcast %77 : vector<2x16x1xf32> to vector<2x16x16xf32>
    %79 = arith.mulf %74, %78 : vector<2x16x16xf32>
    %80 = arith.truncf %79 : vector<2x16x16xf32> to vector<2x16x16xbf16>
    "tpu.trace_start"() <{level = 10 : i32, message = "bqk,bkd->bqd"}> : () -> ()
    %cst_26 = arith.constant dense<0.000000e+00> : vector<2x16x64xf32>
    %81 = tpu.matmul %80, %65, %cst_26 {dimension_numbers = #tpu.dot_dimension_numbers<[2], [1], [1], [2], [0, 0, 0, 1, 1, 2], [0], [0]>} : vector<2x16x16xbf16>, vector<2x16x64xbf16>, vector<2x16x64xf32> -> vector<2x16x64xf32>
    "tpu.trace_stop"() : () -> ()
    %82 = arith.truncf %81 : vector<2x16x64xf32> to vector<2x16x64xbf16>
    %83 = vector.extract_strided_slice %35 {offsets = [0, 128], sizes = [32, 64], strides = [1, 1]} : vector<32x1152xbf16> to vector<32x64xbf16>
    %84 = vector.shape_cast %83 : vector<32x64xbf16> to vector<2x16x64xbf16>
    %85 = vector.extract_strided_slice %35 {offsets = [0, 512], sizes = [32, 64], strides = [1, 1]} : vector<32x1152xbf16> to vector<32x64xbf16>
    %86 = vector.shape_cast %85 : vector<32x64xbf16> to vector<2x16x64xbf16>
    %87 = vector.extract_strided_slice %35 {offsets = [0, 896], sizes = [32, 64], strides = [1, 1]} : vector<32x1152xbf16> to vector<32x64xbf16>
    %88 = vector.shape_cast %87 : vector<32x64xbf16> to vector<2x16x64xbf16>
    "tpu.trace_start"() <{level = 10 : i32, message = "bqd,bkd->bqk"}> : () -> ()
    %cst_27 = arith.constant dense<0.000000e+00> : vector<2x16x16xf32>
    %89 = tpu.matmul %84, %86, %cst_27 {dimension_numbers = #tpu.dot_dimension_numbers<[2], [2], [1], [1], [0, 0, 0, 1, 1, 1], [0], [0]>} : vector<2x16x64xbf16>, vector<2x16x64xbf16>, vector<2x16x16xf32> -> vector<2x16x16xf32>
    "tpu.trace_stop"() : () -> ()
    %90 = vector.shape_cast %36 : vector<16x16xf32> to vector<1x16x16xf32>
    %91 = vector.broadcast %90 : vector<1x16x16xf32> to vector<2x16x16xf32>
    %92 = arith.addf %89, %91 : vector<2x16x16xf32>
    %cst_28 = arith.constant dense<0xFF800000> : vector<2x16xf32>
    %93 = vector.multi_reduction <maximumf>, %92, %cst_28 [2] : vector<2x16x16xf32> to vector<2x16xf32>
    %94 = vector.shape_cast %93 : vector<2x16xf32> to vector<2x16x1xf32>
    %95 = vector.broadcast %94 : vector<2x16x1xf32> to vector<2x16x16xf32>
    %96 = arith.subf %92, %95 : vector<2x16x16xf32>
    %97 = math.exp %96 : vector<2x16x16xf32>
    %cst_29 = arith.constant dense<0.000000e+00> : vector<2x16xf32>
    %98 = vector.multi_reduction <add>, %97, %cst_29 [2] : vector<2x16x16xf32> to vector<2x16xf32>
    %99 = vector.shape_cast %98 : vector<2x16xf32> to vector<2x16x1xf32>
    %100 = tpu.reciprocal %99 {approx = true} : vector<2x16x1xf32> -> vector<2x16x1xf32>
    %101 = vector.broadcast %100 : vector<2x16x1xf32> to vector<2x16x16xf32>
    %102 = arith.mulf %97, %101 : vector<2x16x16xf32>
    %103 = arith.truncf %102 : vector<2x16x16xf32> to vector<2x16x16xbf16>
    "tpu.trace_start"() <{level = 10 : i32, message = "bqk,bkd->bqd"}> : () -> ()
    %cst_30 = arith.constant dense<0.000000e+00> : vector<2x16x64xf32>
    %104 = tpu.matmul %103, %88, %cst_30 {dimension_numbers = #tpu.dot_dimension_numbers<[2], [1], [1], [2], [0, 0, 0, 1, 1, 2], [0], [0]>} : vector<2x16x16xbf16>, vector<2x16x64xbf16>, vector<2x16x64xf32> -> vector<2x16x64xf32>
    "tpu.trace_stop"() : () -> ()
    %105 = arith.truncf %104 : vector<2x16x64xf32> to vector<2x16x64xbf16>
    %106 = vector.extract_strided_slice %35 {offsets = [0, 192], sizes = [32, 64], strides = [1, 1]} : vector<32x1152xbf16> to vector<32x64xbf16>
    %107 = vector.shape_cast %106 : vector<32x64xbf16> to vector<2x16x64xbf16>
    %108 = vector.extract_strided_slice %35 {offsets = [0, 576], sizes = [32, 64], strides = [1, 1]} : vector<32x1152xbf16> to vector<32x64xbf16>
    %109 = vector.shape_cast %108 : vector<32x64xbf16> to vector<2x16x64xbf16>
    %110 = vector.extract_strided_slice %35 {offsets = [0, 960], sizes = [32, 64], strides = [1, 1]} : vector<32x1152xbf16> to vector<32x64xbf16>
    %111 = vector.shape_cast %110 : vector<32x64xbf16> to vector<2x16x64xbf16>
    "tpu.trace_start"() <{level = 10 : i32, message = "bqd,bkd->bqk"}> : () -> ()
    %cst_31 = arith.constant dense<0.000000e+00> : vector<2x16x16xf32>
    %112 = tpu.matmul %107, %109, %cst_31 {dimension_numbers = #tpu.dot_dimension_numbers<[2], [2], [1], [1], [0, 0, 0, 1, 1, 1], [0], [0]>} : vector<2x16x64xbf16>, vector<2x16x64xbf16>, vector<2x16x16xf32> -> vector<2x16x16xf32>
    "tpu.trace_stop"() : () -> ()
    %113 = vector.shape_cast %36 : vector<16x16xf32> to vector<1x16x16xf32>
    %114 = vector.broadcast %113 : vector<1x16x16xf32> to vector<2x16x16xf32>
    %115 = arith.addf %112, %114 : vector<2x16x16xf32>
    %cst_32 = arith.constant dense<0xFF800000> : vector<2x16xf32>
    %116 = vector.multi_reduction <maximumf>, %115, %cst_32 [2] : vector<2x16x16xf32> to vector<2x16xf32>
    %117 = vector.shape_cast %116 : vector<2x16xf32> to vector<2x16x1xf32>
    %118 = vector.broadcast %117 : vector<2x16x1xf32> to vector<2x16x16xf32>
    %119 = arith.subf %115, %118 : vector<2x16x16xf32>
    %120 = math.exp %119 : vector<2x16x16xf32>
    %cst_33 = arith.constant dense<0.000000e+00> : vector<2x16xf32>
    %121 = vector.multi_reduction <add>, %120, %cst_33 [2] : vector<2x16x16xf32> to vector<2x16xf32>
    %122 = vector.shape_cast %121 : vector<2x16xf32> to vector<2x16x1xf32>
    %123 = tpu.reciprocal %122 {approx = true} : vector<2x16x1xf32> -> vector<2x16x1xf32>
    %124 = vector.broadcast %123 : vector<2x16x1xf32> to vector<2x16x16xf32>
    %125 = arith.mulf %120, %124 : vector<2x16x16xf32>
    %126 = arith.truncf %125 : vector<2x16x16xf32> to vector<2x16x16xbf16>
    "tpu.trace_start"() <{level = 10 : i32, message = "bqk,bkd->bqd"}> : () -> ()
    %cst_34 = arith.constant dense<0.000000e+00> : vector<2x16x64xf32>
    %127 = tpu.matmul %126, %111, %cst_34 {dimension_numbers = #tpu.dot_dimension_numbers<[2], [1], [1], [2], [0, 0, 0, 1, 1, 2], [0], [0]>} : vector<2x16x16xbf16>, vector<2x16x64xbf16>, vector<2x16x64xf32> -> vector<2x16x64xf32>
    "tpu.trace_stop"() : () -> ()
    %128 = arith.truncf %127 : vector<2x16x64xf32> to vector<2x16x64xbf16>
    %129 = vector.extract_strided_slice %35 {offsets = [0, 256], sizes = [32, 64], strides = [1, 1]} : vector<32x1152xbf16> to vector<32x64xbf16>
    %130 = vector.shape_cast %129 : vector<32x64xbf16> to vector<2x16x64xbf16>
    %131 = vector.extract_strided_slice %35 {offsets = [0, 640], sizes = [32, 64], strides = [1, 1]} : vector<32x1152xbf16> to vector<32x64xbf16>
    %132 = vector.shape_cast %131 : vector<32x64xbf16> to vector<2x16x64xbf16>
    %133 = vector.extract_strided_slice %35 {offsets = [0, 1024], sizes = [32, 64], strides = [1, 1]} : vector<32x1152xbf16> to vector<32x64xbf16>
    %134 = vector.shape_cast %133 : vector<32x64xbf16> to vector<2x16x64xbf16>
    "tpu.trace_start"() <{level = 10 : i32, message = "bqd,bkd->bqk"}> : () -> ()
    %cst_35 = arith.constant dense<0.000000e+00> : vector<2x16x16xf32>
    %135 = tpu.matmul %130, %132, %cst_35 {dimension_numbers = #tpu.dot_dimension_numbers<[2], [2], [1], [1], [0, 0, 0, 1, 1, 1], [0], [0]>} : vector<2x16x64xbf16>, vector<2x16x64xbf16>, vector<2x16x16xf32> -> vector<2x16x16xf32>
    "tpu.trace_stop"() : () -> ()
    %136 = vector.shape_cast %36 : vector<16x16xf32> to vector<1x16x16xf32>
    %137 = vector.broadcast %136 : vector<1x16x16xf32> to vector<2x16x16xf32>
    %138 = arith.addf %135, %137 : vector<2x16x16xf32>
    %cst_36 = arith.constant dense<0xFF800000> : vector<2x16xf32>
    %139 = vector.multi_reduction <maximumf>, %138, %cst_36 [2] : vector<2x16x16xf32> to vector<2x16xf32>
    %140 = vector.shape_cast %139 : vector<2x16xf32> to vector<2x16x1xf32>
    %141 = vector.broadcast %140 : vector<2x16x1xf32> to vector<2x16x16xf32>
    %142 = arith.subf %138, %141 : vector<2x16x16xf32>
    %143 = math.exp %142 : vector<2x16x16xf32>
    %cst_37 = arith.constant dense<0.000000e+00> : vector<2x16xf32>
    %144 = vector.multi_reduction <add>, %143, %cst_37 [2] : vector<2x16x16xf32> to vector<2x16xf32>
    %145 = vector.shape_cast %144 : vector<2x16xf32> to vector<2x16x1xf32>
    %146 = tpu.reciprocal %145 {approx = true} : vector<2x16x1xf32> -> vector<2x16x1xf32>
    %147 = vector.broadcast %146 : vector<2x16x1xf32> to vector<2x16x16xf32>
    %148 = arith.mulf %143, %147 : vector<2x16x16xf32>
    %149 = arith.truncf %148 : vector<2x16x16xf32> to vector<2x16x16xbf16>
    "tpu.trace_start"() <{level = 10 : i32, message = "bqk,bkd->bqd"}> : () -> ()
    %cst_38 = arith.constant dense<0.000000e+00> : vector<2x16x64xf32>
    %150 = tpu.matmul %149, %134, %cst_38 {dimension_numbers = #tpu.dot_dimension_numbers<[2], [1], [1], [2], [0, 0, 0, 1, 1, 2], [0], [0]>} : vector<2x16x16xbf16>, vector<2x16x64xbf16>, vector<2x16x64xf32> -> vector<2x16x64xf32>
    "tpu.trace_stop"() : () -> ()
    %151 = arith.truncf %150 : vector<2x16x64xf32> to vector<2x16x64xbf16>
    %152 = vector.extract_strided_slice %35 {offsets = [0, 320], sizes = [32, 64], strides = [1, 1]} : vector<32x1152xbf16> to vector<32x64xbf16>
    %153 = vector.shape_cast %152 : vector<32x64xbf16> to vector<2x16x64xbf16>
    %154 = vector.extract_strided_slice %35 {offsets = [0, 704], sizes = [32, 64], strides = [1, 1]} : vector<32x1152xbf16> to vector<32x64xbf16>
    %155 = vector.shape_cast %154 : vector<32x64xbf16> to vector<2x16x64xbf16>
    %156 = vector.extract_strided_slice %35 {offsets = [0, 1088], sizes = [32, 64], strides = [1, 1]} : vector<32x1152xbf16> to vector<32x64xbf16>
    %157 = vector.shape_cast %156 : vector<32x64xbf16> to vector<2x16x64xbf16>
    "tpu.trace_start"() <{level = 10 : i32, message = "bqd,bkd->bqk"}> : () -> ()
    %cst_39 = arith.constant dense<0.000000e+00> : vector<2x16x16xf32>
    %158 = tpu.matmul %153, %155, %cst_39 {dimension_numbers = #tpu.dot_dimension_numbers<[2], [2], [1], [1], [0, 0, 0, 1, 1, 1], [0], [0]>} : vector<2x16x64xbf16>, vector<2x16x64xbf16>, vector<2x16x16xf32> -> vector<2x16x16xf32>
    "tpu.trace_stop"() : () -> ()
    %159 = vector.shape_cast %36 : vector<16x16xf32> to vector<1x16x16xf32>
    %160 = vector.broadcast %159 : vector<1x16x16xf32> to vector<2x16x16xf32>
    %161 = arith.addf %158, %160 : vector<2x16x16xf32>
    %cst_40 = arith.constant dense<0xFF800000> : vector<2x16xf32>
    %162 = vector.multi_reduction <maximumf>, %161, %cst_40 [2] : vector<2x16x16xf32> to vector<2x16xf32>
    %163 = vector.shape_cast %162 : vector<2x16xf32> to vector<2x16x1xf32>
    %164 = vector.broadcast %163 : vector<2x16x1xf32> to vector<2x16x16xf32>
    %165 = arith.subf %161, %164 : vector<2x16x16xf32>
    %166 = math.exp %165 : vector<2x16x16xf32>
    %cst_41 = arith.constant dense<0.000000e+00> : vector<2x16xf32>
    %167 = vector.multi_reduction <add>, %166, %cst_41 [2] : vector<2x16x16xf32> to vector<2x16xf32>
    %168 = vector.shape_cast %167 : vector<2x16xf32> to vector<2x16x1xf32>
    %169 = tpu.reciprocal %168 {approx = true} : vector<2x16x1xf32> -> vector<2x16x1xf32>
    %170 = vector.broadcast %169 : vector<2x16x1xf32> to vector<2x16x16xf32>
    %171 = arith.mulf %166, %170 : vector<2x16x16xf32>
    %172 = arith.truncf %171 : vector<2x16x16xf32> to vector<2x16x16xbf16>
    "tpu.trace_start"() <{level = 10 : i32, message = "bqk,bkd->bqd"}> : () -> ()
    %cst_42 = arith.constant dense<0.000000e+00> : vector<2x16x64xf32>
    %173 = tpu.matmul %172, %157, %cst_42 {dimension_numbers = #tpu.dot_dimension_numbers<[2], [1], [1], [2], [0, 0, 0, 1, 1, 2], [0], [0]>} : vector<2x16x16xbf16>, vector<2x16x64xbf16>, vector<2x16x64xf32> -> vector<2x16x64xf32>
    "tpu.trace_stop"() : () -> ()
    %174 = arith.truncf %173 : vector<2x16x64xf32> to vector<2x16x64xbf16>
    %175 = tpu.concatenate %59, %82, %105, %128, %151, %174 in 2 : vector<2x16x64xbf16>, vector<2x16x64xbf16>, vector<2x16x64xbf16>, vector<2x16x64xbf16>, vector<2x16x64xbf16>, vector<2x16x64xbf16> -> vector<2x16x384xbf16>
    %176 = vector.shape_cast %175 : vector<2x16x384xbf16> to vector<32x384xbf16>
    %c0_43 = arith.constant 0 : index
    %c0_44 = arith.constant 0 : index
    %c0_45 = arith.constant 0 : index
    %177 = vector.load %arg7[%c0_43, %c0_44, %c0_45] : memref<1x384x384xbf16, #tpu.memory_space<vmem>>, vector<1x384x384xbf16>
    %178 = vector.shape_cast %177 : vector<1x384x384xbf16> to vector<384x384xbf16>
    %cst_46 = arith.constant dense<0.000000e+00> : vector<32x384xf32>
    %179 = tpu.matmul %176, %178, %cst_46 {dimension_numbers = #tpu.dot_dimension_numbers<[1], [0], [0], [1], [0, 0, 1, 1], [], []>} : vector<32x384xbf16>, vector<384x384xbf16>, vector<32x384xf32> -> vector<32x384xf32>
    %c0_47 = arith.constant 0 : index
    %c0_48 = arith.constant 0 : index
    %c0_49 = arith.constant 0 : index
    %180 = vector.load %arg8[%c0_47, %c0_48, %c0_49] : memref<1x1x384xf32, #tpu.memory_space<vmem>>, vector<1x1x384xf32>
    %181 = vector.shape_cast %180 : vector<1x1x384xf32> to vector<1x384xf32>
    %182 = vector.broadcast %181 : vector<1x384xf32> to vector<32x384xf32>
    %183 = arith.addf %179, %182 : vector<32x384xf32>
    %184 = arith.addf %4, %183 : vector<32x384xf32>
    %c0_50 = arith.constant 0 : index
    %c0_51 = arith.constant 0 : index
    %c0_52 = arith.constant 0 : index
    %185 = vector.load %arg9[%c0_50, %c0_51, %c0_52] : memref<1x1x384xf32, #tpu.memory_space<vmem>>, vector<1x1x384xf32>
    %186 = vector.shape_cast %185 : vector<1x1x384xf32> to vector<1x384xf32>
    %c0_53 = arith.constant 0 : index
    %c0_54 = arith.constant 0 : index
    %c0_55 = arith.constant 0 : index
    %187 = vector.load %arg10[%c0_53, %c0_54, %c0_55] : memref<1x1x384xf32, #tpu.memory_space<vmem>>, vector<1x1x384xf32>
    %188 = vector.shape_cast %187 : vector<1x1x384xf32> to vector<1x384xf32>
    %cst_56 = arith.constant dense<0.000000e+00> : vector<32xf32>
    %189 = vector.multi_reduction <add>, %184, %cst_56 [1] : vector<32x384xf32> to vector<32xf32>
    %190 = vector.shape_cast %189 : vector<32xf32> to vector<32x1xf32>
    %cst_57 = arith.constant 3.840000e+02 : f32
    %191 = vector.broadcast %cst_57 : f32 to vector<32x1xf32>
    %192 = arith.divf %190, %191 : vector<32x1xf32>
    %193 = vector.broadcast %192 : vector<32x1xf32> to vector<32x384xf32>
    %194 = arith.subf %184, %193 : vector<32x384xf32>
    %195 = arith.mulf %194, %194 : vector<32x384xf32>
    %cst_58 = arith.constant dense<0.000000e+00> : vector<32xf32>
    %196 = vector.multi_reduction <add>, %195, %cst_58 [1] : vector<32x384xf32> to vector<32xf32>
    %197 = vector.shape_cast %196 : vector<32xf32> to vector<32x1xf32>
    %cst_59 = arith.constant 3.840000e+02 : f32
    %198 = vector.broadcast %cst_59 : f32 to vector<32x1xf32>
    %199 = arith.divf %197, %198 : vector<32x1xf32>
    %200 = vector.broadcast %192 : vector<32x1xf32> to vector<32x384xf32>
    %201 = arith.subf %184, %200 : vector<32x384xf32>
    %cst_60 = arith.constant 9.99999974E-6 : f32
    %202 = vector.broadcast %cst_60 : f32 to vector<32x1xf32>
    %203 = arith.addf %199, %202 : vector<32x1xf32>
    %204 = math.rsqrt %203 : vector<32x1xf32>
    %205 = vector.broadcast %204 : vector<32x1xf32> to vector<32x384xf32>
    %206 = arith.mulf %201, %205 : vector<32x384xf32>
    %207 = vector.broadcast %186 : vector<1x384xf32> to vector<32x384xf32>
    %208 = arith.mulf %206, %207 : vector<32x384xf32>
    %209 = vector.broadcast %188 : vector<1x384xf32> to vector<32x384xf32>
    %210 = arith.addf %208, %209 : vector<32x384xf32>
    %211 = arith.truncf %210 : vector<32x384xf32> to vector<32x384xbf16>
    %c0_61 = arith.constant 0 : index
    %c0_62 = arith.constant 0 : index
    %c0_63 = arith.constant 0 : index
    %212 = vector.load %arg11[%c0_61, %c0_62, %c0_63] : memref<1x384x1536xbf16, #tpu.memory_space<vmem>>, vector<1x384x1536xbf16>
    %213 = vector.shape_cast %212 : vector<1x384x1536xbf16> to vector<384x1536xbf16>
    %cst_64 = arith.constant dense<0.000000e+00> : vector<32x1536xf32>
    %214 = tpu.matmul %211, %213, %cst_64 {dimension_numbers = #tpu.dot_dimension_numbers<[1], [0], [0], [1], [0, 0, 1, 1], [], []>} : vector<32x384xbf16>, vector<384x1536xbf16>, vector<32x1536xf32> -> vector<32x1536xf32>
    %c0_65 = arith.constant 0 : index
    %c0_66 = arith.constant 0 : index
    %c0_67 = arith.constant 0 : index
    %215 = vector.load %arg12[%c0_65, %c0_66, %c0_67] : memref<1x1x1536xf32, #tpu.memory_space<vmem>>, vector<1x1x1536xf32>
    %216 = vector.shape_cast %215 : vector<1x1x1536xf32> to vector<1x1536xf32>
    %217 = vector.broadcast %216 : vector<1x1536xf32> to vector<32x1536xf32>
    %218 = arith.addf %214, %217 : vector<32x1536xf32>
    %cst_68 = arith.constant 0.000000e+00 : f32
    %219 = vector.broadcast %cst_68 : f32 to vector<32x1536xf32>
    %220 = arith.maximumf %218, %219 : vector<32x1536xf32>
    %221 = arith.truncf %220 : vector<32x1536xf32> to vector<32x1536xbf16>
    %c0_69 = arith.constant 0 : index
    %c0_70 = arith.constant 0 : index
    %c0_71 = arith.constant 0 : index
    %222 = vector.load %arg13[%c0_69, %c0_70, %c0_71] : memref<1x1536x384xbf16, #tpu.memory_space<vmem>>, vector<1x1536x384xbf16>
    %223 = vector.shape_cast %222 : vector<1x1536x384xbf16> to vector<1536x384xbf16>
    %cst_72 = arith.constant dense<0.000000e+00> : vector<32x384xf32>
    %224 = tpu.matmul %221, %223, %cst_72 {dimension_numbers = #tpu.dot_dimension_numbers<[1], [0], [0], [1], [0, 0, 1, 1], [], []>} : vector<32x1536xbf16>, vector<1536x384xbf16>, vector<32x384xf32> -> vector<32x384xf32>
    %c0_73 = arith.constant 0 : index
    %c0_74 = arith.constant 0 : index
    %c0_75 = arith.constant 0 : index
    %225 = vector.load %arg14[%c0_73, %c0_74, %c0_75] : memref<1x1x384xf32, #tpu.memory_space<vmem>>, vector<1x1x384xf32>
    %226 = vector.shape_cast %225 : vector<1x1x384xf32> to vector<1x384xf32>
    %227 = vector.broadcast %226 : vector<1x384xf32> to vector<32x384xf32>
    %228 = arith.addf %224, %227 : vector<32x384xf32>
    %229 = arith.addf %184, %228 : vector<32x384xf32>
    %230 = vector.shape_cast %229 : vector<32x384xf32> to vector<2x16x384xf32>
    %c0_76 = arith.constant 0 : index
    %c0_77 = arith.constant 0 : index
    %c0_78 = arith.constant 0 : index
    %231 = vector.load %arg20[%c0_76, %c0_77, %c0_78] : memref<2x16x384xf32, #tpu.memory_space<vmem>>, vector<2x16x384xf32>
    tpu.vector_store %arg20[%c0_76, %c0_77, %c0_78], %230 {strides = array<i32>} : memref<2x16x384xf32, #tpu.memory_space<vmem>>, vector<2x16x384xf32>,
    %c5_i32 = arith.constant 5 : i32
    %232 = arith.cmpi eq, %arg1, %c5_i32 : i32
    %233 = arith.extui %232 : i1 to i32
    %c0_i32_79 = arith.constant 0 : i32
    %234 = arith.cmpi ne, %233, %c0_i32_79 : i32
    scf.if %234 {
      %c0_80 = arith.constant 0 : index
      %c0_81 = arith.constant 0 : index
      %235 = vector.load %arg15[%c0_80, %c0_81] : memref<1x384xf32, #tpu.memory_space<vmem>>, vector<1x384xf32>
      %c0_82 = arith.constant 0 : index
      %c0_83 = arith.constant 0 : index
      %236 = vector.load %arg16[%c0_82, %c0_83] : memref<1x384xf32, #tpu.memory_space<vmem>>, vector<1x384xf32>
      %cst_84 = arith.constant dense<0.000000e+00> : vector<32xf32>
      %237 = vector.multi_reduction <add>, %229, %cst_84 [1] : vector<32x384xf32> to vector<32xf32>
      %238 = vector.shape_cast %237 : vector<32xf32> to vector<32x1xf32>
      %cst_85 = arith.constant 3.840000e+02 : f32
      %239 = vector.broadcast %cst_85 : f32 to vector<32x1xf32>
      %240 = arith.divf %238, %239 : vector<32x1xf32>
      %241 = vector.broadcast %240 : vector<32x1xf32> to vector<32x384xf32>
      %242 = arith.subf %229, %241 : vector<32x384xf32>
      %243 = arith.mulf %242, %242 : vector<32x384xf32>
      %cst_86 = arith.constant dense<0.000000e+00> : vector<32xf32>
      %244 = vector.multi_reduction <add>, %243, %cst_86 [1] : vector<32x384xf32> to vector<32xf32>
      %245 = vector.shape_cast %244 : vector<32xf32> to vector<32x1xf32>
      %cst_87 = arith.constant 3.840000e+02 : f32
      %246 = vector.broadcast %cst_87 : f32 to vector<32x1xf32>
      %247 = arith.divf %245, %246 : vector<32x1xf32>
      %248 = vector.broadcast %240 : vector<32x1xf32> to vector<32x384xf32>
      %249 = arith.subf %229, %248 : vector<32x384xf32>
      %cst_88 = arith.constant 9.99999974E-6 : f32
      %250 = vector.broadcast %cst_88 : f32 to vector<32x1xf32>
      %251 = arith.addf %247, %250 : vector<32x1xf32>
      %252 = math.rsqrt %251 : vector<32x1xf32>
      %253 = vector.broadcast %252 : vector<32x1xf32> to vector<32x384xf32>
      %254 = arith.mulf %249, %253 : vector<32x384xf32>
      %255 = vector.broadcast %235 : vector<1x384xf32> to vector<32x384xf32>
      %256 = arith.mulf %254, %255 : vector<32x384xf32>
      %257 = vector.broadcast %236 : vector<1x384xf32> to vector<32x384xf32>
      %258 = arith.addf %256, %257 : vector<32x384xf32>
      %259 = arith.truncf %258 : vector<32x384xf32> to vector<32x384xbf16>
      %c0_89 = arith.constant 0 : index
      %c0_90 = arith.constant 0 : index
      %260 = vector.load %arg17[%c0_89, %c0_90] : memref<384x128xbf16, #tpu.memory_space<vmem>>, vector<384x128xbf16>
      %cst_91 = arith.constant dense<0.000000e+00> : vector<32x128xf32>
      %261 = tpu.matmul %259, %260, %cst_91 {dimension_numbers = #tpu.dot_dimension_numbers<[1], [0], [0], [1], [0, 0, 1, 1], [], []>} : vector<32x384xbf16>, vector<384x128xbf16>, vector<32x128xf32> -> vector<32x128xf32>
      %c0_92 = arith.constant 0 : index
      %c0_93 = arith.constant 0 : index
      %262 = vector.load %arg18[%c0_92, %c0_93] : memref<1x128xf32, #tpu.memory_space<vmem>>, vector<1x128xf32>
      %263 = vector.broadcast %262 : vector<1x128xf32> to vector<32x128xf32>
      %264 = arith.addf %261, %263 : vector<32x128xf32>
      %265 = vector.shape_cast %264 : vector<32x128xf32> to vector<2x16x128xf32>
      %c0_94 = arith.constant 0 : index
      %c0_95 = arith.constant 0 : index
      %c0_96 = arith.constant 0 : index
      %266 = vector.load %arg19[%c0_94, %c0_95, %c0_96] : memref<2x16x128xf32, #tpu.memory_space<vmem>>, vector<2x16x128xf32>
      tpu.vector_store %arg19[%c0_94, %c0_95, %c0_96], %265 {strides = array<i32>} : memref<2x16x128xf32, #tpu.memory_space<vmem>>, vector<2x16x128xf32>,
    } else {
    }
    return
  }
  func.func @transform_0(%arg0: i32, %arg1: i32) -> (i32, i32, i32) {
    %c0_i32 = arith.constant 0 : i32
    %c0_i32_0 = arith.constant 0 : i32
    %c0_i32_1 = arith.constant 0 : i32
    return %arg0, %c0_i32, %c0_i32_0 : i32, i32, i32
  }
  func.func @transform_1(%arg0: i32, %arg1: i32) -> (i32, i32) {
    %c0_i32 = arith.constant 0 : i32
    %c0_i32_0 = arith.constant 0 : i32
    %c0_i32_1 = arith.constant 0 : i32
    return %c0_i32, %c0_i32_0 : i32, i32
  }
  func.func @transform_2(%arg0: i32, %arg1: i32) -> (i32, i32, i32) {
    %c0_i32 = arith.constant 0 : i32
    %c0_i32_0 = arith.constant 0 : i32
    %c0_i32_1 = arith.constant 0 : i32
    return %arg1, %c0_i32, %c0_i32_0 : i32, i32, i32
  }
  func.func @transform_3(%arg0: i32, %arg1: i32) -> (i32, i32, i32) {
    %c0_i32 = arith.constant 0 : i32
    %c0_i32_0 = arith.constant 0 : i32
    %c0_i32_1 = arith.constant 0 : i32
    return %arg1, %c0_i32, %c0_i32_0 : i32, i32, i32
  }
  func.func @transform_4(%arg0: i32, %arg1: i32) -> (i32, i32, i32) {
    %c0_i32 = arith.constant 0 : i32
    %c0_i32_0 = arith.constant 0 : i32
    %c0_i32_1 = arith.constant 0 : i32
    return %arg1, %c0_i32, %c0_i32_0 : i32, i32, i32
  }
  func.func @transform_5(%arg0: i32, %arg1: i32) -> (i32, i32, i32) {
    %c0_i32 = arith.constant 0 : i32
    %c0_i32_0 = arith.constant 0 : i32
    %c0_i32_1 = arith.constant 0 : i32
    return %arg1, %c0_i32, %c0_i32_0 : i32, i32, i32
  }
  func.func @transform_6(%arg0: i32, %arg1: i32) -> (i32, i32, i32) {
    %c0_i32 = arith.constant 0 : i32
    %c0_i32_0 = arith.constant 0 : i32
    %c0_i32_1 = arith.constant 0 : i32
    return %arg1, %c0_i32, %c0_i32_0 : i32, i32, i32
  }
  func.func @transform_7(%arg0: i32, %arg1: i32) -> (i32, i32, i32) {
    %c0_i32 = arith.constant 0 : i32
    %c0_i32_0 = arith.constant 0 : i32
    %c0_i32_1 = arith.constant 0 : i32
    return %arg1, %c0_i32, %c0_i32_0 : i32, i32, i32
  }
  func.func @transform_8(%arg0: i32, %arg1: i32) -> (i32, i32, i32) {
    %c0_i32 = arith.constant 0 : i32
    %c0_i32_0 = arith.constant 0 : i32
    %c0_i32_1 = arith.constant 0 : i32
    return %arg1, %c0_i32, %c0_i32_0 : i32, i32, i32
  }
  func.func @transform_9(%arg0: i32, %arg1: i32) -> (i32, i32, i32) {
    %c0_i32 = arith.constant 0 : i32
    %c0_i32_0 = arith.constant 0 : i32
    %c0_i32_1 = arith.constant 0 : i32
    return %arg1, %c0_i32, %c0_i32_0 : i32, i32, i32
  }
  func.func @transform_10(%arg0: i32, %arg1: i32) -> (i32, i32, i32) {
    %c0_i32 = arith.constant 0 : i32
    %c0_i32_0 = arith.constant 0 : i32
    %c0_i32_1 = arith.constant 0 : i32
    return %arg1, %c0_i32, %c0_i32_0 : i32, i32, i32
  }
  func.func @transform_11(%arg0: i32, %arg1: i32) -> (i32, i32, i32) {
    %c0_i32 = arith.constant 0 : i32
    %c0_i32_0 = arith.constant 0 : i32
    %c0_i32_1 = arith.constant 0 : i32
    return %arg1, %c0_i32, %c0_i32_0 : i32, i32, i32
  }
  func.func @transform_12(%arg0: i32, %arg1: i32) -> (i32, i32, i32) {
    %c0_i32 = arith.constant 0 : i32
    %c0_i32_0 = arith.constant 0 : i32
    %c0_i32_1 = arith.constant 0 : i32
    return %arg1, %c0_i32, %c0_i32_0 : i32, i32, i32
  }
  func.func @transform_13(%arg0: i32, %arg1: i32) -> (i32, i32) {
    %c0_i32 = arith.constant 0 : i32
    %c0_i32_0 = arith.constant 0 : i32
    %c0_i32_1 = arith.constant 0 : i32
    return %c0_i32, %c0_i32_0 : i32, i32
  }
  func.func @transform_14(%arg0: i32, %arg1: i32) -> (i32, i32) {
    %c0_i32 = arith.constant 0 : i32
    %c0_i32_0 = arith.constant 0 : i32
    %c0_i32_1 = arith.constant 0 : i32
    return %c0_i32, %c0_i32_0 : i32, i32
  }
  func.func @transform_15(%arg0: i32, %arg1: i32) -> (i32, i32) {
    %c0_i32 = arith.constant 0 : i32
    %c0_i32_0 = arith.constant 0 : i32
    %c0_i32_1 = arith.constant 0 : i32
    return %c0_i32, %c0_i32_0 : i32, i32
  }
  func.func @transform_16(%arg0: i32, %arg1: i32) -> (i32, i32) {
    %c0_i32 = arith.constant 0 : i32
    %c0_i32_0 = arith.constant 0 : i32
    %c0_i32_1 = arith.constant 0 : i32
    return %c0_i32, %c0_i32_0 : i32, i32
  }
  func.func @transform_17(%arg0: i32, %arg1: i32) -> (i32, i32, i32) {
    %c0_i32 = arith.constant 0 : i32
    %c0_i32_0 = arith.constant 0 : i32
    %c0_i32_1 = arith.constant 0 : i32
    return %arg0, %c0_i32, %c0_i32_0 : i32, i32, i32
  }
}

</mosaic_0001>

<llo_original>
// kernel: forward.1
$region0: #{forward.1}
  #allocation0 [shape = 'u32[]', space=smem, size = 0x4, offset = 0x4, fixed_abs, tag = 'smem constant byte address 0x4 - core index']
  #allocation1 [shape = 'u32[144,128]{1,0:T(1,128)}', space=vmem, size = 0x12000, scoped, tag = 'internal scratch']
  #allocation2 [shape = 'f32[2,16,384]{2,1,0:T(8,128)}', space=vmem, size = 0xc000, scoped, tag = 'scratch operand']
  %s0 = inlined_call_operand.vmem [shape: f32[2,16,384], index: 0, kind: input, shape index: {}]
  %s1 = inlined_call_operand.vmem [shape: f32[16,16], index: 1, kind: input, shape index: {}]
  %s2 = inlined_call_operand.hbm [shape: f32[6,1,384], index: 2, kind: input, shape index: {}]
  %s3 = inlined_call_operand.hbm [shape: f32[6,1,384], index: 3, kind: input, shape index: {}]
  %s4 = inlined_call_operand.hbm [shape: bf16[6,384,1152], index: 4, kind: input, shape index: {}]
  %s5 = inlined_call_operand.hbm [shape: bf16[6,384,384], index: 5, kind: input, shape index: {}]
  %s6 = inlined_call_operand.hbm [shape: f32[6,1,384], index: 6, kind: input, shape index: {}]
  %s7 = inlined_call_operand.hbm [shape: f32[6,1,384], index: 7, kind: input, shape index: {}]
  %s8 = inlined_call_operand.hbm [shape: f32[6,1,384], index: 8, kind: input, shape index: {}]
  %s9 = inlined_call_operand.hbm [shape: bf16[6,384,1536], index: 9, kind: input, shape index: {}]
  %s10 = inlined_call_operand.hbm [shape: f32[6,1,1536], index: 10, kind: input, shape index: {}]
  %s11 = inlined_call_operand.hbm [shape: bf16[6,1536,384], index: 11, kind: input, shape index: {}]
  %s12 = inlined_call_operand.hbm [shape: f32[6,1,384], index: 12, kind: input, shape index: {}]
  %s13 = inlined_call_operand.hbm [shape: f32[1,384], index: 13, kind: input, shape index: {}]
  %s14 = inlined_call_operand.hbm [shape: f32[1,384], index: 14, kind: input, shape index: {}]
  %s15 = inlined_call_operand.hbm [shape: bf16[384,128], index: 15, kind: input, shape index: {}]
  %s16 = inlined_call_operand.hbm [shape: f32[1,128], index: 16, kind: input, shape index: {}]
  %s17 = inlined_call_operand.hbm [shape: f32[2,16,128], index: 17, kind: output, shape index: {}]
  %s18 = sld [smem:[#allocation0]]
  $region169: #{forward.1} parent=0
    _
  %s20 = ssub.s32 1, %s18
  %s21 = scalar_select 0, %s20, %s18
  $region1: #{forward.1} parent=0
    #allocation3 [shape = 'u8[3072]{0}', space=vmem, size = 0xc00, scoped, tag = 'input window, operand 2']
    #allocation4 [shape = 's32[2]{0}', space=sflag, size = 0x8, scoped, tag = 'scoped memory for forward.1']
    #allocation5 [shape = 's32[2]{0}', space=sflag, size = 0x8, scoped, tag = 'scoped memory for forward.1']
    #allocation6 [shape = 'u8[3072]{0}', space=vmem, size = 0xc00, scoped, tag = 'input window, operand 3']
    #allocation7 [shape = 's32[2]{0}', space=sflag, size = 0x8, scoped, tag = 'scoped memory for forward.1']
    #allocation8 [shape = 'u8[1769472]{0}', space=vmem, size = 0x1b0000, scoped, tag = 'input window, operand 4']
    #allocation9 [shape = 'u8[589824]{0}', space=vmem, size = 0x90000, scoped, tag = 'input window, operand 5']
    #allocation10 [shape = 's32[2]{0}', space=sflag, size = 0x8, scoped, tag = 'scoped memory for forward.1']
    #allocation11 [shape = 'u8[3072]{0}', space=vmem, size = 0xc00, scoped, tag = 'input window, operand 6']
    #allocation12 [shape = 'u8[3072]{0}', space=vmem, size = 0xc00, scoped, tag = 'input window, operand 7']
    #allocation13 [shape = 's32[2]{0}', space=sflag, size = 0x8, scoped, tag = 'scoped memory for forward.1']
    #allocation14 [shape = 'u8[3072]{0}', space=vmem, size = 0xc00, scoped, tag = 'input window, operand 8']
    #allocation15 [shape = 'u8[2359296]{0}', space=vmem, size = 0x240000, scoped, tag = 'input window, operand 9']
    #allocation16 [shape = 's32[2]{0}', space=sflag, size = 0x8, scoped, tag = 'scoped memory for forward.1']
    #allocation17 [shape = 'u8[12288]{0}', space=vmem, size = 0x3000, scoped, tag = 'input window, operand 10']
    #allocation18 [shape = 'u8[2359296]{0}', space=vmem, size = 0x240000, scoped, tag = 'input window, operand 11']
    #allocation19 [shape = 's32[2]{0}', space=sflag, size = 0x8, scoped, tag = 'scoped memory for forward.1']
    #allocation20 [shape = 'u8[3072]{0}', space=vmem, size = 0xc00, scoped, tag = 'input window, operand 12']
    #allocation21 [shape = 'u8[1536]{0}', space=vmem, size = 0x800, scoped, tag = 'input window, operand 13, single buffered']
    #allocation22 [shape = 's32[1]{0}', space=sflag, size = 0x4, scoped, tag = 'scoped memory for forward.1']
    #allocation23 [shape = 'u8[1536]{0}', space=vmem, size = 0x800, scoped, tag = 'input window, operand 14, single buffered']
    #allocation24 [shape = 'u8[98304]{0}', space=vmem, size = 0x18000, scoped, tag = 'input window, operand 15, single buffered']
    #allocation25 [shape = 's32[1]{0}', space=sflag, size = 0x4, scoped, tag = 'scoped memory for forward.1']
    #allocation26 [shape = 'u8[512]{0}', space=vmem, size = 0x400, scoped, tag = 'input window, operand 16, single buffered']
    #allocation27 [shape = 'u8[16384]{0}', space=vmem, size = 0x4000, scoped, tag = 'output window, operand 0, single buffered']
    %22 = vsyncpa [#allocation4], 0
    %s23 = scalar_lea.sflag [#allocation4], 1
    %24 = vsyncpa %s23, 0
    %25 = vsyncpa [#allocation7], 0
    %s26 = scalar_lea.sflag [#allocation7], 1
    %27 = vsyncpa %s26, 0
    %28 = vsyncpa [#allocation10], 0
    %s29 = scalar_lea.sflag [#allocation10], 1
    %30 = vsyncpa %s29, 0
    %31 = vsyncpa [#allocation13], 0
    %s32 = scalar_lea.sflag [#allocation13], 1
    %33 = vsyncpa %s32, 0
    %34 = vsyncpa [#allocation16], 0
    %s35 = scalar_lea.sflag [#allocation16], 1
    %36 = vsyncpa %s35, 0
    %37 = vsyncpa [#allocation19], 0
    %s38 = scalar_lea.sflag [#allocation19], 1
    %39 = vsyncpa %s38, 0
    %40 = vsyncpa [#allocation22], 0
    %41 = vsyncpa [#allocation25], 0
    %42 = vsyncpa [#allocation5], 0
    loop: start=0, step=1, limit=8
    $region2: #{forward.1} parent=1 // loop_pre_header
      _
    $region3: #{forward.1} parent=1 // loop_header
      %s44 = sphi 0, %s48
      %p45 = scmp.ge.s32.totalorder %s44, 8
      %s51 = sphi 0, %s63
      %s52 = sphi 0, %s59
      %s53 = sphi 0, %s51
      %s54 = sphi 0, %s52
      %s55 = sphi 0, %s53
      %s56 = sphi 0, %s54
      %s66 = sphi 0, %s68
      %s69 = sphi 0, %s66
      %s70 = sphi 0, %s69
      %s86 = sphi 0, %s70
      %s90 = sphi 0, %s90
      %s92 = sphi 0, %s90
      %s93 = sphi 0, %s92
      %s107 = sphi 0, %s93
      %s113 = sphi 0, %s115
      %s116 = sphi 0, %s113
      %s117 = sphi 0, %s116
      %s133 = sphi 0, %s117
      %s139 = sphi 0, %s141
      %s142 = sphi 0, %s139
      %s143 = sphi 0, %s142
      %s159 = sphi 0, %s143
      %s165 = sphi 0, %s167
      %s168 = sphi 0, %s165
      %s169 = sphi 0, %s168
      %s185 = sphi 0, %s169
      %s191 = sphi 0, %s193
      %s194 = sphi 0, %s191
      %s195 = sphi 0, %s194
      %s211 = sphi 0, %s195
      %s217 = sphi 0, %s219
      %s220 = sphi 0, %s217
      %s221 = sphi 0, %s220
      %s237 = sphi 0, %s221
      %s243 = sphi 0, %s245
      %s246 = sphi 0, %s243
      %s247 = sphi 0, %s246
      %s263 = sphi 0, %s247
      %s269 = sphi 0, %s271
      %s272 = sphi 0, %s269
      %s273 = sphi 0, %s272
      %s289 = sphi 0, %s273
      %s295 = sphi 0, %s297
      %s298 = sphi 0, %s295
      %s299 = sphi 0, %s298
      %s315 = sphi 0, %s299
      %s321 = sphi 0, %s323
      %s324 = sphi 0, %s321
      %s325 = sphi 0, %s324
      %s341 = sphi 0, %s325
      %s347 = sphi 0, %s349
      %s350 = sphi 0, %s347
      %s351 = sphi 0, %s350
      %s367 = sphi 0, %s351
      %s373 = sphi 0, %s375
      %s376 = sphi 0, %s373
      %s377 = sphi 0, %s376
      %s393 = sphi 0, %s377
      %s397 = sphi 0, %s397
      %s399 = sphi 0, %s397
      %s400 = sphi 0, %s399
      %s414 = sphi 0, %s400
      %s418 = sphi 0, %s418
      %s420 = sphi 0, %s418
      %s421 = sphi 0, %s420
      %s435 = sphi 0, %s421
      %s439 = sphi 0, %s439
      %s441 = sphi 0, %s439
      %s442 = sphi 0, %s441
      %s456 = sphi 0, %s442
      %s460 = sphi 0, %s460
      %s462 = sphi 0, %s460
      %s463 = sphi 0, %s462
      %s477 = sphi 0, %s463
      %s483 = sphi 0, %s485
      %s486 = sphi 0, %s483
      %s487 = sphi 0, %s486
      %s503 = sphi 0, %s487
    $region4: #{forward.1} parent=1 // loop_header_branch
      %47 = sbr.rel (%p45) target = $region8
    $region5: #{forward.1} parent=1 // loop_body
      %s49 = ssub.s32 %s44, 1
      %s50 = ssub.s32 %s44, 2
      %s57 = sadd.s32 1, %s52
      %p58 = scmp.ge.s32.totalorder %s57, 6
      %s59 = scalar_select %p58, 0, %s57
      %s60 = sadd.s32 1, %s51
      %s61 = scalar_select %p58, %s60, %s51
      %p62 = scmp.ge.s32.totalorder %s61, 1
      %s63 = scalar_select %p62, 0, %s61
      %s64 = ssub.s32 %s51, %s63
      %p65 = scmp.eq.s32.totalorder %s64, 0
      %s67 = sadd.s32 %s66, 1
      %s68 = scalar_select %p65, %s66, %s67
      %p71 = pneg %p65
      %p72 = scmp.eq.s32.totalorder %s44, 5
      %p73 = por %p71, %p72
      %p74 = scmp.ne.s32.totalorder %s66, %s69
      %p75 = scmp.eq.s32.totalorder %s44, 0
      %p76 = por %p74, %p75
      %p77 = scmp.ne.s32.totalorder %s66, %s69
      %p78 = scmp.eq.s32.totalorder %s49, 5
      %p79 = por %p77, %p78
      %p80 = scmp.ne.s32.totalorder %s69, %s70
      %p81 = scmp.eq.s32.totalorder %s49, 0
      %p82 = por %p80, %p81
      %p83 = scmp.ne.s32.totalorder %s69, %s70
      %p84 = scmp.eq.s32.totalorder %s50, 5
      %p85 = por %p83, %p84
      %p87 = scmp.ne.s32.totalorder %s70, %s86
      %p88 = scmp.eq.s32.totalorder %s50, 0
      %p89 = por %p87, %p88
      %s91 = sadd.s32 %s90, 1
      %p94 = scmp.eq.s32.totalorder %s44, 5
      %p95 = scmp.ne.s32.totalorder %s90, %s92
      %p96 = scmp.eq.s32.totalorder %s44, 0
      %p97 = por %p95, %p96
      %p98 = scmp.ne.s32.totalorder %s90, %s92
      %p99 = scmp.eq.s32.totalorder %s49, 5
      %p100 = por %p98, %p99
      %p101 = scmp.ne.s32.totalorder %s92, %s93
      %p102 = scmp.eq.s32.totalorder %s49, 0
      %p103 = por %p101, %p102
      %p104 = scmp.ne.s32.totalorder %s92, %s93
      %p105 = scmp.eq.s32.totalorder %s50, 5
      %p106 = por %p104, %p105
      %p108 = scmp.ne.s32.totalorder %s93, %s107
      %p109 = scmp.eq.s32.totalorder %s50, 0
      %p110 = por %p108, %p109
      %s111 = ssub.s32 %s52, %s59
      %p112 = scmp.eq.s32.totalorder %s111, 0
      %s114 = sadd.s32 %s113, 1
      %s115 = scalar_select %p112, %s113, %s114
      %p118 = pneg %p112
      %p119 = scmp.eq.s32.totalorder %s44, 5
      %p120 = por %p118, %p119
      %p121 = scmp.ne.s32.totalorder %s113, %s116
      %p122 = scmp.eq.s32.totalorder %s44, 0
      %p123 = por %p121, %p122
      %p124 = scmp.ne.s32.totalorder %s113, %s116
      %p125 = scmp.eq.s32.totalorder %s49, 5
      %p126 = por %p124, %p125
      %p127 = scmp.ne.s32.totalorder %s116, %s117
      %p128 = scmp.eq.s32.totalorder %s49, 0
      %p129 = por %p127, %p128
      %p130 = scmp.ne.s32.totalorder %s116, %s117
      %p131 = scmp.eq.s32.totalorder %s50, 5
      %p132 = por %p130, %p131
      %p134 = scmp.ne.s32.totalorder %s117, %s133
      %p135 = scmp.eq.s32.totalorder %s50, 0
      %p136 = por %p134, %p135
      %s137 = ssub.s32 %s52, %s59
      %p138 = scmp.eq.s32.totalorder %s137, 0
      %s140 = sadd.s32 %s139, 1
      %s141 = scalar_select %p138, %s139, %s140
      %p144 = pneg %p138
      %p145 = scmp.eq.s32.totalorder %s44, 5
      %p146 = por %p144, %p145
      %p147 = scmp.ne.s32.totalorder %s139, %s142
      %p148 = scmp.eq.s32.totalorder %s44, 0
      %p149 = por %p147, %p148
      %p150 = scmp.ne.s32.totalorder %s139, %s142
      %p151 = scmp.eq.s32.totalorder %s49, 5
      %p152 = por %p150, %p151
      %p153 = scmp.ne.s32.totalorder %s142, %s143
      %p154 = scmp.eq.s32.totalorder %s49, 0
      %p155 = por %p153, %p154
      %p156 = scmp.ne.s32.totalorder %s142, %s143
      %p157 = scmp.eq.s32.totalorder %s50, 5
      %p158 = por %p156, %p157
      %p160 = scmp.ne.s32.totalorder %s143, %s159
      %p161 = scmp.eq.s32.totalorder %s50, 0
      %p162 = por %p160, %p161
      %s163 = ssub.s32 %s52, %s59
      %p164 = scmp.eq.s32.totalorder %s163, 0
      %s166 = sadd.s32 %s165, 1
      %s167 = scalar_select %p164, %s165, %s166
      %p170 = pneg %p164
      %p171 = scmp.eq.s32.totalorder %s44, 5
      %p172 = por %p170, %p171
      %p173 = scmp.ne.s32.totalorder %s165, %s168
      %p174 = scmp.eq.s32.totalorder %s44, 0
      %p175 = por %p173, %p174
      %p176 = scmp.ne.s32.totalorder %s165, %s168
      %p177 = scmp.eq.s32.totalorder %s49, 5
      %p178 = por %p176, %p177
      %p179 = scmp.ne.s32.totalorder %s168, %s169
      %p180 = scmp.eq.s32.totalorder %s49, 0
      %p181 = por %p179, %p180
      %p182 = scmp.ne.s32.totalorder %s168, %s169
      %p183 = scmp.eq.s32.totalorder %s50, 5
      %p184 = por %p182, %p183
      %p186 = scmp.ne.s32.totalorder %s169, %s185
      %p187 = scmp.eq.s32.totalorder %s50, 0
      %p188 = por %p186, %p187
      %s189 = ssub.s32 %s52, %s59
      %p190 = scmp.eq.s32.totalorder %s189, 0
      %s192 = sadd.s32 %s191, 1
      %s193 = scalar_select %p190, %s191, %s192
      %p196 = pneg %p190
      %p197 = scmp.eq.s32.totalorder %s44, 5
      %p198 = por %p196, %p197
      %p199 = scmp.ne.s32.totalorder %s191, %s194
      %p200 = scmp.eq.s32.totalorder %s44, 0
      %p201 = por %p199, %p200
      %p202 = scmp.ne.s32.totalorder %s191, %s194
      %p203 = scmp.eq.s32.totalorder %s49, 5
      %p204 = por %p202, %p203
      %p205 = scmp.ne.s32.totalorder %s194, %s195
      %p206 = scmp.eq.s32.totalorder %s49, 0
      %p207 = por %p205, %p206
      %p208 = scmp.ne.s32.totalorder %s194, %s195
      %p209 = scmp.eq.s32.totalorder %s50, 5
      %p210 = por %p208, %p209
      %p212 = scmp.ne.s32.totalorder %s195, %s211
      %p213 = scmp.eq.s32.totalorder %s50, 0
      %p214 = por %p212, %p213
      %s215 = ssub.s32 %s52, %s59
      %p216 = scmp.eq.s32.totalorder %s215, 0
      %s218 = sadd.s32 %s217, 1
      %s219 = scalar_select %p216, %s217, %s218
      %p222 = pneg %p216
      %p223 = scmp.eq.s32.totalorder %s44, 5
      %p224 = por %p222, %p223
      %p225 = scmp.ne.s32.totalorder %s217, %s220
      %p226 = scmp.eq.s32.totalorder %s44, 0
      %p227 = por %p225, %p226
      %p228 = scmp.ne.s32.totalorder %s217, %s220
      %p229 = scmp.eq.s32.totalorder %s49, 5
      %p230 = por %p228, %p229
      %p231 = scmp.ne.s32.totalorder %s220, %s221
      %p232 = scmp.eq.s32.totalorder %s49, 0
      %p233 = por %p231, %p232
      %p234 = scmp.ne.s32.totalorder %s220, %s221
      %p235 = scmp.eq.s32.totalorder %s50, 5
      %p236 = por %p234, %p235
      %p238 = scmp.ne.s32.totalorder %s221, %s237
      %p239 = scmp.eq.s32.totalorder %s50, 0
      %p240 = por %p238, %p239
      %s241 = ssub.s32 %s52, %s59
      %p242 = scmp.eq.s32.totalorder %s241, 0
      %s244 = sadd.s32 %s243, 1
      %s245 = scalar_select %p242, %s243, %s244
      %p248 = pneg %p242
      %p249 = scmp.eq.s32.totalorder %s44, 5
      %p250 = por %p248, %p249
      %p251 = scmp.ne.s32.totalorder %s243, %s246
      %p252 = scmp.eq.s32.totalorder %s44, 0
      %p253 = por %p251, %p252
      %p254 = scmp.ne.s32.totalorder %s243, %s246
      %p255 = scmp.eq.s32.totalorder %s49, 5
      %p256 = por %p254, %p255
      %p257 = scmp.ne.s32.totalorder %s246, %s247
      %p258 = scmp.eq.s32.totalorder %s49, 0
      %p259 = por %p257, %p258
      %p260 = scmp.ne.s32.totalorder %s246, %s247
      %p261 = scmp.eq.s32.totalorder %s50, 5
      %p262 = por %p260, %p261
      %p264 = scmp.ne.s32.totalorder %s247, %s263
      %p265 = scmp.eq.s32.totalorder %s50, 0
      %p266 = por %p264, %p265
      %s267 = ssub.s32 %s52, %s59
      %p268 = scmp.eq.s32.totalorder %s267, 0
      %s270 = sadd.s32 %s269, 1
      %s271 = scalar_select %p268, %s269, %s270
      %p274 = pneg %p268
      %p275 = scmp.eq.s32.totalorder %s44, 5
      %p276 = por %p274, %p275
      %p277 = scmp.ne.s32.totalorder %s269, %s272
      %p278 = scmp.eq.s32.totalorder %s44, 0
      %p279 = por %p277, %p278
      %p280 = scmp.ne.s32.totalorder %s269, %s272
      %p281 = scmp.eq.s32.totalorder %s49, 5
      %p282 = por %p280, %p281
      %p283 = scmp.ne.s32.totalorder %s272, %s273
      %p284 = scmp.eq.s32.totalorder %s49, 0
      %p285 = por %p283, %p284
      %p286 = scmp.ne.s32.totalorder %s272, %s273
      %p287 = scmp.eq.s32.totalorder %s50, 5
      %p288 = por %p286, %p287
      %p290 = scmp.ne.s32.totalorder %s273, %s289
      %p291 = scmp.eq.s32.totalorder %s50, 0
      %p292 = por %p290, %p291
      %s293 = ssub.s32 %s52, %s59
      %p294 = scmp.eq.s32.totalorder %s293, 0
      %s296 = sadd.s32 %s295, 1
      %s297 = scalar_select %p294, %s295, %s296
      %p300 = pneg %p294
      %p301 = scmp.eq.s32.totalorder %s44, 5
      %p302 = por %p300, %p301
      %p303 = scmp.ne.s32.totalorder %s295, %s298
      %p304 = scmp.eq.s32.totalorder %s44, 0
      %p305 = por %p303, %p304
      %p306 = scmp.ne.s32.totalorder %s295, %s298
      %p307 = scmp.eq.s32.totalorder %s49, 5
      %p308 = por %p306, %p307
      %p309 = scmp.ne.s32.totalorder %s298, %s299
      %p310 = scmp.eq.s32.totalorder %s49, 0
      %p311 = por %p309, %p310
      %p312 = scmp.ne.s32.totalorder %s298, %s299
      %p313 = scmp.eq.s32.totalorder %s50, 5
      %p314 = por %p312, %p313
      %p316 = scmp.ne.s32.totalorder %s299, %s315
      %p317 = scmp.eq.s32.totalorder %s50, 0
      %p318 = por %p316, %p317
      %s319 = ssub.s32 %s52, %s59
      %p320 = scmp.eq.s32.totalorder %s319, 0
      %s322 = sadd.s32 %s321, 1
      %s323 = scalar_select %p320, %s321, %s322
      %p326 = pneg %p320
      %p327 = scmp.eq.s32.totalorder %s44, 5
      %p328 = por %p326, %p327
      %p329 = scmp.ne.s32.totalorder %s321, %s324
      %p330 = scmp.eq.s32.totalorder %s44, 0
      %p331 = por %p329, %p330
      %p332 = scmp.ne.s32.totalorder %s321, %s324
      %p333 = scmp.eq.s32.totalorder %s49, 5
      %p334 = por %p332, %p333
      %p335 = scmp.ne.s32.totalorder %s324, %s325
      %p336 = scmp.eq.s32.totalorder %s49, 0
      %p337 = por %p335, %p336
      %p338 = scmp.ne.s32.totalorder %s324, %s325
      %p339 = scmp.eq.s32.totalorder %s50, 5
      %p340 = por %p338, %p339
      %p342 = scmp.ne.s32.totalorder %s325, %s341
      %p343 = scmp.eq.s32.totalorder %s50, 0
      %p344 = por %p342, %p343
      %s345 = ssub.s32 %s52, %s59
      %p346 = scmp.eq.s32.totalorder %s345, 0
      %s348 = sadd.s32 %s347, 1
      %s349 = scalar_select %p346, %s347, %s348
      %p352 = pneg %p346
      %p353 = scmp.eq.s32.totalorder %s44, 5
      %p354 = por %p352, %p353
      %p355 = scmp.ne.s32.totalorder %s347, %s350
      %p356 = scmp.eq.s32.totalorder %s44, 0
      %p357 = por %p355, %p356
      %p358 = scmp.ne.s32.totalorder %s347, %s350
      %p359 = scmp.eq.s32.totalorder %s49, 5
      %p360 = por %p358, %p359
      %p361 = scmp.ne.s32.totalorder %s350, %s351
      %p362 = scmp.eq.s32.totalorder %s49, 0
      %p363 = por %p361, %p362
      %p364 = scmp.ne.s32.totalorder %s350, %s351
      %p365 = scmp.eq.s32.totalorder %s50, 5
      %p366 = por %p364, %p365
      %p368 = scmp.ne.s32.totalorder %s351, %s367
      %p369 = scmp.eq.s32.totalorder %s50, 0
      %p370 = por %p368, %p369
      %s371 = ssub.s32 %s52, %s59
      %p372 = scmp.eq.s32.totalorder %s371, 0
      %s374 = sadd.s32 %s373, 1
      %s375 = scalar_select %p372, %s373, %s374
      %p378 = pneg %p372
      %p379 = scmp.eq.s32.totalorder %s44, 5
      %p380 = por %p378, %p379
      %p381 = scmp.ne.s32.totalorder %s373, %s376
      %p382 = scmp.eq.s32.totalorder %s44, 0
      %p383 = por %p381, %p382
      %p384 = scmp.ne.s32.totalorder %s373, %s376
      %p385 = scmp.eq.s32.totalorder %s49, 5
      %p386 = por %p384, %p385
      %p387 = scmp.ne.s32.totalorder %s376, %s377
      %p388 = scmp.eq.s32.totalorder %s49, 0
      %p389 = por %p387, %p388
      %p390 = scmp.ne.s32.totalorder %s376, %s377
      %p391 = scmp.eq.s32.totalorder %s50, 5
      %p392 = por %p390, %p391
      %p394 = scmp.ne.s32.totalorder %s377, %s393
      %p395 = scmp.eq.s32.totalorder %s50, 0
      %p396 = por %p394, %p395
      %s398 = sadd.s32 %s397, 1
      %p401 = scmp.eq.s32.totalorder %s44, 5
      %p402 = scmp.ne.s32.totalorder %s397, %s399
      %p403 = scmp.eq.s32.totalorder %s44, 0
      %p404 = por %p402, %p403
      %p405 = scmp.ne.s32.totalorder %s397, %s399
      %p406 = scmp.eq.s32.totalorder %s49, 5
      %p407 = por %p405, %p406
      %p408 = scmp.ne.s32.totalorder %s399, %s400
      %p409 = scmp.eq.s32.totalorder %s49, 0
      %p410 = por %p408, %p409
      %p411 = scmp.ne.s32.totalorder %s399, %s400
      %p412 = scmp.eq.s32.totalorder %s50, 5
      %p413 = por %p411, %p412
      %p415 = scmp.ne.s32.totalorder %s400, %s414
      %p416 = scmp.eq.s32.totalorder %s50, 0
      %p417 = por %p415, %p416
      %s419 = sadd.s32 %s418, 1
      %p422 = scmp.eq.s32.totalorder %s44, 5
      %p423 = scmp.ne.s32.totalorder %s418, %s420
      %p424 = scmp.eq.s32.totalorder %s44, 0
      %p425 = por %p423, %p424
      %p426 = scmp.ne.s32.totalorder %s418, %s420
      %p427 = scmp.eq.s32.totalorder %s49, 5
      %p428 = por %p426, %p427
      %p429 = scmp.ne.s32.totalorder %s420, %s421
      %p430 = scmp.eq.s32.totalorder %s49, 0
      %p431 = por %p429, %p430
      %p432 = scmp.ne.s32.totalorder %s420, %s421
      %p433 = scmp.eq.s32.totalorder %s50, 5
      %p434 = por %p432, %p433
      %p436 = scmp.ne.s32.totalorder %s421, %s435
      %p437 = scmp.eq.s32.totalorder %s50, 0
      %p438 = por %p436, %p437
      %s440 = sadd.s32 %s439, 1
      %p443 = scmp.eq.s32.totalorder %s44, 5
      %p444 = scmp.ne.s32.totalorder %s439, %s441
      %p445 = scmp.eq.s32.totalorder %s44, 0
      %p446 = por %p444, %p445
      %p447 = scmp.ne.s32.totalorder %s439, %s441
      %p448 = scmp.eq.s32.totalorder %s49, 5
      %p449 = por %p447, %p448
      %p450 = scmp.ne.s32.totalorder %s441, %s442
      %p451 = scmp.eq.s32.totalorder %s49, 0
      %p452 = por %p450, %p451
      %p453 = scmp.ne.s32.totalorder %s441, %s442
      %p454 = scmp.eq.s32.totalorder %s50, 5
      %p455 = por %p453, %p454
      %p457 = scmp.ne.s32.totalorder %s442, %s456
      %p458 = scmp.eq.s32.totalorder %s50, 0
      %p459 = por %p457, %p458
      %s461 = sadd.s32 %s460, 1
      %p464 = scmp.eq.s32.totalorder %s44, 5
      %p465 = scmp.ne.s32.totalorder %s460, %s462
      %p466 = scmp.eq.s32.totalorder %s44, 0
      %p467 = por %p465, %p466
      %p468 = scmp.ne.s32.totalorder %s460, %s462
      %p469 = scmp.eq.s32.totalorder %s49, 5
      %p470 = por %p468, %p469
      %p471 = scmp.ne.s32.totalorder %s462, %s463
      %p472 = scmp.eq.s32.totalorder %s49, 0
      %p473 = por %p471, %p472
      %p474 = scmp.ne.s32.totalorder %s462, %s463
      %p475 = scmp.eq.s32.totalorder %s50, 5
      %p476 = por %p474, %p475
      %p478 = scmp.ne.s32.totalorder %s463, %s477
      %p479 = scmp.eq.s32.totalorder %s50, 0
      %p480 = por %p478, %p479
      %s481 = ssub.s32 %s51, %s63
      %p482 = scmp.eq.s32.totalorder %s481, 0
      %s484 = sadd.s32 %s483, 1
      %s485 = scalar_select %p482, %s483, %s484
      %p488 = pneg %p482
      %p489 = scmp.eq.s32.totalorder %s44, 5
      %p490 = por %p488, %p489
      %p491 = scmp.ne.s32.totalorder %s483, %s486
      %p492 = scmp.eq.s32.totalorder %s44, 0
      %p493 = por %p491, %p492
      %p494 = scmp.ne.s32.totalorder %s483, %s486
      %p495 = scmp.eq.s32.totalorder %s49, 5
      %p496 = por %p494, %p495
      %p497 = scmp.ne.s32.totalorder %s486, %s487
      %p498 = scmp.eq.s32.totalorder %s49, 0
      %p499 = por %p497, %p498
      %p500 = scmp.ne.s32.totalorder %s486, %s487
      %p501 = scmp.eq.s32.totalorder %s50, 5
      %p502 = por %p500, %p501
      %p504 = scmp.ne.s32.totalorder %s487, %s503
      %p505 = scmp.eq.s32.totalorder %s50, 0
      %p506 = por %p504, %p505
      %p507 = scmp.le.s32.totalorder 1, %s44
      %p508 = scmp.lt.s32.totalorder %s44, 7
      %p509 = pnand %p507, %p508
      %p510 = pneg %p509
      // Predicated region
      $region9: #{forward.1} parent=5 // pred_check
        _
      $region10: #{forward.1} parent=5 // pred_check_branch
        %512 = sbr.rel (%p509) target = $region12
      $region11: #{forward.1} parent=5 // pred_region
        %s513 = ssub.s32 %s44, 1
        // Predicated region
        $region13: #{forward.1} parent=11 // pred_check
          %p514 = pneg %p82
        $region14: #{forward.1} parent=11 // pred_check_branch
          %516 = sbr.rel (%p514) target = $region16
        $region15: #{forward.1} parent=11 // pred_region
          %s517 = smul.u32 2, %s53
          %p518 = scmp.lt.s32.totalorder %s517, 1
          %s519 = scalar_select %p518, %s517, 1
          %s520 = smul.addr %s519, 6
          %s521 = smul.addr %s520, 8
          %s522 = scalar_lea.vmem %s0, %s521
          %s523 = smul.u32 2, %s53
        $region16: #{forward.1} parent=11 // pred_fallthru
          _
        // Predicated region
        $region17: #{forward.1} parent=11 // pred_check
          %p524 = pneg %p103
        $region18: #{forward.1} parent=11 // pred_check_branch
          %526 = sbr.rel (%p524) target = $region20
        $region19: #{forward.1} parent=11 // pred_region
          _
        $region20: #{forward.1} parent=11 // pred_fallthru
          _
        // Predicated region
        $region21: #{forward.1} parent=11 // pred_check
          %p527 = pneg %p410
        $region22: #{forward.1} parent=11 // pred_check_branch
          %529 = sbr.rel (%p527) target = $region24
        $region23: #{forward.1} parent=11 // pred_region
          %s531 = ssub.s32 48, 48
          %532 = vsyncadd [#allocation22], %s531
          %s534 = sshll.u32 [#allocation21], 4
          %s535 = int_to_ptr.vmem [resolvable:$true] %s534
          %537 = dma.hbm_to_vmem [thread:$0]  %s13, 48, %s535, [#allocation22]
        $region24: #{forward.1} parent=11 // pred_fallthru
          _
        // Predicated region
        $region25: #{forward.1} parent=11 // pred_check
          %p538 = pneg %p431
        $region26: #{forward.1} parent=11 // pred_check_branch
          %540 = sbr.rel (%p538) target = $region28
        $region27: #{forward.1} parent=11 // pred_region
          %s542 = ssub.s32 48, 48
          %543 = vsyncadd [#allocation22], %s542
          %s545 = sshll.u32 [#allocation23], 4
          %s546 = int_to_ptr.vmem [resolvable:$true] %s545
          %548 = dma.hbm_to_vmem [thread:$0]  %s14, 48, %s546, [#allocation22]
        $region28: #{forward.1} parent=11 // pred_fallthru
          _
        // Predicated region
        $region29: #{forward.1} parent=11 // pred_check
          %p549 = pneg %p452
        $region30: #{forward.1} parent=11 // pred_check_branch
          %551 = sbr.rel (%p549) target = $region32
        $region31: #{forward.1} parent=11 // pred_region
          %s553 = ssub.s32 3072, 3072
          %554 = vsyncadd [#allocation25], %s553
          %s555 = sshll.u32 [#allocation24], 4
          %s556 = int_to_ptr.vmem [resolvable:$true] %s555
          %561 = dma.hbm_to_vmem [thread:$0]  %s15, 3072, %s556, [#allocation25], 64, 64, 4
        $region32: #{forward.1} parent=11 // pred_fallthru
          _
        // Predicated region
        $region33: #{forward.1} parent=11 // pred_check
          %p562 = pneg %p473
        $region34: #{forward.1} parent=11 // pred_check_branch
          %564 = sbr.rel (%p562) target = $region36
        $region35: #{forward.1} parent=11 // pred_region
          %s566 = ssub.s32 16, 16
          %567 = vsyncadd [#allocation25], %s566
          %s569 = sshll.u32 [#allocation26], 4
          %s570 = int_to_ptr.vmem [resolvable:$true] %s569
          %572 = dma.hbm_to_vmem [thread:$0]  %s16, 16, %s570, [#allocation25]
        $region36: #{forward.1} parent=11 // pred_fallthru
          _
      $region12: #{forward.1} parent=5 // pred_fallthru
        _
      %p573 = scmp.lt.s32.totalorder %s44, 6
      // Predicated region
      $region37: #{forward.1} parent=5 // pred_check
        %p574 = pneg %p573
      $region38: #{forward.1} parent=5 // pred_check_branch
        %576 = sbr.rel (%p574) target = $region40
      $region39: #{forward.1} parent=5 // pred_region
        // Predicated region
        $region41: #{forward.1} parent=39 // pred_check
          %p577 = pneg %p123
        $region42: #{forward.1} parent=39 // pred_check_branch
          %579 = sbr.rel (%p577) target = $region44
        $region43: #{forward.1} parent=39 // pred_region
          %s580 = sand.u32 %s113, 1
          %s581 = scalar_lea.sflag [#allocation4], %s580
          %s582 = sand.u32 %s113, 1
          %s583 = smul.addr %s582, 3
          %s584 = scalar_lea.vmem [#allocation3], %s583
          %s586 = ssub.s32 48, 48
          %587 = vsyncadd %s581, %s586
          %s588 = smul.addr %s52, 3
          %s589 = smul.addr %s588, 16
          %s590 = scalar_lea.hbm %s2, %s589
          %s592 = sshll.u32 %s584, 4
          %s593 = int_to_ptr.vmem [resolvable:$true] %s592
          %595 = dma.hbm_to_vmem [thread:$0]  %s590, 48, %s593, %s581
        $region44: #{forward.1} parent=39 // pred_fallthru
          _
        // Predicated region
        $region45: #{forward.1} parent=39 // pred_check
          %p596 = pneg %p149
        $region46: #{forward.1} parent=39 // pred_check_branch
          %598 = sbr.rel (%p596) target = $region48
        $region47: #{forward.1} parent=39 // pred_region
          %s599 = sand.u32 %s44, 1
          %s600 = scalar_lea.sflag [#allocation7], %s599
          %s601 = sand.u32 %s139, 1
          %s602 = smul.addr %s601, 3
          %s603 = scalar_lea.vmem [#allocation6], %s602
          %s605 = ssub.s32 48, 48
          %606 = vsyncadd %s600, %s605
          %s607 = smul.addr %s52, 3
          %s608 = smul.addr %s607, 16
          %s609 = scalar_lea.hbm %s3, %s608
          %s611 = sshll.u32 %s603, 4
          %s612 = int_to_ptr.vmem [resolvable:$true] %s611
          %614 = dma.hbm_to_vmem [thread:$0]  %s609, 48, %s612, %s600
        $region48: #{forward.1} parent=39 // pred_fallthru
          _
        // Predicated region
        $region49: #{forward.1} parent=39 // pred_check
          %p615 = pneg %p175
        $region50: #{forward.1} parent=39 // pred_check_branch
          %617 = sbr.rel (%p615) target = $region52
        $region51: #{forward.1} parent=39 // pred_region
          %s618 = sand.u32 %s44, 1
          %s619 = scalar_lea.sflag [#allocation7], %s618
          %s620 = sand.u32 %s165, 1
          %s621 = smul.addr %s620, 1728
          %s622 = scalar_lea.vmem [#allocation8], %s621
          %s624 = ssub.s32 27648, 27648
          %625 = vsyncadd %s619, %s624
          %s626 = smul.addr %s52, 432
          %s627 = smul.addr %s626, 64
          %s628 = scalar_lea.hbm %s4, %s627
          %s629 = sshll.u32 %s622, 4
          %s630 = int_to_ptr.vmem [resolvable:$true] %s629
          %635 = dma.hbm_to_vmem [thread:$0]  %s628, 27648, %s630, %s619, 576, 576, 36
        $region52: #{forward.1} parent=39 // pred_fallthru
          _
        // Predicated region
        $region53: #{forward.1} parent=39 // pred_check
          %p636 = pneg %p201
        $region54: #{forward.1} parent=39 // pred_check_branch
          %638 = sbr.rel (%p636) target = $region56
        $region55: #{forward.1} parent=39 // pred_region
          %s639 = sand.u32 %s44, 1
          %s640 = scalar_lea.sflag [#allocation10], %s639
          %s641 = sand.u32 %s191, 1
          %s642 = smul.addr %s641, 576
          %s643 = scalar_lea.vmem [#allocation9], %s642
          %s645 = ssub.s32 9216, 9216
          %646 = vsyncadd %s640, %s645
          %s647 = smul.addr %s52, 144
          %s648 = smul.addr %s647, 64
          %s649 = scalar_lea.hbm %s5, %s648
          %s650 = sshll.u32 %s643, 4
          %s651 = int_to_ptr.vmem [resolvable:$true] %s650
          %656 = dma.hbm_to_vmem [thread:$0]  %s649, 9216, %s651, %s640, 192, 192, 12
        $region56: #{forward.1} parent=39 // pred_fallthru
          _
        // Predicated region
        $region57: #{forward.1} parent=39 // pred_check
          %p657 = pneg %p227
        $region58: #{forward.1} parent=39 // pred_check_branch
          %659 = sbr.rel (%p657) target = $region60
        $region59: #{forward.1} parent=39 // pred_region
          %s660 = sand.u32 %s44, 1
          %s661 = scalar_lea.sflag [#allocation10], %s660
          %s662 = sand.u32 %s217, 1
          %s663 = smul.addr %s662, 3
          %s664 = scalar_lea.vmem [#allocation11], %s663
          %s666 = ssub.s32 48, 48
          %667 = vsyncadd %s661, %s666
          %s668 = smul.addr %s52, 3
          %s669 = smul.addr %s668, 16
          %s670 = scalar_lea.hbm %s6, %s669
          %s672 = sshll.u32 %s664, 4
          %s673 = int_to_ptr.vmem [resolvable:$true] %s672
          %675 = dma.hbm_to_vmem [thread:$0]  %s670, 48, %s673, %s661
        $region60: #{forward.1} parent=39 // pred_fallthru
          _
        // Predicated region
        $region61: #{forward.1} parent=39 // pred_check
          %p676 = pneg %p253
        $region62: #{forward.1} parent=39 // pred_check_branch
          %678 = sbr.rel (%p676) target = $region64
        $region63: #{forward.1} parent=39 // pred_region
          %s679 = sand.u32 %s44, 1
          %s680 = scalar_lea.sflag [#allocation13], %s679
          %s681 = sand.u32 %s243, 1
          %s682 = smul.addr %s681, 3
          %s683 = scalar_lea.vmem [#allocation12], %s682
          %s685 = ssub.s32 48, 48
          %686 = vsyncadd %s680, %s685
          %s687 = smul.addr %s52, 3
          %s688 = smul.addr %s687, 16
          %s689 = scalar_lea.hbm %s7, %s688
          %s691 = sshll.u32 %s683, 4
          %s692 = int_to_ptr.vmem [resolvable:$true] %s691
          %694 = dma.hbm_to_vmem [thread:$0]  %s689, 48, %s692, %s680
        $region64: #{forward.1} parent=39 // pred_fallthru
          _
        // Predicated region
        $region65: #{forward.1} parent=39 // pred_check
          %p695 = pneg %p279
        $region66: #{forward.1} parent=39 // pred_check_branch
          %697 = sbr.rel (%p695) target = $region68
        $region67: #{forward.1} parent=39 // pred_region
          %s698 = sand.u32 %s44, 1
          %s699 = scalar_lea.sflag [#allocation13], %s698
          %s700 = sand.u32 %s269, 1
          %s701 = smul.addr %s700, 3
          %s702 = scalar_lea.vmem [#allocation14], %s701
          %s704 = ssub.s32 48, 48
          %705 = vsyncadd %s699, %s704
          %s706 = smul.addr %s52, 3
          %s707 = smul.addr %s706, 16
          %s708 = scalar_lea.hbm %s8, %s707
          %s710 = sshll.u32 %s702, 4
          %s711 = int_to_ptr.vmem [resolvable:$true] %s710
          %713 = dma.hbm_to_vmem [thread:$0]  %s708, 48, %s711, %s699
        $region68: #{forward.1} parent=39 // pred_fallthru
          _
        // Predicated region
        $region69: #{forward.1} parent=39 // pred_check
          %p714 = pneg %p305
        $region70: #{forward.1} parent=39 // pred_check_branch
          %716 = sbr.rel (%p714) target = $region72
        $region71: #{forward.1} parent=39 // pred_region
          %s717 = sand.u32 %s44, 1
          %s718 = scalar_lea.sflag [#allocation16], %s717
          %s719 = sand.u32 %s295, 1
          %s720 = smul.addr %s719, 2304
          %s721 = scalar_lea.vmem [#allocation15], %s720
          %s723 = ssub.s32 36864, 36864
          %724 = vsyncadd %s718, %s723
          %s725 = smul.addr %s52, 576
          %s726 = smul.addr %s725, 64
          %s727 = scalar_lea.hbm %s9, %s726
          %s728 = sshll.u32 %s721, 4
          %s729 = int_to_ptr.vmem [resolvable:$true] %s728
          %734 = dma.hbm_to_vmem [thread:$0]  %s727, 36864, %s729, %s718, 768, 768, 48
        $region72: #{forward.1} parent=39 // pred_fallthru
          _
        // Predicated region
        $region73: #{forward.1} parent=39 // pred_check
          %p735 = pneg %p331
        $region74: #{forward.1} parent=39 // pred_check_branch
          %737 = sbr.rel (%p735) target = $region76
        $region75: #{forward.1} parent=39 // pred_region
          %s738 = sand.u32 %s44, 1
          %s739 = scalar_lea.sflag [#allocation16], %s738
          %s740 = sand.u32 %s321, 1
          %s741 = smul.addr %s740, 12
          %s742 = scalar_lea.vmem [#allocation17], %s741
          %s744 = ssub.s32 192, 192
          %745 = vsyncadd %s739, %s744
          %s746 = smul.addr %s52, 12
          %s747 = smul.addr %s746, 16
          %s748 = scalar_lea.hbm %s10, %s747
          %s750 = sshll.u32 %s742, 4
          %s751 = int_to_ptr.vmem [resolvable:$true] %s750
          %753 = dma.hbm_to_vmem [thread:$0]  %s748, 192, %s751, %s739
        $region76: #{forward.1} parent=39 // pred_fallthru
          _
        // Predicated region
        $region77: #{forward.1} parent=39 // pred_check
          %p754 = pneg %p357
        $region78: #{forward.1} parent=39 // pred_check_branch
          %756 = sbr.rel (%p754) target = $region80
        $region79: #{forward.1} parent=39 // pred_region
          %s757 = sand.u32 %s44, 1
          %s758 = scalar_lea.sflag [#allocation19], %s757
          %s759 = sand.u32 %s347, 1
          %s760 = smul.addr %s759, 2304
          %s761 = scalar_lea.vmem [#allocation18], %s760
          %s763 = ssub.s32 36864, 36864
          %764 = vsyncadd %s758, %s763
          %s765 = smul.addr %s52, 576
          %s766 = smul.addr %s765, 64
          %s767 = scalar_lea.hbm %s11, %s766
          %s768 = sshll.u32 %s761, 4
          %s769 = int_to_ptr.vmem [resolvable:$true] %s768
          %774 = dma.hbm_to_vmem [thread:$0]  %s767, 36864, %s769, %s758, 192, 192, 12
        $region80: #{forward.1} parent=39 // pred_fallthru
          _
        // Predicated region
        $region81: #{forward.1} parent=39 // pred_check
          %p775 = pneg %p383
        $region82: #{forward.1} parent=39 // pred_check_branch
          %777 = sbr.rel (%p775) target = $region84
        $region83: #{forward.1} parent=39 // pred_region
          %s778 = sand.u32 %s44, 1
          %s779 = scalar_lea.sflag [#allocation19], %s778
          %s780 = sand.u32 %s373, 1
          %s781 = smul.addr %s780, 3
          %s782 = scalar_lea.vmem [#allocation20], %s781
          %s784 = ssub.s32 48, 48
          %785 = vsyncadd %s779, %s784
          %s786 = smul.addr %s52, 3
          %s787 = smul.addr %s786, 16
          %s788 = scalar_lea.hbm %s12, %s787
          %s790 = sshll.u32 %s782, 4
          %s791 = int_to_ptr.vmem [resolvable:$true] %s790
          %793 = dma.hbm_to_vmem [thread:$0]  %s788, 48, %s791, %s779
        $region84: #{forward.1} parent=39 // pred_fallthru
          _
      $region40: #{forward.1} parent=5 // pred_fallthru
        _
      %p794 = scmp.le.s32.totalorder 1, %s44
      %p795 = scmp.lt.s32.totalorder %s44, 7
      %p796 = pnand %p794, %p795
      %p797 = pneg %p796
      // Predicated region
      $region85: #{forward.1} parent=5 // pred_check
        _
      $region86: #{forward.1} parent=5 // pred_check_branch
        %799 = sbr.rel (%p796) target = $region88
      $region87: #{forward.1} parent=5 // pred_region
        %s800 = ssub.s32 %s44, 1
        %s801 = sand.u32 %s116, 1
        %s802 = scalar_lea.sflag [#allocation4], %s801
        %s803 = sand.u32 %s116, 1
        %s804 = smul.addr %s803, 3
        %s805 = scalar_lea.vmem [#allocation3], %s804
        // Predicated region
        $region89: #{forward.1} parent=87 // pred_check
          %p806 = pneg %p129
        $region90: #{forward.1} parent=87 // pred_check_branch
          %808 = sbr.rel (%p806) target = $region92
        $region91: #{forward.1} parent=87 // pred_region
          %809 = dma.done %s802, 48
        $region92: #{forward.1} parent=87 // pred_fallthru
          _
        %s810 = sand.u32 %s49, 1
        %s811 = scalar_lea.sflag [#allocation7], %s810
        %s812 = sand.u32 %s142, 1
        %s813 = smul.addr %s812, 3
        %s814 = scalar_lea.vmem [#allocation6], %s813
        // Predicated region
        $region93: #{forward.1} parent=87 // pred_check
          %p815 = pneg %p155
        $region94: #{forward.1} parent=87 // pred_check_branch
          %817 = sbr.rel (%p815) target = $region96
        $region95: #{forward.1} parent=87 // pred_region
          %818 = dma.done %s811, 48
        $region96: #{forward.1} parent=87 // pred_fallthru
          _
        %s819 = sand.u32 %s49, 1
        %s820 = scalar_lea.sflag [#allocation7], %s819
        %s821 = sand.u32 %s168, 1
        %s822 = smul.addr %s821, 1728
        %s823 = scalar_lea.vmem [#allocation8], %s822
        // Predicated region
        $region97: #{forward.1} parent=87 // pred_check
          %p824 = pneg %p181
        $region98: #{forward.1} parent=87 // pred_check_branch
          %826 = sbr.rel (%p824) target = $region100
        $region99: #{forward.1} parent=87 // pred_region
          %827 = dma.done %s820, 27648
        $region100: #{forward.1} parent=87 // pred_fallthru
          _
        %s828 = sand.u32 %s49, 1
        %s829 = scalar_lea.sflag [#allocation10], %s828
        %s830 = sand.u32 %s194, 1
        %s831 = smul.addr %s830, 576
        %s832 = scalar_lea.vmem [#allocation9], %s831
        // Predicated region
        $region101: #{forward.1} parent=87 // pred_check
          %p833 = pneg %p207
        $region102: #{forward.1} parent=87 // pred_check_branch
          %835 = sbr.rel (%p833) target = $region104
        $region103: #{forward.1} parent=87 // pred_region
          %836 = dma.done %s829, 9216
        $region104: #{forward.1} parent=87 // pred_fallthru
          _
        %s837 = sand.u32 %s49, 1
        %s838 = scalar_lea.sflag [#allocation10], %s837
        %s839 = sand.u32 %s220, 1
        %s840 = smul.addr %s839, 3
        %s841 = scalar_lea.vmem [#allocation11], %s840
        // Predicated region
        $region105: #{forward.1} parent=87 // pred_check
          %p842 = pneg %p233
        $region106: #{forward.1} parent=87 // pred_check_branch
          %844 = sbr.rel (%p842) target = $region108
        $region107: #{forward.1} parent=87 // pred_region
          %845 = dma.done %s838, 48
        $region108: #{forward.1} parent=87 // pred_fallthru
          _
        %s846 = sand.u32 %s49, 1
        %s847 = scalar_lea.sflag [#allocation13], %s846
        %s848 = sand.u32 %s246, 1
        %s849 = smul.addr %s848, 3
        %s850 = scalar_lea.vmem [#allocation12], %s849
        // Predicated region
        $region109: #{forward.1} parent=87 // pred_check
          %p851 = pneg %p259
        $region110: #{forward.1} parent=87 // pred_check_branch
          %853 = sbr.rel (%p851) target = $region112
        $region111: #{forward.1} parent=87 // pred_region
          %854 = dma.done %s847, 48
        $region112: #{forward.1} parent=87 // pred_fallthru
          _
        %s855 = sand.u32 %s49, 1
        %s856 = scalar_lea.sflag [#allocation13], %s855
        %s857 = sand.u32 %s272, 1
        %s858 = smul.addr %s857, 3
        %s859 = scalar_lea.vmem [#allocation14], %s858
        // Predicated region
        $region113: #{forward.1} parent=87 // pred_check
          %p860 = pneg %p285
        $region114: #{forward.1} parent=87 // pred_check_branch
          %862 = sbr.rel (%p860) target = $region116
        $region115: #{forward.1} parent=87 // pred_region
          %863 = dma.done %s856, 48
        $region116: #{forward.1} parent=87 // pred_fallthru
          _
        %s864 = sand.u32 %s49, 1
        %s865 = scalar_lea.sflag [#allocation16], %s864
        %s866 = sand.u32 %s298, 1
        %s867 = smul.addr %s866, 2304
        %s868 = scalar_lea.vmem [#allocation15], %s867
        // Predicated region
        $region117: #{forward.1} parent=87 // pred_check
          %p869 = pneg %p311
        $region118: #{forward.1} parent=87 // pred_check_branch
          %871 = sbr.rel (%p869) target = $region120
        $region119: #{forward.1} parent=87 // pred_region
          %872 = dma.done %s865, 36864
        $region120: #{forward.1} parent=87 // pred_fallthru
          _
        %s873 = sand.u32 %s49, 1
        %s874 = scalar_lea.sflag [#allocation16], %s873
        %s875 = sand.u32 %s324, 1
        %s876 = smul.addr %s875, 12
        %s877 = scalar_lea.vmem [#allocation17], %s876
        // Predicated region
        $region121: #{forward.1} parent=87 // pred_check
          %p878 = pneg %p337
        $region122: #{forward.1} parent=87 // pred_check_branch
          %880 = sbr.rel (%p878) target = $region124
        $region123: #{forward.1} parent=87 // pred_region
          %881 = dma.done %s874, 192
        $region124: #{forward.1} parent=87 // pred_fallthru
          _
        %s882 = sand.u32 %s49, 1
        %s883 = scalar_lea.sflag [#allocation19], %s882
        %s884 = sand.u32 %s350, 1
        %s885 = smul.addr %s884, 2304
        %s886 = scalar_lea.vmem [#allocation18], %s885
        // Predicated region
        $region125: #{forward.1} parent=87 // pred_check
          %p887 = pneg %p363
        $region126: #{forward.1} parent=87 // pred_check_branch
          %889 = sbr.rel (%p887) target = $region128
        $region127: #{forward.1} parent=87 // pred_region
          %890 = dma.done %s883, 36864
        $region128: #{forward.1} parent=87 // pred_fallthru
          _
        %s891 = sand.u32 %s49, 1
        %s892 = scalar_lea.sflag [#allocation19], %s891
        %s893 = sand.u32 %s376, 1
        %s894 = smul.addr %s893, 3
        %s895 = scalar_lea.vmem [#allocation20], %s894
        // Predicated region
        $region129: #{forward.1} parent=87 // pred_check
          %p896 = pneg %p389
        $region130: #{forward.1} parent=87 // pred_check_branch
          %898 = sbr.rel (%p896) target = $region132
        $region131: #{forward.1} parent=87 // pred_region
          %899 = dma.done %s892, 48
        $region132: #{forward.1} parent=87 // pred_fallthru
          _
        // Predicated region
        $region133: #{forward.1} parent=87 // pred_check
          %p900 = pneg %p410
        $region134: #{forward.1} parent=87 // pred_check_branch
          %902 = sbr.rel (%p900) target = $region136
        $region135: #{forward.1} parent=87 // pred_region
          %903 = dma.done [#allocation22], 48
        $region136: #{forward.1} parent=87 // pred_fallthru
          _
        // Predicated region
        $region137: #{forward.1} parent=87 // pred_check
          %p904 = pneg %p431
        $region138: #{forward.1} parent=87 // pred_check_branch
          %906 = sbr.rel (%p904) target = $region140
        $region139: #{forward.1} parent=87 // pred_region
          %907 = dma.done [#allocation22], 48
        $region140: #{forward.1} parent=87 // pred_fallthru
          _
        // Predicated region
        $region141: #{forward.1} parent=87 // pred_check
          %p908 = pneg %p452
        $region142: #{forward.1} parent=87 // pred_check_branch
          %910 = sbr.rel (%p908) target = $region144
        $region143: #{forward.1} parent=87 // pred_region
          %911 = dma.done [#allocation25], 3072
        $region144: #{forward.1} parent=87 // pred_fallthru
          _
        // Predicated region
        $region145: #{forward.1} parent=87 // pred_check
          %p912 = pneg %p473
        $region146: #{forward.1} parent=87 // pred_check_branch
          %914 = sbr.rel (%p912) target = $region148
        $region147: #{forward.1} parent=87 // pred_region
          %915 = dma.done [#allocation25], 16
        $region148: #{forward.1} parent=87 // pred_fallthru
          _
        %s916 = smul.u32 2, %s53
        %p917 = scmp.lt.s32.totalorder %s916, 1
        %s918 = scalar_select %p917, %s916, 1
        %s919 = smul.addr %s918, 6
        %s920 = smul.addr %s919, 8
        %s921 = scalar_lea.vmem %s0, %s920
        %p922 = pneg %p82
        %p923 = pneg %p79
        %p924 = pneg %p103
        %p925 = pneg %p100
        %s926 = sand.u32 %s116, 1
        %s927 = scalar_lea.sflag [#allocation4], %s926
        %s928 = sand.u32 %s116, 1
        %s929 = smul.addr %s928, 3
        %s930 = scalar_lea.vmem [#allocation3], %s929
        %p931 = pneg %p129
        %p932 = pneg %p126
        %s933 = sand.u32 %s49, 1
        %s934 = scalar_lea.sflag [#allocation7], %s933
        %s935 = sand.u32 %s142, 1
        %s936 = smul.addr %s935, 3
        %s937 = scalar_lea.vmem [#allocation6], %s936
        %p938 = pneg %p155
        %p939 = pneg %p152
        %s940 = sand.u32 %s49, 1
        %s941 = scalar_lea.sflag [#allocation7], %s940
        %s942 = sand.u32 %s168, 1
        %s943 = smul.addr %s942, 1728
        %s944 = scalar_lea.vmem [#allocation8], %s943
        %p945 = pneg %p181
        %p946 = pneg %p178
        %s947 = sand.u32 %s49, 1
        %s948 = scalar_lea.sflag [#allocation10], %s947
        %s949 = sand.u32 %s194, 1
        %s950 = smul.addr %s949, 576
        %s951 = scalar_lea.vmem [#allocation9], %s950
        %p952 = pneg %p207
        %p953 = pneg %p204
        %s954 = sand.u32 %s49, 1
        %s955 = scalar_lea.sflag [#allocation10], %s954
        %s956 = sand.u32 %s220, 1
        %s957 = smul.addr %s956, 3
        %s958 = scalar_lea.vmem [#allocation11], %s957
        %p959 = pneg %p233
        %p960 = pneg %p230
        %s961 = sand.u32 %s49, 1
        %s962 = scalar_lea.sflag [#allocation13], %s961
        %s963 = sand.u32 %s246, 1
        %s964 = smul.addr %s963, 3
        %s965 = scalar_lea.vmem [#allocation12], %s964
        %p966 = pneg %p259
        %p967 = pneg %p256
        %s968 = sand.u32 %s49, 1
        %s969 = scalar_lea.sflag [#allocation13], %s968
        %s970 = sand.u32 %s272, 1
        %s971 = smul.addr %s970, 3
        %s972 = scalar_lea.vmem [#allocation14], %s971
        %p973 = pneg %p285
        %p974 = pneg %p282
        %s975 = sand.u32 %s49, 1
        %s976 = scalar_lea.sflag [#allocation16], %s975
        %s977 = sand.u32 %s298, 1
        %s978 = smul.addr %s977, 2304
        %s979 = scalar_lea.vmem [#allocation15], %s978
        %p980 = pneg %p311
        %p981 = pneg %p308
        %s982 = sand.u32 %s49, 1
        %s983 = scalar_lea.sflag [#allocation16], %s982
        %s984 = sand.u32 %s324, 1
        %s985 = smul.addr %s984, 12
        %s986 = scalar_lea.vmem [#allocation17], %s985
        %p987 = pneg %p337
        %p988 = pneg %p334
        %s989 = sand.u32 %s49, 1
        %s990 = scalar_lea.sflag [#allocation19], %s989
        %s991 = sand.u32 %s350, 1
        %s992 = smul.addr %s991, 2304
        %s993 = scalar_lea.vmem [#allocation18], %s992
        %p994 = pneg %p363
        %p995 = pneg %p360
        %s996 = sand.u32 %s49, 1
        %s997 = scalar_lea.sflag [#allocation19], %s996
        %s998 = sand.u32 %s376, 1
        %s999 = smul.addr %s998, 3
        %s1000 = scalar_lea.vmem [#allocation20], %s999
        %p1001 = pneg %p389
        %p1002 = pneg %p386
        %p1003 = pneg %p410
        %p1004 = pneg %p407
        %p1005 = pneg %p431
        %p1006 = pneg %p428
        %p1007 = pneg %p452
        %p1008 = pneg %p449
        %p1009 = pneg %p473
        %p1010 = pneg %p470
        %p1011 = pneg %p499
        %p1012 = pneg %p496
        %s1013 = smul.u32 2, %s53
        %p1014 = scmp.lt.s32.totalorder %s1013, 1
        %s1015 = scalar_select %p1014, %s1013, 1
        %s1016 = smul.addr %s1015, 6
        %s1017 = smul.addr %s1016, 8
        %s1018 = scalar_lea.vmem %s0, %s1017
        %s1019 = smul.u32 2, %s53
        %s1020 = smul.u32 2, %s53
        %p1022 = scmp.eq.s32.totalorder %s54, 0
        // Predicated region
        $region149: #{forward.1} parent=87 // pred_check
          %p1023 = pneg %p1022
        $region150: #{forward.1} parent=87 // pred_check_branch
          %1025 = sbr.rel (%p1023) target = $region152
        $region151: #{forward.1} parent=87 // pred_region
          %v1026 = vld [vmem:[%s1018] sm:$0xff]
          %v1027 = vld [vmem:[%s1018 + $0x8] sm:$0xff]
          %v1028 = vld [vmem:[%s1018 + $0x10] sm:$0xff]
          %v1029 = vld [vmem:[%s1018 + $0x18] sm:$0xff]
          %v1030 = vld [vmem:[%s1018 + $0x20] sm:$0xff]
          %v1031 = vld [vmem:[%s1018 + $0x28] sm:$0xff]
          %v1032 = vld [vmem:[%s1018 + $0x30] sm:$0xff]
          %v1033 = vld [vmem:[%s1018 + $0x38] sm:$0xff]
          %v1034 = vld [vmem:[%s1018 + $0x40] sm:$0xff]
          %v1035 = vld [vmem:[%s1018 + $0x48] sm:$0xff]
          %v1036 = vld [vmem:[%s1018 + $0x50] sm:$0xff]
          %v1037 = vld [vmem:[%s1018 + $0x58] sm:$0xff]
          %1038 = vst [vmem:[#allocation2] sm:$0xff] %v1026
          %1039 = vst [vmem:[#allocation2 + $0x8] sm:$0xff] %v1027
          %1040 = vst [vmem:[#allocation2 + $0x10] sm:$0xff] %v1028
          %1041 = vst [vmem:[#allocation2 + $0x18] sm:$0xff] %v1029
          %1042 = vst [vmem:[#allocation2 + $0x20] sm:$0xff] %v1030
          %1043 = vst [vmem:[#allocation2 + $0x28] sm:$0xff] %v1031
          %1044 = vst [vmem:[#allocation2 + $0x30] sm:$0xff] %v1032
          %1045 = vst [vmem:[#allocation2 + $0x38] sm:$0xff] %v1033
          %1046 = vst [vmem:[#allocation2 + $0x40] sm:$0xff] %v1034
          %1047 = vst [vmem:[#allocation2 + $0x48] sm:$0xff] %v1035
          %1048 = vst [vmem:[#allocation2 + $0x50] sm:$0xff] %v1036
          %1049 = vst [vmem:[#allocation2 + $0x58] sm:$0xff] %v1037
        $region152: #{forward.1} parent=87 // pred_fallthru
          _
        %v1050 = vld [vmem:[#allocation2] sm:$0xff]
        %v1051 = vld [vmem:[#allocation2 + $0x8] sm:$0xff]
        %v1052 = vld [vmem:[#allocation2 + $0x10] sm:$0xff]
        %v1053 = vld [vmem:[#allocation2 + $0x18] sm:$0xff]
        %v1054 = vld [vmem:[#allocation2 + $0x20] sm:$0xff]
        %v1055 = vld [vmem:[#allocation2 + $0x28] sm:$0xff]
        %v1056 = vld [vmem:[#allocation2 + $0x30] sm:$0xff]
        %v1057 = vld [vmem:[#allocation2 + $0x38] sm:$0xff]
        %v1058 = vld [vmem:[#allocation2 + $0x40] sm:$0xff]
        %v1059 = vld [vmem:[#allocation2 + $0x48] sm:$0xff]
        %v1060 = vld [vmem:[#allocation2 + $0x50] sm:$0xff]
        %v1061 = vld [vmem:[#allocation2 + $0x58] sm:$0xff]
        %v1062 = vld [vmem:[%s805] sm:$0x7]
        %v1063 = vld [vmem:[%s814] sm:$0x7]
        %v1064 = vadd.f32 %v1050, %v1051
        %v1065 = vadd.f32 %v1064, %v1052
        %1066 = vadd.xlane.f32.xlu0 %v1065
        %v1067 = vpop.xlane.xlu0 %1066
        %v1068 = vadd.f32 %v1053, %v1054
        %v1069 = vadd.f32 %v1068, %v1055
        %1070 = vadd.xlane.f32.xlu0 %v1069
        %v1071 = vpop.xlane.xlu0 %1070
        %v1072 = vadd.f32 %v1056, %v1057
        %v1073 = vadd.f32 %v1072, %v1058
        %1074 = vadd.xlane.f32.xlu0 %v1073
        %v1075 = vpop.xlane.xlu0 %1074
        %v1076 = vadd.f32 %v1059, %v1060
        %v1077 = vadd.f32 %v1076, %v1061
        %1078 = vadd.xlane.f32.xlu0 %v1077
        %v1079 = vpop.xlane.xlu0 %1078
        %v1080 = vrcp.pop 384.0
        %v1081 = vmul.f32 %v1067, %v1080
        %v1082 = vmul.f32 %v1071, %v1080
        %v1083 = vmul.f32 %v1075, %v1080
        %v1084 = vmul.f32 %v1079, %v1080
        %v1085 = vsub.f32 %v1050, %v1081
        %v1086 = vsub.f32 %v1051, %v1081
        %v1087 = vsub.f32 %v1052, %v1081
        %v1088 = vsub.f32 %v1053, %v1082
        %v1089 = vsub.f32 %v1054, %v1082
        %v1090 = vsub.f32 %v1055, %v1082
        %v1091 = vsub.f32 %v1056, %v1083
        %v1092 = vsub.f32 %v1057, %v1083
        %v1093 = vsub.f32 %v1058, %v1083
        %v1094 = vsub.f32 %v1059, %v1084
        %v1095 = vsub.f32 %v1060, %v1084
        %v1096 = vsub.f32 %v1061, %v1084
        %v1097 = vmul.f32 %v1085, %v1085
        %v1098 = vmul.f32 %v1086, %v1086
        %v1099 = vmul.f32 %v1087, %v1087
        %v1100 = vmul.f32 %v1088, %v1088
        %v1101 = vmul.f32 %v1089, %v1089
        %v1102 = vmul.f32 %v1090, %v1090
        %v1103 = vmul.f32 %v1091, %v1091
        %v1104 = vmul.f32 %v1092, %v1092
        %v1105 = vmul.f32 %v1093, %v1093
        %v1106 = vmul.f32 %v1094, %v1094
        %v1107 = vmul.f32 %v1095, %v1095
        %v1108 = vmul.f32 %v1096, %v1096
        %v1109 = vadd.f32 %v1097, %v1098
        %v1110 = vadd.f32 %v1109, %v1099
        %1111 = vadd.xlane.f32.xlu0 %v1110
        %v1112 = vpop.xlane.xlu0 %1111
        %v1113 = vadd.f32 %v1100, %v1101
        %v1114 = vadd.f32 %v1113, %v1102
        %1115 = vadd.xlane.f32.xlu0 %v1114
        %v1116 = vpop.xlane.xlu0 %1115
        %v1117 = vadd.f32 %v1103, %v1104
        %v1118 = vadd.f32 %v1117, %v1105
        %1119 = vadd.xlane.f32.xlu0 %v1118
        %v1120 = vpop.xlane.xlu0 %1119
        %v1121 = vadd.f32 %v1106, %v1107
        %v1122 = vadd.f32 %v1121, %v1108
        %1123 = vadd.xlane.f32.xlu0 %v1122
        %v1124 = vpop.xlane.xlu0 %1123
        %v1125 = vmul.f32 %v1112, %v1080
        %v1126 = vmul.f32 %v1116, %v1080
        %v1127 = vmul.f32 %v1120, %v1080
        %v1128 = vmul.f32 %v1124, %v1080
        %v1129 = vadd.f32 %v1125, 1e-05
        %v1130 = vadd.f32 %v1126, 1e-05
        %v1131 = vadd.f32 %v1127, 1e-05
        %v1132 = vadd.f32 %v1128, 1e-05
        %v1133 = vrsqrt.pop %v1129
        %v1134 = vrsqrt.pop %v1130
        %v1135 = vrsqrt.pop %v1131
        %v1136 = vrsqrt.pop %v1132
        %v1137 = vmul.f32 %v1085, %v1133
        %v1138 = vmul.f32 %v1086, %v1133
        %v1139 = vmul.f32 %v1087, %v1133
        %v1140 = vmul.f32 %v1088, %v1134
        %v1141 = vmul.f32 %v1089, %v1134
        %v1142 = vmul.f32 %v1090, %v1134
        %v1143 = vmul.f32 %v1091, %v1135
        %v1144 = vmul.f32 %v1092, %v1135
        %v1145 = vmul.f32 %v1093, %v1135
        %v1146 = vmul.f32 %v1094, %v1136
        %v1147 = vmul.f32 %v1095, %v1136
        %v1148 = vmul.f32 %v1096, %v1136
        %v1150 = vlaneseq
        %v1151 = vshrl.u32 %v1150, 7
        %v1152 = vsub.s32 0, %v1151
        %v1153 = vrot.slane %v1062, %v1152
        %v1154 = vlaneseq
        %v1155 = vshrl.u32 %v1154, 7
        %v1156 = vsub.s32 1, %v1155
        %v1157 = vrot.slane %v1062, %v1156
        %v1158 = vlaneseq
        %v1159 = vshrl.u32 %v1158, 7
        %v1160 = vsub.s32 2, %v1159
        %v1161 = vrot.slane %v1062, %v1160
        %v1165 = vmul.f32 %v1137, %v1153
        %v1166 = vmul.f32 %v1138, %v1157
        %v1167 = vmul.f32 %v1139, %v1161
        %v1168 = vmul.f32 %v1140, %v1153
        %v1169 = vmul.f32 %v1141, %v1157
        %v1170 = vmul.f32 %v1142, %v1161
        %v1171 = vmul.f32 %v1143, %v1153
        %v1172 = vmul.f32 %v1144, %v1157
        %v1173 = vmul.f32 %v1145, %v1161
        %v1174 = vmul.f32 %v1146, %v1153
        %v1175 = vmul.f32 %v1147, %v1157
        %v1176 = vmul.f32 %v1148, %v1161
        %v1178 = vlaneseq
        %v1179 = vshrl.u32 %v1178, 7
        %v1180 = vsub.s32 0, %v1179
        %v1181 = vrot.slane %v1063, %v1180
        %v1182 = vlaneseq
        %v1183 = vshrl.u32 %v1182, 7
        %v1184 = vsub.s32 1, %v1183
        %v1185 = vrot.slane %v1063, %v1184
        %v1186 = vlaneseq
        %v1187 = vshrl.u32 %v1186, 7
        %v1188 = vsub.s32 2, %v1187
        %v1189 = vrot.slane %v1063, %v1188
        %v1193 = vadd.f32 %v1165, %v1181
        %v1194 = vadd.f32 %v1166, %v1185
        %v1195 = vadd.f32 %v1167, %v1189
        %v1196 = vadd.f32 %v1168, %v1181
        %v1197 = vadd.f32 %v1169, %v1185
        %v1198 = vadd.f32 %v1170, %v1189
        %v1199 = vadd.f32 %v1171, %v1181
        %v1200 = vadd.f32 %v1172, %v1185
        %v1201 = vadd.f32 %v1173, %v1189
        %v1202 = vadd.f32 %v1174, %v1181
        %v1203 = vadd.f32 %v1175, %v1185
        %v1204 = vadd.f32 %v1176, %v1189
        %v1205 = vpack.c.bf16 %v1196, %v1193
        %v1206 = vpack.c.bf16 %v1197, %v1194
        %v1207 = vpack.c.bf16 %v1198, %v1195
        %v1208 = vpack.c.bf16 %v1202, %v1199
        %v1209 = vpack.c.bf16 %v1203, %v1200
        %v1210 = vpack.c.bf16 %v1204, %v1201
        %v1211 = vld [vmem:[%s823] sm:$0xff]
        %v1212 = vld [vmem:[%s823 + $0x8] sm:$0xff]
        %v1213 = vld [vmem:[%s823 + $0x10] sm:$0xff]
        %v1214 = vld [vmem:[%s823 + $0x18] sm:$0xff]
        %v1215 = vld [vmem:[%s823 + $0x20] sm:$0xf]
        %v1216 = vld [vmem:[%s823 + $0x24] sm:$0xff]
        %v1217 = vld [vmem:[%s823 + $0x2c] sm:$0xff]
        %v1218 = vld [vmem:[%s823 + $0x34] sm:$0xff]
        %v1219 = vld [vmem:[%s823 + $0x3c] sm:$0xff]
        %v1220 = vld [vmem:[%s823 + $0x44] sm:$0xf]
        %v1221 = vld [vmem:[%s823 + $0x48] sm:$0xff]
        %v1222 = vld [vmem:[%s823 + $0x50] sm:$0xff]
        %v1223 = vld [vmem:[%s823 + $0x58] sm:$0xff]
        %v1224 = vld [vmem:[%s823 + $0x60] sm:$0xff]
        %v1225 = vld [vmem:[%s823 + $0x68] sm:$0xf]
        %v1226 = vld [vmem:[%s823 + $0x6c] sm:$0xff]
        %v1227 = vld [vmem:[%s823 + $0x74] sm:$0xff]
        %v1228 = vld [vmem:[%s823 + $0x7c] sm:$0xff]
        %v1229 = vld [vmem:[%s823 + $0x84] sm:$0xff]
        %v1230 = vld [vmem:[%s823 + $0x8c] sm:$0xf]
        %v1231 = vld [vmem:[%s823 + $0x90] sm:$0xff]
        %v1232 = vld [vmem:[%s823 + $0x98] sm:$0xff]
        %v1233 = vld [vmem:[%s823 + $0xa0] sm:$0xff]
        %v1234 = vld [vmem:[%s823 + $0xa8] sm:$0xff]
        %v1235 = vld [vmem:[%s823 + $0xb0] sm:$0xf]
        %v1236 = vld [vmem:[%s823 + $0xb4] sm:$0xff]
        %v1237 = vld [vmem:[%s823 + $0xbc] sm:$0xff]
        %v1238 = vld [vmem:[%s823 + $0xc4] sm:$0xff]
        %v1239 = vld [vmem:[%s823 + $0xcc] sm:$0xff]
        %v1240 = vld [vmem:[%s823 + $0xd4] sm:$0xf]
        %v1241 = vld [vmem:[%s823 + $0xd8] sm:$0xff]
        %v1242 = vld [vmem:[%s823 + $0xe0] sm:$0xff]
        %v1243 = vld [vmem:[%s823 + $0xe8] sm:$0xff]
        %v1244 = vld [vmem:[%s823 + $0xf0] sm:$0xff]
        %v1245 = vld [vmem:[%s823 + $0xf8] sm:$0xf]
        %v1246 = vld [vmem:[%s823 + $0xfc] sm:$0xff]
        %v1247 = vld [vmem:[%s823 + $0x104] sm:$0xff]
        %v1248 = vld [vmem:[%s823 + $0x10c] sm:$0xff]
        %v1249 = vld [vmem:[%s823 + $0x114] sm:$0xff]
        %v1250 = vld [vmem:[%s823 + $0x11c] sm:$0xf]
        %v1251 = vld [vmem:[%s823 + $0x120] sm:$0xff]
        %v1252 = vld [vmem:[%s823 + $0x128] sm:$0xff]
        %v1253 = vld [vmem:[%s823 + $0x130] sm:$0xff]
        %v1254 = vld [vmem:[%s823 + $0x138] sm:$0xff]
        %v1255 = vld [vmem:[%s823 + $0x140] sm:$0xf]
        %v1256 = vld [vmem:[%s823 + $0x144] sm:$0xff]
        %v1257 = vld [vmem:[%s823 + $0x14c] sm:$0xff]
        %v1258 = vld [vmem:[%s823 + $0x154] sm:$0xff]
        %v1259 = vld [vmem:[%s823 + $0x15c] sm:$0xff]
        %v1260 = vld [vmem:[%s823 + $0x164] sm:$0xf]
        %v1261 = vld [vmem:[%s823 + $0x168] sm:$0xff]
        %v1262 = vld [vmem:[%s823 + $0x170] sm:$0xff]
        %v1263 = vld [vmem:[%s823 + $0x178] sm:$0xff]
        %v1264 = vld [vmem:[%s823 + $0x180] sm:$0xff]
        %v1265 = vld [vmem:[%s823 + $0x188] sm:$0xf]
        %v1266 = vld [vmem:[%s823 + $0x18c] sm:$0xff]
        %v1267 = vld [vmem:[%s823 + $0x194] sm:$0xff]
        %v1268 = vld [vmem:[%s823 + $0x19c] sm:$0xff]
        %v1269 = vld [vmem:[%s823 + $0x1a4] sm:$0xff]
        %v1270 = vld [vmem:[%s823 + $0x1ac] sm:$0xf]
        %v1271 = vld [vmem:[%s823 + $0x1b0] sm:$0xff]
        %v1272 = vld [vmem:[%s823 + $0x1b8] sm:$0xff]
        %v1273 = vld [vmem:[%s823 + $0x1c0] sm:$0xff]
        %v1274 = vld [vmem:[%s823 + $0x1c8] sm:$0xff]
        %v1275 = vld [vmem:[%s823 + $0x1d0] sm:$0xf]
        %v1276 = vld [vmem:[%s823 + $0x1d4] sm:$0xff]
        %v1277 = vld [vmem:[%s823 + $0x1dc] sm:$0xff]
        %v1278 = vld [vmem:[%s823 + $0x1e4] sm:$0xff]
        %v1279 = vld [vmem:[%s823 + $0x1ec] sm:$0xff]
        %v1280 = vld [vmem:[%s823 + $0x1f4] sm:$0xf]
        %v1281 = vld [vmem:[%s823 + $0x1f8] sm:$0xff]
        %v1282 = vld [vmem:[%s823 + $0x200] sm:$0xff]
        %v1283 = vld [vmem:[%s823 + $0x208] sm:$0xff]
        %v1284 = vld [vmem:[%s823 + $0x210] sm:$0xff]
        %v1285 = vld [vmem:[%s823 + $0x218] sm:$0xf]
        %v1286 = vld [vmem:[%s823 + $0x21c] sm:$0xff]
        %v1287 = vld [vmem:[%s823 + $0x224] sm:$0xff]
        %v1288 = vld [vmem:[%s823 + $0x22c] sm:$0xff]
        %v1289 = vld [vmem:[%s823 + $0x234] sm:$0xff]
        %v1290 = vld [vmem:[%s823 + $0x23c] sm:$0xf]
        %v1291 = vld [vmem:[%s823 + $0x240] sm:$0xff]
        %v1292 = vld [vmem:[%s823 + $0x248] sm:$0xff]
        %v1293 = vld [vmem:[%s823 + $0x250] sm:$0xff]
        %v1294 = vld [vmem:[%s823 + $0x258] sm:$0xff]
        %v1295 = vld [vmem:[%s823 + $0x260] sm:$0xf]
        %v1296 = vld [vmem:[%s823 + $0x264] sm:$0xff]
        %v1297 = vld [vmem:[%s823 + $0x26c] sm:$0xff]
        %v1298 = vld [vmem:[%s823 + $0x274] sm:$0xff]
        %v1299 = vld [vmem:[%s823 + $0x27c] sm:$0xff]
        %v1300 = vld [vmem:[%s823 + $0x284] sm:$0xf]
        %v1301 = vld [vmem:[%s823 + $0x288] sm:$0xff]
        %v1302 = vld [vmem:[%s823 + $0x290] sm:$0xff]
        %v1303 = vld [vmem:[%s823 + $0x298] sm:$0xff]
        %v1304 = vld [vmem:[%s823 + $0x2a0] sm:$0xff]
        %v1305 = vld [vmem:[%s823 + $0x2a8] sm:$0xf]
        %v1306 = vld [vmem:[%s823 + $0x2ac] sm:$0xff]
        %v1307 = vld [vmem:[%s823 + $0x2b4] sm:$0xff]
        %v1308 = vld [vmem:[%s823 + $0x2bc] sm:$0xff]
        %v1309 = vld [vmem:[%s823 + $0x2c4] sm:$0xff]
        %v1310 = vld [vmem:[%s823 + $0x2cc] sm:$0xf]
        %v1311 = vld [vmem:[%s823 + $0x2d0] sm:$0xff]
        %v1312 = vld [vmem:[%s823 + $0x2d8] sm:$0xff]
        %v1313 = vld [vmem:[%s823 + $0x2e0] sm:$0xff]
        %v1314 = vld [vmem:[%s823 + $0x2e8] sm:$0xff]
        %v1315 = vld [vmem:[%s823 + $0x2f0] sm:$0xf]
        %v1316 = vld [vmem:[%s823 + $0x2f4] sm:$0xff]
        %v1317 = vld [vmem:[%s823 + $0x2fc] sm:$0xff]
        %v1318 = vld [vmem:[%s823 + $0x304] sm:$0xff]
        %v1319 = vld [vmem:[%s823 + $0x30c] sm:$0xff]
        %v1320 = vld [vmem:[%s823 + $0x314] sm:$0xf]
        %v1321 = vld [vmem:[%s823 + $0x318] sm:$0xff]
        %v1322 = vld [vmem:[%s823 + $0x320] sm:$0xff]
        %v1323 = vld [vmem:[%s823 + $0x328] sm:$0xff]
        %v1324 = vld [vmem:[%s823 + $0x330] sm:$0xff]
        %v1325 = vld [vmem:[%s823 + $0x338] sm:$0xf]
        %v1326 = vld [vmem:[%s823 + $0x33c] sm:$0xff]
        %v1327 = vld [vmem:[%s823 + $0x344] sm:$0xff]
        %v1328 = vld [vmem:[%s823 + $0x34c] sm:$0xff]
        %v1329 = vld [vmem:[%s823 + $0x354] sm:$0xff]
        %v1330 = vld [vmem:[%s823 + $0x35c] sm:$0xf]
        %v1331 = vld [vmem:[%s823 + $0x360] sm:$0xff]
        %v1332 = vld [vmem:[%s823 + $0x368] sm:$0xff]
        %v1333 = vld [vmem:[%s823 + $0x370] sm:$0xff]
        %v1334 = vld [vmem:[%s823 + $0x378] sm:$0xff]
        %v1335 = vld [vmem:[%s823 + $0x380] sm:$0xf]
        %v1336 = vld [vmem:[%s823 + $0x384] sm:$0xff]
        %v1337 = vld [vmem:[%s823 + $0x38c] sm:$0xff]
        %v1338 = vld [vmem:[%s823 + $0x394] sm:$0xff]
        %v1339 = vld [vmem:[%s823 + $0x39c] sm:$0xff]
        %v1340 = vld [vmem:[%s823 + $0x3a4] sm:$0xf]
        %v1341 = vld [vmem:[%s823 + $0x3a8] sm:$0xff]
        %v1342 = vld [vmem:[%s823 + $0x3b0] sm:$0xff]
        %v1343 = vld [vmem:[%s823 + $0x3b8] sm:$0xff]
        %v1344 = vld [vmem:[%s823 + $0x3c0] sm:$0xff]
        %v1345 = vld [vmem:[%s823 + $0x3c8] sm:$0xf]
        %v1346 = vld [vmem:[%s823 + $0x3cc] sm:$0xff]
        %v1347 = vld [vmem:[%s823 + $0x3d4] sm:$0xff]
        %v1348 = vld [vmem:[%s823 + $0x3dc] sm:$0xff]
        %v1349 = vld [vmem:[%s823 + $0x3e4] sm:$0xff]
        %v1350 = vld [vmem:[%s823 + $0x3ec] sm:$0xf]
        %v1351 = vld [vmem:[%s823 + $0x3f0] sm:$0xff]
        %v1352 = vld [vmem:[%s823 + $0x3f8] sm:$0xff]
        %v1353 = vld [vmem:[%s823 + $0x400] sm:$0xff]
        %v1354 = vld [vmem:[%s823 + $0x408] sm:$0xff]
        %v1355 = vld [vmem:[%s823 + $0x410] sm:$0xf]
        %v1356 = vld [vmem:[%s823 + $0x414] sm:$0xff]
        %v1357 = vld [vmem:[%s823 + $0x41c] sm:$0xff]
        %v1358 = vld [vmem:[%s823 + $0x424] sm:$0xff]
        %v1359 = vld [vmem:[%s823 + $0x42c] sm:$0xff]
        %v1360 = vld [vmem:[%s823 + $0x434] sm:$0xf]
        %v1361 = vld [vmem:[%s823 + $0x438] sm:$0xff]
        %v1362 = vld [vmem:[%s823 + $0x440] sm:$0xff]
        %v1363 = vld [vmem:[%s823 + $0x448] sm:$0xff]
        %v1364 = vld [vmem:[%s823 + $0x450] sm:$0xff]
        %v1365 = vld [vmem:[%s823 + $0x458] sm:$0xf]
        %v1366 = vld [vmem:[%s823 + $0x45c] sm:$0xff]
        %v1367 = vld [vmem:[%s823 + $0x464] sm:$0xff]
        %v1368 = vld [vmem:[%s823 + $0x46c] sm:$0xff]
        %v1369 = vld [vmem:[%s823 + $0x474] sm:$0xff]
        %v1370 = vld [vmem:[%s823 + $0x47c] sm:$0xf]
        %v1371 = vld [vmem:[%s823 + $0x480] sm:$0xff]
        %v1372 = vld [vmem:[%s823 + $0x488] sm:$0xff]
        %v1373 = vld [vmem:[%s823 + $0x490] sm:$0xff]
        %v1374 = vld [vmem:[%s823 + $0x498] sm:$0xff]
        %v1375 = vld [vmem:[%s823 + $0x4a0] sm:$0xf]
        %v1376 = vld [vmem:[%s823 + $0x4a4] sm:$0xff]
        %v1377 = vld [vmem:[%s823 + $0x4ac] sm:$0xff]
        %v1378 = vld [vmem:[%s823 + $0x4b4] sm:$0xff]
        %v1379 = vld [vmem:[%s823 + $0x4bc] sm:$0xff]
        %v1380 = vld [vmem:[%s823 + $0x4c4] sm:$0xf]
        %v1381 = vld [vmem:[%s823 + $0x4c8] sm:$0xff]
        %v1382 = vld [vmem:[%s823 + $0x4d0] sm:$0xff]
        %v1383 = vld [vmem:[%s823 + $0x4d8] sm:$0xff]
        %v1384 = vld [vmem:[%s823 + $0x4e0] sm:$0xff]
        %v1385 = vld [vmem:[%s823 + $0x4e8] sm:$0xf]
        %v1386 = vld [vmem:[%s823 + $0x4ec] sm:$0xff]
        %v1387 = vld [vmem:[%s823 + $0x4f4] sm:$0xff]
        %v1388 = vld [vmem:[%s823 + $0x4fc] sm:$0xff]
        %v1389 = vld [vmem:[%s823 + $0x504] sm:$0xff]
        %v1390 = vld [vmem:[%s823 + $0x50c] sm:$0xf]
        %v1391 = vld [vmem:[%s823 + $0x510] sm:$0xff]
        %v1392 = vld [vmem:[%s823 + $0x518] sm:$0xff]
        %v1393 = vld [vmem:[%s823 + $0x520] sm:$0xff]
        %v1394 = vld [vmem:[%s823 + $0x528] sm:$0xff]
        %v1395 = vld [vmem:[%s823 + $0x530] sm:$0xf]
        %v1396 = vld [vmem:[%s823 + $0x534] sm:$0xff]
        %v1397 = vld [vmem:[%s823 + $0x53c] sm:$0xff]
        %v1398 = vld [vmem:[%s823 + $0x544] sm:$0xff]
        %v1399 = vld [vmem:[%s823 + $0x54c] sm:$0xff]
        %v1400 = vld [vmem:[%s823 + $0x554] sm:$0xf]
        %v1401 = vld [vmem:[%s823 + $0x558] sm:$0xff]
        %v1402 = vld [vmem:[%s823 + $0x560] sm:$0xff]
        %v1403 = vld [vmem:[%s823 + $0x568] sm:$0xff]
        %v1404 = vld [vmem:[%s823 + $0x570] sm:$0xff]
        %v1405 = vld [vmem:[%s823 + $0x578] sm:$0xf]
        %v1406 = vld [vmem:[%s823 + $0x57c] sm:$0xff]
        %v1407 = vld [vmem:[%s823 + $0x584] sm:$0xff]
        %v1408 = vld [vmem:[%s823 + $0x58c] sm:$0xff]
        %v1409 = vld [vmem:[%s823 + $0x594] sm:$0xff]
        %v1410 = vld [vmem:[%s823 + $0x59c] sm:$0xf]
        %v1411 = vld [vmem:[%s823 + $0x5a0] sm:$0xff]
        %v1412 = vld [vmem:[%s823 + $0x5a8] sm:$0xff]
        %v1413 = vld [vmem:[%s823 + $0x5b0] sm:$0xff]
        %v1414 = vld [vmem:[%s823 + $0x5b8] sm:$0xff]
        %v1415 = vld [vmem:[%s823 + $0x5c0] sm:$0xf]
        %v1416 = vld [vmem:[%s823 + $0x5c4] sm:$0xff]
        %v1417 = vld [vmem:[%s823 + $0x5cc] sm:$0xff]
        %v1418 = vld [vmem:[%s823 + $0x5d4] sm:$0xff]
        %v1419 = vld [vmem:[%s823 + $0x5dc] sm:$0xff]
        %v1420 = vld [vmem:[%s823 + $0x5e4] sm:$0xf]
        %v1421 = vld [vmem:[%s823 + $0x5e8] sm:$0xff]
        %v1422 = vld [vmem:[%s823 + $0x5f0] sm:$0xff]
        %v1423 = vld [vmem:[%s823 + $0x5f8] sm:$0xff]
        %v1424 = vld [vmem:[%s823 + $0x600] sm:$0xff]
        %v1425 = vld [vmem:[%s823 + $0x608] sm:$0xf]
        %v1426 = vld [vmem:[%s823 + $0x60c] sm:$0xff]
        %v1427 = vld [vmem:[%s823 + $0x614] sm:$0xff]
        %v1428 = vld [vmem:[%s823 + $0x61c] sm:$0xff]
        %v1429 = vld [vmem:[%s823 + $0x624] sm:$0xff]
        %v1430 = vld [vmem:[%s823 + $0x62c] sm:$0xf]
        %v1431 = vld [vmem:[%s823 + $0x630] sm:$0xff]
        %v1432 = vld [vmem:[%s823 + $0x638] sm:$0xff]
        %v1433 = vld [vmem:[%s823 + $0x640] sm:$0xff]
        %v1434 = vld [vmem:[%s823 + $0x648] sm:$0xff]
        %v1435 = vld [vmem:[%s823 + $0x650] sm:$0xf]
        %v1436 = vld [vmem:[%s823 + $0x654] sm:$0xff]
        %v1437 = vld [vmem:[%s823 + $0x65c] sm:$0xff]
        %v1438 = vld [vmem:[%s823 + $0x664] sm:$0xff]
        %v1439 = vld [vmem:[%s823 + $0x66c] sm:$0xff]
        %v1440 = vld [vmem:[%s823 + $0x674] sm:$0xf]
        %v1441 = vld [vmem:[%s823 + $0x678] sm:$0xff]
        %v1442 = vld [vmem:[%s823 + $0x680] sm:$0xff]
        %v1443 = vld [vmem:[%s823 + $0x688] sm:$0xff]
        %v1444 = vld [vmem:[%s823 + $0x690] sm:$0xff]
        %v1445 = vld [vmem:[%s823 + $0x698] sm:$0xf]
        %v1446 = vld [vmem:[%s823 + $0x69c] sm:$0xff]
        %v1447 = vld [vmem:[%s823 + $0x6a4] sm:$0xff]
        %v1448 = vld [vmem:[%s823 + $0x6ac] sm:$0xff]
        %v1449 = vld [vmem:[%s823 + $0x6b4] sm:$0xff]
        %v1450 = vld [vmem:[%s823 + $0x6bc] sm:$0xf]
        %v1691 = vunpack.c.l.b16 %v1211
        %v1692 = vunpack.c.h.b16 %v1211
        %v1693 = vunpack.c.l.b16 %v1212
        %v1694 = vunpack.c.h.b16 %v1212
        %v1695 = vunpack.c.l.b16 %v1213
        %v1696 = vunpack.c.h.b16 %v1213
        %v1697 = vunpack.c.l.b16 %v1214
        %v1698 = vunpack.c.h.b16 %v1214
        %v1699 = vunpack.c.l.b16 %v1215
        %v1700 = vunpack.c.l.b16 %v1216
        %v1701 = vunpack.c.h.b16 %v1216
        %v1702 = vunpack.c.l.b16 %v1217
        %v1703 = vunpack.c.h.b16 %v1217
        %v1704 = vunpack.c.l.b16 %v1218
        %v1705 = vunpack.c.h.b16 %v1218
        %v1706 = vunpack.c.l.b16 %v1219
        %v1707 = vunpack.c.h.b16 %v1219
        %v1708 = vunpack.c.l.b16 %v1220
        %v1709 = vunpack.c.l.b16 %v1221
        %v1710 = vunpack.c.h.b16 %v1221
        %v1711 = vunpack.c.l.b16 %v1222
        %v1712 = vunpack.c.h.b16 %v1222
        %v1713 = vunpack.c.l.b16 %v1223
        %v1714 = vunpack.c.h.b16 %v1223
        %v1715 = vunpack.c.l.b16 %v1224
        %v1716 = vunpack.c.h.b16 %v1224
        %v1717 = vunpack.c.l.b16 %v1225
        %v1718 = vunpack.c.l.b16 %v1226
        %v1719 = vunpack.c.h.b16 %v1226
        %v1720 = vunpack.c.l.b16 %v1227
        %v1721 = vunpack.c.h.b16 %v1227
        %v1722 = vunpack.c.l.b16 %v1228
        %v1723 = vunpack.c.h.b16 %v1228
        %v1724 = vunpack.c.l.b16 %v1229
        %v1725 = vunpack.c.h.b16 %v1229
        %v1726 = vunpack.c.l.b16 %v1230
        %v1727 = vunpack.c.l.b16 %v1231
        %v1728 = vunpack.c.h.b16 %v1231
        %v1729 = vunpack.c.l.b16 %v1232
        %v1730 = vunpack.c.h.b16 %v1232
        %v1731 = vunpack.c.l.b16 %v1233
        %v1732 = vunpack.c.h.b16 %v1233
        %v1733 = vunpack.c.l.b16 %v1234
        %v1734 = vunpack.c.h.b16 %v1234
        %v1735 = vunpack.c.l.b16 %v1235
        %v1736 = vunpack.c.l.b16 %v1236
        %v1737 = vunpack.c.h.b16 %v1236
        %v1738 = vunpack.c.l.b16 %v1237
        %v1739 = vunpack.c.h.b16 %v1237
        %v1740 = vunpack.c.l.b16 %v1238
        %v1741 = vunpack.c.h.b16 %v1238
        %v1742 = vunpack.c.l.b16 %v1239
        %v1743 = vunpack.c.h.b16 %v1239
        %v1744 = vunpack.c.l.b16 %v1240
        %v1745 = vunpack.c.l.b16 %v1241
        %v1746 = vunpack.c.h.b16 %v1241
        %v1747 = vunpack.c.l.b16 %v1242
        %v1748 = vunpack.c.h.b16 %v1242
        %v1749 = vunpack.c.l.b16 %v1243
        %v1750 = vunpack.c.h.b16 %v1243
        %v1751 = vunpack.c.l.b16 %v1244
        %v1752 = vunpack.c.h.b16 %v1244
        %v1753 = vunpack.c.l.b16 %v1245
        %v1754 = vunpack.c.l.b16 %v1246
        %v1755 = vunpack.c.h.b16 %v1246
        %v1756 = vunpack.c.l.b16 %v1247
        %v1757 = vunpack.c.h.b16 %v1247
        %v1758 = vunpack.c.l.b16 %v1248
        %v1759 = vunpack.c.h.b16 %v1248
        %v1760 = vunpack.c.l.b16 %v1249
        %v1761 = vunpack.c.h.b16 %v1249
        %v1762 = vunpack.c.l.b16 %v1250
        %v1763 = vunpack.c.l.b16 %v1251
        %v1764 = vunpack.c.h.b16 %v1251
        %v1765 = vunpack.c.l.b16 %v1252
        %v1766 = vunpack.c.h.b16 %v1252
        %v1767 = vunpack.c.l.b16 %v1253
        %v1768 = vunpack.c.h.b16 %v1253
        %v1769 = vunpack.c.l.b16 %v1254
        %v1770 = vunpack.c.h.b16 %v1254
        %v1771 = vunpack.c.l.b16 %v1255
        %v1772 = vunpack.c.l.b16 %v1256
        %v1773 = vunpack.c.h.b16 %v1256
        %v1774 = vunpack.c.l.b16 %v1257
        %v1775 = vunpack.c.h.b16 %v1257
        %v1776 = vunpack.c.l.b16 %v1258
        %v1777 = vunpack.c.h.b16 %v1258
        %v1778 = vunpack.c.l.b16 %v1259
        %v1779 = vunpack.c.h.b16 %v1259
        %v1780 = vunpack.c.l.b16 %v1260
        %v1781 = vunpack.c.l.b16 %v1261
        %v1782 = vunpack.c.h.b16 %v1261
        %v1783 = vunpack.c.l.b16 %v1262
        %v1784 = vunpack.c.h.b16 %v1262
        %v1785 = vunpack.c.l.b16 %v1263
        %v1786 = vunpack.c.h.b16 %v1263
        %v1787 = vunpack.c.l.b16 %v1264
        %v1788 = vunpack.c.h.b16 %v1264
        %v1789 = vunpack.c.l.b16 %v1265
        %v1790 = vunpack.c.l.b16 %v1266
        %v1791 = vunpack.c.h.b16 %v1266
        %v1792 = vunpack.c.l.b16 %v1267
        %v1793 = vunpack.c.h.b16 %v1267
        %v1794 = vunpack.c.l.b16 %v1268
        %v1795 = vunpack.c.h.b16 %v1268
        %v1796 = vunpack.c.l.b16 %v1269
        %v1797 = vunpack.c.h.b16 %v1269
        %v1798 = vunpack.c.l.b16 %v1270
        %v1799 = vunpack.c.l.b16 %v1271
        %v1800 = vunpack.c.h.b16 %v1271
        %v1801 = vunpack.c.l.b16 %v1272
        %v1802 = vunpack.c.h.b16 %v1272
        %v1803 = vunpack.c.l.b16 %v1273
        %v1804 = vunpack.c.h.b16 %v1273
        %v1805 = vunpack.c.l.b16 %v1274
        %v1806 = vunpack.c.h.b16 %v1274
        %v1807 = vunpack.c.l.b16 %v1275
        %v1808 = vunpack.c.l.b16 %v1276
        %v1809 = vunpack.c.h.b16 %v1276
        %v1810 = vunpack.c.l.b16 %v1277
        %v1811 = vunpack.c.h.b16 %v1277
        %v1812 = vunpack.c.l.b16 %v1278
        %v1813 = vunpack.c.h.b16 %v1278
        %v1814 = vunpack.c.l.b16 %v1279
        %v1815 = vunpack.c.h.b16 %v1279
        %v1816 = vunpack.c.l.b16 %v1280
        %v1817 = vunpack.c.l.b16 %v1281
        %v1818 = vunpack.c.h.b16 %v1281
        %v1819 = vunpack.c.l.b16 %v1282
        %v1820 = vunpack.c.h.b16 %v1282
        %v1821 = vunpack.c.l.b16 %v1283
        %v1822 = vunpack.c.h.b16 %v1283
        %v1823 = vunpack.c.l.b16 %v1284
        %v1824 = vunpack.c.h.b16 %v1284
        %v1825 = vunpack.c.l.b16 %v1285
        %v1826 = vunpack.c.l.b16 %v1286
        %v1827 = vunpack.c.h.b16 %v1286
        %v1828 = vunpack.c.l.b16 %v1287
        %v1829 = vunpack.c.h.b16 %v1287
        %v1830 = vunpack.c.l.b16 %v1288
        %v1831 = vunpack.c.h.b16 %v1288
        %v1832 = vunpack.c.l.b16 %v1289
        %v1833 = vunpack.c.h.b16 %v1289
        %v1834 = vunpack.c.l.b16 %v1290
        %v1835 = vunpack.c.l.b16 %v1291
        %v1836 = vunpack.c.h.b16 %v1291
        %v1837 = vunpack.c.l.b16 %v1292
        %v1838 = vunpack.c.h.b16 %v1292
        %v1839 = vunpack.c.l.b16 %v1293
        %v1840 = vunpack.c.h.b16 %v1293
        %v1841 = vunpack.c.l.b16 %v1294
        %v1842 = vunpack.c.h.b16 %v1294
        %v1843 = vunpack.c.l.b16 %v1295
        %v1844 = vunpack.c.l.b16 %v1296
        %v1845 = vunpack.c.h.b16 %v1296
        %v1846 = vunpack.c.l.b16 %v1297
        %v1847 = vunpack.c.h.b16 %v1297
        %v1848 = vunpack.c.l.b16 %v1298
        %v1849 = vunpack.c.h.b16 %v1298
        %v1850 = vunpack.c.l.b16 %v1299
        %v1851 = vunpack.c.h.b16 %v1299
        %v1852 = vunpack.c.l.b16 %v1300
        %v1853 = vunpack.c.l.b16 %v1301
        %v1854 = vunpack.c.h.b16 %v1301
        %v1855 = vunpack.c.l.b16 %v1302
        %v1856 = vunpack.c.h.b16 %v1302
        %v1857 = vunpack.c.l.b16 %v1303
        %v1858 = vunpack.c.h.b16 %v1303
        %v1859 = vunpack.c.l.b16 %v1304
        %v1860 = vunpack.c.h.b16 %v1304
        %v1861 = vunpack.c.l.b16 %v1305
        %v1862 = vunpack.c.l.b16 %v1306
        %v1863 = vunpack.c.h.b16 %v1306
        %v1864 = vunpack.c.l.b16 %v1307
        %v1865 = vunpack.c.h.b16 %v1307
        %v1866 = vunpack.c.l.b16 %v1308
        %v1867 = vunpack.c.h.b16 %v1308
        %v1868 = vunpack.c.l.b16 %v1309
        %v1869 = vunpack.c.h.b16 %v1309
        %v1870 = vunpack.c.l.b16 %v1310
        %v1871 = vunpack.c.l.b16 %v1311
        %v1872 = vunpack.c.h.b16 %v1311
        %v1873 = vunpack.c.l.b16 %v1312
        %v1874 = vunpack.c.h.b16 %v1312
        %v1875 = vunpack.c.l.b16 %v1313
        %v1876 = vunpack.c.h.b16 %v1313
        %v1877 = vunpack.c.l.b16 %v1314
        %v1878 = vunpack.c.h.b16 %v1314
        %v1879 = vunpack.c.l.b16 %v1315
        %v1880 = vunpack.c.l.b16 %v1316
        %v1881 = vunpack.c.h.b16 %v1316
        %v1882 = vunpack.c.l.b16 %v1317
        %v1883 = vunpack.c.h.b16 %v1317
        %v1884 = vunpack.c.l.b16 %v1318
        %v1885 = vunpack.c.h.b16 %v1318
        %v1886 = vunpack.c.l.b16 %v1319
        %v1887 = vunpack.c.h.b16 %v1319
        %v1888 = vunpack.c.l.b16 %v1320
        %v1889 = vunpack.c.l.b16 %v1321
        %v1890 = vunpack.c.h.b16 %v1321
        %v1891 = vunpack.c.l.b16 %v1322
        %v1892 = vunpack.c.h.b16 %v1322
        %v1893 = vunpack.c.l.b16 %v1323
        %v1894 = vunpack.c.h.b16 %v1323
        %v1895 = vunpack.c.l.b16 %v1324
        %v1896 = vunpack.c.h.b16 %v1324
        %v1897 = vunpack.c.l.b16 %v1325
        %v1898 = vunpack.c.l.b16 %v1326
        %v1899 = vunpack.c.h.b16 %v1326
        %v1900 = vunpack.c.l.b16 %v1327
        %v1901 = vunpack.c.h.b16 %v1327
        %v1902 = vunpack.c.l.b16 %v1328
        %v1903 = vunpack.c.h.b16 %v1328
        %v1904 = vunpack.c.l.b16 %v1329
        %v1905 = vunpack.c.h.b16 %v1329
        %v1906 = vunpack.c.l.b16 %v1330
        %v1907 = vunpack.c.l.b16 %v1331
        %v1908 = vunpack.c.h.b16 %v1331
        %v1909 = vunpack.c.l.b16 %v1332
        %v1910 = vunpack.c.h.b16 %v1332
        %v1911 = vunpack.c.l.b16 %v1333
        %v1912 = vunpack.c.h.b16 %v1333
        %v1913 = vunpack.c.l.b16 %v1334
        %v1914 = vunpack.c.h.b16 %v1334
        %v1915 = vunpack.c.l.b16 %v1335
        %v1916 = vunpack.c.l.b16 %v1336
        %v1917 = vunpack.c.h.b16 %v1336
        %v1918 = vunpack.c.l.b16 %v1337
        %v1919 = vunpack.c.h.b16 %v1337
        %v1920 = vunpack.c.l.b16 %v1338
        %v1921 = vunpack.c.h.b16 %v1338
        %v1922 = vunpack.c.l.b16 %v1339
        %v1923 = vunpack.c.h.b16 %v1339
        %v1924 = vunpack.c.l.b16 %v1340
        %v1925 = vunpack.c.l.b16 %v1341
        %v1926 = vunpack.c.h.b16 %v1341
        %v1927 = vunpack.c.l.b16 %v1342
        %v1928 = vunpack.c.h.b16 %v1342
        %v1929 = vunpack.c.l.b16 %v1343
        %v1930 = vunpack.c.h.b16 %v1343
        %v1931 = vunpack.c.l.b16 %v1344
        %v1932 = vunpack.c.h.b16 %v1344
        %v1933 = vunpack.c.l.b16 %v1345
        %v1934 = vunpack.c.l.b16 %v1346
        %v1935 = vunpack.c.h.b16 %v1346
        %v1936 = vunpack.c.l.b16 %v1347
        %v1937 = vunpack.c.h.b16 %v1347
        %v1938 = vunpack.c.l.b16 %v1348
        %v1939 = vunpack.c.h.b16 %v1348
        %v1940 = vunpack.c.l.b16 %v1349
        %v1941 = vunpack.c.h.b16 %v1349
        %v1942 = vunpack.c.l.b16 %v1350
        %v1943 = vunpack.c.l.b16 %v1351
        %v1944 = vunpack.c.h.b16 %v1351
        %v1945 = vunpack.c.l.b16 %v1352
        %v1946 = vunpack.c.h.b16 %v1352
        %v1947 = vunpack.c.l.b16 %v1353
        %v1948 = vunpack.c.h.b16 %v1353
        %v1949 = vunpack.c.l.b16 %v1354
        %v1950 = vunpack.c.h.b16 %v1354
        %v1951 = vunpack.c.l.b16 %v1355
        %v1952 = vunpack.c.l.b16 %v1356
        %v1953 = vunpack.c.h.b16 %v1356
        %v1954 = vunpack.c.l.b16 %v1357
        %v1955 = vunpack.c.h.b16 %v1357
        %v1956 = vunpack.c.l.b16 %v1358
        %v1957 = vunpack.c.h.b16 %v1358
        %v1958 = vunpack.c.l.b16 %v1359
        %v1959 = vunpack.c.h.b16 %v1359
        %v1960 = vunpack.c.l.b16 %v1360
        %v1961 = vunpack.c.l.b16 %v1361
        %v1962 = vunpack.c.h.b16 %v1361
        %v1963 = vunpack.c.l.b16 %v1362
        %v1964 = vunpack.c.h.b16 %v1362
        %v1965 = vunpack.c.l.b16 %v1363
        %v1966 = vunpack.c.h.b16 %v1363
        %v1967 = vunpack.c.l.b16 %v1364
        %v1968 = vunpack.c.h.b16 %v1364
        %v1969 = vunpack.c.l.b16 %v1365
        %v1970 = vunpack.c.l.b16 %v1366
        %v1971 = vunpack.c.h.b16 %v1366
        %v1972 = vunpack.c.l.b16 %v1367
        %v1973 = vunpack.c.h.b16 %v1367
        %v1974 = vunpack.c.l.b16 %v1368
        %v1975 = vunpack.c.h.b16 %v1368
        %v1976 = vunpack.c.l.b16 %v1369
        %v1977 = vunpack.c.h.b16 %v1369
        %v1978 = vunpack.c.l.b16 %v1370
        %v1979 = vunpack.c.l.b16 %v1371
        %v1980 = vunpack.c.h.b16 %v1371
        %v1981 = vunpack.c.l.b16 %v1372
        %v1982 = vunpack.c.h.b16 %v1372
        %v1983 = vunpack.c.l.b16 %v1373
        %v1984 = vunpack.c.h.b16 %v1373
        %v1985 = vunpack.c.l.b16 %v1374
        %v1986 = vunpack.c.h.b16 %v1374
        %v1987 = vunpack.c.l.b16 %v1375
        %v1988 = vunpack.c.l.b16 %v1376
        %v1989 = vunpack.c.h.b16 %v1376
        %v1990 = vunpack.c.l.b16 %v1377
        %v1991 = vunpack.c.h.b16 %v1377
        %v1992 = vunpack.c.l.b16 %v1378
        %v1993 = vunpack.c.h.b16 %v1378
        %v1994 = vunpack.c.l.b16 %v1379
        %v1995 = vunpack.c.h.b16 %v1379
        %v1996 = vunpack.c.l.b16 %v1380
        %v1997 = vunpack.c.l.b16 %v1381
        %v1998 = vunpack.c.h.b16 %v1381
        %v1999 = vunpack.c.l.b16 %v1382
        %v2000 = vunpack.c.h.b16 %v1382
        %v2001 = vunpack.c.l.b16 %v1383
        %v2002 = vunpack.c.h.b16 %v1383
        %v2003 = vunpack.c.l.b16 %v1384
        %v2004 = vunpack.c.h.b16 %v1384
        %v2005 = vunpack.c.l.b16 %v1385
        %v2006 = vunpack.c.l.b16 %v1386
        %v2007 = vunpack.c.h.b16 %v1386
        %v2008 = vunpack.c.l.b16 %v1387
        %v2009 = vunpack.c.h.b16 %v1387
        %v2010 = vunpack.c.l.b16 %v1388
        %v2011 = vunpack.c.h.b16 %v1388
        %v2012 = vunpack.c.l.b16 %v1389
        %v2013 = vunpack.c.h.b16 %v1389
        %v2014 = vunpack.c.l.b16 %v1390
        %v2015 = vunpack.c.l.b16 %v1391
        %v2016 = vunpack.c.h.b16 %v1391
        %v2017 = vunpack.c.l.b16 %v1392
        %v2018 = vunpack.c.h.b16 %v1392
        %v2019 = vunpack.c.l.b16 %v1393
        %v2020 = vunpack.c.h.b16 %v1393
        %v2021 = vunpack.c.l.b16 %v1394
        %v2022 = vunpack.c.h.b16 %v1394
        %v2023 = vunpack.c.l.b16 %v1395
        %v2024 = vunpack.c.l.b16 %v1396
        %v2025 = vunpack.c.h.b16 %v1396
        %v2026 = vunpack.c.l.b16 %v1397
        %v2027 = vunpack.c.h.b16 %v1397
        %v2028 = vunpack.c.l.b16 %v1398
        %v2029 = vunpack.c.h.b16 %v1398
        %v2030 = vunpack.c.l.b16 %v1399
        %v2031 = vunpack.c.h.b16 %v1399
        %v2032 = vunpack.c.l.b16 %v1400
        %v2033 = vunpack.c.l.b16 %v1401
        %v2034 = vunpack.c.h.b16 %v1401
        %v2035 = vunpack.c.l.b16 %v1402
        %v2036 = vunpack.c.h.b16 %v1402
        %v2037 = vunpack.c.l.b16 %v1403
        %v2038 = vunpack.c.h.b16 %v1403
        %v2039 = vunpack.c.l.b16 %v1404
        %v2040 = vunpack.c.h.b16 %v1404
        %v2041 = vunpack.c.l.b16 %v1405
        %v2042 = vunpack.c.l.b16 %v1406
        %v2043 = vunpack.c.h.b16 %v1406
        %v2044 = vunpack.c.l.b16 %v1407
        %v2045 = vunpack.c.h.b16 %v1407
        %v2046 = vunpack.c.l.b16 %v1408
        %v2047 = vunpack.c.h.b16 %v1408
        %v2048 = vunpack.c.l.b16 %v1409
        %v2049 = vunpack.c.h.b16 %v1409
        %v2050 = vunpack.c.l.b16 %v1410
        %v2051 = vunpack.c.l.b16 %v1411
        %v2052 = vunpack.c.h.b16 %v1411
        %v2053 = vunpack.c.l.b16 %v1412
        %v2054 = vunpack.c.h.b16 %v1412
        %v2055 = vunpack.c.l.b16 %v1413
        %v2056 = vunpack.c.h.b16 %v1413
        %v2057 = vunpack.c.l.b16 %v1414
        %v2058 = vunpack.c.h.b16 %v1414
        %v2059 = vunpack.c.l.b16 %v1415
        %v2060 = vunpack.c.l.b16 %v1416
        %v2061 = vunpack.c.h.b16 %v1416
        %v2062 = vunpack.c.l.b16 %v1417
        %v2063 = vunpack.c.h.b16 %v1417
        %v2064 = vunpack.c.l.b16 %v1418
        %v2065 = vunpack.c.h.b16 %v1418
        %v2066 = vunpack.c.l.b16 %v1419
        %v2067 = vunpack.c.h.b16 %v1419
        %v2068 = vunpack.c.l.b16 %v1420
        %v2069 = vunpack.c.l.b16 %v1421
        %v2070 = vunpack.c.h.b16 %v1421
        %v2071 = vunpack.c.l.b16 %v1422
        %v2072 = vunpack.c.h.b16 %v1422
        %v2073 = vunpack.c.l.b16 %v1423
        %v2074 = vunpack.c.h.b16 %v1423
        %v2075 = vunpack.c.l.b16 %v1424
        %v2076 = vunpack.c.h.b16 %v1424
        %v2077 = vunpack.c.l.b16 %v1425
        %v2078 = vunpack.c.l.b16 %v1426
        %v2079 = vunpack.c.h.b16 %v1426
        %v2080 = vunpack.c.l.b16 %v1427
        %v2081 = vunpack.c.h.b16 %v1427
        %v2082 = vunpack.c.l.b16 %v1428
        %v2083 = vunpack.c.h.b16 %v1428
        %v2084 = vunpack.c.l.b16 %v1429
        %v2085 = vunpack.c.h.b16 %v1429
        %v2086 = vunpack.c.l.b16 %v1430
        %v2087 = vunpack.c.l.b16 %v1431
        %v2088 = vunpack.c.h.b16 %v1431
        %v2089 = vunpack.c.l.b16 %v1432
        %v2090 = vunpack.c.h.b16 %v1432
        %v2091 = vunpack.c.l.b16 %v1433
        %v2092 = vunpack.c.h.b16 %v1433
        %v2093 = vunpack.c.l.b16 %v1434
        %v2094 = vunpack.c.h.b16 %v1434
        %v2095 = vunpack.c.l.b16 %v1435
        %v2096 = vunpack.c.l.b16 %v1436
        %v2097 = vunpack.c.h.b16 %v1436
        %v2098 = vunpack.c.l.b16 %v1437
        %v2099 = vunpack.c.h.b16 %v1437
        %v2100 = vunpack.c.l.b16 %v1438
        %v2101 = vunpack.c.h.b16 %v1438
        %v2102 = vunpack.c.l.b16 %v1439
        %v2103 = vunpack.c.h.b16 %v1439
        %v2104 = vunpack.c.l.b16 %v1440
        %v2105 = vunpack.c.l.b16 %v1441
        %v2106 = vunpack.c.h.b16 %v1441
        %v2107 = vunpack.c.l.b16 %v1442
        %v2108 = vunpack.c.h.b16 %v1442
        %v2109 = vunpack.c.l.b16 %v1443
        %v2110 = vunpack.c.h.b16 %v1443
        %v2111 = vunpack.c.l.b16 %v1444
        %v2112 = vunpack.c.h.b16 %v1444
        %v2113 = vunpack.c.l.b16 %v1445
        %v2114 = vunpack.c.l.b16 %v1446
        %v2115 = vunpack.c.h.b16 %v1446
        %v2116 = vunpack.c.l.b16 %v1447
        %v2117 = vunpack.c.h.b16 %v1447
        %v2118 = vunpack.c.l.b16 %v1448
        %v2119 = vunpack.c.h.b16 %v1448
        %v2120 = vunpack.c.l.b16 %v1449
        %v2121 = vunpack.c.h.b16 %v1449
        %v2122 = vunpack.c.l.b16 %v1450
        %v2123 = vpack.c.b16 %v1700, %v1691
        %v2124 = vpack.c.b16 %v1701, %v1692
        %v2125 = vpack.c.b16 %v1702, %v1693
        %v2126 = vpack.c.b16 %v1703, %v1694
        %v2127 = vpack.c.b16 %v1704, %v1695
        %v2128 = vpack.c.b16 %v1705, %v1696
        %v2129 = vpack.c.b16 %v1706, %v1697
        %v2130 = vpack.c.b16 %v1707, %v1698
        %v2131 = vpack.c.b16 %v1708, %v1699
        %v2132 = vpack.c.b16 %v1718, %v1709
        %v2133 = vpack.c.b16 %v1719, %v1710
        %v2134 = vpack.c.b16 %v1720, %v1711
        %v2135 = vpack.c.b16 %v1721, %v1712
        %v2136 = vpack.c.b16 %v1722, %v1713
        %v2137 = vpack.c.b16 %v1723, %v1714
        %v2138 = vpack.c.b16 %v1724, %v1715
        %v2139 = vpack.c.b16 %v1725, %v1716
        %v2140 = vpack.c.b16 %v1726, %v1717
        %v2141 = vpack.c.b16 %v1736, %v1727
        %v2142 = vpack.c.b16 %v1737, %v1728
        %v2143 = vpack.c.b16 %v1738, %v1729
        %v2144 = vpack.c.b16 %v1739, %v1730
        %v2145 = vpack.c.b16 %v1740, %v1731
        %v2146 = vpack.c.b16 %v1741, %v1732
        %v2147 = vpack.c.b16 %v1742, %v1733
        %v2148 = vpack.c.b16 %v1743, %v1734
        %v2149 = vpack.c.b16 %v1744, %v1735
        %v2150 = vpack.c.b16 %v1754, %v1745
        %v2151 = vpack.c.b16 %v1755, %v1746
        %v2152 = vpack.c.b16 %v1756, %v1747
        %v2153 = vpack.c.b16 %v1757, %v1748
        %v2154 = vpack.c.b16 %v1758, %v1749
        %v2155 = vpack.c.b16 %v1759, %v1750
        %v2156 = vpack.c.b16 %v1760, %v1751
        %v2157 = vpack.c.b16 %v1761, %v1752
        %v2158 = vpack.c.b16 %v1762, %v1753
        %v2159 = vpack.c.b16 %v1772, %v1763
        %v2160 = vpack.c.b16 %v1773, %v1764
        %v2161 = vpack.c.b16 %v1774, %v1765
        %v2162 = vpack.c.b16 %v1775, %v1766
        %v2163 = vpack.c.b16 %v1776, %v1767
        %v2164 = vpack.c.b16 %v1777, %v1768
        %v2165 = vpack.c.b16 %v1778, %v1769
        %v2166 = vpack.c.b16 %v1779, %v1770
        %v2167 = vpack.c.b16 %v1780, %v1771
        %v2168 = vpack.c.b16 %v1790, %v1781
        %v2169 = vpack.c.b16 %v1791, %v1782
        %v2170 = vpack.c.b16 %v1792, %v1783
        %v2171 = vpack.c.b16 %v1793, %v1784
        %v2172 = vpack.c.b16 %v1794, %v1785
        %v2173 = vpack.c.b16 %v1795, %v1786
        %v2174 = vpack.c.b16 %v1796, %v1787
        %v2175 = vpack.c.b16 %v1797, %v1788
        %v2176 = vpack.c.b16 %v1798, %v1789
        %v2177 = vpack.c.b16 %v1808, %v1799
        %v2178 = vpack.c.b16 %v1809, %v1800
        %v2179 = vpack.c.b16 %v1810, %v1801
        %v2180 = vpack.c.b16 %v1811, %v1802
        %v2181 = vpack.c.b16 %v1812, %v1803
        %v2182 = vpack.c.b16 %v1813, %v1804
        %v2183 = vpack.c.b16 %v1814, %v1805
        %v2184 = vpack.c.b16 %v1815, %v1806
        %v2185 = vpack.c.b16 %v1816, %v1807
        %v2186 = vpack.c.b16 %v1826, %v1817
        %v2187 = vpack.c.b16 %v1827, %v1818
        %v2188 = vpack.c.b16 %v1828, %v1819
        %v2189 = vpack.c.b16 %v1829, %v1820
        %v2190 = vpack.c.b16 %v1830, %v1821
        %v2191 = vpack.c.b16 %v1831, %v1822
        %v2192 = vpack.c.b16 %v1832, %v1823
        %v2193 = vpack.c.b16 %v1833, %v1824
        %v2194 = vpack.c.b16 %v1834, %v1825
        %v2195 = vpack.c.b16 %v1844, %v1835
        %v2196 = vpack.c.b16 %v1845, %v1836
        %v2197 = vpack.c.b16 %v1846, %v1837
        %v2198 = vpack.c.b16 %v1847, %v1838
        %v2199 = vpack.c.b16 %v1848, %v1839
        %v2200 = vpack.c.b16 %v1849, %v1840
        %v2201 = vpack.c.b16 %v1850, %v1841
        %v2202 = vpack.c.b16 %v1851, %v1842
        %v2203 = vpack.c.b16 %v1852, %v1843
        %v2204 = vpack.c.b16 %v1862, %v1853
        %v2205 = vpack.c.b16 %v1863, %v1854
        %v2206 = vpack.c.b16 %v1864, %v1855
        %v2207 = vpack.c.b16 %v1865, %v1856
        %v2208 = vpack.c.b16 %v1866, %v1857
        %v2209 = vpack.c.b16 %v1867, %v1858
        %v2210 = vpack.c.b16 %v1868, %v1859
        %v2211 = vpack.c.b16 %v1869, %v1860
        %v2212 = vpack.c.b16 %v1870, %v1861
        %v2213 = vpack.c.b16 %v1880, %v1871
        %v2214 = vpack.c.b16 %v1881, %v1872
        %v2215 = vpack.c.b16 %v1882, %v1873
        %v2216 = vpack.c.b16 %v1883, %v1874
        %v2217 = vpack.c.b16 %v1884, %v1875
        %v2218 = vpack.c.b16 %v1885, %v1876
        %v2219 = vpack.c.b16 %v1886, %v1877
        %v2220 = vpack.c.b16 %v1887, %v1878
        %v2221 = vpack.c.b16 %v1888, %v1879
        %v2222 = vpack.c.b16 %v1898, %v1889
        %v2223 = vpack.c.b16 %v1899, %v1890
        %v2224 = vpack.c.b16 %v1900, %v1891
        %v2225 = vpack.c.b16 %v1901, %v1892
        %v2226 = vpack.c.b16 %v1902, %v1893
        %v2227 = vpack.c.b16 %v1903, %v1894
        %v2228 = vpack.c.b16 %v1904, %v1895
        %v2229 = vpack.c.b16 %v1905, %v1896
        %v2230 = vpack.c.b16 %v1906, %v1897
        %v2231 = vpack.c.b16 %v1916, %v1907
        %v2232 = vpack.c.b16 %v1917, %v1908
        %v2233 = vpack.c.b16 %v1918, %v1909
        %v2234 = vpack.c.b16 %v1919, %v1910
        %v2235 = vpack.c.b16 %v1920, %v1911
        %v2236 = vpack.c.b16 %v1921, %v1912
        %v2237 = vpack.c.b16 %v1922, %v1913
        %v2238 = vpack.c.b16 %v1923, %v1914
        %v2239 = vpack.c.b16 %v1924, %v1915
        %v2240 = vpack.c.b16 %v1934, %v1925
        %v2241 = vpack.c.b16 %v1935, %v1926
        %v2242 = vpack.c.b16 %v1936, %v1927
        %v2243 = vpack.c.b16 %v1937, %v1928
        %v2244 = vpack.c.b16 %v1938, %v1929
        %v2245 = vpack.c.b16 %v1939, %v1930
        %v2246 = vpack.c.b16 %v1940, %v1931
        %v2247 = vpack.c.b16 %v1941, %v1932
        %v2248 = vpack.c.b16 %v1942, %v1933
        %v2249 = vpack.c.b16 %v1952, %v1943
        %v2250 = vpack.c.b16 %v1953, %v1944
        %v2251 = vpack.c.b16 %v1954, %v1945
        %v2252 = vpack.c.b16 %v1955, %v1946
        %v2253 = vpack.c.b16 %v1956, %v1947
        %v2254 = vpack.c.b16 %v1957, %v1948
        %v2255 = vpack.c.b16 %v1958, %v1949
        %v2256 = vpack.c.b16 %v1959, %v1950
        %v2257 = vpack.c.b16 %v1960, %v1951
        %v2258 = vpack.c.b16 %v1970, %v1961
        %v2259 = vpack.c.b16 %v1971, %v1962
        %v2260 = vpack.c.b16 %v1972, %v1963
        %v2261 = vpack.c.b16 %v1973, %v1964
        %v2262 = vpack.c.b16 %v1974, %v1965
        %v2263 = vpack.c.b16 %v1975, %v1966
        %v2264 = vpack.c.b16 %v1976, %v1967
        %v2265 = vpack.c.b16 %v1977, %v1968
        %v2266 = vpack.c.b16 %v1978, %v1969
        %v2267 = vpack.c.b16 %v1988, %v1979
        %v2268 = vpack.c.b16 %v1989, %v1980
        %v2269 = vpack.c.b16 %v1990, %v1981
        %v2270 = vpack.c.b16 %v1991, %v1982
        %v2271 = vpack.c.b16 %v1992, %v1983
        %v2272 = vpack.c.b16 %v1993, %v1984
        %v2273 = vpack.c.b16 %v1994, %v1985
        %v2274 = vpack.c.b16 %v1995, %v1986
        %v2275 = vpack.c.b16 %v1996, %v1987
        %v2276 = vpack.c.b16 %v2006, %v1997
        %v2277 = vpack.c.b16 %v2007, %v1998
        %v2278 = vpack.c.b16 %v2008, %v1999
        %v2279 = vpack.c.b16 %v2009, %v2000
        %v2280 = vpack.c.b16 %v2010, %v2001
        %v2281 = vpack.c.b16 %v2011, %v2002
        %v2282 = vpack.c.b16 %v2012, %v2003
        %v2283 = vpack.c.b16 %v2013, %v2004
        %v2284 = vpack.c.b16 %v2014, %v2005
        %v2285 = vpack.c.b16 %v2024, %v2015
        %v2286 = vpack.c.b16 %v2025, %v2016
        %v2287 = vpack.c.b16 %v2026, %v2017
        %v2288 = vpack.c.b16 %v2027, %v2018
        %v2289 = vpack.c.b16 %v2028, %v2019
        %v2290 = vpack.c.b16 %v2029, %v2020
        %v2291 = vpack.c.b16 %v2030, %v2021
        %v2292 = vpack.c.b16 %v2031, %v2022
        %v2293 = vpack.c.b16 %v2032, %v2023
        %v2294 = vpack.c.b16 %v2042, %v2033
        %v2295 = vpack.c.b16 %v2043, %v2034
        %v2296 = vpack.c.b16 %v2044, %v2035
        %v2297 = vpack.c.b16 %v2045, %v2036
        %v2298 = vpack.c.b16 %v2046, %v2037
        %v2299 = vpack.c.b16 %v2047, %v2038
        %v2300 = vpack.c.b16 %v2048, %v2039
        %v2301 = vpack.c.b16 %v2049, %v2040
        %v2302 = vpack.c.b16 %v2050, %v2041
        %v2303 = vpack.c.b16 %v2060, %v2051
        %v2304 = vpack.c.b16 %v2061, %v2052
        %v2305 = vpack.c.b16 %v2062, %v2053
        %v2306 = vpack.c.b16 %v2063, %v2054
        %v2307 = vpack.c.b16 %v2064, %v2055
        %v2308 = vpack.c.b16 %v2065, %v2056
        %v2309 = vpack.c.b16 %v2066, %v2057
        %v2310 = vpack.c.b16 %v2067, %v2058
        %v2311 = vpack.c.b16 %v2068, %v2059
        %v2312 = vpack.c.b16 %v2078, %v2069
        %v2313 = vpack.c.b16 %v2079, %v2070
        %v2314 = vpack.c.b16 %v2080, %v2071
        %v2315 = vpack.c.b16 %v2081, %v2072
        %v2316 = vpack.c.b16 %v2082, %v2073
        %v2317 = vpack.c.b16 %v2083, %v2074
        %v2318 = vpack.c.b16 %v2084, %v2075
        %v2319 = vpack.c.b16 %v2085, %v2076
        %v2320 = vpack.c.b16 %v2086, %v2077
        %v2321 = vpack.c.b16 %v2096, %v2087
        %v2322 = vpack.c.b16 %v2097, %v2088
        %v2323 = vpack.c.b16 %v2098, %v2089
        %v2324 = vpack.c.b16 %v2099, %v2090
        %v2325 = vpack.c.b16 %v2100, %v2091
        %v2326 = vpack.c.b16 %v2101, %v2092
        %v2327 = vpack.c.b16 %v2102, %v2093
        %v2328 = vpack.c.b16 %v2103, %v2094
        %v2329 = vpack.c.b16 %v2104, %v2095
        %v2330 = vpack.c.b16 %v2114, %v2105
        %v2331 = vpack.c.b16 %v2115, %v2106
        %v2332 = vpack.c.b16 %v2116, %v2107
        %v2333 = vpack.c.b16 %v2117, %v2108
        %v2334 = vpack.c.b16 %v2118, %v2109
        %v2335 = vpack.c.b16 %v2119, %v2110
        %v2336 = vpack.c.b16 %v2120, %v2111
        %v2337 = vpack.c.b16 %v2121, %v2112
        %v2338 = vpack.c.b16 %v2122, %v2113
        %2555 = vmatprep.subr.bf16.mxu0 %v2124
        %2556 = vmatpush1.bf16.msra.mxu0 %v2123
        %2557 = vmatprep.subr.bf16.mxu0 %v2133
        %2558 = vmatpush1.bf16.msra.mxu0 %v2132
        %2559 = vmatprep.subr.bf16.mxu0 %v2142
        %2560 = vmatpush1.bf16.msra.mxu0 %v2141
        %2561 = vmatprep.subr.bf16.mxu0 %v2151
        %2562 = vmatpush1.bf16.msra.mxu0 %v2150
        %2563 = vmatprep.subr.bf16.mxu0 %v2160
        %2564 = vmatpush1.bf16.msra.mxu0 %v2159
        %2565 = vmatprep.subr.bf16.mxu0 %v2169
        %2566 = vmatpush1.bf16.msra.mxu0 %v2168
        %2567 = vmatprep.subr.bf16.mxu0 %v2178
        %2568 = vmatpush1.bf16.msra.mxu0 %v2177
        %2569 = vmatprep.subr.bf16.mxu0 %v2187
        %2570 = vmatpush1.bf16.msra.mxu0 %v2186
        %2571 = vmatprep.subr.bf16.mxu0 %v2196
        %2572 = vmatpush1.bf16.msra.mxu0 %v2195
        %2573 = vmatprep.subr.bf16.mxu0 %v2205
        %2574 = vmatpush1.bf16.msra.mxu0 %v2204
        %2575 = vmatprep.subr.bf16.mxu0 %v2214
        %2576 = vmatpush1.bf16.msra.mxu0 %v2213
        %2577 = vmatprep.subr.bf16.mxu0 %v2223
        %2578 = vmatpush1.bf16.msra.mxu0 %v2222
        %2579 = vmatprep.subr.bf16.mxu0 %v2232
        %2580 = vmatpush1.bf16.msra.mxu0 %v2231
        %2581 = vmatprep.subr.bf16.mxu0 %v2241
        %2582 = vmatpush1.bf16.msra.mxu0 %v2240
        %2583 = vmatprep.subr.bf16.mxu0 %v2250
        %2584 = vmatpush1.bf16.msra.mxu0 %v2249
        %2585 = vmatprep.subr.bf16.mxu0 %v2259
        %2586 = vmatpush1.bf16.msra.mxu0 %v2258
        %2587 = vmatprep.mubr.bf16.mxu0 %v1206
        %2588 = vmatmul.mubr.bf16.gmra.mrb[0].mxu0 %v1205
        %v2589 = vpop.f32.mrb[0].mxu0
        %v2590 = vadd.f32 0.0, %v2589
        %v2591 = vpop.f32.mrb[0].mxu0
        %v2592 = vadd.f32 0.0, %v2591
        %v2593 = vpop.f32.mrb[0].mxu0
        %v2594 = vadd.f32 0.0, %v2593
        %v2595 = vpop.f32.mrb[0].mxu0
        %v2596 = vadd.f32 0.0, %v2595
        %2597 = vmatprep.mubr.bf16.mxu0 %v1209
        %2598 = vmatmul.mubr.bf16.gmra.mrb[0].mxu0 %v1208
        %v2599 = vpop.f32.mrb[0].mxu0
        %v2600 = vadd.f32 0.0, %v2599
        %v2601 = vpop.f32.mrb[0].mxu0
        %v2602 = vadd.f32 0.0, %v2601
        %v2603 = vpop.f32.mrb[0].mxu0
        %v2604 = vadd.f32 0.0, %v2603
        %v2605 = vpop.f32.mrb[0].mxu0
        %v2606 = vadd.f32 0.0, %v2605
        %2607 = vdwg.mxu0
        %2608 = vmatprep.subr.bf16.mxu0 %v2268
        %2609 = vmatpush1.bf16.msra.mxu0 %v2267
        %2610 = vmatprep.subr.bf16.mxu0 %v2277
        %2611 = vmatpush1.bf16.msra.mxu0 %v2276
        %2612 = vmatprep.subr.bf16.mxu0 %v2286
        %2613 = vmatpush1.bf16.msra.mxu0 %v2285
        %2614 = vmatprep.subr.bf16.mxu0 %v2295
        %2615 = vmatpush1.bf16.msra.mxu0 %v2294
        %2616 = vmatprep.subr.bf16.mxu0 %v2304
        %2617 = vmatpush1.bf16.msra.mxu0 %v2303
        %2618 = vmatprep.subr.bf16.mxu0 %v2313
        %2619 = vmatpush1.bf16.msra.mxu0 %v2312
        %2620 = vmatprep.subr.bf16.mxu0 %v2322
        %2621 = vmatpush1.bf16.msra.mxu0 %v2321
        %2622 = vmatprep.subr.bf16.mxu0 %v2331
        %2623 = vmatpush1.bf16.msra.mxu0 %v2330
        %2624 = vmatprep.subr.bf16.mxu0 0
        %2625 = vmatpush1.bf16.msra.mxu0 0
        %2626 = vmatprep.subr.bf16.mxu0 0
        %2627 = vmatpush1.bf16.msra.mxu0 0
        %2628 = vmatprep.subr.bf16.mxu0 0
        %2629 = vmatpush1.bf16.msra.mxu0 0
        %2630 = vmatprep.subr.bf16.mxu0 0
        %2631 = vmatpush1.bf16.msra.mxu0 0
        %2632 = vmatprep.subr.bf16.mxu0 0
        %2633 = vmatpush1.bf16.msra.mxu0 0
        %2634 = vmatprep.subr.bf16.mxu0 0
        %2635 = vmatpush1.bf16.msra.mxu0 0
        %2636 = vmatprep.subr.bf16.mxu0 0
        %2637 = vmatpush1.bf16.msra.mxu0 0
        %2638 = vmatprep.subr.bf16.mxu0 0
        %2639 = vmatpush1.bf16.msra.mxu0 0
        %2640 = vmatprep.mubr.bf16.mxu0 0
        %2641 = vmatmul.mubr.bf16.gmra.mrb[0].mxu0 %v1207
        %v2642 = vpop.f32.mrb[0].mxu0
        %v2643 = vadd.f32 %v2590, %v2642
        %v2644 = vpop.f32.mrb[0].mxu0
        %v2645 = vadd.f32 %v2592, %v2644
        %v2646 = vpop.f32.mrb[0].mxu0
        %v2647 = vadd.f32 %v2594, %v2646
        %v2648 = vpop.f32.mrb[0].mxu0
        %v2649 = vadd.f32 %v2596, %v2648
        %2650 = vmatprep.mubr.bf16.mxu0 0
        %2651 = vmatmul.mubr.bf16.gmra.mrb[0].mxu0 %v1210
        %v2652 = vpop.f32.mrb[0].mxu0
        %v2653 = vadd.f32 %v2600, %v2652
        %v2654 = vpop.f32.mrb[0].mxu0
        %v2655 = vadd.f32 %v2602, %v2654
        %v2656 = vpop.f32.mrb[0].mxu0
        %v2657 = vadd.f32 %v2604, %v2656
        %v2658 = vpop.f32.mrb[0].mxu0
        %v2659 = vadd.f32 %v2606, %v2658
        %2660 = vdwg.mxu0
        %2661 = vmatprep.subr.bf16.mxu0 %v2126
        %2662 = vmatpush1.bf16.msra.mxu0 %v2125
        %2663 = vmatprep.subr.bf16.mxu0 %v2135
        %2664 = vmatpush1.bf16.msra.mxu0 %v2134
        %2665 = vmatprep.subr.bf16.mxu0 %v2144
        %2666 = vmatpush1.bf16.msra.mxu0 %v2143
        %2667 = vmatprep.subr.bf16.mxu0 %v2153
        %2668 = vmatpush1.bf16.msra.mxu0 %v2152
        %2669 = vmatprep.subr.bf16.mxu0 %v2162
        %2670 = vmatpush1.bf16.msra.mxu0 %v2161
        %2671 = vmatprep.subr.bf16.mxu0 %v2171
        %2672 = vmatpush1.bf16.msra.mxu0 %v2170
        %2673 = vmatprep.subr.bf16.mxu0 %v2180
        %2674 = vmatpush1.bf16.msra.mxu0 %v2179
        %2675 = vmatprep.subr.bf16.mxu0 %v2189
        %2676 = vmatpush1.bf16.msra.mxu0 %v2188
        %2677 = vmatprep.subr.bf16.mxu0 %v2198
        %2678 = vmatpush1.bf16.msra.mxu0 %v2197
        %2679 = vmatprep.subr.bf16.mxu0 %v2207
        %2680 = vmatpush1.bf16.msra.mxu0 %v2206
        %2681 = vmatprep.subr.bf16.mxu0 %v2216
        %2682 = vmatpush1.bf16.msra.mxu0 %v2215
        %2683 = vmatprep.subr.bf16.mxu0 %v2225
        %2684 = vmatpush1.bf16.msra.mxu0 %v2224
        %2685 = vmatprep.subr.bf16.mxu0 %v2234
        %2686 = vmatpush1.bf16.msra.mxu0 %v2233
        %2687 = vmatprep.subr.bf16.mxu0 %v2243
        %2688 = vmatpush1.bf16.msra.mxu0 %v2242
        %2689 = vmatprep.subr.bf16.mxu0 %v2252
        %2690 = vmatpush1.bf16.msra.mxu0 %v2251
        %2691 = vmatprep.subr.bf16.mxu0 %v2261
        %2692 = vmatpush1.bf16.msra.mxu0 %v2260
        %2693 = vmatprep.mubr.bf16.mxu0 %v1206
        %2694 = vmatmul.mubr.bf16.gmra.mrb[0].mxu0 %v1205
        %v2695 = vpop.f32.mrb[0].mxu0
        %v2696 = vadd.f32 0.0, %v2695
        %v2697 = vpop.f32.mrb[0].mxu0
        %v2698 = vadd.f32 0.0, %v2697
        %v2699 = vpop.f32.mrb[0].mxu0
        %v2700 = vadd.f32 0.0, %v2699
        %v2701 = vpop.f32.mrb[0].mxu0
        %v2702 = vadd.f32 0.0, %v2701
        %2703 = vmatprep.mubr.bf16.mxu0 %v1209
        %2704 = vmatmul.mubr.bf16.gmra.mrb[0].mxu0 %v1208
        %v2705 = vpop.f32.mrb[0].mxu0
        %v2706 = vadd.f32 0.0, %v2705
        %v2707 = vpop.f32.mrb[0].mxu0
        %v2708 = vadd.f32 0.0, %v2707
        %v2709 = vpop.f32.mrb[0].mxu0
        %v2710 = vadd.f32 0.0, %v2709
        %v2711 = vpop.f32.mrb[0].mxu0
        %v2712 = vadd.f32 0.0, %v2711
        %2713 = vdwg.mxu0
        %2714 = vmatprep.subr.bf16.mxu0 %v2270
        %2715 = vmatpush1.bf16.msra.mxu0 %v2269
        %2716 = vmatprep.subr.bf16.mxu0 %v2279
        %2717 = vmatpush1.bf16.msra.mxu0 %v2278
        %2718 = vmatprep.subr.bf16.mxu0 %v2288
        %2719 = vmatpush1.bf16.msra.mxu0 %v2287
        %2720 = vmatprep.subr.bf16.mxu0 %v2297
        %2721 = vmatpush1.bf16.msra.mxu0 %v2296
        %2722 = vmatprep.subr.bf16.mxu0 %v2306
        %2723 = vmatpush1.bf16.msra.mxu0 %v2305
        %2724 = vmatprep.subr.bf16.mxu0 %v2315
        %2725 = vmatpush1.bf16.msra.mxu0 %v2314
        %2726 = vmatprep.subr.bf16.mxu0 %v2324
        %2727 = vmatpush1.bf16.msra.mxu0 %v2323
        %2728 = vmatprep.subr.bf16.mxu0 %v2333
        %2729 = vmatpush1.bf16.msra.mxu0 %v2332
        %2730 = vmatprep.subr.bf16.mxu0 0
        %2731 = vmatpush1.bf16.msra.mxu0 0
        %2732 = vmatprep.subr.bf16.mxu0 0
        %2733 = vmatpush1.bf16.msra.mxu0 0
        %2734 = vmatprep.subr.bf16.mxu0 0
        %2735 = vmatpush1.bf16.msra.mxu0 0
        %2736 = vmatprep.subr.bf16.mxu0 0
        %2737 = vmatpush1.bf16.msra.mxu0 0
        %2738 = vmatprep.subr.bf16.mxu0 0
        %2739 = vmatpush1.bf16.msra.mxu0 0
        %2740 = vmatprep.subr.bf16.mxu0 0
        %2741 = vmatpush1.bf16.msra.mxu0 0
        %2742 = vmatprep.subr.bf16.mxu0 0
        %2743 = vmatpush1.bf16.msra.mxu0 0
        %2744 = vmatprep.subr.bf16.mxu0 0
        %2745 = vmatpush1.bf16.msra.mxu0 0
        %2746 = vmatprep.mubr.bf16.mxu0 0
        %2747 = vmatmul.mubr.bf16.gmra.mrb[0].mxu0 %v1207
        %v2748 = vpop.f32.mrb[0].mxu0
        %v2749 = vadd.f32 %v2696, %v2748
        %v2750 = vpop.f32.mrb[0].mxu0
        %v2751 = vadd.f32 %v2698, %v2750
        %v2752 = vpop.f32.mrb[0].mxu0
        %v2753 = vadd.f32 %v2700, %v2752
        %v2754 = vpop.f32.mrb[0].mxu0
        %v2755 = vadd.f32 %v2702, %v2754
        %2756 = vmatprep.mubr.bf16.mxu0 0
        %2757 = vmatmul.mubr.bf16.gmra.mrb[0].mxu0 %v1210
        %v2758 = vpop.f32.mrb[0].mxu0
        %v2759 = vadd.f32 %v2706, %v2758
        %v2760 = vpop.f32.mrb[0].mxu0
        %v2761 = vadd.f32 %v2708, %v2760
        %v2762 = vpop.f32.mrb[0].mxu0
        %v2763 = vadd.f32 %v2710, %v2762
        %v2764 = vpop.f32.mrb[0].mxu0
        %v2765 = vadd.f32 %v2712, %v2764
        %2766 = vdwg.mxu0
        %2767 = vmatprep.subr.bf16.mxu0 %v2128
        %2768 = vmatpush1.bf16.msra.mxu0 %v2127
        %2769 = vmatprep.subr.bf16.mxu0 %v2137
        %2770 = vmatpush1.bf16.msra.mxu0 %v2136
        %2771 = vmatprep.subr.bf16.mxu0 %v2146
        %2772 = vmatpush1.bf16.msra.mxu0 %v2145
        %2773 = vmatprep.subr.bf16.mxu0 %v2155
        %2774 = vmatpush1.bf16.msra.mxu0 %v2154
        %2775 = vmatprep.subr.bf16.mxu0 %v2164
        %2776 = vmatpush1.bf16.msra.mxu0 %v2163
        %2777 = vmatprep.subr.bf16.mxu0 %v2173
        %2778 = vmatpush1.bf16.msra.mxu0 %v2172
        %2779 = vmatprep.subr.bf16.mxu0 %v2182
        %2780 = vmatpush1.bf16.msra.mxu0 %v2181
        %2781 = vmatprep.subr.bf16.mxu0 %v2191
        %2782 = vmatpush1.bf16.msra.mxu0 %v2190
        %2783 = vmatprep.subr.bf16.mxu0 %v2200
        %2784 = vmatpush1.bf16.msra.mxu0 %v2199
        %2785 = vmatprep.subr.bf16.mxu0 %v2209
        %2786 = vmatpush1.bf16.msra.mxu0 %v2208
        %2787 = vmatprep.subr.bf16.mxu0 %v2218
        %2788 = vmatpush1.bf16.msra.mxu0 %v2217
        %2789 = vmatprep.subr.bf16.mxu0 %v2227
        %2790 = vmatpush1.bf16.msra.mxu0 %v2226
        %2791 = vmatprep.subr.bf16.mxu0 %v2236
        %2792 = vmatpush1.bf16.msra.mxu0 %v2235
        %2793 = vmatprep.subr.bf16.mxu0 %v2245
        %2794 = vmatpush1.bf16.msra.mxu0 %v2244
        %2795 = vmatprep.subr.bf16.mxu0 %v2254
        %2796 = vmatpush1.bf16.msra.mxu0 %v2253
        %2797 = vmatprep.subr.bf16.mxu0 %v2263
        %2798 = vmatpush1.bf16.msra.mxu0 %v2262
        %2799 = vmatprep.mubr.bf16.mxu0 %v1206
        %2800 = vmatmul.mubr.bf16.gmra.mrb[0].mxu0 %v1205
        %v2801 = vpop.f32.mrb[0].mxu0
        %v2802 = vadd.f32 0.0, %v2801
        %v2803 = vpop.f32.mrb[0].mxu0
        %v2804 = vadd.f32 0.0, %v2803
        %v2805 = vpop.f32.mrb[0].mxu0
        %v2806 = vadd.f32 0.0, %v2805
        %v2807 = vpop.f32.mrb[0].mxu0
        %v2808 = vadd.f32 0.0, %v2807
        %2809 = vmatprep.mubr.bf16.mxu0 %v1209
        %2810 = vmatmul.mubr.bf16.gmra.mrb[0].mxu0 %v1208
        %v2811 = vpop.f32.mrb[0].mxu0
        %v2812 = vadd.f32 0.0, %v2811
        %v2813 = vpop.f32.mrb[0].mxu0
        %v2814 = vadd.f32 0.0, %v2813
        %v2815 = vpop.f32.mrb[0].mxu0
        %v2816 = vadd.f32 0.0, %v2815
        %v2817 = vpop.f32.mrb[0].mxu0
        %v2818 = vadd.f32 0.0, %v2817
        %2819 = vdwg.mxu0
        %2820 = vmatprep.subr.bf16.mxu0 %v2272
        %2821 = vmatpush1.bf16.msra.mxu0 %v2271
        %2822 = vmatprep.subr.bf16.mxu0 %v2281
        %2823 = vmatpush1.bf16.msra.mxu0 %v2280
        %2824 = vmatprep.subr.bf16.mxu0 %v2290
        %2825 = vmatpush1.bf16.msra.mxu0 %v2289
        %2826 = vmatprep.subr.bf16.mxu0 %v2299
        %2827 = vmatpush1.bf16.msra.mxu0 %v2298
        %2828 = vmatprep.subr.bf16.mxu0 %v2308
        %2829 = vmatpush1.bf16.msra.mxu0 %v2307
        %2830 = vmatprep.subr.bf16.mxu0 %v2317
        %2831 = vmatpush1.bf16.msra.mxu0 %v2316
        %2832 = vmatprep.subr.bf16.mxu0 %v2326
        %2833 = vmatpush1.bf16.msra.mxu0 %v2325
        %2834 = vmatprep.subr.bf16.mxu0 %v2335
        %2835 = vmatpush1.bf16.msra.mxu0 %v2334
        %2836 = vmatprep.subr.bf16.mxu0 0
        %2837 = vmatpush1.bf16.msra.mxu0 0
        %2838 = vmatprep.subr.bf16.mxu0 0
        %2839 = vmatpush1.bf16.msra.mxu0 0
        %2840 = vmatprep.subr.bf16.mxu0 0
        %2841 = vmatpush1.bf16.msra.mxu0 0
        %2842 = vmatprep.subr.bf16.mxu0 0
        %2843 = vmatpush1.bf16.msra.mxu0 0
        %2844 = vmatprep.subr.bf16.mxu0 0
        %2845 = vmatpush1.bf16.msra.mxu0 0
        %2846 = vmatprep.subr.bf16.mxu0 0
        %2847 = vmatpush1.bf16.msra.mxu0 0
        %2848 = vmatprep.subr.bf16.mxu0 0
        %2849 = vmatpush1.bf16.msra.mxu0 0
        %2850 = vmatprep.subr.bf16.mxu0 0
        %2851 = vmatpush1.bf16.msra.mxu0 0
        %2852 = vmatprep.mubr.bf16.mxu0 0
        %2853 = vmatmul.mubr.bf16.gmra.mrb[0].mxu0 %v1207
        %v2854 = vpop.f32.mrb[0].mxu0
        %v2855 = vadd.f32 %v2802, %v2854
        %v2856 = vpop.f32.mrb[0].mxu0
        %v2857 = vadd.f32 %v2804, %v2856
        %v2858 = vpop.f32.mrb[0].mxu0
        %v2859 = vadd.f32 %v2806, %v2858
        %v2860 = vpop.f32.mrb[0].mxu0
        %v2861 = vadd.f32 %v2808, %v2860
        %2862 = vmatprep.mubr.bf16.mxu0 0
        %2863 = vmatmul.mubr.bf16.gmra.mrb[0].mxu0 %v1210
        %v2864 = vpop.f32.mrb[0].mxu0
        %v2865 = vadd.f32 %v2812, %v2864
        %v2866 = vpop.f32.mrb[0].mxu0
        %v2867 = vadd.f32 %v2814, %v2866
        %v2868 = vpop.f32.mrb[0].mxu0
        %v2869 = vadd.f32 %v2816, %v2868
        %v2870 = vpop.f32.mrb[0].mxu0
        %v2871 = vadd.f32 %v2818, %v2870
        %2872 = vdwg.mxu0
        %2873 = vmatprep.subr.bf16.mxu0 %v2130
        %2874 = vmatpush1.bf16.msra.mxu0 %v2129
        %2875 = vmatprep.subr.bf16.mxu0 %v2139
        %2876 = vmatpush1.bf16.msra.mxu0 %v2138
        %2877 = vmatprep.subr.bf16.mxu0 %v2148
        %2878 = vmatpush1.bf16.msra.mxu0 %v2147
        %2879 = vmatprep.subr.bf16.mxu0 %v2157
        %2880 = vmatpush1.bf16.msra.mxu0 %v2156
        %2881 = vmatprep.subr.bf16.mxu0 %v2166
        %2882 = vmatpush1.bf16.msra.mxu0 %v2165
        %2883 = vmatprep.subr.bf16.mxu0 %v2175
        %2884 = vmatpush1.bf16.msra.mxu0 %v2174
        %2885 = vmatprep.subr.bf16.mxu0 %v2184
        %2886 = vmatpush1.bf16.msra.mxu0 %v2183
        %2887 = vmatprep.subr.bf16.mxu0 %v2193
        %2888 = vmatpush1.bf16.msra.mxu0 %v2192
        %2889 = vmatprep.subr.bf16.mxu0 %v2202
        %2890 = vmatpush1.bf16.msra.mxu0 %v2201
        %2891 = vmatprep.subr.bf16.mxu0 %v2211
        %2892 = vmatpush1.bf16.msra.mxu0 %v2210
        %2893 = vmatprep.subr.bf16.mxu0 %v2220
        %2894 = vmatpush1.bf16.msra.mxu0 %v2219
        %2895 = vmatprep.subr.bf16.mxu0 %v2229
        %2896 = vmatpush1.bf16.msra.mxu0 %v2228
        %2897 = vmatprep.subr.bf16.mxu0 %v2238
        %2898 = vmatpush1.bf16.msra.mxu0 %v2237
        %2899 = vmatprep.subr.bf16.mxu0 %v2247
        %2900 = vmatpush1.bf16.msra.mxu0 %v2246
        %2901 = vmatprep.subr.bf16.mxu0 %v2256
        %2902 = vmatpush1.bf16.msra.mxu0 %v2255
        %2903 = vmatprep.subr.bf16.mxu0 %v2265
        %2904 = vmatpush1.bf16.msra.mxu0 %v2264
        %2905 = vmatprep.mubr.bf16.mxu0 %v1206
        %2906 = vmatmul.mubr.bf16.gmra.mrb[0].mxu0 %v1205
        %v2907 = vpop.f32.mrb[0].mxu0
        %v2908 = vadd.f32 0.0, %v2907
        %v2909 = vpop.f32.mrb[0].mxu0
        %v2910 = vadd.f32 0.0, %v2909
        %v2911 = vpop.f32.mrb[0].mxu0
        %v2912 = vadd.f32 0.0, %v2911
        %v2913 = vpop.f32.mrb[0].mxu0
        %v2914 = vadd.f32 0.0, %v2913
        %2915 = vmatprep.mubr.bf16.mxu0 %v1209
        %2916 = vmatmul.mubr.bf16.gmra.mrb[0].mxu0 %v1208
        %v2917 = vpop.f32.mrb[0].mxu0
        %v2918 = vadd.f32 0.0, %v2917
        %v2919 = vpop.f32.mrb[0].mxu0
        %v2920 = vadd.f32 0.0, %v2919
        %v2921 = vpop.f32.mrb[0].mxu0
        %v2922 = vadd.f32 0.0, %v2921
        %v2923 = vpop.f32.mrb[0].mxu0
        %v2924 = vadd.f32 0.0, %v2923
        %2925 = vdwg.mxu0
        %2926 = vmatprep.subr.bf16.mxu0 %v2274
        %2927 = vmatpush1.bf16.msra.mxu0 %v2273
        %2928 = vmatprep.subr.bf16.mxu0 %v2283
        %2929 = vmatpush1.bf16.msra.mxu0 %v2282
        %2930 = vmatprep.subr.bf16.mxu0 %v2292
        %2931 = vmatpush1.bf16.msra.mxu0 %v2291
        %2932 = vmatprep.subr.bf16.mxu0 %v2301
        %2933 = vmatpush1.bf16.msra.mxu0 %v2300
        %2934 = vmatprep.subr.bf16.mxu0 %v2310
        %2935 = vmatpush1.bf16.msra.mxu0 %v2309
        %2936 = vmatprep.subr.bf16.mxu0 %v2319
        %2937 = vmatpush1.bf16.msra.mxu0 %v2318
        %2938 = vmatprep.subr.bf16.mxu0 %v2328
        %2939 = vmatpush1.bf16.msra.mxu0 %v2327
        %2940 = vmatprep.subr.bf16.mxu0 %v2337
        %2941 = vmatpush1.bf16.msra.mxu0 %v2336
        %2942 = vmatprep.subr.bf16.mxu0 0
        %2943 = vmatpush1.bf16.msra.mxu0 0
        %2944 = vmatprep.subr.bf16.mxu0 0
        %2945 = vmatpush1.bf16.msra.mxu0 0
        %2946 = vmatprep.subr.bf16.mxu0 0
        %2947 = vmatpush1.bf16.msra.mxu0 0
        %2948 = vmatprep.subr.bf16.mxu0 0
        %2949 = vmatpush1.bf16.msra.mxu0 0
        %2950 = vmatprep.subr.bf16.mxu0 0
        %2951 = vmatpush1.bf16.msra.mxu0 0
        %2952 = vmatprep.subr.bf16.mxu0 0
        %2953 = vmatpush1.bf16.msra.mxu0 0
        %2954 = vmatprep.subr.bf16.mxu0 0
        %2955 = vmatpush1.bf16.msra.mxu0 0
        %2956 = vmatprep.subr.bf16.mxu0 0
        %2957 = vmatpush1.bf16.msra.mxu0 0
        %2958 = vmatprep.mubr.bf16.mxu0 0
        %2959 = vmatmul.mubr.bf16.gmra.mrb[0].mxu0 %v1207
        %v2960 = vpop.f32.mrb[0].mxu0
        %v2961 = vadd.f32 %v2908, %v2960
        %v2962 = vpop.f32.mrb[0].mxu0
        %v2963 = vadd.f32 %v2910, %v2962
        %v2964 = vpop.f32.mrb[0].mxu0
        %v2965 = vadd.f32 %v2912, %v2964
        %v2966 = vpop.f32.mrb[0].mxu0
        %v2967 = vadd.f32 %v2914, %v2966
        %2968 = vmatprep.mubr.bf16.mxu0 0
        %2969 = vmatmul.mubr.bf16.gmra.mrb[0].mxu0 %v1210
        %v2970 = vpop.f32.mrb[0].mxu0
        %v2971 = vadd.f32 %v2918, %v2970
        %v2972 = vpop.f32.mrb[0].mxu0
        %v2973 = vadd.f32 %v2920, %v2972
        %v2974 = vpop.f32.mrb[0].mxu0
        %v2975 = vadd.f32 %v2922, %v2974
        %v2976 = vpop.f32.mrb[0].mxu0
        %v2977 = vadd.f32 %v2924, %v2976
        %2978 = vdwg.mxu0
        %2979 = vmatprep.subr.bf16.mxu0 0
        %2980 = vmatpush1.bf16.msra.mxu0 %v2131
        %2981 = vmatprep.subr.bf16.mxu0 0
        %2982 = vmatpush1.bf16.msra.mxu0 %v2140
        %2983 = vmatprep.subr.bf16.mxu0 0
        %2984 = vmatpush1.bf16.msra.mxu0 %v2149
        %2985 = vmatprep.subr.bf16.mxu0 0
        %2986 = vmatpush1.bf16.msra.mxu0 %v2158
        %2987 = vmatprep.subr.bf16.mxu0 0
        %2988 = vmatpush1.bf16.msra.mxu0 %v2167
        %2989 = vmatprep.subr.bf16.mxu0 0
        %2990 = vmatpush1.bf16.msra.mxu0 %v2176
        %2991 = vmatprep.subr.bf16.mxu0 0
        %2992 = vmatpush1.bf16.msra.mxu0 %v2185
        %2993 = vmatprep.subr.bf16.mxu0 0
        %2994 = vmatpush1.bf16.msra.mxu0 %v2194
        %2995 = vmatprep.subr.bf16.mxu0 0
        %2996 = vmatpush1.bf16.msra.mxu0 %v2203
        %2997 = vmatprep.subr.bf16.mxu0 0
        %2998 = vmatpush1.bf16.msra.mxu0 %v2212
        %2999 = vmatprep.subr.bf16.mxu0 0
        %3000 = vmatpush1.bf16.msra.mxu0 %v2221
        %3001 = vmatprep.subr.bf16.mxu0 0
        %3002 = vmatpush1.bf16.msra.mxu0 %v2230
        %3003 = vmatprep.subr.bf16.mxu0 0
        %3004 = vmatpush1.bf16.msra.mxu0 %v2239
        %3005 = vmatprep.subr.bf16.mxu0 0
        %3006 = vmatpush1.bf16.msra.mxu0 %v2248
        %3007 = vmatprep.subr.bf16.mxu0 0
        %3008 = vmatpush1.bf16.msra.mxu0 %v2257
        %3009 = vmatprep.subr.bf16.mxu0 0
        %3010 = vmatpush1.bf16.msra.mxu0 %v2266
        %3011 = vmatprep.mubr.bf16.mxu0 %v1206
        %3012 = vmatmul.mubr.bf16.gmra.mrb[0].mxu0 %v1205
        %v3013 = vpop.f32.mrb[0].mxu0
        %v3014 = vadd.f32 0.0, %v3013
        %v3015 = vpop.f32.mrb[0].mxu0
        %v3016 = vpop.f32.mrb[0].mxu0
        %v3017 = vadd.f32 0.0, %v3016
        %v3018 = vpop.f32.mrb[0].mxu0
        %3019 = vmatprep.mubr.bf16.mxu0 %v1209
        %3020 = vmatmul.mubr.bf16.gmra.mrb[0].mxu0 %v1208
        %v3021 = vpop.f32.mrb[0].mxu0
        %v3022 = vadd.f32 0.0, %v3021
        %v3023 = vpop.f32.mrb[0].mxu0
        %v3024 = vpop.f32.mrb[0].mxu0
        %v3025 = vadd.f32 0.0, %v3024
        %v3026 = vpop.f32.mrb[0].mxu0
        %3027 = vdwg.mxu0
        %3028 = vmatprep.subr.bf16.mxu0 0
        %3029 = vmatpush1.bf16.msra.mxu0 %v2275
        %3030 = vmatprep.subr.bf16.mxu0 0
        %3031 = vmatpush1.bf16.msra.mxu0 %v2284
        %3032 = vmatprep.subr.bf16.mxu0 0
        %3033 = vmatpush1.bf16.msra.mxu0 %v2293
        %3034 = vmatprep.subr.bf16.mxu0 0
        %3035 = vmatpush1.bf16.msra.mxu0 %v2302
        %3036 = vmatprep.subr.bf16.mxu0 0
        %3037 = vmatpush1.bf16.msra.mxu0 %v2311
        %3038 = vmatprep.subr.bf16.mxu0 0
        %3039 = vmatpush1.bf16.msra.mxu0 %v2320
        %3040 = vmatprep.subr.bf16.mxu0 0
        %3041 = vmatpush1.bf16.msra.mxu0 %v2329
        %3042 = vmatprep.subr.bf16.mxu0 0
        %3043 = vmatpush1.bf16.msra.mxu0 %v2338
        %3044 = vmatprep.subr.bf16.mxu0 0
        %3045 = vmatpush1.bf16.msra.mxu0 0
        %3046 = vmatprep.subr.bf16.mxu0 0
        %3047 = vmatpush1.bf16.msra.mxu0 0
        %3048 = vmatprep.subr.bf16.mxu0 0
        %3049 = vmatpush1.bf16.msra.mxu0 0
        %3050 = vmatprep.subr.bf16.mxu0 0
        %3051 = vmatpush1.bf16.msra.mxu0 0
        %3052 = vmatprep.subr.bf16.mxu0 0
        %3053 = vmatpush1.bf16.msra.mxu0 0
        %3054 = vmatprep.subr.bf16.mxu0 0
        %3055 = vmatpush1.bf16.msra.mxu0 0
        %3056 = vmatprep.subr.bf16.mxu0 0
        %3057 = vmatpush1.bf16.msra.mxu0 0
        %3058 = vmatprep.subr.bf16.mxu0 0
        %3059 = vmatpush1.bf16.msra.mxu0 0
        %3060 = vmatprep.mubr.bf16.mxu0 0
        %3061 = vmatmul.mubr.bf16.gmra.mrb[0].mxu0 %v1207
        %v3062 = vpop.f32.mrb[0].mxu0
        %v3063 = vadd.f32 %v3014, %v3062
        %v3064 = vpop.f32.mrb[0].mxu0
        %v3065 = vpop.f32.mrb[0].mxu0
        %v3066 = vadd.f32 %v3017, %v3065
        %v3067 = vpop.f32.mrb[0].mxu0
        %3068 = vmatprep.mubr.bf16.mxu0 0
        %3069 = vmatmul.mubr.bf16.gmra.mrb[0].mxu0 %v1210
        %v3070 = vpop.f32.mrb[0].mxu0
        %v3071 = vadd.f32 %v3022, %v3070
        %v3072 = vpop.f32.mrb[0].mxu0
        %v3073 = vpop.f32.mrb[0].mxu0
        %v3074 = vadd.f32 %v3025, %v3073
        %v3075 = vpop.f32.mrb[0].mxu0
        %3076 = vdwg.mxu0
        %v3077 = vpack.c.bf16 %v2647, %v2643
        %v3078 = vpack.c.bf16 %v2649, %v2645
        %v3079 = vpack.c.bf16 %v2753, %v2749
        %v3080 = vpack.c.bf16 %v2755, %v2751
        %v3081 = vpack.c.bf16 %v2859, %v2855
        %v3082 = vpack.c.bf16 %v2861, %v2857
        %v3083 = vpack.c.bf16 %v2965, %v2961
        %v3084 = vpack.c.bf16 %v2967, %v2963
        %v3085 = vpack.c.bf16 %v3066, %v3063
        %v3086 = vpack.c.bf16 %v2657, %v2653
        %v3087 = vpack.c.bf16 %v2659, %v2655
        %v3088 = vpack.c.bf16 %v2763, %v2759
        %v3089 = vpack.c.bf16 %v2765, %v2761
        %v3090 = vpack.c.bf16 %v2869, %v2865
        %v3091 = vpack.c.bf16 %v2871, %v2867
        %v3092 = vpack.c.bf16 %v2975, %v2971
        %v3093 = vpack.c.bf16 %v2977, %v2973
        %v3094 = vpack.c.bf16 %v3074, %v3071
        %v3095 = vld [vmem:[%s1] sm:$0xff]
        %v3096 = vld [vmem:[%s1 + $0x8] sm:$0xff]
        %vm3097 = vcmask 523264
        %v3099 = vsel %vm3097, %v3077, 0
        %v3102 = vsel %vm3097, %v3080, 0
        %3104 = vmatprep.subr.bf16.mxu0 0
        %3105 = vmatpush1.bf16.xpose.msra.mxu0 %v3102
        %3106 = vmatprep.subr.bf16.mxu0 0
        %3107 = vmatpush1.bf16.xpose.msra.mxu0 0
        %3108 = vmatprep.subr.bf16.mxu0 0
        %3109 = vmatpush1.bf16.xpose.msra.mxu0 0
        %3110 = vmatprep.subr.bf16.mxu0 0
        %3111 = vmatpush1.bf16.xpose.msra.mxu0 0
        %3112 = vmatprep.subr.bf16.mxu0 0
        %3113 = vmatpush1.bf16.xpose.msra.mxu0 0
        %3114 = vmatprep.subr.bf16.mxu0 0
        %3115 = vmatpush1.bf16.xpose.msra.mxu0 0
        %3116 = vmatprep.subr.bf16.mxu0 0
        %3117 = vmatpush1.bf16.xpose.msra.mxu0 0
        %3118 = vmatprep.subr.bf16.mxu0 0
        %3119 = vmatpush1.bf16.xpose.msra.mxu0 0
        %3120 = vmatprep.subr.bf16.mxu0 0
        %3121 = vmatpush1.bf16.xpose.msra.mxu0 0
        %3122 = vmatprep.subr.bf16.mxu0 0
        %3123 = vmatpush1.bf16.xpose.msra.mxu0 0
        %3124 = vmatprep.subr.bf16.mxu0 0
        %3125 = vmatpush1.bf16.xpose.msra.mxu0 0
        %3126 = vmatprep.subr.bf16.mxu0 0
        %3127 = vmatpush1.bf16.xpose.msra.mxu0 0
        %3128 = vmatprep.subr.bf16.mxu0 0
        %3129 = vmatpush1.bf16.xpose.msra.mxu0 0
        %3130 = vmatprep.subr.bf16.mxu0 0
        %3131 = vmatpush1.bf16.xpose.msra.mxu0 0
        %3132 = vmatprep.subr.bf16.mxu0 0
        %3133 = vmatpush1.bf16.xpose.msra.mxu0 0
        %3134 = vmatprep.subr.bf16.mxu0 0
        %3135 = vmatpush1.bf16.xpose.msra.mxu0 0
        %3136 = vmatprep.mubr.bf16.mxu0 0
        %3137 = vmatmul.mubr.bf16.gmra.mrb[0].mxu0 %v3099
        %v3138 = vpop.f32.mrb[0].mxu0
        %v3139 = vadd.f32 %v3095, %v3138
        %v3140 = vpop.f32.mrb[0].mxu0
        %v3141 = vpop.f32.mrb[0].mxu0
        %v3142 = vadd.f32 %v3096, %v3141
        %v3143 = vpop.f32.mrb[0].mxu0
        %3144 = vdwg.mxu0
        %v3146 = vsel %vm3097, %v3086, 0
        %v3149 = vsel %vm3097, %v3089, 0
        %3151 = vmatprep.subr.bf16.mxu0 0
        %3152 = vmatpush1.bf16.xpose.msra.mxu0 %v3149
        %3153 = vmatprep.subr.bf16.mxu0 0
        %3154 = vmatpush1.bf16.xpose.msra.mxu0 0
        %3155 = vmatprep.subr.bf16.mxu0 0
        %3156 = vmatpush1.bf16.xpose.msra.mxu0 0
        %3157 = vmatprep.subr.bf16.mxu0 0
        %3158 = vmatpush1.bf16.xpose.msra.mxu0 0
        %3159 = vmatprep.subr.bf16.mxu0 0
        %3160 = vmatpush1.bf16.xpose.msra.mxu0 0
        %3161 = vmatprep.subr.bf16.mxu0 0
        %3162 = vmatpush1.bf16.xpose.msra.mxu0 0
        %3163 = vmatprep.subr.bf16.mxu0 0
        %3164 = vmatpush1.bf16.xpose.msra.mxu0 0
        %3165 = vmatprep.subr.bf16.mxu0 0
        %3166 = vmatpush1.bf16.xpose.msra.mxu0 0
        %3167 = vmatprep.subr.bf16.mxu0 0
        %3168 = vmatpush1.bf16.xpose.msra.mxu0 0
        %3169 = vmatprep.subr.bf16.mxu0 0
        %3170 = vmatpush1.bf16.xpose.msra.mxu0 0
        %3171 = vmatprep.subr.bf16.mxu0 0
        %3172 = vmatpush1.bf16.xpose.msra.mxu0 0
        %3173 = vmatprep.subr.bf16.mxu0 0
        %3174 = vmatpush1.bf16.xpose.msra.mxu0 0
        %3175 = vmatprep.subr.bf16.mxu0 0
        %3176 = vmatpush1.bf16.xpose.msra.mxu0 0
        %3177 = vmatprep.subr.bf16.mxu0 0
        %3178 = vmatpush1.bf16.xpose.msra.mxu0 0
        %3179 = vmatprep.subr.bf16.mxu0 0
        %3180 = vmatpush1.bf16.xpose.msra.mxu0 0
        %3181 = vmatprep.subr.bf16.mxu0 0
        %3182 = vmatpush1.bf16.xpose.msra.mxu0 0
        %3183 = vmatprep.mubr.bf16.mxu0 0
        %3184 = vmatmul.mubr.bf16.gmra.mrb[0].mxu0 %v3146
        %v3185 = vpop.f32.mrb[0].mxu0
        %v3186 = vadd.f32 %v3095, %v3185
        %v3187 = vpop.f32.mrb[0].mxu0
        %v3188 = vpop.f32.mrb[0].mxu0
        %v3189 = vadd.f32 %v3096, %v3188
        %v3190 = vpop.f32.mrb[0].mxu0
        %3191 = vdwg.mxu0
        %vm3192 = vcmask 130048
        %v3193 = vsel %vm3192, %v3139, -inf
        %3194 = vmax.xlane.f32.xlu0 %v3193
        %v3195 = vpop.xlane.xlu0 %3194
        %v3196 = vsel %vm3192, %v3142, -inf
        %3197 = vmax.xlane.f32.xlu0 %v3196
        %v3198 = vpop.xlane.xlu0 %3197
        %v3199 = vsel %vm3192, %v3186, -inf
        %3200 = vmax.xlane.f32.xlu0 %v3199
        %v3201 = vpop.xlane.xlu0 %3200
        %v3202 = vsel %vm3192, %v3189, -inf
        %3203 = vmax.xlane.f32.xlu0 %v3202
        %v3204 = vpop.xlane.xlu0 %3203
        %v3205 = vsub.f32 %v3139, %v3195
        %v3206 = vsub.f32 %v3142, %v3198
        %v3207 = vsub.f32 %v3186, %v3201
        %v3208 = vsub.f32 %v3189, %v3204
        %v3209 = vmul.f32 %v3205, 1.442695
        %v3210 = vpow.pop %v3209
        %v3211 = vmul.f32 %v3206, 1.442695
        %v3212 = vpow.pop %v3211
        %v3213 = vmul.f32 %v3207, 1.442695
        %v3214 = vpow.pop %v3213
        %v3215 = vmul.f32 %v3208, 1.442695
        %v3216 = vpow.pop %v3215
        %v3217 = vsel %vm3192, %v3210, 0.0
        %3218 = vadd.xlane.f32.xlu0 %v3217
        %v3219 = vpop.xlane.xlu0 %3218
        %v3220 = vsel %vm3192, %v3212, 0.0
        %3221 = vadd.xlane.f32.xlu0 %v3220
        %v3222 = vpop.xlane.xlu0 %3221
        %v3223 = vsel %vm3192, %v3214, 0.0
        %3224 = vadd.xlane.f32.xlu0 %v3223
        %v3225 = vpop.xlane.xlu0 %3224
        %v3226 = vsel %vm3192, %v3216, 0.0
        %3227 = vadd.xlane.f32.xlu0 %v3226
        %v3228 = vpop.xlane.xlu0 %3227
        %v3229 = vrcp.pop %v3219
        %v3230 = vrcp.pop %v3222
        %v3231 = vrcp.pop %v3225
        %v3232 = vrcp.pop %v3228
        %v3233 = vmul.f32 %v3210, %v3229
        %v3234 = vmul.f32 %v3212, %v3230
        %v3235 = vmul.f32 %v3214, %v3231
        %v3236 = vmul.f32 %v3216, %v3232
        %v3237 = vpack.c.bf16 %v3234, %v3233
        %v3238 = vpack.c.bf16 %v3236, %v3235
        %v3240 = vsel %vm3192, %v3237, 0
        %3242 = vmatprep.subr.bf16.mxu0 0
        %3243 = vmatpush1.bf16.msra.mxu0 %v3083
        %3244 = vmatprep.subr.bf16.mxu0 0
        %3245 = vmatpush1.bf16.msra.mxu0 0
        %3246 = vmatprep.subr.bf16.mxu0 0
        %3247 = vmatpush1.bf16.msra.mxu0 0
        %3248 = vmatprep.subr.bf16.mxu0 0
        %3249 = vmatpush1.bf16.msra.mxu0 0
        %3250 = vmatprep.subr.bf16.mxu0 0
        %3251 = vmatpush1.bf16.msra.mxu0 0
        %3252 = vmatprep.subr.bf16.mxu0 0
        %3253 = vmatpush1.bf16.msra.mxu0 0
        %3254 = vmatprep.subr.bf16.mxu0 0
        %3255 = vmatpush1.bf16.msra.mxu0 0
        %3256 = vmatprep.subr.bf16.mxu0 0
        %3257 = vmatpush1.bf16.msra.mxu0 0
        %3258 = vmatprep.subr.bf16.mxu0 0
        %3259 = vmatpush1.bf16.msra.mxu0 0
        %3260 = vmatprep.subr.bf16.mxu0 0
        %3261 = vmatpush1.bf16.msra.mxu0 0
        %3262 = vmatprep.subr.bf16.mxu0 0
        %3263 = vmatpush1.bf16.msra.mxu0 0
        %3264 = vmatprep.subr.bf16.mxu0 0
        %3265 = vmatpush1.bf16.msra.mxu0 0
        %3266 = vmatprep.subr.bf16.mxu0 0
        %3267 = vmatpush1.bf16.msra.mxu0 0
        %3268 = vmatprep.subr.bf16.mxu0 0
        %3269 = vmatpush1.bf16.msra.mxu0 0
        %3270 = vmatprep.subr.bf16.mxu0 0
        %3271 = vmatpush1.bf16.msra.mxu0 0
        %3272 = vmatprep.subr.bf16.mxu0 0
        %3273 = vmatpush1.bf16.msra.mxu0 0
        %3274 = vmatprep.mubr.bf16.mxu0 0
        %3275 = vmatmul.mubr.bf16.gmra.mrb[0].mxu0 %v3240
        %v3276 = vpop.f32.mrb[0].mxu0
        %v3277 = vadd.f32 0.0, %v3276
        %v3278 = vpop.f32.mrb[0].mxu0
        %v3279 = vpop.f32.mrb[0].mxu0
        %v3280 = vadd.f32 0.0, %v3279
        %v3281 = vpop.f32.mrb[0].mxu0
        %3282 = vdwg.mxu0
        %v3284 = vsel %vm3192, %v3238, 0
        %3286 = vmatprep.subr.bf16.mxu0 0
        %3287 = vmatpush1.bf16.msra.mxu0 %v3092
        %3288 = vmatprep.subr.bf16.mxu0 0
        %3289 = vmatpush1.bf16.msra.mxu0 0
        %3290 = vmatprep.subr.bf16.mxu0 0
        %3291 = vmatpush1.bf16.msra.mxu0 0
        %3292 = vmatprep.subr.bf16.mxu0 0
        %3293 = vmatpush1.bf16.msra.mxu0 0
        %3294 = vmatprep.subr.bf16.mxu0 0
        %3295 = vmatpush1.bf16.msra.mxu0 0
        %3296 = vmatprep.subr.bf16.mxu0 0
        %3297 = vmatpush1.bf16.msra.mxu0 0
        %3298 = vmatprep.subr.bf16.mxu0 0
        %3299 = vmatpush1.bf16.msra.mxu0 0
        %3300 = vmatprep.subr.bf16.mxu0 0
        %3301 = vmatpush1.bf16.msra.mxu0 0
        %3302 = vmatprep.subr.bf16.mxu0 0
        %3303 = vmatpush1.bf16.msra.mxu0 0
        %3304 = vmatprep.subr.bf16.mxu0 0
        %3305 = vmatpush1.bf16.msra.mxu0 0
        %3306 = vmatprep.subr.bf16.mxu0 0
        %3307 = vmatpush1.bf16.msra.mxu0 0
        %3308 = vmatprep.subr.bf16.mxu0 0
        %3309 = vmatpush1.bf16.msra.mxu0 0
        %3310 = vmatprep.subr.bf16.mxu0 0
        %3311 = vmatpush1.bf16.msra.mxu0 0
        %3312 = vmatprep.subr.bf16.mxu0 0
        %3313 = vmatpush1.bf16.msra.mxu0 0
        %3314 = vmatprep.subr.bf16.mxu0 0
        %3315 = vmatpush1.bf16.msra.mxu0 0
        %3316 = vmatprep.subr.bf16.mxu0 0
        %3317 = vmatpush1.bf16.msra.mxu0 0
        %3318 = vmatprep.mubr.bf16.mxu0 0
        %3319 = vmatmul.mubr.bf16.gmra.mrb[0].mxu0 %v3284
        %v3320 = vpop.f32.mrb[0].mxu0
        %v3321 = vadd.f32 0.0, %v3320
        %v3322 = vpop.f32.mrb[0].mxu0
        %v3323 = vpop.f32.mrb[0].mxu0
        %v3324 = vadd.f32 0.0, %v3323
        %v3325 = vpop.f32.mrb[0].mxu0
        %3326 = vdwg.mxu0
        %v3327 = vpack.c.bf16 %v3280, %v3277
        %v3328 = vpack.c.bf16 %v3324, %v3321
        %3330 = vrot.lane.b32.xlu0 %v3077, 64
        %v3331 = vpop.permute.xlu0 %3330
        %3333 = vrot.lane.b32.xlu0 %v3080, 64
        %v3334 = vpop.permute.xlu0 %3333
        %v3336 = vsel %vm3097, %v3331, 0
        %v3339 = vsel %vm3097, %v3334, 0
        %3341 = vmatprep.subr.bf16.mxu0 0
        %3342 = vmatpush1.bf16.xpose.msra.mxu0 %v3339
        %3343 = vmatprep.subr.bf16.mxu0 0
        %3344 = vmatpush1.bf16.xpose.msra.mxu0 0
        %3345 = vmatprep.subr.bf16.mxu0 0
        %3346 = vmatpush1.bf16.xpose.msra.mxu0 0
        %3347 = vmatprep.subr.bf16.mxu0 0
        %3348 = vmatpush1.bf16.xpose.msra.mxu0 0
        %3349 = vmatprep.subr.bf16.mxu0 0
        %3350 = vmatpush1.bf16.xpose.msra.mxu0 0
        %3351 = vmatprep.subr.bf16.mxu0 0
        %3352 = vmatpush1.bf16.xpose.msra.mxu0 0
        %3353 = vmatprep.subr.bf16.mxu0 0
        %3354 = vmatpush1.bf16.xpose.msra.mxu0 0
        %3355 = vmatprep.subr.bf16.mxu0 0
        %3356 = vmatpush1.bf16.xpose.msra.mxu0 0
        %3357 = vmatprep.subr.bf16.mxu0 0
        %3358 = vmatpush1.bf16.xpose.msra.mxu0 0
        %3359 = vmatprep.subr.bf16.mxu0 0
        %3360 = vmatpush1.bf16.xpose.msra.mxu0 0
        %3361 = vmatprep.subr.bf16.mxu0 0
        %3362 = vmatpush1.bf16.xpose.msra.mxu0 0
        %3363 = vmatprep.subr.bf16.mxu0 0
        %3364 = vmatpush1.bf16.xpose.msra.mxu0 0
        %3365 = vmatprep.subr.bf16.mxu0 0
        %3366 = vmatpush1.bf16.xpose.msra.mxu0 0
        %3367 = vmatprep.subr.bf16.mxu0 0
        %3368 = vmatpush1.bf16.xpose.msra.mxu0 0
        %3369 = vmatprep.subr.bf16.mxu0 0
        %3370 = vmatpush1.bf16.xpose.msra.mxu0 0
        %3371 = vmatprep.subr.bf16.mxu0 0
        %3372 = vmatpush1.bf16.xpose.msra.mxu0 0
        %3373 = vmatprep.mubr.bf16.mxu0 0
        %3374 = vmatmul.mubr.bf16.gmra.mrb[0].mxu0 %v3336
        %v3375 = vpop.f32.mrb[0].mxu0
        %v3376 = vadd.f32 %v3095, %v3375
        %v3377 = vpop.f32.mrb[0].mxu0
        %v3378 = vpop.f32.mrb[0].mxu0
        %v3379 = vadd.f32 %v3096, %v3378
        %v3380 = vpop.f32.mrb[0].mxu0
        %3381 = vdwg.mxu0
        %3383 = vrot.lane.b32.xlu0 %v3086, 64
        %v3384 = vpop.permute.xlu0 %3383
        %3386 = vrot.lane.b32.xlu0 %v3089, 64
        %v3387 = vpop.permute.xlu0 %3386
        %v3389 = vsel %vm3097, %v3384, 0
        %v3392 = vsel %vm3097, %v3387, 0
        %3394 = vmatprep.subr.bf16.mxu0 0
        %3395 = vmatpush1.bf16.xpose.msra.mxu0 %v3392
        %3396 = vmatprep.subr.bf16.mxu0 0
        %3397 = vmatpush1.bf16.xpose.msra.mxu0 0
        %3398 = vmatprep.subr.bf16.mxu0 0
        %3399 = vmatpush1.bf16.xpose.msra.mxu0 0
        %3400 = vmatprep.subr.bf16.mxu0 0
        %3401 = vmatpush1.bf16.xpose.msra.mxu0 0
        %3402 = vmatprep.subr.bf16.mxu0 0
        %3403 = vmatpush1.bf16.xpose.msra.mxu0 0
        %3404 = vmatprep.subr.bf16.mxu0 0
        %3405 = vmatpush1.bf16.xpose.msra.mxu0 0
        %3406 = vmatprep.subr.bf16.mxu0 0
        %3407 = vmatpush1.bf16.xpose.msra.mxu0 0
        %3408 = vmatprep.subr.bf16.mxu0 0
        %3409 = vmatpush1.bf16.xpose.msra.mxu0 0
        %3410 = vmatprep.subr.bf16.mxu0 0
        %3411 = vmatpush1.bf16.xpose.msra.mxu0 0
        %3412 = vmatprep.subr.bf16.mxu0 0
        %3413 = vmatpush1.bf16.xpose.msra.mxu0 0
        %3414 = vmatprep.subr.bf16.mxu0 0
        %3415 = vmatpush1.bf16.xpose.msra.mxu0 0
        %3416 = vmatprep.subr.bf16.mxu0 0
        %3417 = vmatpush1.bf16.xpose.msra.mxu0 0
        %3418 = vmatprep.subr.bf16.mxu0 0
        %3419 = vmatpush1.bf16.xpose.msra.mxu0 0
        %3420 = vmatprep.subr.bf16.mxu0 0
        %3421 = vmatpush1.bf16.xpose.msra.mxu0 0
        %3422 = vmatprep.subr.bf16.mxu0 0
        %3423 = vmatpush1.bf16.xpose.msra.mxu0 0
        %3424 = vmatprep.subr.bf16.mxu0 0
        %3425 = vmatpush1.bf16.xpose.msra.mxu0 0
        %3426 = vmatprep.mubr.bf16.mxu0 0
        %3427 = vmatmul.mubr.bf16.gmra.mrb[0].mxu0 %v3389
        %v3428 = vpop.f32.mrb[0].mxu0
        %v3429 = vadd.f32 %v3095, %v3428
        %v3430 = vpop.f32.mrb[0].mxu0
        %v3431 = vpop.f32.mrb[0].mxu0
        %v3432 = vadd.f32 %v3096, %v3431
        %v3433 = vpop.f32.mrb[0].mxu0
        %3434 = vdwg.mxu0
        %v3435 = vsel %vm3192, %v3376, -inf
        %3436 = vmax.xlane.f32.xlu0 %v3435
        %v3437 = vpop.xlane.xlu0 %3436
        %v3438 = vsel %vm3192, %v3379, -inf
        %3439 = vmax.xlane.f32.xlu0 %v3438
        %v3440 = vpop.xlane.xlu0 %3439
        %v3441 = vsel %vm3192, %v3429, -inf
        %3442 = vmax.xlane.f32.xlu0 %v3441
        %v3443 = vpop.xlane.xlu0 %3442
        %v3444 = vsel %vm3192, %v3432, -inf
        %3445 = vmax.xlane.f32.xlu0 %v3444
        %v3446 = vpop.xlane.xlu0 %3445
        %v3447 = vsub.f32 %v3376, %v3437
        %v3448 = vsub.f32 %v3379, %v3440
        %v3449 = vsub.f32 %v3429, %v3443
        %v3450 = vsub.f32 %v3432, %v3446
        %v3451 = vmul.f32 %v3447, 1.442695
        %v3452 = vpow.pop %v3451
        %v3453 = vmul.f32 %v3448, 1.442695
        %v3454 = vpow.pop %v3453
        %v3455 = vmul.f32 %v3449, 1.442695
        %v3456 = vpow.pop %v3455
        %v3457 = vmul.f32 %v3450, 1.442695
        %v3458 = vpow.pop %v3457
        %v3459 = vsel %vm3192, %v3452, 0.0
        %3460 = vadd.xlane.f32.xlu0 %v3459
        %v3461 = vpop.xlane.xlu0 %3460
        %v3462 = vsel %vm3192, %v3454, 0.0
        %3463 = vadd.xlane.f32.xlu0 %v3462
        %v3464 = vpop.xlane.xlu0 %3463
        %v3465 = vsel %vm3192, %v3456, 0.0
        %3466 = vadd.xlane.f32.xlu0 %v3465
        %v3467 = vpop.xlane.xlu0 %3466
        %v3468 = vsel %vm3192, %v3458, 0.0
        %3469 = vadd.xlane.f32.xlu0 %v3468
        %v3470 = vpop.xlane.xlu0 %3469
        %v3471 = vrcp.pop %v3461
        %v3472 = vrcp.pop %v3464
        %v3473 = vrcp.pop %v3467
        %v3474 = vrcp.pop %v3470
        %v3475 = vmul.f32 %v3452, %v3471
        %v3476 = vmul.f32 %v3454, %v3472
        %v3477 = vmul.f32 %v3456, %v3473
        %v3478 = vmul.f32 %v3458, %v3474
        %v3479 = vpack.c.bf16 %v3476, %v3475
        %v3480 = vpack.c.bf16 %v3478, %v3477
        %3482 = vrot.lane.b32.xlu0 %v3083, 64
        %v3483 = vpop.permute.xlu0 %3482
        %v3486 = vsel %vm3192, %v3479, 0
        %3488 = vmatprep.subr.bf16.mxu0 0
        %3489 = vmatpush1.bf16.msra.mxu0 %v3483
        %3490 = vmatprep.subr.bf16.mxu0 0
        %3491 = vmatpush1.bf16.msra.mxu0 0
        %3492 = vmatprep.subr.bf16.mxu0 0
        %3493 = vmatpush1.bf16.msra.mxu0 0
        %3494 = vmatprep.subr.bf16.mxu0 0
        %3495 = vmatpush1.bf16.msra.mxu0 0
        %3496 = vmatprep.subr.bf16.mxu0 0
        %3497 = vmatpush1.bf16.msra.mxu0 0
        %3498 = vmatprep.subr.bf16.mxu0 0
        %3499 = vmatpush1.bf16.msra.mxu0 0
        %3500 = vmatprep.subr.bf16.mxu0 0
        %3501 = vmatpush1.bf16.msra.mxu0 0
        %3502 = vmatprep.subr.bf16.mxu0 0
        %3503 = vmatpush1.bf16.msra.mxu0 0
        %3504 = vmatprep.subr.bf16.mxu0 0
        %3505 = vmatpush1.bf16.msra.mxu0 0
        %3506 = vmatprep.subr.bf16.mxu0 0
        %3507 = vmatpush1.bf16.msra.mxu0 0
        %3508 = vmatprep.subr.bf16.mxu0 0
        %3509 = vmatpush1.bf16.msra.mxu0 0
        %3510 = vmatprep.subr.bf16.mxu0 0
        %3511 = vmatpush1.bf16.msra.mxu0 0
        %3512 = vmatprep.subr.bf16.mxu0 0
        %3513 = vmatpush1.bf16.msra.mxu0 0
        %3514 = vmatprep.subr.bf16.mxu0 0
        %3515 = vmatpush1.bf16.msra.mxu0 0
        %3516 = vmatprep.subr.bf16.mxu0 0
        %3517 = vmatpush1.bf16.msra.mxu0 0
        %3518 = vmatprep.subr.bf16.mxu0 0
        %3519 = vmatpush1.bf16.msra.mxu0 0
        %3520 = vmatprep.mubr.bf16.mxu0 0
        %3521 = vmatmul.mubr.bf16.gmra.mrb[0].mxu0 %v3486
        %v3522 = vpop.f32.mrb[0].mxu0
        %v3523 = vadd.f32 0.0, %v3522
        %v3524 = vpop.f32.mrb[0].mxu0
        %v3525 = vpop.f32.mrb[0].mxu0
        %v3526 = vadd.f32 0.0, %v3525
        %v3527 = vpop.f32.mrb[0].mxu0
        %3528 = vdwg.mxu0
        %3530 = vrot.lane.b32.xlu0 %v3092, 64
        %v3531 = vpop.permute.xlu0 %3530
        %v3534 = vsel %vm3192, %v3480, 0
        %3536 = vmatprep.subr.bf16.mxu0 0
        %3537 = vmatpush1.bf16.msra.mxu0 %v3531
        %3538 = vmatprep.subr.bf16.mxu0 0
        %3539 = vmatpush1.bf16.msra.mxu0 0
        %3540 = vmatprep.subr.bf16.mxu0 0
        %3541 = vmatpush1.bf16.msra.mxu0 0
        %3542 = vmatprep.subr.bf16.mxu0 0
        %3543 = vmatpush1.bf16.msra.mxu0 0
        %3544 = vmatprep.subr.bf16.mxu0 0
        %3545 = vmatpush1.bf16.msra.mxu0 0
        %3546 = vmatprep.subr.bf16.mxu0 0
        %3547 = vmatpush1.bf16.msra.mxu0 0
        %3548 = vmatprep.subr.bf16.mxu0 0
        %3549 = vmatpush1.bf16.msra.mxu0 0
        %3550 = vmatprep.subr.bf16.mxu0 0
        %3551 = vmatpush1.bf16.msra.mxu0 0
        %3552 = vmatprep.subr.bf16.mxu0 0
        %3553 = vmatpush1.bf16.msra.mxu0 0
        %3554 = vmatprep.subr.bf16.mxu0 0
        %3555 = vmatpush1.bf16.msra.mxu0 0
        %3556 = vmatprep.subr.bf16.mxu0 0
        %3557 = vmatpush1.bf16.msra.mxu0 0
        %3558 = vmatprep.subr.bf16.mxu0 0
        %3559 = vmatpush1.bf16.msra.mxu0 0
        %3560 = vmatprep.subr.bf16.mxu0 0
        %3561 = vmatpush1.bf16.msra.mxu0 0
        %3562 = vmatprep.subr.bf16.mxu0 0
        %3563 = vmatpush1.bf16.msra.mxu0 0
        %3564 = vmatprep.subr.bf16.mxu0 0
        %3565 = vmatpush1.bf16.msra.mxu0 0
        %3566 = vmatprep.subr.bf16.mxu0 0
        %3567 = vmatpush1.bf16.msra.mxu0 0
        %3568 = vmatprep.mubr.bf16.mxu0 0
        %3569 = vmatmul.mubr.bf16.gmra.mrb[0].mxu0 %v3534
        %v3570 = vpop.f32.mrb[0].mxu0
        %v3571 = vadd.f32 0.0, %v3570
        %v3572 = vpop.f32.mrb[0].mxu0
        %v3573 = vpop.f32.mrb[0].mxu0
        %v3574 = vadd.f32 0.0, %v3573
        %v3575 = vpop.f32.mrb[0].mxu0
        %3576 = vdwg.mxu0
        %v3577 = vpack.c.bf16 %v3526, %v3523
        %v3578 = vpack.c.bf16 %v3574, %v3571
        %v3580 = vsel %vm3097, %v3078, 0
        %v3583 = vsel %vm3097, %v3081, 0
        %3585 = vmatprep.subr.bf16.mxu0 0
        %3586 = vmatpush1.bf16.xpose.msra.mxu0 %v3583
        %3587 = vmatprep.subr.bf16.mxu0 0
        %3588 = vmatpush1.bf16.xpose.msra.mxu0 0
        %3589 = vmatprep.subr.bf16.mxu0 0
        %3590 = vmatpush1.bf16.xpose.msra.mxu0 0
        %3591 = vmatprep.subr.bf16.mxu0 0
        %3592 = vmatpush1.bf16.xpose.msra.mxu0 0
        %3593 = vmatprep.subr.bf16.mxu0 0
        %3594 = vmatpush1.bf16.xpose.msra.mxu0 0
        %3595 = vmatprep.subr.bf16.mxu0 0
        %3596 = vmatpush1.bf16.xpose.msra.mxu0 0
        %3597 = vmatprep.subr.bf16.mxu0 0
        %3598 = vmatpush1.bf16.xpose.msra.mxu0 0
        %3599 = vmatprep.subr.bf16.mxu0 0
        %3600 = vmatpush1.bf16.xpose.msra.mxu0 0
        %3601 = vmatprep.subr.bf16.mxu0 0
        %3602 = vmatpush1.bf16.xpose.msra.mxu0 0
        %3603 = vmatprep.subr.bf16.mxu0 0
        %3604 = vmatpush1.bf16.xpose.msra.mxu0 0
        %3605 = vmatprep.subr.bf16.mxu0 0
        %3606 = vmatpush1.bf16.xpose.msra.mxu0 0
        %3607 = vmatprep.subr.bf16.mxu0 0
        %3608 = vmatpush1.bf16.xpose.msra.mxu0 0
        %3609 = vmatprep.subr.bf16.mxu0 0
        %3610 = vmatpush1.bf16.xpose.msra.mxu0 0
        %3611 = vmatprep.subr.bf16.mxu0 0
        %3612 = vmatpush1.bf16.xpose.msra.mxu0 0
        %3613 = vmatprep.subr.bf16.mxu0 0
        %3614 = vmatpush1.bf16.xpose.msra.mxu0 0
        %3615 = vmatprep.subr.bf16.mxu0 0
        %3616 = vmatpush1.bf16.xpose.msra.mxu0 0
        %3617 = vmatprep.mubr.bf16.mxu0 0
        %3618 = vmatmul.mubr.bf16.gmra.mrb[0].mxu0 %v3580
        %v3619 = vpop.f32.mrb[0].mxu0
        %v3620 = vadd.f32 %v3095, %v3619
        %v3621 = vpop.f32.mrb[0].mxu0
        %v3622 = vpop.f32.mrb[0].mxu0
        %v3623 = vadd.f32 %v3096, %v3622
        %v3624 = vpop.f32.mrb[0].mxu0
        %3625 = vdwg.mxu0
        %v3627 = vsel %vm3097, %v3087, 0
        %v3630 = vsel %vm3097, %v3090, 0
        %3632 = vmatprep.subr.bf16.mxu0 0
        %3633 = vmatpush1.bf16.xpose.msra.mxu0 %v3630
        %3634 = vmatprep.subr.bf16.mxu0 0
        %3635 = vmatpush1.bf16.xpose.msra.mxu0 0
        %3636 = vmatprep.subr.bf16.mxu0 0
        %3637 = vmatpush1.bf16.xpose.msra.mxu0 0
        %3638 = vmatprep.subr.bf16.mxu0 0
        %3639 = vmatpush1.bf16.xpose.msra.mxu0 0
        %3640 = vmatprep.subr.bf16.mxu0 0
        %3641 = vmatpush1.bf16.xpose.msra.mxu0 0
        %3642 = vmatprep.subr.bf16.mxu0 0
        %3643 = vmatpush1.bf16.xpose.msra.mxu0 0
        %3644 = vmatprep.subr.bf16.mxu0 0
        %3645 = vmatpush1.bf16.xpose.msra.mxu0 0
        %3646 = vmatprep.subr.bf16.mxu0 0
        %3647 = vmatpush1.bf16.xpose.msra.mxu0 0
        %3648 = vmatprep.subr.bf16.mxu0 0
        %3649 = vmatpush1.bf16.xpose.msra.mxu0 0
        %3650 = vmatprep.subr.bf16.mxu0 0
        %3651 = vmatpush1.bf16.xpose.msra.mxu0 0
        %3652 = vmatprep.subr.bf16.mxu0 0
        %3653 = vmatpush1.bf16.xpose.msra.mxu0 0
        %3654 = vmatprep.subr.bf16.mxu0 0
        %3655 = vmatpush1.bf16.xpose.msra.mxu0 0
        %3656 = vmatprep.subr.bf16.mxu0 0
        %3657 = vmatpush1.bf16.xpose.msra.mxu0 0
        %3658 = vmatprep.subr.bf16.mxu0 0
        %3659 = vmatpush1.bf16.xpose.msra.mxu0 0
        %3660 = vmatprep.subr.bf16.mxu0 0
        %3661 = vmatpush1.bf16.xpose.msra.mxu0 0
        %3662 = vmatprep.subr.bf16.mxu0 0
        %3663 = vmatpush1.bf16.xpose.msra.mxu0 0
        %3664 = vmatprep.mubr.bf16.mxu0 0
        %3665 = vmatmul.mubr.bf16.gmra.mrb[0].mxu0 %v3627
        %v3666 = vpop.f32.mrb[0].mxu0
        %v3667 = vadd.f32 %v3095, %v3666
        %v3668 = vpop.f32.mrb[0].mxu0
        %v3669 = vpop.f32.mrb[0].mxu0
        %v3670 = vadd.f32 %v3096, %v3669
        %v3671 = vpop.f32.mrb[0].mxu0
        %3672 = vdwg.mxu0
        %v3673 = vsel %vm3192, %v3620, -inf
        %3674 = vmax.xlane.f32.xlu0 %v3673
        %v3675 = vpop.xlane.xlu0 %3674
        %v3676 = vsel %vm3192, %v3623, -inf
        %3677 = vmax.xlane.f32.xlu0 %v3676
        %v3678 = vpop.xlane.xlu0 %3677
        %v3679 = vsel %vm3192, %v3667, -inf
        %3680 = vmax.xlane.f32.xlu0 %v3679
        %v3681 = vpop.xlane.xlu0 %3680
        %v3682 = vsel %vm3192, %v3670, -inf
        %3683 = vmax.xlane.f32.xlu0 %v3682
        %v3684 = vpop.xlane.xlu0 %3683
        %v3685 = vsub.f32 %v3620, %v3675
        %v3686 = vsub.f32 %v3623, %v3678
        %v3687 = vsub.f32 %v3667, %v3681
        %v3688 = vsub.f32 %v3670, %v3684
        %v3689 = vmul.f32 %v3685, 1.442695
        %v3690 = vpow.pop %v3689
        %v3691 = vmul.f32 %v3686, 1.442695
        %v3692 = vpow.pop %v3691
        %v3693 = vmul.f32 %v3687, 1.442695
        %v3694 = vpow.pop %v3693
        %v3695 = vmul.f32 %v3688, 1.442695
        %v3696 = vpow.pop %v3695
        %v3697 = vsel %vm3192, %v3690, 0.0
        %3698 = vadd.xlane.f32.xlu0 %v3697
        %v3699 = vpop.xlane.xlu0 %3698
        %v3700 = vsel %vm3192, %v3692, 0.0
        %3701 = vadd.xlane.f32.xlu0 %v3700
        %v3702 = vpop.xlane.xlu0 %3701
        %v3703 = vsel %vm3192, %v3694, 0.0
        %3704 = vadd.xlane.f32.xlu0 %v3703
        %v3705 = vpop.xlane.xlu0 %3704
        %v3706 = vsel %vm3192, %v3696, 0.0
        %3707 = vadd.xlane.f32.xlu0 %v3706
        %v3708 = vpop.xlane.xlu0 %3707
        %v3709 = vrcp.pop %v3699
        %v3710 = vrcp.pop %v3702
        %v3711 = vrcp.pop %v3705
        %v3712 = vrcp.pop %v3708
        %v3713 = vmul.f32 %v3690, %v3709
        %v3714 = vmul.f32 %v3692, %v3710
        %v3715 = vmul.f32 %v3694, %v3711
        %v3716 = vmul.f32 %v3696, %v3712
        %v3717 = vpack.c.bf16 %v3714, %v3713
        %v3718 = vpack.c.bf16 %v3716, %v3715
        %v3720 = vsel %vm3192, %v3717, 0
        %3722 = vmatprep.subr.bf16.mxu0 0
        %3723 = vmatpush1.bf16.msra.mxu0 %v3084
        %3724 = vmatprep.subr.bf16.mxu0 0
        %3725 = vmatpush1.bf16.msra.mxu0 0
        %3726 = vmatprep.subr.bf16.mxu0 0
        %3727 = vmatpush1.bf16.msra.mxu0 0
        %3728 = vmatprep.subr.bf16.mxu0 0
        %3729 = vmatpush1.bf16.msra.mxu0 0
        %3730 = vmatprep.subr.bf16.mxu0 0
        %3731 = vmatpush1.bf16.msra.mxu0 0
        %3732 = vmatprep.subr.bf16.mxu0 0
        %3733 = vmatpush1.bf16.msra.mxu0 0
        %3734 = vmatprep.subr.bf16.mxu0 0
        %3735 = vmatpush1.bf16.msra.mxu0 0
        %3736 = vmatprep.subr.bf16.mxu0 0
        %3737 = vmatpush1.bf16.msra.mxu0 0
        %3738 = vmatprep.subr.bf16.mxu0 0
        %3739 = vmatpush1.bf16.msra.mxu0 0
        %3740 = vmatprep.subr.bf16.mxu0 0
        %3741 = vmatpush1.bf16.msra.mxu0 0
        %3742 = vmatprep.subr.bf16.mxu0 0
        %3743 = vmatpush1.bf16.msra.mxu0 0
        %3744 = vmatprep.subr.bf16.mxu0 0
        %3745 = vmatpush1.bf16.msra.mxu0 0
        %3746 = vmatprep.subr.bf16.mxu0 0
        %3747 = vmatpush1.bf16.msra.mxu0 0
        %3748 = vmatprep.subr.bf16.mxu0 0
        %3749 = vmatpush1.bf16.msra.mxu0 0
        %3750 = vmatprep.subr.bf16.mxu0 0
        %3751 = vmatpush1.bf16.msra.mxu0 0
        %3752 = vmatprep.subr.bf16.mxu0 0
        %3753 = vmatpush1.bf16.msra.mxu0 0
        %3754 = vmatprep.mubr.bf16.mxu0 0
        %3755 = vmatmul.mubr.bf16.gmra.mrb[0].mxu0 %v3720
        %v3756 = vpop.f32.mrb[0].mxu0
        %v3757 = vadd.f32 0.0, %v3756
        %v3758 = vpop.f32.mrb[0].mxu0
        %v3759 = vpop.f32.mrb[0].mxu0
        %v3760 = vadd.f32 0.0, %v3759
        %v3761 = vpop.f32.mrb[0].mxu0
        %3762 = vdwg.mxu0
        %v3764 = vsel %vm3192, %v3718, 0
        %3766 = vmatprep.subr.bf16.mxu0 0
        %3767 = vmatpush1.bf16.msra.mxu0 %v3093
        %3768 = vmatprep.subr.bf16.mxu0 0
        %3769 = vmatpush1.bf16.msra.mxu0 0
        %3770 = vmatprep.subr.bf16.mxu0 0
        %3771 = vmatpush1.bf16.msra.mxu0 0
        %3772 = vmatprep.subr.bf16.mxu0 0
        %3773 = vmatpush1.bf16.msra.mxu0 0
        %3774 = vmatprep.subr.bf16.mxu0 0
        %3775 = vmatpush1.bf16.msra.mxu0 0
        %3776 = vmatprep.subr.bf16.mxu0 0
        %3777 = vmatpush1.bf16.msra.mxu0 0
        %3778 = vmatprep.subr.bf16.mxu0 0
        %3779 = vmatpush1.bf16.msra.mxu0 0
        %3780 = vmatprep.subr.bf16.mxu0 0
        %3781 = vmatpush1.bf16.msra.mxu0 0
        %3782 = vmatprep.subr.bf16.mxu0 0
        %3783 = vmatpush1.bf16.msra.mxu0 0
        %3784 = vmatprep.subr.bf16.mxu0 0
        %3785 = vmatpush1.bf16.msra.mxu0 0
        %3786 = vmatprep.subr.bf16.mxu0 0
        %3787 = vmatpush1.bf16.msra.mxu0 0
        %3788 = vmatprep.subr.bf16.mxu0 0
        %3789 = vmatpush1.bf16.msra.mxu0 0
        %3790 = vmatprep.subr.bf16.mxu0 0
        %3791 = vmatpush1.bf16.msra.mxu0 0
        %3792 = vmatprep.subr.bf16.mxu0 0
        %3793 = vmatpush1.bf16.msra.mxu0 0
        %3794 = vmatprep.subr.bf16.mxu0 0
        %3795 = vmatpush1.bf16.msra.mxu0 0
        %3796 = vmatprep.subr.bf16.mxu0 0
        %3797 = vmatpush1.bf16.msra.mxu0 0
        %3798 = vmatprep.mubr.bf16.mxu0 0
        %3799 = vmatmul.mubr.bf16.gmra.mrb[0].mxu0 %v3764
        %v3800 = vpop.f32.mrb[0].mxu0
        %v3801 = vadd.f32 0.0, %v3800
        %v3802 = vpop.f32.mrb[0].mxu0
        %v3803 = vpop.f32.mrb[0].mxu0
        %v3804 = vadd.f32 0.0, %v3803
        %v3805 = vpop.f32.mrb[0].mxu0
        %3806 = vdwg.mxu0
        %v3807 = vpack.c.bf16 %v3760, %v3757
        %v3808 = vpack.c.bf16 %v3804, %v3801
        %3810 = vrot.lane.b32.xlu0 %v3078, 64
        %v3811 = vpop.permute.xlu0 %3810
        %3813 = vrot.lane.b32.xlu0 %v3081, 64
        %v3814 = vpop.permute.xlu0 %3813
        %v3816 = vsel %vm3097, %v3811, 0
        %v3819 = vsel %vm3097, %v3814, 0
        %3821 = vmatprep.subr.bf16.mxu0 0
        %3822 = vmatpush1.bf16.xpose.msra.mxu0 %v3819
        %3823 = vmatprep.subr.bf16.mxu0 0
        %3824 = vmatpush1.bf16.xpose.msra.mxu0 0
        %3825 = vmatprep.subr.bf16.mxu0 0
        %3826 = vmatpush1.bf16.xpose.msra.mxu0 0
        %3827 = vmatprep.subr.bf16.mxu0 0
        %3828 = vmatpush1.bf16.xpose.msra.mxu0 0
        %3829 = vmatprep.subr.bf16.mxu0 0
        %3830 = vmatpush1.bf16.xpose.msra.mxu0 0
        %3831 = vmatprep.subr.bf16.mxu0 0
        %3832 = vmatpush1.bf16.xpose.msra.mxu0 0
        %3833 = vmatprep.subr.bf16.mxu0 0
        %3834 = vmatpush1.bf16.xpose.msra.mxu0 0
        %3835 = vmatprep.subr.bf16.mxu0 0
        %3836 = vmatpush1.bf16.xpose.msra.mxu0 0
        %3837 = vmatprep.subr.bf16.mxu0 0
        %3838 = vmatpush1.bf16.xpose.msra.mxu0 0
        %3839 = vmatprep.subr.bf16.mxu0 0
        %3840 = vmatpush1.bf16.xpose.msra.mxu0 0
        %3841 = vmatprep.subr.bf16.mxu0 0
        %3842 = vmatpush1.bf16.xpose.msra.mxu0 0
        %3843 = vmatprep.subr.bf16.mxu0 0
        %3844 = vmatpush1.bf16.xpose.msra.mxu0 0
        %3845 = vmatprep.subr.bf16.mxu0 0
        %3846 = vmatpush1.bf16.xpose.msra.mxu0 0
        %3847 = vmatprep.subr.bf16.mxu0 0
        %3848 = vmatpush1.bf16.xpose.msra.mxu0 0
        %3849 = vmatprep.subr.bf16.mxu0 0
        %3850 = vmatpush1.bf16.xpose.msra.mxu0 0
        %3851 = vmatprep.subr.bf16.mxu0 0
        %3852 = vmatpush1.bf16.xpose.msra.mxu0 0
        %3853 = vmatprep.mubr.bf16.mxu0 0
        %3854 = vmatmul.mubr.bf16.gmra.mrb[0].mxu0 %v3816
        %v3855 = vpop.f32.mrb[0].mxu0
        %v3856 = vadd.f32 %v3095, %v3855
        %v3857 = vpop.f32.mrb[0].mxu0
        %v3858 = vpop.f32.mrb[0].mxu0
        %v3859 = vadd.f32 %v3096, %v3858
        %v3860 = vpop.f32.mrb[0].mxu0
        %3861 = vdwg.mxu0
        %3863 = vrot.lane.b32.xlu0 %v3087, 64
        %v3864 = vpop.permute.xlu0 %3863
        %3866 = vrot.lane.b32.xlu0 %v3090, 64
        %v3867 = vpop.permute.xlu0 %3866
        %v3869 = vsel %vm3097, %v3864, 0
        %v3872 = vsel %vm3097, %v3867, 0
        %3874 = vmatprep.subr.bf16.mxu0 0
        %3875 = vmatpush1.bf16.xpose.msra.mxu0 %v3872
        %3876 = vmatprep.subr.bf16.mxu0 0
        %3877 = vmatpush1.bf16.xpose.msra.mxu0 0
        %3878 = vmatprep.subr.bf16.mxu0 0
        %3879 = vmatpush1.bf16.xpose.msra.mxu0 0
        %3880 = vmatprep.subr.bf16.mxu0 0
        %3881 = vmatpush1.bf16.xpose.msra.mxu0 0
        %3882 = vmatprep.subr.bf16.mxu0 0
        %3883 = vmatpush1.bf16.xpose.msra.mxu0 0
        %3884 = vmatprep.subr.bf16.mxu0 0
        %3885 = vmatpush1.bf16.xpose.msra.mxu0 0
        %3886 = vmatprep.subr.bf16.mxu0 0
        %3887 = vmatpush1.bf16.xpose.msra.mxu0 0
        %3888 = vmatprep.subr.bf16.mxu0 0
        %3889 = vmatpush1.bf16.xpose.msra.mxu0 0
        %3890 = vmatprep.subr.bf16.mxu0 0
        %3891 = vmatpush1.bf16.xpose.msra.mxu0 0
        %3892 = vmatprep.subr.bf16.mxu0 0
        %3893 = vmatpush1.bf16.xpose.msra.mxu0 0
        %3894 = vmatprep.subr.bf16.mxu0 0
        %3895 = vmatpush1.bf16.xpose.msra.mxu0 0
        %3896 = vmatprep.subr.bf16.mxu0 0
        %3897 = vmatpush1.bf16.xpose.msra.mxu0 0
        %3898 = vmatprep.subr.bf16.mxu0 0
        %3899 = vmatpush1.bf16.xpose.msra.mxu0 0
        %3900 = vmatprep.subr.bf16.mxu0 0
        %3901 = vmatpush1.bf16.xpose.msra.mxu0 0
        %3902 = vmatprep.subr.bf16.mxu0 0
        %3903 = vmatpush1.bf16.xpose.msra.mxu0 0
        %3904 = vmatprep.subr.bf16.mxu0 0
        %3905 = vmatpush1.bf16.xpose.msra.mxu0 0
        %3906 = vmatprep.mubr.bf16.mxu0 0
        %3907 = vmatmul.mubr.bf16.gmra.mrb[0].mxu0 %v3869
        %v3908 = vpop.f32.mrb[0].mxu0
        %v3909 = vadd.f32 %v3095, %v3908
        %v3910 = vpop.f32.mrb[0].mxu0
        %v3911 = vpop.f32.mrb[0].mxu0
        %v3912 = vadd.f32 %v3096, %v3911
        %v3913 = vpop.f32.mrb[0].mxu0
        %3914 = vdwg.mxu0
        %v3915 = vsel %vm3192, %v3856, -inf
        %3916 = vmax.xlane.f32.xlu0 %v3915
        %v3917 = vpop.xlane.xlu0 %3916
        %v3918 = vsel %vm3192, %v3859, -inf
        %3919 = vmax.xlane.f32.xlu0 %v3918
        %v3920 = vpop.xlane.xlu0 %3919
        %v3921 = vsel %vm3192, %v3909, -inf
        %3922 = vmax.xlane.f32.xlu0 %v3921
        %v3923 = vpop.xlane.xlu0 %3922
        %v3924 = vsel %vm3192, %v3912, -inf
        %3925 = vmax.xlane.f32.xlu0 %v3924
        %v3926 = vpop.xlane.xlu0 %3925
        %v3927 = vsub.f32 %v3856, %v3917
        %v3928 = vsub.f32 %v3859, %v3920
        %v3929 = vsub.f32 %v3909, %v3923
        %v3930 = vsub.f32 %v3912, %v3926
        %v3931 = vmul.f32 %v3927, 1.442695
        %v3932 = vpow.pop %v3931
        %v3933 = vmul.f32 %v3928, 1.442695
        %v3934 = vpow.pop %v3933
        %v3935 = vmul.f32 %v3929, 1.442695
        %v3936 = vpow.pop %v3935
        %v3937 = vmul.f32 %v3930, 1.442695
        %v3938 = vpow.pop %v3937
        %v3939 = vsel %vm3192, %v3932, 0.0
        %3940 = vadd.xlane.f32.xlu0 %v3939
        %v3941 = vpop.xlane.xlu0 %3940
        %v3942 = vsel %vm3192, %v3934, 0.0
        %3943 = vadd.xlane.f32.xlu0 %v3942
        %v3944 = vpop.xlane.xlu0 %3943
        %v3945 = vsel %vm3192, %v3936, 0.0
        %3946 = vadd.xlane.f32.xlu0 %v3945
        %v3947 = vpop.xlane.xlu0 %3946
        %v3948 = vsel %vm3192, %v3938, 0.0
        %3949 = vadd.xlane.f32.xlu0 %v3948
        %v3950 = vpop.xlane.xlu0 %3949
        %v3951 = vrcp.pop %v3941
        %v3952 = vrcp.pop %v3944
        %v3953 = vrcp.pop %v3947
        %v3954 = vrcp.pop %v3950
        %v3955 = vmul.f32 %v3932, %v3951
        %v3956 = vmul.f32 %v3934, %v3952
        %v3957 = vmul.f32 %v3936, %v3953
        %v3958 = vmul.f32 %v3938, %v3954
        %v3959 = vpack.c.bf16 %v3956, %v3955
        %v3960 = vpack.c.bf16 %v3958, %v3957
        %3962 = vrot.lane.b32.xlu0 %v3084, 64
        %v3963 = vpop.permute.xlu0 %3962
        %v3966 = vsel %vm3192, %v3959, 0
        %3968 = vmatprep.subr.bf16.mxu0 0
        %3969 = vmatpush1.bf16.msra.mxu0 %v3963
        %3970 = vmatprep.subr.bf16.mxu0 0
        %3971 = vmatpush1.bf16.msra.mxu0 0
        %3972 = vmatprep.subr.bf16.mxu0 0
        %3973 = vmatpush1.bf16.msra.mxu0 0
        %3974 = vmatprep.subr.bf16.mxu0 0
        %3975 = vmatpush1.bf16.msra.mxu0 0
        %3976 = vmatprep.subr.bf16.mxu0 0
        %3977 = vmatpush1.bf16.msra.mxu0 0
        %3978 = vmatprep.subr.bf16.mxu0 0
        %3979 = vmatpush1.bf16.msra.mxu0 0
        %3980 = vmatprep.subr.bf16.mxu0 0
        %3981 = vmatpush1.bf16.msra.mxu0 0
        %3982 = vmatprep.subr.bf16.mxu0 0
        %3983 = vmatpush1.bf16.msra.mxu0 0
        %3984 = vmatprep.subr.bf16.mxu0 0
        %3985 = vmatpush1.bf16.msra.mxu0 0
        %3986 = vmatprep.subr.bf16.mxu0 0
        %3987 = vmatpush1.bf16.msra.mxu0 0
        %3988 = vmatprep.subr.bf16.mxu0 0
        %3989 = vmatpush1.bf16.msra.mxu0 0
        %3990 = vmatprep.subr.bf16.mxu0 0
        %3991 = vmatpush1.bf16.msra.mxu0 0
        %3992 = vmatprep.subr.bf16.mxu0 0
        %3993 = vmatpush1.bf16.msra.mxu0 0
        %3994 = vmatprep.subr.bf16.mxu0 0
        %3995 = vmatpush1.bf16.msra.mxu0 0
        %3996 = vmatprep.subr.bf16.mxu0 0
        %3997 = vmatpush1.bf16.msra.mxu0 0
        %3998 = vmatprep.subr.bf16.mxu0 0
        %3999 = vmatpush1.bf16.msra.mxu0 0
        %4000 = vmatprep.mubr.bf16.mxu0 0
        %4001 = vmatmul.mubr.bf16.gmra.mrb[0].mxu0 %v3966
        %v4002 = vpop.f32.mrb[0].mxu0
        %v4003 = vadd.f32 0.0, %v4002
        %v4004 = vpop.f32.mrb[0].mxu0
        %v4005 = vpop.f32.mrb[0].mxu0
        %v4006 = vadd.f32 0.0, %v4005
        %v4007 = vpop.f32.mrb[0].mxu0
        %4008 = vdwg.mxu0
        %4010 = vrot.lane.b32.xlu0 %v3093, 64
        %v4011 = vpop.permute.xlu0 %4010
        %v4014 = vsel %vm3192, %v3960, 0
        %4016 = vmatprep.subr.bf16.mxu0 0
        %4017 = vmatpush1.bf16.msra.mxu0 %v4011
        %4018 = vmatprep.subr.bf16.mxu0 0
        %4019 = vmatpush1.bf16.msra.mxu0 0
        %4020 = vmatprep.subr.bf16.mxu0 0
        %4021 = vmatpush1.bf16.msra.mxu0 0
        %4022 = vmatprep.subr.bf16.mxu0 0
        %4023 = vmatpush1.bf16.msra.mxu0 0
        %4024 = vmatprep.subr.bf16.mxu0 0
        %4025 = vmatpush1.bf16.msra.mxu0 0
        %4026 = vmatprep.subr.bf16.mxu0 0
        %4027 = vmatpush1.bf16.msra.mxu0 0
        %4028 = vmatprep.subr.bf16.mxu0 0
        %4029 = vmatpush1.bf16.msra.mxu0 0
        %4030 = vmatprep.subr.bf16.mxu0 0
        %4031 = vmatpush1.bf16.msra.mxu0 0
        %4032 = vmatprep.subr.bf16.mxu0 0
        %4033 = vmatpush1.bf16.msra.mxu0 0
        %4034 = vmatprep.subr.bf16.mxu0 0
        %4035 = vmatpush1.bf16.msra.mxu0 0
        %4036 = vmatprep.subr.bf16.mxu0 0
        %4037 = vmatpush1.bf16.msra.mxu0 0
        %4038 = vmatprep.subr.bf16.mxu0 0
        %4039 = vmatpush1.bf16.msra.mxu0 0
        %4040 = vmatprep.subr.bf16.mxu0 0
        %4041 = vmatpush1.bf16.msra.mxu0 0
        %4042 = vmatprep.subr.bf16.mxu0 0
        %4043 = vmatpush1.bf16.msra.mxu0 0
        %4044 = vmatprep.subr.bf16.mxu0 0
        %4045 = vmatpush1.bf16.msra.mxu0 0
        %4046 = vmatprep.subr.bf16.mxu0 0
        %4047 = vmatpush1.bf16.msra.mxu0 0
        %4048 = vmatprep.mubr.bf16.mxu0 0
        %4049 = vmatmul.mubr.bf16.gmra.mrb[0].mxu0 %v4014
        %v4050 = vpop.f32.mrb[0].mxu0
        %v4051 = vadd.f32 0.0, %v4050
        %v4052 = vpop.f32.mrb[0].mxu0
        %v4053 = vpop.f32.mrb[0].mxu0
        %v4054 = vadd.f32 0.0, %v4053
        %v4055 = vpop.f32.mrb[0].mxu0
        %4056 = vdwg.mxu0
        %v4057 = vpack.c.bf16 %v4006, %v4003
        %v4058 = vpack.c.bf16 %v4054, %v4051
        %v4060 = vsel %vm3097, %v3079, 0
        %v4063 = vsel %vm3097, %v3082, 0
        %4065 = vmatprep.subr.bf16.mxu0 0
        %4066 = vmatpush1.bf16.xpose.msra.mxu0 %v4063
        %4067 = vmatprep.subr.bf16.mxu0 0
        %4068 = vmatpush1.bf16.xpose.msra.mxu0 0
        %4069 = vmatprep.subr.bf16.mxu0 0
        %4070 = vmatpush1.bf16.xpose.msra.mxu0 0
        %4071 = vmatprep.subr.bf16.mxu0 0
        %4072 = vmatpush1.bf16.xpose.msra.mxu0 0
        %4073 = vmatprep.subr.bf16.mxu0 0
        %4074 = vmatpush1.bf16.xpose.msra.mxu0 0
        %4075 = vmatprep.subr.bf16.mxu0 0
        %4076 = vmatpush1.bf16.xpose.msra.mxu0 0
        %4077 = vmatprep.subr.bf16.mxu0 0
        %4078 = vmatpush1.bf16.xpose.msra.mxu0 0
        %4079 = vmatprep.subr.bf16.mxu0 0
        %4080 = vmatpush1.bf16.xpose.msra.mxu0 0
        %4081 = vmatprep.subr.bf16.mxu0 0
        %4082 = vmatpush1.bf16.xpose.msra.mxu0 0
        %4083 = vmatprep.subr.bf16.mxu0 0
        %4084 = vmatpush1.bf16.xpose.msra.mxu0 0
        %4085 = vmatprep.subr.bf16.mxu0 0
        %4086 = vmatpush1.bf16.xpose.msra.mxu0 0
        %4087 = vmatprep.subr.bf16.mxu0 0
        %4088 = vmatpush1.bf16.xpose.msra.mxu0 0
        %4089 = vmatprep.subr.bf16.mxu0 0
        %4090 = vmatpush1.bf16.xpose.msra.mxu0 0
        %4091 = vmatprep.subr.bf16.mxu0 0
        %4092 = vmatpush1.bf16.xpose.msra.mxu0 0
        %4093 = vmatprep.subr.bf16.mxu0 0
        %4094 = vmatpush1.bf16.xpose.msra.mxu0 0
        %4095 = vmatprep.subr.bf16.mxu0 0
        %4096 = vmatpush1.bf16.xpose.msra.mxu0 0
        %4097 = vmatprep.mubr.bf16.mxu0 0
        %4098 = vmatmul.mubr.bf16.gmra.mrb[0].mxu0 %v4060
        %v4099 = vpop.f32.mrb[0].mxu0
        %v4100 = vadd.f32 %v3095, %v4099
        %v4101 = vpop.f32.mrb[0].mxu0
        %v4102 = vpop.f32.mrb[0].mxu0
        %v4103 = vadd.f32 %v3096, %v4102
        %v4104 = vpop.f32.mrb[0].mxu0
        %4105 = vdwg.mxu0
        %v4107 = vsel %vm3097, %v3088, 0
        %v4110 = vsel %vm3097, %v3091, 0
        %4112 = vmatprep.subr.bf16.mxu0 0
        %4113 = vmatpush1.bf16.xpose.msra.mxu0 %v4110
        %4114 = vmatprep.subr.bf16.mxu0 0
        %4115 = vmatpush1.bf16.xpose.msra.mxu0 0
        %4116 = vmatprep.subr.bf16.mxu0 0
        %4117 = vmatpush1.bf16.xpose.msra.mxu0 0
        %4118 = vmatprep.subr.bf16.mxu0 0
        %4119 = vmatpush1.bf16.xpose.msra.mxu0 0
        %4120 = vmatprep.subr.bf16.mxu0 0
        %4121 = vmatpush1.bf16.xpose.msra.mxu0 0
        %4122 = vmatprep.subr.bf16.mxu0 0
        %4123 = vmatpush1.bf16.xpose.msra.mxu0 0
        %4124 = vmatprep.subr.bf16.mxu0 0
        %4125 = vmatpush1.bf16.xpose.msra.mxu0 0
        %4126 = vmatprep.subr.bf16.mxu0 0
        %4127 = vmatpush1.bf16.xpose.msra.mxu0 0
        %4128 = vmatprep.subr.bf16.mxu0 0
        %4129 = vmatpush1.bf16.xpose.msra.mxu0 0
        %4130 = vmatprep.subr.bf16.mxu0 0
        %4131 = vmatpush1.bf16.xpose.msra.mxu0 0
        %4132 = vmatprep.subr.bf16.mxu0 0
        %4133 = vmatpush1.bf16.xpose.msra.mxu0 0
        %4134 = vmatprep.subr.bf16.mxu0 0
        %4135 = vmatpush1.bf16.xpose.msra.mxu0 0
        %4136 = vmatprep.subr.bf16.mxu0 0
        %4137 = vmatpush1.bf16.xpose.msra.mxu0 0
        %4138 = vmatprep.subr.bf16.mxu0 0
        %4139 = vmatpush1.bf16.xpose.msra.mxu0 0
        %4140 = vmatprep.subr.bf16.mxu0 0
        %4141 = vmatpush1.bf16.xpose.msra.mxu0 0
        %4142 = vmatprep.subr.bf16.mxu0 0
        %4143 = vmatpush1.bf16.xpose.msra.mxu0 0
        %4144 = vmatprep.mubr.bf16.mxu0 0
        %4145 = vmatmul.mubr.bf16.gmra.mrb[0].mxu0 %v4107
        %v4146 = vpop.f32.mrb[0].mxu0
        %v4147 = vadd.f32 %v3095, %v4146
        %v4148 = vpop.f32.mrb[0].mxu0
        %v4149 = vpop.f32.mrb[0].mxu0
        %v4150 = vadd.f32 %v3096, %v4149
        %v4151 = vpop.f32.mrb[0].mxu0
        %4152 = vdwg.mxu0
        %v4153 = vsel %vm3192, %v4100, -inf
        %4154 = vmax.xlane.f32.xlu0 %v4153
        %v4155 = vpop.xlane.xlu0 %4154
        %v4156 = vsel %vm3192, %v4103, -inf
        %4157 = vmax.xlane.f32.xlu0 %v4156
        %v4158 = vpop.xlane.xlu0 %4157
        %v4159 = vsel %vm3192, %v4147, -inf
        %4160 = vmax.xlane.f32.xlu0 %v4159
        %v4161 = vpop.xlane.xlu0 %4160
        %v4162 = vsel %vm3192, %v4150, -inf
        %4163 = vmax.xlane.f32.xlu0 %v4162
        %v4164 = vpop.xlane.xlu0 %4163
        %v4165 = vsub.f32 %v4100, %v4155
        %v4166 = vsub.f32 %v4103, %v4158
        %v4167 = vsub.f32 %v4147, %v4161
        %v4168 = vsub.f32 %v4150, %v4164
        %v4169 = vmul.f32 %v4165, 1.442695
        %v4170 = vpow.pop %v4169
        %v4171 = vmul.f32 %v4166, 1.442695
        %v4172 = vpow.pop %v4171
        %v4173 = vmul.f32 %v4167, 1.442695
        %v4174 = vpow.pop %v4173
        %v4175 = vmul.f32 %v4168, 1.442695
        %v4176 = vpow.pop %v4175
        %v4177 = vsel %vm3192, %v4170, 0.0
        %4178 = vadd.xlane.f32.xlu0 %v4177
        %v4179 = vpop.xlane.xlu0 %4178
        %v4180 = vsel %vm3192, %v4172, 0.0
        %4181 = vadd.xlane.f32.xlu0 %v4180
        %v4182 = vpop.xlane.xlu0 %4181
        %v4183 = vsel %vm3192, %v4174, 0.0
        %4184 = vadd.xlane.f32.xlu0 %v4183
        %v4185 = vpop.xlane.xlu0 %4184
        %v4186 = vsel %vm3192, %v4176, 0.0
        %4187 = vadd.xlane.f32.xlu0 %v4186
        %v4188 = vpop.xlane.xlu0 %4187
        %v4189 = vrcp.pop %v4179
        %v4190 = vrcp.pop %v4182
        %v4191 = vrcp.pop %v4185
        %v4192 = vrcp.pop %v4188
        %v4193 = vmul.f32 %v4170, %v4189
        %v4194 = vmul.f32 %v4172, %v4190
        %v4195 = vmul.f32 %v4174, %v4191
        %v4196 = vmul.f32 %v4176, %v4192
        %v4197 = vpack.c.bf16 %v4194, %v4193
        %v4198 = vpack.c.bf16 %v4196, %v4195
        %v4200 = vsel %vm3192, %v4197, 0
        %4202 = vmatprep.subr.bf16.mxu0 0
        %4203 = vmatpush1.bf16.msra.mxu0 %v3085
        %4204 = vmatprep.subr.bf16.mxu0 0
        %4205 = vmatpush1.bf16.msra.mxu0 0
        %4206 = vmatprep.subr.bf16.mxu0 0
        %4207 = vmatpush1.bf16.msra.mxu0 0
        %4208 = vmatprep.subr.bf16.mxu0 0
        %4209 = vmatpush1.bf16.msra.mxu0 0
        %4210 = vmatprep.subr.bf16.mxu0 0
        %4211 = vmatpush1.bf16.msra.mxu0 0
        %4212 = vmatprep.subr.bf16.mxu0 0
        %4213 = vmatpush1.bf16.msra.mxu0 0
        %4214 = vmatprep.subr.bf16.mxu0 0
        %4215 = vmatpush1.bf16.msra.mxu0 0
        %4216 = vmatprep.subr.bf16.mxu0 0
        %4217 = vmatpush1.bf16.msra.mxu0 0
        %4218 = vmatprep.subr.bf16.mxu0 0
        %4219 = vmatpush1.bf16.msra.mxu0 0
        %4220 = vmatprep.subr.bf16.mxu0 0
        %4221 = vmatpush1.bf16.msra.mxu0 0
        %4222 = vmatprep.subr.bf16.mxu0 0
        %4223 = vmatpush1.bf16.msra.mxu0 0
        %4224 = vmatprep.subr.bf16.mxu0 0
        %4225 = vmatpush1.bf16.msra.mxu0 0
        %4226 = vmatprep.subr.bf16.mxu0 0
        %4227 = vmatpush1.bf16.msra.mxu0 0
        %4228 = vmatprep.subr.bf16.mxu0 0
        %4229 = vmatpush1.bf16.msra.mxu0 0
        %4230 = vmatprep.subr.bf16.mxu0 0
        %4231 = vmatpush1.bf16.msra.mxu0 0
        %4232 = vmatprep.subr.bf16.mxu0 0
        %4233 = vmatpush1.bf16.msra.mxu0 0
        %4234 = vmatprep.mubr.bf16.mxu0 0
        %4235 = vmatmul.mubr.bf16.gmra.mrb[0].mxu0 %v4200
        %v4236 = vpop.f32.mrb[0].mxu0
        %v4237 = vadd.f32 0.0, %v4236
        %v4238 = vpop.f32.mrb[0].mxu0
        %v4239 = vpop.f32.mrb[0].mxu0
        %v4240 = vadd.f32 0.0, %v4239
        %v4241 = vpop.f32.mrb[0].mxu0
        %4242 = vdwg.mxu0
        %v4244 = vsel %vm3192, %v4198, 0
        %4246 = vmatprep.subr.bf16.mxu0 0
        %4247 = vmatpush1.bf16.msra.mxu0 %v3094
        %4248 = vmatprep.subr.bf16.mxu0 0
        %4249 = vmatpush1.bf16.msra.mxu0 0
        %4250 = vmatprep.subr.bf16.mxu0 0
        %4251 = vmatpush1.bf16.msra.mxu0 0
        %4252 = vmatprep.subr.bf16.mxu0 0
        %4253 = vmatpush1.bf16.msra.mxu0 0
        %4254 = vmatprep.subr.bf16.mxu0 0
        %4255 = vmatpush1.bf16.msra.mxu0 0
        %4256 = vmatprep.subr.bf16.mxu0 0
        %4257 = vmatpush1.bf16.msra.mxu0 0
        %4258 = vmatprep.subr.bf16.mxu0 0
        %4259 = vmatpush1.bf16.msra.mxu0 0
        %4260 = vmatprep.subr.bf16.mxu0 0
        %4261 = vmatpush1.bf16.msra.mxu0 0
        %4262 = vmatprep.subr.bf16.mxu0 0
        %4263 = vmatpush1.bf16.msra.mxu0 0
        %4264 = vmatprep.subr.bf16.mxu0 0
        %4265 = vmatpush1.bf16.msra.mxu0 0
        %4266 = vmatprep.subr.bf16.mxu0 0
        %4267 = vmatpush1.bf16.msra.mxu0 0
        %4268 = vmatprep.subr.bf16.mxu0 0
        %4269 = vmatpush1.bf16.msra.mxu0 0
        %4270 = vmatprep.subr.bf16.mxu0 0
        %4271 = vmatpush1.bf16.msra.mxu0 0
        %4272 = vmatprep.subr.bf16.mxu0 0
        %4273 = vmatpush1.bf16.msra.mxu0 0
        %4274 = vmatprep.subr.bf16.mxu0 0
        %4275 = vmatpush1.bf16.msra.mxu0 0
        %4276 = vmatprep.subr.bf16.mxu0 0
        %4277 = vmatpush1.bf16.msra.mxu0 0
        %4278 = vmatprep.mubr.bf16.mxu0 0
        %4279 = vmatmul.mubr.bf16.gmra.mrb[0].mxu0 %v4244
        %v4280 = vpop.f32.mrb[0].mxu0
        %v4281 = vadd.f32 0.0, %v4280
        %v4282 = vpop.f32.mrb[0].mxu0
        %v4283 = vpop.f32.mrb[0].mxu0
        %v4284 = vadd.f32 0.0, %v4283
        %v4285 = vpop.f32.mrb[0].mxu0
        %4286 = vdwg.mxu0
        %v4287 = vpack.c.bf16 %v4240, %v4237
        %v4288 = vpack.c.bf16 %v4284, %v4281
        %4290 = vrot.lane.b32.xlu0 %v3079, 64
        %v4291 = vpop.permute.xlu0 %4290
        %4293 = vrot.lane.b32.xlu0 %v3082, 64
        %v4294 = vpop.permute.xlu0 %4293
        %v4296 = vsel %vm3097, %v4291, 0
        %v4299 = vsel %vm3097, %v4294, 0
        %4301 = vmatprep.subr.bf16.mxu0 0
        %4302 = vmatpush1.bf16.xpose.msra.mxu0 %v4299
        %4303 = vmatprep.subr.bf16.mxu0 0
        %4304 = vmatpush1.bf16.xpose.msra.mxu0 0
        %4305 = vmatprep.subr.bf16.mxu0 0
        %4306 = vmatpush1.bf16.xpose.msra.mxu0 0
        %4307 = vmatprep.subr.bf16.mxu0 0
        %4308 = vmatpush1.bf16.xpose.msra.mxu0 0
        %4309 = vmatprep.subr.bf16.mxu0 0
        %4310 = vmatpush1.bf16.xpose.msra.mxu0 0
        %4311 = vmatprep.subr.bf16.mxu0 0
        %4312 = vmatpush1.bf16.xpose.msra.mxu0 0
        %4313 = vmatprep.subr.bf16.mxu0 0
        %4314 = vmatpush1.bf16.xpose.msra.mxu0 0
        %4315 = vmatprep.subr.bf16.mxu0 0
        %4316 = vmatpush1.bf16.xpose.msra.mxu0 0
        %4317 = vmatprep.subr.bf16.mxu0 0
        %4318 = vmatpush1.bf16.xpose.msra.mxu0 0
        %4319 = vmatprep.subr.bf16.mxu0 0
        %4320 = vmatpush1.bf16.xpose.msra.mxu0 0
        %4321 = vmatprep.subr.bf16.mxu0 0
        %4322 = vmatpush1.bf16.xpose.msra.mxu0 0
        %4323 = vmatprep.subr.bf16.mxu0 0
        %4324 = vmatpush1.bf16.xpose.msra.mxu0 0
        %4325 = vmatprep.subr.bf16.mxu0 0
        %4326 = vmatpush1.bf16.xpose.msra.mxu0 0
        %4327 = vmatprep.subr.bf16.mxu0 0
        %4328 = vmatpush1.bf16.xpose.msra.mxu0 0
        %4329 = vmatprep.subr.bf16.mxu0 0
        %4330 = vmatpush1.bf16.xpose.msra.mxu0 0
        %4331 = vmatprep.subr.bf16.mxu0 0
        %4332 = vmatpush1.bf16.xpose.msra.mxu0 0
        %4333 = vmatprep.mubr.bf16.mxu0 0
        %4334 = vmatmul.mubr.bf16.gmra.mrb[0].mxu0 %v4296
        %v4335 = vpop.f32.mrb[0].mxu0
        %v4336 = vadd.f32 %v3095, %v4335
        %v4337 = vpop.f32.mrb[0].mxu0
        %v4338 = vpop.f32.mrb[0].mxu0
        %v4339 = vadd.f32 %v3096, %v4338
        %v4340 = vpop.f32.mrb[0].mxu0
        %4341 = vdwg.mxu0
        %4343 = vrot.lane.b32.xlu0 %v3088, 64
        %v4344 = vpop.permute.xlu0 %4343
        %4346 = vrot.lane.b32.xlu0 %v3091, 64
        %v4347 = vpop.permute.xlu0 %4346
        %v4349 = vsel %vm3097, %v4344, 0
        %v4352 = vsel %vm3097, %v4347, 0
        %4354 = vmatprep.subr.bf16.mxu0 0
        %4355 = vmatpush1.bf16.xpose.msra.mxu0 %v4352
        %4356 = vmatprep.subr.bf16.mxu0 0
        %4357 = vmatpush1.bf16.xpose.msra.mxu0 0
        %4358 = vmatprep.subr.bf16.mxu0 0
        %4359 = vmatpush1.bf16.xpose.msra.mxu0 0
        %4360 = vmatprep.subr.bf16.mxu0 0
        %4361 = vmatpush1.bf16.xpose.msra.mxu0 0
        %4362 = vmatprep.subr.bf16.mxu0 0
        %4363 = vmatpush1.bf16.xpose.msra.mxu0 0
        %4364 = vmatprep.subr.bf16.mxu0 0
        %4365 = vmatpush1.bf16.xpose.msra.mxu0 0
        %4366 = vmatprep.subr.bf16.mxu0 0
        %4367 = vmatpush1.bf16.xpose.msra.mxu0 0
        %4368 = vmatprep.subr.bf16.mxu0 0
        %4369 = vmatpush1.bf16.xpose.msra.mxu0 0
        %4370 = vmatprep.subr.bf16.mxu0 0
        %4371 = vmatpush1.bf16.xpose.msra.mxu0 0
        %4372 = vmatprep.subr.bf16.mxu0 0
        %4373 = vmatpush1.bf16.xpose.msra.mxu0 0
        %4374 = vmatprep.subr.bf16.mxu0 0
        %4375 = vmatpush1.bf16.xpose.msra.mxu0 0
        %4376 = vmatprep.subr.bf16.mxu0 0
        %4377 = vmatpush1.bf16.xpose.msra.mxu0 0
        %4378 = vmatprep.subr.bf16.mxu0 0
        %4379 = vmatpush1.bf16.xpose.msra.mxu0 0
        %4380 = vmatprep.subr.bf16.mxu0 0
        %4381 = vmatpush1.bf16.xpose.msra.mxu0 0
        %4382 = vmatprep.subr.bf16.mxu0 0
        %4383 = vmatpush1.bf16.xpose.msra.mxu0 0
        %4384 = vmatprep.subr.bf16.mxu0 0
        %4385 = vmatpush1.bf16.xpose.msra.mxu0 0
        %4386 = vmatprep.mubr.bf16.mxu0 0
        %4387 = vmatmul.mubr.bf16.gmra.mrb[0].mxu0 %v4349
        %v4388 = vpop.f32.mrb[0].mxu0
        %v4389 = vadd.f32 %v3095, %v4388
        %v4390 = vpop.f32.mrb[0].mxu0
        %v4391 = vpop.f32.mrb[0].mxu0
        %v4392 = vadd.f32 %v3096, %v4391
        %v4393 = vpop.f32.mrb[0].mxu0
        %4394 = vdwg.mxu0
        %v4395 = vsel %vm3192, %v4336, -inf
        %4396 = vmax.xlane.f32.xlu0 %v4395
        %v4397 = vpop.xlane.xlu0 %4396
        %v4398 = vsel %vm3192, %v4339, -inf
        %4399 = vmax.xlane.f32.xlu0 %v4398
        %v4400 = vpop.xlane.xlu0 %4399
        %v4401 = vsel %vm3192, %v4389, -inf
        %4402 = vmax.xlane.f32.xlu0 %v4401
        %v4403 = vpop.xlane.xlu0 %4402
        %v4404 = vsel %vm3192, %v4392, -inf
        %4405 = vmax.xlane.f32.xlu0 %v4404
        %v4406 = vpop.xlane.xlu0 %4405
        %v4407 = vsub.f32 %v4336, %v4397
        %v4408 = vsub.f32 %v4339, %v4400
        %v4409 = vsub.f32 %v4389, %v4403
        %v4410 = vsub.f32 %v4392, %v4406
        %v4411 = vmul.f32 %v4407, 1.442695
        %v4412 = vpow.pop %v4411
        %v4413 = vmul.f32 %v4408, 1.442695
        %v4414 = vpow.pop %v4413
        %v4415 = vmul.f32 %v4409, 1.442695
        %v4416 = vpow.pop %v4415
        %v4417 = vmul.f32 %v4410, 1.442695
        %v4418 = vpow.pop %v4417
        %v4419 = vsel %vm3192, %v4412, 0.0
        %4420 = vadd.xlane.f32.xlu0 %v4419
        %v4421 = vpop.xlane.xlu0 %4420
        %v4422 = vsel %vm3192, %v4414, 0.0
        %4423 = vadd.xlane.f32.xlu0 %v4422
        %v4424 = vpop.xlane.xlu0 %4423
        %v4425 = vsel %vm3192, %v4416, 0.0
        %4426 = vadd.xlane.f32.xlu0 %v4425
        %v4427 = vpop.xlane.xlu0 %4426
        %v4428 = vsel %vm3192, %v4418, 0.0
        %4429 = vadd.xlane.f32.xlu0 %v4428
        %v4430 = vpop.xlane.xlu0 %4429
        %v4431 = vrcp.pop %v4421
        %v4432 = vrcp.pop %v4424
        %v4433 = vrcp.pop %v4427
        %v4434 = vrcp.pop %v4430
        %v4435 = vmul.f32 %v4412, %v4431
        %v4436 = vmul.f32 %v4414, %v4432
        %v4437 = vmul.f32 %v4416, %v4433
        %v4438 = vmul.f32 %v4418, %v4434
        %v4439 = vpack.c.bf16 %v4436, %v4435
        %v4440 = vpack.c.bf16 %v4438, %v4437
        %4442 = vrot.lane.b32.xlu0 %v3085, 64
        %v4443 = vpop.permute.xlu0 %4442
        %v4446 = vsel %vm3192, %v4439, 0
        %4448 = vmatprep.subr.bf16.mxu0 0
        %4449 = vmatpush1.bf16.msra.mxu0 %v4443
        %4450 = vmatprep.subr.bf16.mxu0 0
        %4451 = vmatpush1.bf16.msra.mxu0 0
        %4452 = vmatprep.subr.bf16.mxu0 0
        %4453 = vmatpush1.bf16.msra.mxu0 0
        %4454 = vmatprep.subr.bf16.mxu0 0
        %4455 = vmatpush1.bf16.msra.mxu0 0
        %4456 = vmatprep.subr.bf16.mxu0 0
        %4457 = vmatpush1.bf16.msra.mxu0 0
        %4458 = vmatprep.subr.bf16.mxu0 0
        %4459 = vmatpush1.bf16.msra.mxu0 0
        %4460 = vmatprep.subr.bf16.mxu0 0
        %4461 = vmatpush1.bf16.msra.mxu0 0
        %4462 = vmatprep.subr.bf16.mxu0 0
        %4463 = vmatpush1.bf16.msra.mxu0 0
        %4464 = vmatprep.subr.bf16.mxu0 0
        %4465 = vmatpush1.bf16.msra.mxu0 0
        %4466 = vmatprep.subr.bf16.mxu0 0
        %4467 = vmatpush1.bf16.msra.mxu0 0
        %4468 = vmatprep.subr.bf16.mxu0 0
        %4469 = vmatpush1.bf16.msra.mxu0 0
        %4470 = vmatprep.subr.bf16.mxu0 0
        %4471 = vmatpush1.bf16.msra.mxu0 0
        %4472 = vmatprep.subr.bf16.mxu0 0
        %4473 = vmatpush1.bf16.msra.mxu0 0
        %4474 = vmatprep.subr.bf16.mxu0 0
        %4475 = vmatpush1.bf16.msra.mxu0 0
        %4476 = vmatprep.subr.bf16.mxu0 0
        %4477 = vmatpush1.bf16.msra.mxu0 0
        %4478 = vmatprep.subr.bf16.mxu0 0
        %4479 = vmatpush1.bf16.msra.mxu0 0
        %4480 = vmatprep.mubr.bf16.mxu0 0
        %4481 = vmatmul.mubr.bf16.gmra.mrb[0].mxu0 %v4446
        %v4482 = vpop.f32.mrb[0].mxu0
        %v4483 = vadd.f32 0.0, %v4482
        %v4484 = vpop.f32.mrb[0].mxu0
        %v4485 = vpop.f32.mrb[0].mxu0
        %v4486 = vadd.f32 0.0, %v4485
        %v4487 = vpop.f32.mrb[0].mxu0
        %4488 = vdwg.mxu0
        %4490 = vrot.lane.b32.xlu0 %v3094, 64
        %v4491 = vpop.permute.xlu0 %4490
        %v4494 = vsel %vm3192, %v4440, 0
        %4496 = vmatprep.subr.bf16.mxu0 0
        %4497 = vmatpush1.bf16.msra.mxu0 %v4491
        %4498 = vmatprep.subr.bf16.mxu0 0
        %4499 = vmatpush1.bf16.msra.mxu0 0
        %4500 = vmatprep.subr.bf16.mxu0 0
        %4501 = vmatpush1.bf16.msra.mxu0 0
        %4502 = vmatprep.subr.bf16.mxu0 0
        %4503 = vmatpush1.bf16.msra.mxu0 0
        %4504 = vmatprep.subr.bf16.mxu0 0
        %4505 = vmatpush1.bf16.msra.mxu0 0
        %4506 = vmatprep.subr.bf16.mxu0 0
        %4507 = vmatpush1.bf16.msra.mxu0 0
        %4508 = vmatprep.subr.bf16.mxu0 0
        %4509 = vmatpush1.bf16.msra.mxu0 0
        %4510 = vmatprep.subr.bf16.mxu0 0
        %4511 = vmatpush1.bf16.msra.mxu0 0
        %4512 = vmatprep.subr.bf16.mxu0 0
        %4513 = vmatpush1.bf16.msra.mxu0 0
        %4514 = vmatprep.subr.bf16.mxu0 0
        %4515 = vmatpush1.bf16.msra.mxu0 0
        %4516 = vmatprep.subr.bf16.mxu0 0
        %4517 = vmatpush1.bf16.msra.mxu0 0
        %4518 = vmatprep.subr.bf16.mxu0 0
        %4519 = vmatpush1.bf16.msra.mxu0 0
        %4520 = vmatprep.subr.bf16.mxu0 0
        %4521 = vmatpush1.bf16.msra.mxu0 0
        %4522 = vmatprep.subr.bf16.mxu0 0
        %4523 = vmatpush1.bf16.msra.mxu0 0
        %4524 = vmatprep.subr.bf16.mxu0 0
        %4525 = vmatpush1.bf16.msra.mxu0 0
        %4526 = vmatprep.subr.bf16.mxu0 0
        %4527 = vmatpush1.bf16.msra.mxu0 0
        %4528 = vmatprep.mubr.bf16.mxu0 0
        %4529 = vmatmul.mubr.bf16.gmra.mrb[0].mxu0 %v4494
        %v4530 = vpop.f32.mrb[0].mxu0
        %v4531 = vadd.f32 0.0, %v4530
        %v4532 = vpop.f32.mrb[0].mxu0
        %v4533 = vpop.f32.mrb[0].mxu0
        %v4534 = vadd.f32 0.0, %v4533
        %v4535 = vpop.f32.mrb[0].mxu0
        %4536 = vdwg.mxu0
        %v4537 = vpack.c.bf16 %v4486, %v4483
        %v4538 = vpack.c.bf16 %v4534, %v4531
        %4541 = vrot.lane.b32.xlu0 %v3577, 64
        %v4542 = vpop.permute.xlu0 %4541
        %4543 = vrot.lane.b32.xlu0 %v3578, 64
        %v4544 = vpop.permute.xlu0 %4543
        %4547 = vrot.lane.b32.xlu0 %v4057, 64
        %v4548 = vpop.permute.xlu0 %4547
        %4549 = vrot.lane.b32.xlu0 %v4058, 64
        %v4550 = vpop.permute.xlu0 %4549
        %4553 = vrot.lane.b32.xlu0 %v4537, 64
        %v4554 = vpop.permute.xlu0 %4553
        %4555 = vrot.lane.b32.xlu0 %v4538, 64
        %v4556 = vpop.permute.xlu0 %4555
        %v4559 = vsel %vm3097, %v3327, %v4542
        %v4563 = vsel %vm3097, %v3328, %v4544
        %v4567 = vsel %vm3097, %v3807, %v4548
        %v4571 = vsel %vm3097, %v3808, %v4550
        %v4575 = vsel %vm3097, %v4287, %v4554
        %v4579 = vsel %vm3097, %v4288, %v4556
        %v4581 = vld [vmem:[%s832] sm:$0xff]
        %v4582 = vld [vmem:[%s832 + $0x8] sm:$0xf]
        %v4583 = vld [vmem:[%s832 + $0xc] sm:$0xff]
        %v4584 = vld [vmem:[%s832 + $0x14] sm:$0xf]
        %v4585 = vld [vmem:[%s832 + $0x18] sm:$0xff]
        %v4586 = vld [vmem:[%s832 + $0x20] sm:$0xf]
        %v4587 = vld [vmem:[%s832 + $0x24] sm:$0xff]
        %v4588 = vld [vmem:[%s832 + $0x2c] sm:$0xf]
        %v4589 = vld [vmem:[%s832 + $0x30] sm:$0xff]
        %v4590 = vld [vmem:[%s832 + $0x38] sm:$0xf]
        %v4591 = vld [vmem:[%s832 + $0x3c] sm:$0xff]
        %v4592 = vld [vmem:[%s832 + $0x44] sm:$0xf]
        %v4593 = vld [vmem:[%s832 + $0x48] sm:$0xff]
        %v4594 = vld [vmem:[%s832 + $0x50] sm:$0xf]
        %v4595 = vld [vmem:[%s832 + $0x54] sm:$0xff]
        %v4596 = vld [vmem:[%s832 + $0x5c] sm:$0xf]
        %v4597 = vld [vmem:[%s832 + $0x60] sm:$0xff]
        %v4598 = vld [vmem:[%s832 + $0x68] sm:$0xf]
        %v4599 = vld [vmem:[%s832 + $0x6c] sm:$0xff]
        %v4600 = vld [vmem:[%s832 + $0x74] sm:$0xf]
        %v4601 = vld [vmem:[%s832 + $0x78] sm:$0xff]
        %v4602 = vld [vmem:[%s832 + $0x80] sm:$0xf]
        %v4603 = vld [vmem:[%s832 + $0x84] sm:$0xff]
        %v4604 = vld [vmem:[%s832 + $0x8c] sm:$0xf]
        %v4605 = vld [vmem:[%s832 + $0x90] sm:$0xff]
        %v4606 = vld [vmem:[%s832 + $0x98] sm:$0xf]
        %v4607 = vld [vmem:[%s832 + $0x9c] sm:$0xff]
        %v4608 = vld [vmem:[%s832 + $0xa4] sm:$0xf]
        %v4609 = vld [vmem:[%s832 + $0xa8] sm:$0xff]
        %v4610 = vld [vmem:[%s832 + $0xb0] sm:$0xf]
        %v4611 = vld [vmem:[%s832 + $0xb4] sm:$0xff]
        %v4612 = vld [vmem:[%s832 + $0xbc] sm:$0xf]
        %v4613 = vld [vmem:[%s832 + $0xc0] sm:$0xff]
        %v4614 = vld [vmem:[%s832 + $0xc8] sm:$0xf]
        %v4615 = vld [vmem:[%s832 + $0xcc] sm:$0xff]
        %v4616 = vld [vmem:[%s832 + $0xd4] sm:$0xf]
        %v4617 = vld [vmem:[%s832 + $0xd8] sm:$0xff]
        %v4618 = vld [vmem:[%s832 + $0xe0] sm:$0xf]
        %v4619 = vld [vmem:[%s832 + $0xe4] sm:$0xff]
        %v4620 = vld [vmem:[%s832 + $0xec] sm:$0xf]
        %v4621 = vld [vmem:[%s832 + $0xf0] sm:$0xff]
        %v4622 = vld [vmem:[%s832 + $0xf8] sm:$0xf]
        %v4623 = vld [vmem:[%s832 + $0xfc] sm:$0xff]
        %v4624 = vld [vmem:[%s832 + $0x104] sm:$0xf]
        %v4625 = vld [vmem:[%s832 + $0x108] sm:$0xff]
        %v4626 = vld [vmem:[%s832 + $0x110] sm:$0xf]
        %v4627 = vld [vmem:[%s832 + $0x114] sm:$0xff]
        %v4628 = vld [vmem:[%s832 + $0x11c] sm:$0xf]
        %v4629 = vld [vmem:[%s832 + $0x120] sm:$0xff]
        %v4630 = vld [vmem:[%s832 + $0x128] sm:$0xf]
        %v4631 = vld [vmem:[%s832 + $0x12c] sm:$0xff]
        %v4632 = vld [vmem:[%s832 + $0x134] sm:$0xf]
        %v4633 = vld [vmem:[%s832 + $0x138] sm:$0xff]
        %v4634 = vld [vmem:[%s832 + $0x140] sm:$0xf]
        %v4635 = vld [vmem:[%s832 + $0x144] sm:$0xff]
        %v4636 = vld [vmem:[%s832 + $0x14c] sm:$0xf]
        %v4637 = vld [vmem:[%s832 + $0x150] sm:$0xff]
        %v4638 = vld [vmem:[%s832 + $0x158] sm:$0xf]
        %v4639 = vld [vmem:[%s832 + $0x15c] sm:$0xff]
        %v4640 = vld [vmem:[%s832 + $0x164] sm:$0xf]
        %v4641 = vld [vmem:[%s832 + $0x168] sm:$0xff]
        %v4642 = vld [vmem:[%s832 + $0x170] sm:$0xf]
        %v4643 = vld [vmem:[%s832 + $0x174] sm:$0xff]
        %v4644 = vld [vmem:[%s832 + $0x17c] sm:$0xf]
        %v4645 = vld [vmem:[%s832 + $0x180] sm:$0xff]
        %v4646 = vld [vmem:[%s832 + $0x188] sm:$0xf]
        %v4647 = vld [vmem:[%s832 + $0x18c] sm:$0xff]
        %v4648 = vld [vmem:[%s832 + $0x194] sm:$0xf]
        %v4649 = vld [vmem:[%s832 + $0x198] sm:$0xff]
        %v4650 = vld [vmem:[%s832 + $0x1a0] sm:$0xf]
        %v4651 = vld [vmem:[%s832 + $0x1a4] sm:$0xff]
        %v4652 = vld [vmem:[%s832 + $0x1ac] sm:$0xf]
        %v4653 = vld [vmem:[%s832 + $0x1b0] sm:$0xff]
        %v4654 = vld [vmem:[%s832 + $0x1b8] sm:$0xf]
        %v4655 = vld [vmem:[%s832 + $0x1bc] sm:$0xff]
        %v4656 = vld [vmem:[%s832 + $0x1c4] sm:$0xf]
        %v4657 = vld [vmem:[%s832 + $0x1c8] sm:$0xff]
        %v4658 = vld [vmem:[%s832 + $0x1d0] sm:$0xf]
        %v4659 = vld [vmem:[%s832 + $0x1d4] sm:$0xff]
        %v4660 = vld [vmem:[%s832 + $0x1dc] sm:$0xf]
        %v4661 = vld [vmem:[%s832 + $0x1e0] sm:$0xff]
        %v4662 = vld [vmem:[%s832 + $0x1e8] sm:$0xf]
        %v4663 = vld [vmem:[%s832 + $0x1ec] sm:$0xff]
        %v4664 = vld [vmem:[%s832 + $0x1f4] sm:$0xf]
        %v4665 = vld [vmem:[%s832 + $0x1f8] sm:$0xff]
        %v4666 = vld [vmem:[%s832 + $0x200] sm:$0xf]
        %v4667 = vld [vmem:[%s832 + $0x204] sm:$0xff]
        %v4668 = vld [vmem:[%s832 + $0x20c] sm:$0xf]
        %v4669 = vld [vmem:[%s832 + $0x210] sm:$0xff]
        %v4670 = vld [vmem:[%s832 + $0x218] sm:$0xf]
        %v4671 = vld [vmem:[%s832 + $0x21c] sm:$0xff]
        %v4672 = vld [vmem:[%s832 + $0x224] sm:$0xf]
        %v4673 = vld [vmem:[%s832 + $0x228] sm:$0xff]
        %v4674 = vld [vmem:[%s832 + $0x230] sm:$0xf]
        %v4675 = vld [vmem:[%s832 + $0x234] sm:$0xff]
        %v4676 = vld [vmem:[%s832 + $0x23c] sm:$0xf]
        %v4677 = vld [vmem:[%s841] sm:$0x7]
        %v4679 = vlaneseq
        %v4680 = vshrl.u32 %v4679, 7
        %v4681 = vsub.s32 0, %v4680
        %v4682 = vrot.slane %v4677, %v4681
        %v4683 = vlaneseq
        %v4684 = vshrl.u32 %v4683, 7
        %v4685 = vsub.s32 1, %v4684
        %v4686 = vrot.slane %v4677, %v4685
        %v4687 = vlaneseq
        %v4688 = vshrl.u32 %v4687, 7
        %v4689 = vsub.s32 2, %v4688
        %v4690 = vrot.slane %v4677, %v4689
        %v4790 = vunpack.c.l.b16 %v4581
        %v4791 = vunpack.c.h.b16 %v4581
        %v4792 = vunpack.c.l.b16 %v4582
        %v4793 = vunpack.c.l.b16 %v4583
        %v4794 = vunpack.c.h.b16 %v4583
        %v4795 = vunpack.c.l.b16 %v4584
        %v4796 = vunpack.c.l.b16 %v4585
        %v4797 = vunpack.c.h.b16 %v4585
        %v4798 = vunpack.c.l.b16 %v4586
        %v4799 = vunpack.c.l.b16 %v4587
        %v4800 = vunpack.c.h.b16 %v4587
        %v4801 = vunpack.c.l.b16 %v4588
        %v4802 = vunpack.c.l.b16 %v4589
        %v4803 = vunpack.c.h.b16 %v4589
        %v4804 = vunpack.c.l.b16 %v4590
        %v4805 = vunpack.c.l.b16 %v4591
        %v4806 = vunpack.c.h.b16 %v4591
        %v4807 = vunpack.c.l.b16 %v4592
        %v4808 = vunpack.c.l.b16 %v4593
        %v4809 = vunpack.c.h.b16 %v4593
        %v4810 = vunpack.c.l.b16 %v4594
        %v4811 = vunpack.c.l.b16 %v4595
        %v4812 = vunpack.c.h.b16 %v4595
        %v4813 = vunpack.c.l.b16 %v4596
        %v4814 = vunpack.c.l.b16 %v4597
        %v4815 = vunpack.c.h.b16 %v4597
        %v4816 = vunpack.c.l.b16 %v4598
        %v4817 = vunpack.c.l.b16 %v4599
        %v4818 = vunpack.c.h.b16 %v4599
        %v4819 = vunpack.c.l.b16 %v4600
        %v4820 = vunpack.c.l.b16 %v4601
        %v4821 = vunpack.c.h.b16 %v4601
        %v4822 = vunpack.c.l.b16 %v4602
        %v4823 = vunpack.c.l.b16 %v4603
        %v4824 = vunpack.c.h.b16 %v4603
        %v4825 = vunpack.c.l.b16 %v4604
        %v4826 = vunpack.c.l.b16 %v4605
        %v4827 = vunpack.c.h.b16 %v4605
        %v4828 = vunpack.c.l.b16 %v4606
        %v4829 = vunpack.c.l.b16 %v4607
        %v4830 = vunpack.c.h.b16 %v4607
        %v4831 = vunpack.c.l.b16 %v4608
        %v4832 = vunpack.c.l.b16 %v4609
        %v4833 = vunpack.c.h.b16 %v4609
        %v4834 = vunpack.c.l.b16 %v4610
        %v4835 = vunpack.c.l.b16 %v4611
        %v4836 = vunpack.c.h.b16 %v4611
        %v4837 = vunpack.c.l.b16 %v4612
        %v4838 = vunpack.c.l.b16 %v4613
        %v4839 = vunpack.c.h.b16 %v4613
        %v4840 = vunpack.c.l.b16 %v4614
        %v4841 = vunpack.c.l.b16 %v4615
        %v4842 = vunpack.c.h.b16 %v4615
        %v4843 = vunpack.c.l.b16 %v4616
        %v4844 = vunpack.c.l.b16 %v4617
        %v4845 = vunpack.c.h.b16 %v4617
        %v4846 = vunpack.c.l.b16 %v4618
        %v4847 = vunpack.c.l.b16 %v4619
        %v4848 = vunpack.c.h.b16 %v4619
        %v4849 = vunpack.c.l.b16 %v4620
        %v4850 = vunpack.c.l.b16 %v4621
        %v4851 = vunpack.c.h.b16 %v4621
        %v4852 = vunpack.c.l.b16 %v4622
        %v4853 = vunpack.c.l.b16 %v4623
        %v4854 = vunpack.c.h.b16 %v4623
        %v4855 = vunpack.c.l.b16 %v4624
        %v4856 = vunpack.c.l.b16 %v4625
        %v4857 = vunpack.c.h.b16 %v4625
        %v4858 = vunpack.c.l.b16 %v4626
        %v4859 = vunpack.c.l.b16 %v4627
        %v4860 = vunpack.c.h.b16 %v4627
        %v4861 = vunpack.c.l.b16 %v4628
        %v4862 = vunpack.c.l.b16 %v4629
        %v4863 = vunpack.c.h.b16 %v4629
        %v4864 = vunpack.c.l.b16 %v4630
        %v4865 = vunpack.c.l.b16 %v4631
        %v4866 = vunpack.c.h.b16 %v4631
        %v4867 = vunpack.c.l.b16 %v4632
        %v4868 = vunpack.c.l.b16 %v4633
        %v4869 = vunpack.c.h.b16 %v4633
        %v4870 = vunpack.c.l.b16 %v4634
        %v4871 = vunpack.c.l.b16 %v4635
        %v4872 = vunpack.c.h.b16 %v4635
        %v4873 = vunpack.c.l.b16 %v4636
        %v4874 = vunpack.c.l.b16 %v4637
        %v4875 = vunpack.c.h.b16 %v4637
        %v4876 = vunpack.c.l.b16 %v4638
        %v4877 = vunpack.c.l.b16 %v4639
        %v4878 = vunpack.c.h.b16 %v4639
        %v4879 = vunpack.c.l.b16 %v4640
        %v4880 = vunpack.c.l.b16 %v4641
        %v4881 = vunpack.c.h.b16 %v4641
        %v4882 = vunpack.c.l.b16 %v4642
        %v4883 = vunpack.c.l.b16 %v4643
        %v4884 = vunpack.c.h.b16 %v4643
        %v4885 = vunpack.c.l.b16 %v4644
        %v4886 = vunpack.c.l.b16 %v4645
        %v4887 = vunpack.c.h.b16 %v4645
        %v4888 = vunpack.c.l.b16 %v4646
        %v4889 = vunpack.c.l.b16 %v4647
        %v4890 = vunpack.c.h.b16 %v4647
        %v4891 = vunpack.c.l.b16 %v4648
        %v4892 = vunpack.c.l.b16 %v4649
        %v4893 = vunpack.c.h.b16 %v4649
        %v4894 = vunpack.c.l.b16 %v4650
        %v4895 = vunpack.c.l.b16 %v4651
        %v4896 = vunpack.c.h.b16 %v4651
        %v4897 = vunpack.c.l.b16 %v4652
        %v4898 = vunpack.c.l.b16 %v4653
        %v4899 = vunpack.c.h.b16 %v4653
        %v4900 = vunpack.c.l.b16 %v4654
        %v4901 = vunpack.c.l.b16 %v4655
        %v4902 = vunpack.c.h.b16 %v4655
        %v4903 = vunpack.c.l.b16 %v4656
        %v4904 = vunpack.c.l.b16 %v4657
        %v4905 = vunpack.c.h.b16 %v4657
        %v4906 = vunpack.c.l.b16 %v4658
        %v4907 = vunpack.c.l.b16 %v4659
        %v4908 = vunpack.c.h.b16 %v4659
        %v4909 = vunpack.c.l.b16 %v4660
        %v4910 = vunpack.c.l.b16 %v4661
        %v4911 = vunpack.c.h.b16 %v4661
        %v4912 = vunpack.c.l.b16 %v4662
        %v4913 = vunpack.c.l.b16 %v4663
        %v4914 = vunpack.c.h.b16 %v4663
        %v4915 = vunpack.c.l.b16 %v4664
        %v4916 = vunpack.c.l.b16 %v4665
        %v4917 = vunpack.c.h.b16 %v4665
        %v4918 = vunpack.c.l.b16 %v4666
        %v4919 = vunpack.c.l.b16 %v4667
        %v4920 = vunpack.c.h.b16 %v4667
        %v4921 = vunpack.c.l.b16 %v4668
        %v4922 = vunpack.c.l.b16 %v4669
        %v4923 = vunpack.c.h.b16 %v4669
        %v4924 = vunpack.c.l.b16 %v4670
        %v4925 = vunpack.c.l.b16 %v4671
        %v4926 = vunpack.c.h.b16 %v4671
        %v4927 = vunpack.c.l.b16 %v4672
        %v4928 = vunpack.c.l.b16 %v4673
        %v4929 = vunpack.c.h.b16 %v4673
        %v4930 = vunpack.c.l.b16 %v4674
        %v4931 = vunpack.c.l.b16 %v4675
        %v4932 = vunpack.c.h.b16 %v4675
        %v4933 = vunpack.c.l.b16 %v4676
        %v4934 = vpack.c.b16 %v4793, %v4790
        %v4935 = vpack.c.b16 %v4794, %v4791
        %v4936 = vpack.c.b16 %v4795, %v4792
        %v4937 = vpack.c.b16 %v4799, %v4796
        %v4938 = vpack.c.b16 %v4800, %v4797
        %v4939 = vpack.c.b16 %v4801, %v4798
        %v4940 = vpack.c.b16 %v4805, %v4802
        %v4941 = vpack.c.b16 %v4806, %v4803
        %v4942 = vpack.c.b16 %v4807, %v4804
        %v4943 = vpack.c.b16 %v4811, %v4808
        %v4944 = vpack.c.b16 %v4812, %v4809
        %v4945 = vpack.c.b16 %v4813, %v4810
        %v4946 = vpack.c.b16 %v4817, %v4814
        %v4947 = vpack.c.b16 %v4818, %v4815
        %v4948 = vpack.c.b16 %v4819, %v4816
        %v4949 = vpack.c.b16 %v4823, %v4820
        %v4950 = vpack.c.b16 %v4824, %v4821
        %v4951 = vpack.c.b16 %v4825, %v4822
        %v4952 = vpack.c.b16 %v4829, %v4826
        %v4953 = vpack.c.b16 %v4830, %v4827
        %v4954 = vpack.c.b16 %v4831, %v4828
        %v4955 = vpack.c.b16 %v4835, %v4832
        %v4956 = vpack.c.b16 %v4836, %v4833
        %v4957 = vpack.c.b16 %v4837, %v4834
        %v4958 = vpack.c.b16 %v4841, %v4838
        %v4959 = vpack.c.b16 %v4842, %v4839
        %v4960 = vpack.c.b16 %v4843, %v4840
        %v4961 = vpack.c.b16 %v4847, %v4844
        %v4962 = vpack.c.b16 %v4848, %v4845
        %v4963 = vpack.c.b16 %v4849, %v4846
        %v4964 = vpack.c.b16 %v4853, %v4850
        %v4965 = vpack.c.b16 %v4854, %v4851
        %v4966 = vpack.c.b16 %v4855, %v4852
        %v4967 = vpack.c.b16 %v4859, %v4856
        %v4968 = vpack.c.b16 %v4860, %v4857
        %v4969 = vpack.c.b16 %v4861, %v4858
        %v4970 = vpack.c.b16 %v4865, %v4862
        %v4971 = vpack.c.b16 %v4866, %v4863
        %v4972 = vpack.c.b16 %v4867, %v4864
        %v4973 = vpack.c.b16 %v4871, %v4868
        %v4974 = vpack.c.b16 %v4872, %v4869
        %v4975 = vpack.c.b16 %v4873, %v4870
        %v4976 = vpack.c.b16 %v4877, %v4874
        %v4977 = vpack.c.b16 %v4878, %v4875
        %v4978 = vpack.c.b16 %v4879, %v4876
        %v4979 = vpack.c.b16 %v4883, %v4880
        %v4980 = vpack.c.b16 %v4884, %v4881
        %v4981 = vpack.c.b16 %v4885, %v4882
        %v4982 = vpack.c.b16 %v4889, %v4886
        %v4983 = vpack.c.b16 %v4890, %v4887
        %v4984 = vpack.c.b16 %v4891, %v4888
        %v4985 = vpack.c.b16 %v4895, %v4892
        %v4986 = vpack.c.b16 %v4896, %v4893
        %v4987 = vpack.c.b16 %v4897, %v4894
        %v4988 = vpack.c.b16 %v4901, %v4898
        %v4989 = vpack.c.b16 %v4902, %v4899
        %v4990 = vpack.c.b16 %v4903, %v4900
        %v4991 = vpack.c.b16 %v4907, %v4904
        %v4992 = vpack.c.b16 %v4908, %v4905
        %v4993 = vpack.c.b16 %v4909, %v4906
        %v4994 = vpack.c.b16 %v4913, %v4910
        %v4995 = vpack.c.b16 %v4914, %v4911
        %v4996 = vpack.c.b16 %v4915, %v4912
        %v4997 = vpack.c.b16 %v4919, %v4916
        %v4998 = vpack.c.b16 %v4920, %v4917
        %v4999 = vpack.c.b16 %v4921, %v4918
        %v5000 = vpack.c.b16 %v4925, %v4922
        %v5001 = vpack.c.b16 %v4926, %v4923
        %v5002 = vpack.c.b16 %v4927, %v4924
        %v5003 = vpack.c.b16 %v4931, %v4928
        %v5004 = vpack.c.b16 %v4932, %v4929
        %v5005 = vpack.c.b16 %v4933, %v4930
        %5078 = vmatprep.subr.bf16.mxu0 %v4935
        %5079 = vmatpush1.bf16.msra.mxu0 %v4934
        %5080 = vmatprep.subr.bf16.mxu0 %v4938
        %5081 = vmatpush1.bf16.msra.mxu0 %v4937
        %5082 = vmatprep.subr.bf16.mxu0 %v4941
        %5083 = vmatpush1.bf16.msra.mxu0 %v4940
        %5084 = vmatprep.subr.bf16.mxu0 %v4944
        %5085 = vmatpush1.bf16.msra.mxu0 %v4943
        %5086 = vmatprep.subr.bf16.mxu0 %v4947
        %5087 = vmatpush1.bf16.msra.mxu0 %v4946
        %5088 = vmatprep.subr.bf16.mxu0 %v4950
        %5089 = vmatpush1.bf16.msra.mxu0 %v4949
        %5090 = vmatprep.subr.bf16.mxu0 %v4953
        %5091 = vmatpush1.bf16.msra.mxu0 %v4952
        %5092 = vmatprep.subr.bf16.mxu0 %v4956
        %5093 = vmatpush1.bf16.msra.mxu0 %v4955
        %5094 = vmatprep.subr.bf16.mxu0 %v4959
        %5095 = vmatpush1.bf16.msra.mxu0 %v4958
        %5096 = vmatprep.subr.bf16.mxu0 %v4962
        %5097 = vmatpush1.bf16.msra.mxu0 %v4961
        %5098 = vmatprep.subr.bf16.mxu0 %v4965
        %5099 = vmatpush1.bf16.msra.mxu0 %v4964
        %5100 = vmatprep.subr.bf16.mxu0 %v4968
        %5101 = vmatpush1.bf16.msra.mxu0 %v4967
        %5102 = vmatprep.subr.bf16.mxu0 %v4971
        %5103 = vmatpush1.bf16.msra.mxu0 %v4970
        %5104 = vmatprep.subr.bf16.mxu0 %v4974
        %5105 = vmatpush1.bf16.msra.mxu0 %v4973
        %5106 = vmatprep.subr.bf16.mxu0 %v4977
        %5107 = vmatpush1.bf16.msra.mxu0 %v4976
        %5108 = vmatprep.subr.bf16.mxu0 %v4980
        %5109 = vmatpush1.bf16.msra.mxu0 %v4979
        %5110 = vmatprep.mubr.bf16.mxu0 %v4567
        %5111 = vmatmul.mubr.bf16.gmra.mrb[0].mxu0 %v4559
        %v5112 = vpop.f32.mrb[0].mxu0
        %v5113 = vadd.f32 %v4682, %v5112
        %v5114 = vpop.f32.mrb[0].mxu0
        %v5115 = vadd.f32 %v4686, %v5114
        %v5116 = vpop.f32.mrb[0].mxu0
        %v5117 = vadd.f32 %v4682, %v5116
        %v5118 = vpop.f32.mrb[0].mxu0
        %v5119 = vadd.f32 %v4686, %v5118
        %5120 = vmatprep.mubr.bf16.mxu0 %v4571
        %5121 = vmatmul.mubr.bf16.gmra.mrb[0].mxu0 %v4563
        %v5122 = vpop.f32.mrb[0].mxu0
        %v5123 = vadd.f32 %v4682, %v5122
        %v5124 = vpop.f32.mrb[0].mxu0
        %v5125 = vadd.f32 %v4686, %v5124
        %v5126 = vpop.f32.mrb[0].mxu0
        %v5127 = vadd.f32 %v4682, %v5126
        %v5128 = vpop.f32.mrb[0].mxu0
        %v5129 = vadd.f32 %v4686, %v5128
        %5130 = vdwg.mxu0
        %5131 = vmatprep.subr.bf16.mxu0 %v4983
        %5132 = vmatpush1.bf16.msra.mxu0 %v4982
        %5133 = vmatprep.subr.bf16.mxu0 %v4986
        %5134 = vmatpush1.bf16.msra.mxu0 %v4985
        %5135 = vmatprep.subr.bf16.mxu0 %v4989
        %5136 = vmatpush1.bf16.msra.mxu0 %v4988
        %5137 = vmatprep.subr.bf16.mxu0 %v4992
        %5138 = vmatpush1.bf16.msra.mxu0 %v4991
        %5139 = vmatprep.subr.bf16.mxu0 %v4995
        %5140 = vmatpush1.bf16.msra.mxu0 %v4994
        %5141 = vmatprep.subr.bf16.mxu0 %v4998
        %5142 = vmatpush1.bf16.msra.mxu0 %v4997
        %5143 = vmatprep.subr.bf16.mxu0 %v5001
        %5144 = vmatpush1.bf16.msra.mxu0 %v5000
        %5145 = vmatprep.subr.bf16.mxu0 %v5004
        %5146 = vmatpush1.bf16.msra.mxu0 %v5003
        %5147 = vmatprep.subr.bf16.mxu0 0
        %5148 = vmatpush1.bf16.msra.mxu0 0
        %5149 = vmatprep.subr.bf16.mxu0 0
        %5150 = vmatpush1.bf16.msra.mxu0 0
        %5151 = vmatprep.subr.bf16.mxu0 0
        %5152 = vmatpush1.bf16.msra.mxu0 0
        %5153 = vmatprep.subr.bf16.mxu0 0
        %5154 = vmatpush1.bf16.msra.mxu0 0
        %5155 = vmatprep.subr.bf16.mxu0 0
        %5156 = vmatpush1.bf16.msra.mxu0 0
        %5157 = vmatprep.subr.bf16.mxu0 0
        %5158 = vmatpush1.bf16.msra.mxu0 0
        %5159 = vmatprep.subr.bf16.mxu0 0
        %5160 = vmatpush1.bf16.msra.mxu0 0
        %5161 = vmatprep.subr.bf16.mxu0 0
        %5162 = vmatpush1.bf16.msra.mxu0 0
        %5163 = vmatprep.mubr.bf16.mxu0 0
        %5164 = vmatmul.mubr.bf16.gmra.mrb[0].mxu0 %v4575
        %v5165 = vpop.f32.mrb[0].mxu0
        %v5166 = vadd.f32 %v5113, %v5165
        %v5167 = vpop.f32.mrb[0].mxu0
        %v5168 = vadd.f32 %v5115, %v5167
        %v5169 = vpop.f32.mrb[0].mxu0
        %v5170 = vadd.f32 %v5117, %v5169
        %v5171 = vpop.f32.mrb[0].mxu0
        %v5172 = vadd.f32 %v5119, %v5171
        %5173 = vmatprep.mubr.bf16.mxu0 0
        %5174 = vmatmul.mubr.bf16.gmra.mrb[0].mxu0 %v4579
        %v5175 = vpop.f32.mrb[0].mxu0
        %v5176 = vadd.f32 %v5123, %v5175
        %v5177 = vpop.f32.mrb[0].mxu0
        %v5178 = vadd.f32 %v5125, %v5177
        %v5179 = vpop.f32.mrb[0].mxu0
        %v5180 = vadd.f32 %v5127, %v5179
        %v5181 = vpop.f32.mrb[0].mxu0
        %v5182 = vadd.f32 %v5129, %v5181
        %5183 = vdwg.mxu0
        %5184 = vmatprep.subr.bf16.mxu0 0
        %5185 = vmatpush1.bf16.msra.mxu0 %v4936
        %5186 = vmatprep.subr.bf16.mxu0 0
        %5187 = vmatpush1.bf16.msra.mxu0 %v4939
        %5188 = vmatprep.subr.bf16.mxu0 0
        %5189 = vmatpush1.bf16.msra.mxu0 %v4942
        %5190 = vmatprep.subr.bf16.mxu0 0
        %5191 = vmatpush1.bf16.msra.mxu0 %v4945
        %5192 = vmatprep.subr.bf16.mxu0 0
        %5193 = vmatpush1.bf16.msra.mxu0 %v4948
        %5194 = vmatprep.subr.bf16.mxu0 0
        %5195 = vmatpush1.bf16.msra.mxu0 %v4951
        %5196 = vmatprep.subr.bf16.mxu0 0
        %5197 = vmatpush1.bf16.msra.mxu0 %v4954
        %5198 = vmatprep.subr.bf16.mxu0 0
        %5199 = vmatpush1.bf16.msra.mxu0 %v4957
        %5200 = vmatprep.subr.bf16.mxu0 0
        %5201 = vmatpush1.bf16.msra.mxu0 %v4960
        %5202 = vmatprep.subr.bf16.mxu0 0
        %5203 = vmatpush1.bf16.msra.mxu0 %v4963
        %5204 = vmatprep.subr.bf16.mxu0 0
        %5205 = vmatpush1.bf16.msra.mxu0 %v4966
        %5206 = vmatprep.subr.bf16.mxu0 0
        %5207 = vmatpush1.bf16.msra.mxu0 %v4969
        %5208 = vmatprep.subr.bf16.mxu0 0
        %5209 = vmatpush1.bf16.msra.mxu0 %v4972
        %5210 = vmatprep.subr.bf16.mxu0 0
        %5211 = vmatpush1.bf16.msra.mxu0 %v4975
        %5212 = vmatprep.subr.bf16.mxu0 0
        %5213 = vmatpush1.bf16.msra.mxu0 %v4978
        %5214 = vmatprep.subr.bf16.mxu0 0
        %5215 = vmatpush1.bf16.msra.mxu0 %v4981
        %5216 = vmatprep.mubr.bf16.mxu0 %v4567
        %5217 = vmatmul.mubr.bf16.gmra.mrb[0].mxu0 %v4559
        %v5218 = vpop.f32.mrb[0].mxu0
        %v5219 = vadd.f32 %v4690, %v5218
        %v5220 = vpop.f32.mrb[0].mxu0
        %v5221 = vpop.f32.mrb[0].mxu0
        %v5222 = vadd.f32 %v4690, %v5221
        %v5223 = vpop.f32.mrb[0].mxu0
        %5224 = vmatprep.mubr.bf16.mxu0 %v4571
        %5225 = vmatmul.mubr.bf16.gmra.mrb[0].mxu0 %v4563
        %v5226 = vpop.f32.mrb[0].mxu0
        %v5227 = vadd.f32 %v4690, %v5226
        %v5228 = vpop.f32.mrb[0].mxu0
        %v5229 = vpop.f32.mrb[0].mxu0
        %v5230 = vadd.f32 %v4690, %v5229
        %v5231 = vpop.f32.mrb[0].mxu0
        %5232 = vdwg.mxu0
        %5233 = vmatprep.subr.bf16.mxu0 0
        %5234 = vmatpush1.bf16.msra.mxu0 %v4984
        %5235 = vmatprep.subr.bf16.mxu0 0
        %5236 = vmatpush1.bf16.msra.mxu0 %v4987
        %5237 = vmatprep.subr.bf16.mxu0 0
        %5238 = vmatpush1.bf16.msra.mxu0 %v4990
        %5239 = vmatprep.subr.bf16.mxu0 0
        %5240 = vmatpush1.bf16.msra.mxu0 %v4993
        %5241 = vmatprep.subr.bf16.mxu0 0
        %5242 = vmatpush1.bf16.msra.mxu0 %v4996
        %5243 = vmatprep.subr.bf16.mxu0 0
        %5244 = vmatpush1.bf16.msra.mxu0 %v4999
        %5245 = vmatprep.subr.bf16.mxu0 0
        %5246 = vmatpush1.bf16.msra.mxu0 %v5002
        %5247 = vmatprep.subr.bf16.mxu0 0
        %5248 = vmatpush1.bf16.msra.mxu0 %v5005
        %5249 = vmatprep.subr.bf16.mxu0 0
        %5250 = vmatpush1.bf16.msra.mxu0 0
        %5251 = vmatprep.subr.bf16.mxu0 0
        %5252 = vmatpush1.bf16.msra.mxu0 0
        %5253 = vmatprep.subr.bf16.mxu0 0
        %5254 = vmatpush1.bf16.msra.mxu0 0
        %5255 = vmatprep.subr.bf16.mxu0 0
        %5256 = vmatpush1.bf16.msra.mxu0 0
        %5257 = vmatprep.subr.bf16.mxu0 0
        %5258 = vmatpush1.bf16.msra.mxu0 0
        %5259 = vmatprep.subr.bf16.mxu0 0
        %5260 = vmatpush1.bf16.msra.mxu0 0
        %5261 = vmatprep.subr.bf16.mxu0 0
        %5262 = vmatpush1.bf16.msra.mxu0 0
        %5263 = vmatprep.subr.bf16.mxu0 0
        %5264 = vmatpush1.bf16.msra.mxu0 0
        %5265 = vmatprep.mubr.bf16.mxu0 0
        %5266 = vmatmul.mubr.bf16.gmra.mrb[0].mxu0 %v4575
        %v5267 = vpop.f32.mrb[0].mxu0
        %v5268 = vadd.f32 %v5219, %v5267
        %v5269 = vpop.f32.mrb[0].mxu0
        %v5270 = vpop.f32.mrb[0].mxu0
        %v5271 = vadd.f32 %v5222, %v5270
        %v5272 = vpop.f32.mrb[0].mxu0
        %5273 = vmatprep.mubr.bf16.mxu0 0
        %5274 = vmatmul.mubr.bf16.gmra.mrb[0].mxu0 %v4579
        %v5275 = vpop.f32.mrb[0].mxu0
        %v5276 = vadd.f32 %v5227, %v5275
        %v5277 = vpop.f32.mrb[0].mxu0
        %v5278 = vpop.f32.mrb[0].mxu0
        %v5279 = vadd.f32 %v5230, %v5278
        %v5280 = vpop.f32.mrb[0].mxu0
        %5281 = vdwg.mxu0
        %v5282 = vadd.f32 %v1050, %v5166
        %v5283 = vadd.f32 %v1051, %v5168
        %v5284 = vadd.f32 %v1052, %v5268
        %v5285 = vadd.f32 %v1053, %v5170
        %v5286 = vadd.f32 %v1054, %v5172
        %v5287 = vadd.f32 %v1055, %v5271
        %v5288 = vadd.f32 %v1056, %v5176
        %v5289 = vadd.f32 %v1057, %v5178
        %v5290 = vadd.f32 %v1058, %v5276
        %v5291 = vadd.f32 %v1059, %v5180
        %v5292 = vadd.f32 %v1060, %v5182
        %v5293 = vadd.f32 %v1061, %v5279
        %v5294 = vld [vmem:[%s850] sm:$0x7]
        %v5295 = vld [vmem:[%s859] sm:$0x7]
        %v5296 = vadd.f32 %v5282, %v5283
        %v5297 = vadd.f32 %v5296, %v5284
        %5298 = vadd.xlane.f32.xlu0 %v5297
        %v5299 = vpop.xlane.xlu0 %5298
        %v5300 = vadd.f32 %v5285, %v5286
        %v5301 = vadd.f32 %v5300, %v5287
        %5302 = vadd.xlane.f32.xlu0 %v5301
        %v5303 = vpop.xlane.xlu0 %5302
        %v5304 = vadd.f32 %v5288, %v5289
        %v5305 = vadd.f32 %v5304, %v5290
        %5306 = vadd.xlane.f32.xlu0 %v5305
        %v5307 = vpop.xlane.xlu0 %5306
        %v5308 = vadd.f32 %v5291, %v5292
        %v5309 = vadd.f32 %v5308, %v5293
        %5310 = vadd.xlane.f32.xlu0 %v5309
        %v5311 = vpop.xlane.xlu0 %5310
        %v5312 = vmul.f32 %v5299, %v1080
        %v5313 = vmul.f32 %v5303, %v1080
        %v5314 = vmul.f32 %v5307, %v1080
        %v5315 = vmul.f32 %v5311, %v1080
        %v5316 = vsub.f32 %v5282, %v5312
        %v5317 = vsub.f32 %v5283, %v5312
        %v5318 = vsub.f32 %v5284, %v5312
        %v5319 = vsub.f32 %v5285, %v5313
        %v5320 = vsub.f32 %v5286, %v5313
        %v5321 = vsub.f32 %v5287, %v5313
        %v5322 = vsub.f32 %v5288, %v5314
        %v5323 = vsub.f32 %v5289, %v5314
        %v5324 = vsub.f32 %v5290, %v5314
        %v5325 = vsub.f32 %v5291, %v5315
        %v5326 = vsub.f32 %v5292, %v5315
        %v5327 = vsub.f32 %v5293, %v5315
        %v5328 = vmul.f32 %v5316, %v5316
        %v5329 = vmul.f32 %v5317, %v5317
        %v5330 = vmul.f32 %v5318, %v5318
        %v5331 = vmul.f32 %v5319, %v5319
        %v5332 = vmul.f32 %v5320, %v5320
        %v5333 = vmul.f32 %v5321, %v5321
        %v5334 = vmul.f32 %v5322, %v5322
        %v5335 = vmul.f32 %v5323, %v5323
        %v5336 = vmul.f32 %v5324, %v5324
        %v5337 = vmul.f32 %v5325, %v5325
        %v5338 = vmul.f32 %v5326, %v5326
        %v5339 = vmul.f32 %v5327, %v5327
        %v5340 = vadd.f32 %v5328, %v5329
        %v5341 = vadd.f32 %v5340, %v5330
        %5342 = vadd.xlane.f32.xlu0 %v5341
        %v5343 = vpop.xlane.xlu0 %5342
        %v5344 = vadd.f32 %v5331, %v5332
        %v5345 = vadd.f32 %v5344, %v5333
        %5346 = vadd.xlane.f32.xlu0 %v5345
        %v5347 = vpop.xlane.xlu0 %5346
        %v5348 = vadd.f32 %v5334, %v5335
        %v5349 = vadd.f32 %v5348, %v5336
        %5350 = vadd.xlane.f32.xlu0 %v5349
        %v5351 = vpop.xlane.xlu0 %5350
        %v5352 = vadd.f32 %v5337, %v5338
        %v5353 = vadd.f32 %v5352, %v5339
        %5354 = vadd.xlane.f32.xlu0 %v5353
        %v5355 = vpop.xlane.xlu0 %5354
        %v5356 = vmul.f32 %v5343, %v1080
        %v5357 = vmul.f32 %v5347, %v1080
        %v5358 = vmul.f32 %v5351, %v1080
        %v5359 = vmul.f32 %v5355, %v1080
        %v5360 = vadd.f32 %v5356, 1e-05
        %v5361 = vadd.f32 %v5357, 1e-05
        %v5362 = vadd.f32 %v5358, 1e-05
        %v5363 = vadd.f32 %v5359, 1e-05
        %v5364 = vrsqrt.pop %v5360
        %v5365 = vrsqrt.pop %v5361
        %v5366 = vrsqrt.pop %v5362
        %v5367 = vrsqrt.pop %v5363
        %v5368 = vmul.f32 %v5316, %v5364
        %v5369 = vmul.f32 %v5317, %v5364
        %v5370 = vmul.f32 %v5318, %v5364
        %v5371 = vmul.f32 %v5319, %v5365
        %v5372 = vmul.f32 %v5320, %v5365
        %v5373 = vmul.f32 %v5321, %v5365
        %v5374 = vmul.f32 %v5322, %v5366
        %v5375 = vmul.f32 %v5323, %v5366
        %v5376 = vmul.f32 %v5324, %v5366
        %v5377 = vmul.f32 %v5325, %v5367
        %v5378 = vmul.f32 %v5326, %v5367
        %v5379 = vmul.f32 %v5327, %v5367
        %v5381 = vlaneseq
        %v5382 = vshrl.u32 %v5381, 7
        %v5383 = vsub.s32 0, %v5382
        %v5384 = vrot.slane %v5294, %v5383
        %v5385 = vlaneseq
        %v5386 = vshrl.u32 %v5385, 7
        %v5387 = vsub.s32 1, %v5386
        %v5388 = vrot.slane %v5294, %v5387
        %v5389 = vlaneseq
        %v5390 = vshrl.u32 %v5389, 7
        %v5391 = vsub.s32 2, %v5390
        %v5392 = vrot.slane %v5294, %v5391
        %v5396 = vmul.f32 %v5368, %v5384
        %v5397 = vmul.f32 %v5369, %v5388
        %v5398 = vmul.f32 %v5370, %v5392
        %v5399 = vmul.f32 %v5371, %v5384
        %v5400 = vmul.f32 %v5372, %v5388
        %v5401 = vmul.f32 %v5373, %v5392
        %v5402 = vmul.f32 %v5374, %v5384
        %v5403 = vmul.f32 %v5375, %v5388
        %v5404 = vmul.f32 %v5376, %v5392
        %v5405 = vmul.f32 %v5377, %v5384
        %v5406 = vmul.f32 %v5378, %v5388
        %v5407 = vmul.f32 %v5379, %v5392
        %v5409 = vlaneseq
        %v5410 = vshrl.u32 %v5409, 7
        %v5411 = vsub.s32 0, %v5410
        %v5412 = vrot.slane %v5295, %v5411
        %v5413 = vlaneseq
        %v5414 = vshrl.u32 %v5413, 7
        %v5415 = vsub.s32 1, %v5414
        %v5416 = vrot.slane %v5295, %v5415
        %v5417 = vlaneseq
        %v5418 = vshrl.u32 %v5417, 7
        %v5419 = vsub.s32 2, %v5418
        %v5420 = vrot.slane %v5295, %v5419
        %v5424 = vadd.f32 %v5396, %v5412
        %v5425 = vadd.f32 %v5397, %v5416
        %v5426 = vadd.f32 %v5398, %v5420
        %v5427 = vadd.f32 %v5399, %v5412
        %v5428 = vadd.f32 %v5400, %v5416
        %v5429 = vadd.f32 %v5401, %v5420
        %v5430 = vadd.f32 %v5402, %v5412
        %v5431 = vadd.f32 %v5403, %v5416
        %v5432 = vadd.f32 %v5404, %v5420
        %v5433 = vadd.f32 %v5405, %v5412
        %v5434 = vadd.f32 %v5406, %v5416
        %v5435 = vadd.f32 %v5407, %v5420
        %v5436 = vpack.c.bf16 %v5427, %v5424
        %v5437 = vpack.c.bf16 %v5428, %v5425
        %v5438 = vpack.c.bf16 %v5429, %v5426
        %v5439 = vpack.c.bf16 %v5433, %v5430
        %v5440 = vpack.c.bf16 %v5434, %v5431
        %v5441 = vpack.c.bf16 %v5435, %v5432
        %v5442 = vld [vmem:[%s868] sm:$0xff]
        %v5443 = vld [vmem:[%s868 + $0x8] sm:$0xff]
        %v5444 = vld [vmem:[%s868 + $0x10] sm:$0xff]
        %v5445 = vld [vmem:[%s868 + $0x18] sm:$0xff]
        %v5446 = vld [vmem:[%s868 + $0x20] sm:$0xff]
        %v5447 = vld [vmem:[%s868 + $0x28] sm:$0xff]
        %v5448 = vld [vmem:[%s868 + $0x30] sm:$0xff]
        %v5449 = vld [vmem:[%s868 + $0x38] sm:$0xff]
        %v5450 = vld [vmem:[%s868 + $0x40] sm:$0xff]
        %v5451 = vld [vmem:[%s868 + $0x48] sm:$0xff]
        %v5452 = vld [vmem:[%s868 + $0x50] sm:$0xff]
        %v5453 = vld [vmem:[%s868 + $0x58] sm:$0xff]
        %v5454 = vld [vmem:[%s868 + $0x60] sm:$0xff]
        %v5455 = vld [vmem:[%s868 + $0x68] sm:$0xff]
        %v5456 = vld [vmem:[%s868 + $0x70] sm:$0xff]
        %v5457 = vld [vmem:[%s868 + $0x78] sm:$0xff]
        %v5458 = vld [vmem:[%s868 + $0x80] sm:$0xff]
        %v5459 = vld [vmem:[%s868 + $0x88] sm:$0xff]
        %v5460 = vld [vmem:[%s868 + $0x90] sm:$0xff]
        %v5461 = vld [vmem:[%s868 + $0x98] sm:$0xff]
        %v5462 = vld [vmem:[%s868 + $0xa0] sm:$0xff]
        %v5463 = vld [vmem:[%s868 + $0xa8] sm:$0xff]
        %v5464 = vld [vmem:[%s868 + $0xb0] sm:$0xff]
        %v5465 = vld [vmem:[%s868 + $0xb8] sm:$0xff]
        %v5466 = vld [vmem:[%s868 + $0xc0] sm:$0xff]
        %v5467 = vld [vmem:[%s868 + $0xc8] sm:$0xff]
        %v5468 = vld [vmem:[%s868 + $0xd0] sm:$0xff]
        %v5469 = vld [vmem:[%s868 + $0xd8] sm:$0xff]
        %v5470 = vld [vmem:[%s868 + $0xe0] sm:$0xff]
        %v5471 = vld [vmem:[%s868 + $0xe8] sm:$0xff]
        %v5472 = vld [vmem:[%s868 + $0xf0] sm:$0xff]
        %v5473 = vld [vmem:[%s868 + $0xf8] sm:$0xff]
        %v5474 = vld [vmem:[%s868 + $0x100] sm:$0xff]
        %v5475 = vld [vmem:[%s868 + $0x108] sm:$0xff]
        %v5476 = vld [vmem:[%s868 + $0x110] sm:$0xff]
        %v5477 = vld [vmem:[%s868 + $0x118] sm:$0xff]
        %v5478 = vld [vmem:[%s868 + $0x120] sm:$0xff]
        %v5479 = vld [vmem:[%s868 + $0x128] sm:$0xff]
        %v5480 = vld [vmem:[%s868 + $0x130] sm:$0xff]
        %v5481 = vld [vmem:[%s868 + $0x138] sm:$0xff]
        %v5482 = vld [vmem:[%s868 + $0x140] sm:$0xff]
        %v5483 = vld [vmem:[%s868 + $0x148] sm:$0xff]
        %v5484 = vld [vmem:[%s868 + $0x150] sm:$0xff]
        %v5485 = vld [vmem:[%s868 + $0x158] sm:$0xff]
        %v5486 = vld [vmem:[%s868 + $0x160] sm:$0xff]
        %v5487 = vld [vmem:[%s868 + $0x168] sm:$0xff]
        %v5488 = vld [vmem:[%s868 + $0x170] sm:$0xff]
        %v5489 = vld [vmem:[%s868 + $0x178] sm:$0xff]
        %v5490 = vld [vmem:[%s868 + $0x180] sm:$0xff]
        %v5491 = vld [vmem:[%s868 + $0x188] sm:$0xff]
        %v5492 = vld [vmem:[%s868 + $0x190] sm:$0xff]
        %v5493 = vld [vmem:[%s868 + $0x198] sm:$0xff]
        %v5494 = vld [vmem:[%s868 + $0x1a0] sm:$0xff]
        %v5495 = vld [vmem:[%s868 + $0x1a8] sm:$0xff]
        %v5496 = vld [vmem:[%s868 + $0x1b0] sm:$0xff]
        %v5497 = vld [vmem:[%s868 + $0x1b8] sm:$0xff]
        %v5498 = vld [vmem:[%s868 + $0x1c0] sm:$0xff]
        %v5499 = vld [vmem:[%s868 + $0x1c8] sm:$0xff]
        %v5500 = vld [vmem:[%s868 + $0x1d0] sm:$0xff]
        %v5501 = vld [vmem:[%s868 + $0x1d8] sm:$0xff]
        %v5502 = vld [vmem:[%s868 + $0x1e0] sm:$0xff]
        %v5503 = vld [vmem:[%s868 + $0x1e8] sm:$0xff]
        %v5504 = vld [vmem:[%s868 + $0x1f0] sm:$0xff]
        %v5505 = vld [vmem:[%s868 + $0x1f8] sm:$0xff]
        %v5506 = vld [vmem:[%s868 + $0x200] sm:$0xff]
        %v5507 = vld [vmem:[%s868 + $0x208] sm:$0xff]
        %v5508 = vld [vmem:[%s868 + $0x210] sm:$0xff]
        %v5509 = vld [vmem:[%s868 + $0x218] sm:$0xff]
        %v5510 = vld [vmem:[%s868 + $0x220] sm:$0xff]
        %v5511 = vld [vmem:[%s868 + $0x228] sm:$0xff]
        %v5512 = vld [vmem:[%s868 + $0x230] sm:$0xff]
        %v5513 = vld [vmem:[%s868 + $0x238] sm:$0xff]
        %v5514 = vld [vmem:[%s868 + $0x240] sm:$0xff]
        %v5515 = vld [vmem:[%s868 + $0x248] sm:$0xff]
        %v5516 = vld [vmem:[%s868 + $0x250] sm:$0xff]
        %v5517 = vld [vmem:[%s868 + $0x258] sm:$0xff]
        %v5518 = vld [vmem:[%s868 + $0x260] sm:$0xff]
        %v5519 = vld [vmem:[%s868 + $0x268] sm:$0xff]
        %v5520 = vld [vmem:[%s868 + $0x270] sm:$0xff]
        %v5521 = vld [vmem:[%s868 + $0x278] sm:$0xff]
        %v5522 = vld [vmem:[%s868 + $0x280] sm:$0xff]
        %v5523 = vld [vmem:[%s868 + $0x288] sm:$0xff]
        %v5524 = vld [vmem:[%s868 + $0x290] sm:$0xff]
        %v5525 = vld [vmem:[%s868 + $0x298] sm:$0xff]
        %v5526 = vld [vmem:[%s868 + $0x2a0] sm:$0xff]
        %v5527 = vld [vmem:[%s868 + $0x2a8] sm:$0xff]
        %v5528 = vld [vmem:[%s868 + $0x2b0] sm:$0xff]
        %v5529 = vld [vmem:[%s868 + $0x2b8] sm:$0xff]
        %v5530 = vld [vmem:[%s868 + $0x2c0] sm:$0xff]
        %v5531 = vld [vmem:[%s868 + $0x2c8] sm:$0xff]
        %v5532 = vld [vmem:[%s868 + $0x2d0] sm:$0xff]
        %v5533 = vld [vmem:[%s868 + $0x2d8] sm:$0xff]
        %v5534 = vld [vmem:[%s868 + $0x2e0] sm:$0xff]
        %v5535 = vld [vmem:[%s868 + $0x2e8] sm:$0xff]
        %v5536 = vld [vmem:[%s868 + $0x2f0] sm:$0xff]
        %v5537 = vld [vmem:[%s868 + $0x2f8] sm:$0xff]
        %v5538 = vld [vmem:[%s868 + $0x300] sm:$0xff]
        %v5539 = vld [vmem:[%s868 + $0x308] sm:$0xff]
        %v5540 = vld [vmem:[%s868 + $0x310] sm:$0xff]
        %v5541 = vld [vmem:[%s868 + $0x318] sm:$0xff]
        %v5542 = vld [vmem:[%s868 + $0x320] sm:$0xff]
        %v5543 = vld [vmem:[%s868 + $0x328] sm:$0xff]
        %v5544 = vld [vmem:[%s868 + $0x330] sm:$0xff]
        %v5545 = vld [vmem:[%s868 + $0x338] sm:$0xff]
        %v5546 = vld [vmem:[%s868 + $0x340] sm:$0xff]
        %v5547 = vld [vmem:[%s868 + $0x348] sm:$0xff]
        %v5548 = vld [vmem:[%s868 + $0x350] sm:$0xff]
        %v5549 = vld [vmem:[%s868 + $0x358] sm:$0xff]
        %v5550 = vld [vmem:[%s868 + $0x360] sm:$0xff]
        %v5551 = vld [vmem:[%s868 + $0x368] sm:$0xff]
        %v5552 = vld [vmem:[%s868 + $0x370] sm:$0xff]
        %v5553 = vld [vmem:[%s868 + $0x378] sm:$0xff]
        %v5554 = vld [vmem:[%s868 + $0x380] sm:$0xff]
        %v5555 = vld [vmem:[%s868 + $0x388] sm:$0xff]
        %v5556 = vld [vmem:[%s868 + $0x390] sm:$0xff]
        %v5557 = vld [vmem:[%s868 + $0x398] sm:$0xff]
        %v5558 = vld [vmem:[%s868 + $0x3a0] sm:$0xff]
        %v5559 = vld [vmem:[%s868 + $0x3a8] sm:$0xff]
        %v5560 = vld [vmem:[%s868 + $0x3b0] sm:$0xff]
        %v5561 = vld [vmem:[%s868 + $0x3b8] sm:$0xff]
        %v5562 = vld [vmem:[%s868 + $0x3c0] sm:$0xff]
        %v5563 = vld [vmem:[%s868 + $0x3c8] sm:$0xff]
        %v5564 = vld [vmem:[%s868 + $0x3d0] sm:$0xff]
        %v5565 = vld [vmem:[%s868 + $0x3d8] sm:$0xff]
        %v5566 = vld [vmem:[%s868 + $0x3e0] sm:$0xff]
        %v5567 = vld [vmem:[%s868 + $0x3e8] sm:$0xff]
        %v5568 = vld [vmem:[%s868 + $0x3f0] sm:$0xff]
        %v5569 = vld [vmem:[%s868 + $0x3f8] sm:$0xff]
        %v5570 = vld [vmem:[%s868 + $0x400] sm:$0xff]
        %v5571 = vld [vmem:[%s868 + $0x408] sm:$0xff]
        %v5572 = vld [vmem:[%s868 + $0x410] sm:$0xff]
        %v5573 = vld [vmem:[%s868 + $0x418] sm:$0xff]
        %v5574 = vld [vmem:[%s868 + $0x420] sm:$0xff]
        %v5575 = vld [vmem:[%s868 + $0x428] sm:$0xff]
        %v5576 = vld [vmem:[%s868 + $0x430] sm:$0xff]
        %v5577 = vld [vmem:[%s868 + $0x438] sm:$0xff]
        %v5578 = vld [vmem:[%s868 + $0x440] sm:$0xff]
        %v5579 = vld [vmem:[%s868 + $0x448] sm:$0xff]
        %v5580 = vld [vmem:[%s868 + $0x450] sm:$0xff]
        %v5581 = vld [vmem:[%s868 + $0x458] sm:$0xff]
        %v5582 = vld [vmem:[%s868 + $0x460] sm:$0xff]
        %v5583 = vld [vmem:[%s868 + $0x468] sm:$0xff]
        %v5584 = vld [vmem:[%s868 + $0x470] sm:$0xff]
        %v5585 = vld [vmem:[%s868 + $0x478] sm:$0xff]
        %v5586 = vld [vmem:[%s868 + $0x480] sm:$0xff]
        %v5587 = vld [vmem:[%s868 + $0x488] sm:$0xff]
        %v5588 = vld [vmem:[%s868 + $0x490] sm:$0xff]
        %v5589 = vld [vmem:[%s868 + $0x498] sm:$0xff]
        %v5590 = vld [vmem:[%s868 + $0x4a0] sm:$0xff]
        %v5591 = vld [vmem:[%s868 + $0x4a8] sm:$0xff]
        %v5592 = vld [vmem:[%s868 + $0x4b0] sm:$0xff]
        %v5593 = vld [vmem:[%s868 + $0x4b8] sm:$0xff]
        %v5594 = vld [vmem:[%s868 + $0x4c0] sm:$0xff]
        %v5595 = vld [vmem:[%s868 + $0x4c8] sm:$0xff]
        %v5596 = vld [vmem:[%s868 + $0x4d0] sm:$0xff]
        %v5597 = vld [vmem:[%s868 + $0x4d8] sm:$0xff]
        %v5598 = vld [vmem:[%s868 + $0x4e0] sm:$0xff]
        %v5599 = vld [vmem:[%s868 + $0x4e8] sm:$0xff]
        %v5600 = vld [vmem:[%s868 + $0x4f0] sm:$0xff]
        %v5601 = vld [vmem:[%s868 + $0x4f8] sm:$0xff]
        %v5602 = vld [vmem:[%s868 + $0x500] sm:$0xff]
        %v5603 = vld [vmem:[%s868 + $0x508] sm:$0xff]
        %v5604 = vld [vmem:[%s868 + $0x510] sm:$0xff]
        %v5605 = vld [vmem:[%s868 + $0x518] sm:$0xff]
        %v5606 = vld [vmem:[%s868 + $0x520] sm:$0xff]
        %v5607 = vld [vmem:[%s868 + $0x528] sm:$0xff]
        %v5608 = vld [vmem:[%s868 + $0x530] sm:$0xff]
        %v5609 = vld [vmem:[%s868 + $0x538] sm:$0xff]
        %v5610 = vld [vmem:[%s868 + $0x540] sm:$0xff]
        %v5611 = vld [vmem:[%s868 + $0x548] sm:$0xff]
        %v5612 = vld [vmem:[%s868 + $0x550] sm:$0xff]
        %v5613 = vld [vmem:[%s868 + $0x558] sm:$0xff]
        %v5614 = vld [vmem:[%s868 + $0x560] sm:$0xff]
        %v5615 = vld [vmem:[%s868 + $0x568] sm:$0xff]
        %v5616 = vld [vmem:[%s868 + $0x570] sm:$0xff]
        %v5617 = vld [vmem:[%s868 + $0x578] sm:$0xff]
        %v5618 = vld [vmem:[%s868 + $0x580] sm:$0xff]
        %v5619 = vld [vmem:[%s868 + $0x588] sm:$0xff]
        %v5620 = vld [vmem:[%s868 + $0x590] sm:$0xff]
        %v5621 = vld [vmem:[%s868 + $0x598] sm:$0xff]
        %v5622 = vld [vmem:[%s868 + $0x5a0] sm:$0xff]
        %v5623 = vld [vmem:[%s868 + $0x5a8] sm:$0xff]
        %v5624 = vld [vmem:[%s868 + $0x5b0] sm:$0xff]
        %v5625 = vld [vmem:[%s868 + $0x5b8] sm:$0xff]
        %v5626 = vld [vmem:[%s868 + $0x5c0] sm:$0xff]
        %v5627 = vld [vmem:[%s868 + $0x5c8] sm:$0xff]
        %v5628 = vld [vmem:[%s868 + $0x5d0] sm:$0xff]
        %v5629 = vld [vmem:[%s868 + $0x5d8] sm:$0xff]
        %v5630 = vld [vmem:[%s868 + $0x5e0] sm:$0xff]
        %v5631 = vld [vmem:[%s868 + $0x5e8] sm:$0xff]
        %v5632 = vld [vmem:[%s868 + $0x5f0] sm:$0xff]
        %v5633 = vld [vmem:[%s868 + $0x5f8] sm:$0xff]
        %v5634 = vld [vmem:[%s868 + $0x600] sm:$0xff]
        %v5635 = vld [vmem:[%s868 + $0x608] sm:$0xff]
        %v5636 = vld [vmem:[%s868 + $0x610] sm:$0xff]
        %v5637 = vld [vmem:[%s868 + $0x618] sm:$0xff]
        %v5638 = vld [vmem:[%s868 + $0x620] sm:$0xff]
        %v5639 = vld [vmem:[%s868 + $0x628] sm:$0xff]
        %v5640 = vld [vmem:[%s868 + $0x630] sm:$0xff]
        %v5641 = vld [vmem:[%s868 + $0x638] sm:$0xff]
        %v5642 = vld [vmem:[%s868 + $0x640] sm:$0xff]
        %v5643 = vld [vmem:[%s868 + $0x648] sm:$0xff]
        %v5644 = vld [vmem:[%s868 + $0x650] sm:$0xff]
        %v5645 = vld [vmem:[%s868 + $0x658] sm:$0xff]
        %v5646 = vld [vmem:[%s868 + $0x660] sm:$0xff]
        %v5647 = vld [vmem:[%s868 + $0x668] sm:$0xff]
        %v5648 = vld [vmem:[%s868 + $0x670] sm:$0xff]
        %v5649 = vld [vmem:[%s868 + $0x678] sm:$0xff]
        %v5650 = vld [vmem:[%s868 + $0x680] sm:$0xff]
        %v5651 = vld [vmem:[%s868 + $0x688] sm:$0xff]
        %v5652 = vld [vmem:[%s868 + $0x690] sm:$0xff]
        %v5653 = vld [vmem:[%s868 + $0x698] sm:$0xff]
        %v5654 = vld [vmem:[%s868 + $0x6a0] sm:$0xff]
        %v5655 = vld [vmem:[%s868 + $0x6a8] sm:$0xff]
        %v5656 = vld [vmem:[%s868 + $0x6b0] sm:$0xff]
        %v5657 = vld [vmem:[%s868 + $0x6b8] sm:$0xff]
        %v5658 = vld [vmem:[%s868 + $0x6c0] sm:$0xff]
        %v5659 = vld [vmem:[%s868 + $0x6c8] sm:$0xff]
        %v5660 = vld [vmem:[%s868 + $0x6d0] sm:$0xff]
        %v5661 = vld [vmem:[%s868 + $0x6d8] sm:$0xff]
        %v5662 = vld [vmem:[%s868 + $0x6e0] sm:$0xff]
        %v5663 = vld [vmem:[%s868 + $0x6e8] sm:$0xff]
        %v5664 = vld [vmem:[%s868 + $0x6f0] sm:$0xff]
        %v5665 = vld [vmem:[%s868 + $0x6f8] sm:$0xff]
        %v5666 = vld [vmem:[%s868 + $0x700] sm:$0xff]
        %v5667 = vld [vmem:[%s868 + $0x708] sm:$0xff]
        %v5668 = vld [vmem:[%s868 + $0x710] sm:$0xff]
        %v5669 = vld [vmem:[%s868 + $0x718] sm:$0xff]
        %v5670 = vld [vmem:[%s868 + $0x720] sm:$0xff]
        %v5671 = vld [vmem:[%s868 + $0x728] sm:$0xff]
        %v5672 = vld [vmem:[%s868 + $0x730] sm:$0xff]
        %v5673 = vld [vmem:[%s868 + $0x738] sm:$0xff]
        %v5674 = vld [vmem:[%s868 + $0x740] sm:$0xff]
        %v5675 = vld [vmem:[%s868 + $0x748] sm:$0xff]
        %v5676 = vld [vmem:[%s868 + $0x750] sm:$0xff]
        %v5677 = vld [vmem:[%s868 + $0x758] sm:$0xff]
        %v5678 = vld [vmem:[%s868 + $0x760] sm:$0xff]
        %v5679 = vld [vmem:[%s868 + $0x768] sm:$0xff]
        %v5680 = vld [vmem:[%s868 + $0x770] sm:$0xff]
        %v5681 = vld [vmem:[%s868 + $0x778] sm:$0xff]
        %v5682 = vld [vmem:[%s868 + $0x780] sm:$0xff]
        %v5683 = vld [vmem:[%s868 + $0x788] sm:$0xff]
        %v5684 = vld [vmem:[%s868 + $0x790] sm:$0xff]
        %v5685 = vld [vmem:[%s868 + $0x798] sm:$0xff]
        %v5686 = vld [vmem:[%s868 + $0x7a0] sm:$0xff]
        %v5687 = vld [vmem:[%s868 + $0x7a8] sm:$0xff]
        %v5688 = vld [vmem:[%s868 + $0x7b0] sm:$0xff]
        %v5689 = vld [vmem:[%s868 + $0x7b8] sm:$0xff]
        %v5690 = vld [vmem:[%s868 + $0x7c0] sm:$0xff]
        %v5691 = vld [vmem:[%s868 + $0x7c8] sm:$0xff]
        %v5692 = vld [vmem:[%s868 + $0x7d0] sm:$0xff]
        %v5693 = vld [vmem:[%s868 + $0x7d8] sm:$0xff]
        %v5694 = vld [vmem:[%s868 + $0x7e0] sm:$0xff]
        %v5695 = vld [vmem:[%s868 + $0x7e8] sm:$0xff]
        %v5696 = vld [vmem:[%s868 + $0x7f0] sm:$0xff]
        %v5697 = vld [vmem:[%s868 + $0x7f8] sm:$0xff]
        %v5698 = vld [vmem:[%s868 + $0x800] sm:$0xff]
        %v5699 = vld [vmem:[%s868 + $0x808] sm:$0xff]
        %v5700 = vld [vmem:[%s868 + $0x810] sm:$0xff]
        %v5701 = vld [vmem:[%s868 + $0x818] sm:$0xff]
        %v5702 = vld [vmem:[%s868 + $0x820] sm:$0xff]
        %v5703 = vld [vmem:[%s868 + $0x828] sm:$0xff]
        %v5704 = vld [vmem:[%s868 + $0x830] sm:$0xff]
        %v5705 = vld [vmem:[%s868 + $0x838] sm:$0xff]
        %v5706 = vld [vmem:[%s868 + $0x840] sm:$0xff]
        %v5707 = vld [vmem:[%s868 + $0x848] sm:$0xff]
        %v5708 = vld [vmem:[%s868 + $0x850] sm:$0xff]
        %v5709 = vld [vmem:[%s868 + $0x858] sm:$0xff]
        %v5710 = vld [vmem:[%s868 + $0x860] sm:$0xff]
        %v5711 = vld [vmem:[%s868 + $0x868] sm:$0xff]
        %v5712 = vld [vmem:[%s868 + $0x870] sm:$0xff]
        %v5713 = vld [vmem:[%s868 + $0x878] sm:$0xff]
        %v5714 = vld [vmem:[%s868 + $0x880] sm:$0xff]
        %v5715 = vld [vmem:[%s868 + $0x888] sm:$0xff]
        %v5716 = vld [vmem:[%s868 + $0x890] sm:$0xff]
        %v5717 = vld [vmem:[%s868 + $0x898] sm:$0xff]
        %v5718 = vld [vmem:[%s868 + $0x8a0] sm:$0xff]
        %v5719 = vld [vmem:[%s868 + $0x8a8] sm:$0xff]
        %v5720 = vld [vmem:[%s868 + $0x8b0] sm:$0xff]
        %v5721 = vld [vmem:[%s868 + $0x8b8] sm:$0xff]
        %v5722 = vld [vmem:[%s868 + $0x8c0] sm:$0xff]
        %v5723 = vld [vmem:[%s868 + $0x8c8] sm:$0xff]
        %v5724 = vld [vmem:[%s868 + $0x8d0] sm:$0xff]
        %v5725 = vld [vmem:[%s868 + $0x8d8] sm:$0xff]
        %v5726 = vld [vmem:[%s868 + $0x8e0] sm:$0xff]
        %v5727 = vld [vmem:[%s868 + $0x8e8] sm:$0xff]
        %v5728 = vld [vmem:[%s868 + $0x8f0] sm:$0xff]
        %v5729 = vld [vmem:[%s868 + $0x8f8] sm:$0xff]
        %v5730 = vld [vmem:[%s877] sm:$0xff]
        %v5731 = vld [vmem:[%s877 + $0x8] sm:$0xf]
        %v5734 = vlaneseq
        %v5735 = vshrl.u32 %v5734, 7
        %v5736 = vsub.s32 0, %v5735
        %v5737 = vrot.slane %v5730, %v5736
        %v5738 = vlaneseq
        %v5739 = vshrl.u32 %v5738, 7
        %v5740 = vsub.s32 1, %v5739
        %v5741 = vrot.slane %v5730, %v5740
        %v5742 = vlaneseq
        %v5743 = vshrl.u32 %v5742, 7
        %v5744 = vsub.s32 2, %v5743
        %v5745 = vrot.slane %v5730, %v5744
        %v5746 = vlaneseq
        %v5747 = vshrl.u32 %v5746, 7
        %v5748 = vsub.s32 3, %v5747
        %v5749 = vrot.slane %v5730, %v5748
        %v5750 = vlaneseq
        %v5751 = vshrl.u32 %v5750, 7
        %v5752 = vsub.s32 4, %v5751
        %v5753 = vrot.slane %v5730, %v5752
        %v5754 = vlaneseq
        %v5755 = vshrl.u32 %v5754, 7
        %v5756 = vsub.s32 5, %v5755
        %v5757 = vrot.slane %v5730, %v5756
        %v5758 = vlaneseq
        %v5759 = vshrl.u32 %v5758, 7
        %v5760 = vsub.s32 6, %v5759
        %v5761 = vrot.slane %v5730, %v5760
        %v5762 = vlaneseq
        %v5763 = vshrl.u32 %v5762, 7
        %v5764 = vsub.s32 7, %v5763
        %v5765 = vrot.slane %v5730, %v5764
        %v5766 = vlaneseq
        %v5767 = vshrl.u32 %v5766, 7
        %v5768 = vsub.s32 0, %v5767
        %v5769 = vrot.slane %v5731, %v5768
        %v5770 = vlaneseq
        %v5771 = vshrl.u32 %v5770, 7
        %v5772 = vsub.s32 1, %v5771
        %v5773 = vrot.slane %v5731, %v5772
        %v5774 = vlaneseq
        %v5775 = vshrl.u32 %v5774, 7
        %v5776 = vsub.s32 2, %v5775
        %v5777 = vrot.slane %v5731, %v5776
        %v5778 = vlaneseq
        %v5779 = vshrl.u32 %v5778, 7
        %v5780 = vsub.s32 3, %v5779
        %v5781 = vrot.slane %v5731, %v5780
        %v6082 = vunpack.c.l.b16 %v5442
        %v6083 = vunpack.c.h.b16 %v5442
        %v6084 = vunpack.c.l.b16 %v5443
        %v6085 = vunpack.c.h.b16 %v5443
        %v6086 = vunpack.c.l.b16 %v5444
        %v6087 = vunpack.c.h.b16 %v5444
        %v6088 = vunpack.c.l.b16 %v5445
        %v6089 = vunpack.c.h.b16 %v5445
        %v6090 = vunpack.c.l.b16 %v5446
        %v6091 = vunpack.c.h.b16 %v5446
        %v6092 = vunpack.c.l.b16 %v5447
        %v6093 = vunpack.c.h.b16 %v5447
        %v6094 = vunpack.c.l.b16 %v5448
        %v6095 = vunpack.c.h.b16 %v5448
        %v6096 = vunpack.c.l.b16 %v5449
        %v6097 = vunpack.c.h.b16 %v5449
        %v6098 = vunpack.c.l.b16 %v5450
        %v6099 = vunpack.c.h.b16 %v5450
        %v6100 = vunpack.c.l.b16 %v5451
        %v6101 = vunpack.c.h.b16 %v5451
        %v6102 = vunpack.c.l.b16 %v5452
        %v6103 = vunpack.c.h.b16 %v5452
        %v6104 = vunpack.c.l.b16 %v5453
        %v6105 = vunpack.c.h.b16 %v5453
        %v6106 = vunpack.c.l.b16 %v5454
        %v6107 = vunpack.c.h.b16 %v5454
        %v6108 = vunpack.c.l.b16 %v5455
        %v6109 = vunpack.c.h.b16 %v5455
        %v6110 = vunpack.c.l.b16 %v5456
        %v6111 = vunpack.c.h.b16 %v5456
        %v6112 = vunpack.c.l.b16 %v5457
        %v6113 = vunpack.c.h.b16 %v5457
        %v6114 = vunpack.c.l.b16 %v5458
        %v6115 = vunpack.c.h.b16 %v5458
        %v6116 = vunpack.c.l.b16 %v5459
        %v6117 = vunpack.c.h.b16 %v5459
        %v6118 = vunpack.c.l.b16 %v5460
        %v6119 = vunpack.c.h.b16 %v5460
        %v6120 = vunpack.c.l.b16 %v5461
        %v6121 = vunpack.c.h.b16 %v5461
        %v6122 = vunpack.c.l.b16 %v5462
        %v6123 = vunpack.c.h.b16 %v5462
        %v6124 = vunpack.c.l.b16 %v5463
        %v6125 = vunpack.c.h.b16 %v5463
        %v6126 = vunpack.c.l.b16 %v5464
        %v6127 = vunpack.c.h.b16 %v5464
        %v6128 = vunpack.c.l.b16 %v5465
        %v6129 = vunpack.c.h.b16 %v5465
        %v6130 = vunpack.c.l.b16 %v5466
        %v6131 = vunpack.c.h.b16 %v5466
        %v6132 = vunpack.c.l.b16 %v5467
        %v6133 = vunpack.c.h.b16 %v5467
        %v6134 = vunpack.c.l.b16 %v5468
        %v6135 = vunpack.c.h.b16 %v5468
        %v6136 = vunpack.c.l.b16 %v5469
        %v6137 = vunpack.c.h.b16 %v5469
        %v6138 = vunpack.c.l.b16 %v5470
        %v6139 = vunpack.c.h.b16 %v5470
        %v6140 = vunpack.c.l.b16 %v5471
        %v6141 = vunpack.c.h.b16 %v5471
        %v6142 = vunpack.c.l.b16 %v5472
        %v6143 = vunpack.c.h.b16 %v5472
        %v6144 = vunpack.c.l.b16 %v5473
        %v6145 = vunpack.c.h.b16 %v5473
        %v6146 = vunpack.c.l.b16 %v5474
        %v6147 = vunpack.c.h.b16 %v5474
        %v6148 = vunpack.c.l.b16 %v5475
        %v6149 = vunpack.c.h.b16 %v5475
        %v6150 = vunpack.c.l.b16 %v5476
        %v6151 = vunpack.c.h.b16 %v5476
        %v6152 = vunpack.c.l.b16 %v5477
        %v6153 = vunpack.c.h.b16 %v5477
        %v6154 = vunpack.c.l.b16 %v5478
        %v6155 = vunpack.c.h.b16 %v5478
        %v6156 = vunpack.c.l.b16 %v5479
        %v6157 = vunpack.c.h.b16 %v5479
        %v6158 = vunpack.c.l.b16 %v5480
        %v6159 = vunpack.c.h.b16 %v5480
        %v6160 = vunpack.c.l.b16 %v5481
        %v6161 = vunpack.c.h.b16 %v5481
        %v6162 = vunpack.c.l.b16 %v5482
        %v6163 = vunpack.c.h.b16 %v5482
        %v6164 = vunpack.c.l.b16 %v5483
        %v6165 = vunpack.c.h.b16 %v5483
        %v6166 = vunpack.c.l.b16 %v5484
        %v6167 = vunpack.c.h.b16 %v5484
        %v6168 = vunpack.c.l.b16 %v5485
        %v6169 = vunpack.c.h.b16 %v5485
        %v6170 = vunpack.c.l.b16 %v5486
        %v6171 = vunpack.c.h.b16 %v5486
        %v6172 = vunpack.c.l.b16 %v5487
        %v6173 = vunpack.c.h.b16 %v5487
        %v6174 = vunpack.c.l.b16 %v5488
        %v6175 = vunpack.c.h.b16 %v5488
        %v6176 = vunpack.c.l.b16 %v5489
        %v6177 = vunpack.c.h.b16 %v5489
        %v6178 = vunpack.c.l.b16 %v5490
        %v6179 = vunpack.c.h.b16 %v5490
        %v6180 = vunpack.c.l.b16 %v5491
        %v6181 = vunpack.c.h.b16 %v5491
        %v6182 = vunpack.c.l.b16 %v5492
        %v6183 = vunpack.c.h.b16 %v5492
        %v6184 = vunpack.c.l.b16 %v5493
        %v6185 = vunpack.c.h.b16 %v5493
        %v6186 = vunpack.c.l.b16 %v5494
        %v6187 = vunpack.c.h.b16 %v5494
        %v6188 = vunpack.c.l.b16 %v5495
        %v6189 = vunpack.c.h.b16 %v5495
        %v6190 = vunpack.c.l.b16 %v5496
        %v6191 = vunpack.c.h.b16 %v5496
        %v6192 = vunpack.c.l.b16 %v5497
        %v6193 = vunpack.c.h.b16 %v5497
        %v6194 = vunpack.c.l.b16 %v5498
        %v6195 = vunpack.c.h.b16 %v5498
        %v6196 = vunpack.c.l.b16 %v5499
        %v6197 = vunpack.c.h.b16 %v5499
        %v6198 = vunpack.c.l.b16 %v5500
        %v6199 = vunpack.c.h.b16 %v5500
        %v6200 = vunpack.c.l.b16 %v5501
        %v6201 = vunpack.c.h.b16 %v5501
        %v6202 = vunpack.c.l.b16 %v5502
        %v6203 = vunpack.c.h.b16 %v5502
        %v6204 = vunpack.c.l.b16 %v5503
        %v6205 = vunpack.c.h.b16 %v5503
        %v6206 = vunpack.c.l.b16 %v5504
        %v6207 = vunpack.c.h.b16 %v5504
        %v6208 = vunpack.c.l.b16 %v5505
        %v6209 = vunpack.c.h.b16 %v5505
        %v6210 = vunpack.c.l.b16 %v5506
        %v6211 = vunpack.c.h.b16 %v5506
        %v6212 = vunpack.c.l.b16 %v5507
        %v6213 = vunpack.c.h.b16 %v5507
        %v6214 = vunpack.c.l.b16 %v5508
        %v6215 = vunpack.c.h.b16 %v5508
        %v6216 = vunpack.c.l.b16 %v5509
        %v6217 = vunpack.c.h.b16 %v5509
        %v6218 = vunpack.c.l.b16 %v5510
        %v6219 = vunpack.c.h.b16 %v5510
        %v6220 = vunpack.c.l.b16 %v5511
        %v6221 = vunpack.c.h.b16 %v5511
        %v6222 = vunpack.c.l.b16 %v5512
        %v6223 = vunpack.c.h.b16 %v5512
        %v6224 = vunpack.c.l.b16 %v5513
        %v6225 = vunpack.c.h.b16 %v5513
        %v6226 = vunpack.c.l.b16 %v5514
        %v6227 = vunpack.c.h.b16 %v5514
        %v6228 = vunpack.c.l.b16 %v5515
        %v6229 = vunpack.c.h.b16 %v5515
        %v6230 = vunpack.c.l.b16 %v5516
        %v6231 = vunpack.c.h.b16 %v5516
        %v6232 = vunpack.c.l.b16 %v5517
        %v6233 = vunpack.c.h.b16 %v5517
        %v6234 = vunpack.c.l.b16 %v5518
        %v6235 = vunpack.c.h.b16 %v5518
        %v6236 = vunpack.c.l.b16 %v5519
        %v6237 = vunpack.c.h.b16 %v5519
        %v6238 = vunpack.c.l.b16 %v5520
        %v6239 = vunpack.c.h.b16 %v5520
        %v6240 = vunpack.c.l.b16 %v5521
        %v6241 = vunpack.c.h.b16 %v5521
        %v6242 = vunpack.c.l.b16 %v5522
        %v6243 = vunpack.c.h.b16 %v5522
        %v6244 = vunpack.c.l.b16 %v5523
        %v6245 = vunpack.c.h.b16 %v5523
        %v6246 = vunpack.c.l.b16 %v5524
        %v6247 = vunpack.c.h.b16 %v5524
        %v6248 = vunpack.c.l.b16 %v5525
        %v6249 = vunpack.c.h.b16 %v5525
        %v6250 = vunpack.c.l.b16 %v5526
        %v6251 = vunpack.c.h.b16 %v5526
        %v6252 = vunpack.c.l.b16 %v5527
        %v6253 = vunpack.c.h.b16 %v5527
        %v6254 = vunpack.c.l.b16 %v5528
        %v6255 = vunpack.c.h.b16 %v5528
        %v6256 = vunpack.c.l.b16 %v5529
        %v6257 = vunpack.c.h.b16 %v5529
        %v6258 = vunpack.c.l.b16 %v5530
        %v6259 = vunpack.c.h.b16 %v5530
        %v6260 = vunpack.c.l.b16 %v5531
        %v6261 = vunpack.c.h.b16 %v5531
        %v6262 = vunpack.c.l.b16 %v5532
        %v6263 = vunpack.c.h.b16 %v5532
        %v6264 = vunpack.c.l.b16 %v5533
        %v6265 = vunpack.c.h.b16 %v5533
        %v6266 = vunpack.c.l.b16 %v5534
        %v6267 = vunpack.c.h.b16 %v5534
        %v6268 = vunpack.c.l.b16 %v5535
        %v6269 = vunpack.c.h.b16 %v5535
        %v6270 = vunpack.c.l.b16 %v5536
        %v6271 = vunpack.c.h.b16 %v5536
        %v6272 = vunpack.c.l.b16 %v5537
        %v6273 = vunpack.c.h.b16 %v5537
        %v6274 = vunpack.c.l.b16 %v5538
        %v6275 = vunpack.c.h.b16 %v5538
        %v6276 = vunpack.c.l.b16 %v5539
        %v6277 = vunpack.c.h.b16 %v5539
        %v6278 = vunpack.c.l.b16 %v5540
        %v6279 = vunpack.c.h.b16 %v5540
        %v6280 = vunpack.c.l.b16 %v5541
        %v6281 = vunpack.c.h.b16 %v5541
        %v6282 = vunpack.c.l.b16 %v5542
        %v6283 = vunpack.c.h.b16 %v5542
        %v6284 = vunpack.c.l.b16 %v5543
        %v6285 = vunpack.c.h.b16 %v5543
        %v6286 = vunpack.c.l.b16 %v5544
        %v6287 = vunpack.c.h.b16 %v5544
        %v6288 = vunpack.c.l.b16 %v5545
        %v6289 = vunpack.c.h.b16 %v5545
        %v6290 = vunpack.c.l.b16 %v5546
        %v6291 = vunpack.c.h.b16 %v5546
        %v6292 = vunpack.c.l.b16 %v5547
        %v6293 = vunpack.c.h.b16 %v5547
        %v6294 = vunpack.c.l.b16 %v5548
        %v6295 = vunpack.c.h.b16 %v5548
        %v6296 = vunpack.c.l.b16 %v5549
        %v6297 = vunpack.c.h.b16 %v5549
        %v6298 = vunpack.c.l.b16 %v5550
        %v6299 = vunpack.c.h.b16 %v5550
        %v6300 = vunpack.c.l.b16 %v5551
        %v6301 = vunpack.c.h.b16 %v5551
        %v6302 = vunpack.c.l.b16 %v5552
        %v6303 = vunpack.c.h.b16 %v5552
        %v6304 = vunpack.c.l.b16 %v5553
        %v6305 = vunpack.c.h.b16 %v5553
        %v6306 = vunpack.c.l.b16 %v5554
        %v6307 = vunpack.c.h.b16 %v5554
        %v6308 = vunpack.c.l.b16 %v5555
        %v6309 = vunpack.c.h.b16 %v5555
        %v6310 = vunpack.c.l.b16 %v5556
        %v6311 = vunpack.c.h.b16 %v5556
        %v6312 = vunpack.c.l.b16 %v5557
        %v6313 = vunpack.c.h.b16 %v5557
        %v6314 = vunpack.c.l.b16 %v5558
        %v6315 = vunpack.c.h.b16 %v5558
        %v6316 = vunpack.c.l.b16 %v5559
        %v6317 = vunpack.c.h.b16 %v5559
        %v6318 = vunpack.c.l.b16 %v5560
        %v6319 = vunpack.c.h.b16 %v5560
        %v6320 = vunpack.c.l.b16 %v5561
        %v6321 = vunpack.c.h.b16 %v5561
        %v6322 = vunpack.c.l.b16 %v5562
        %v6323 = vunpack.c.h.b16 %v5562
        %v6324 = vunpack.c.l.b16 %v5563
        %v6325 = vunpack.c.h.b16 %v5563
        %v6326 = vunpack.c.l.b16 %v5564
        %v6327 = vunpack.c.h.b16 %v5564
        %v6328 = vunpack.c.l.b16 %v5565
        %v6329 = vunpack.c.h.b16 %v5565
        %v6330 = vunpack.c.l.b16 %v5566
        %v6331 = vunpack.c.h.b16 %v5566
        %v6332 = vunpack.c.l.b16 %v5567
        %v6333 = vunpack.c.h.b16 %v5567
        %v6334 = vunpack.c.l.b16 %v5568
        %v6335 = vunpack.c.h.b16 %v5568
        %v6336 = vunpack.c.l.b16 %v5569
        %v6337 = vunpack.c.h.b16 %v5569
        %v6338 = vunpack.c.l.b16 %v5570
        %v6339 = vunpack.c.h.b16 %v5570
        %v6340 = vunpack.c.l.b16 %v5571
        %v6341 = vunpack.c.h.b16 %v5571
        %v6342 = vunpack.c.l.b16 %v5572
        %v6343 = vunpack.c.h.b16 %v5572
        %v6344 = vunpack.c.l.b16 %v5573
        %v6345 = vunpack.c.h.b16 %v5573
        %v6346 = vunpack.c.l.b16 %v5574
        %v6347 = vunpack.c.h.b16 %v5574
        %v6348 = vunpack.c.l.b16 %v5575
        %v6349 = vunpack.c.h.b16 %v5575
        %v6350 = vunpack.c.l.b16 %v5576
        %v6351 = vunpack.c.h.b16 %v5576
        %v6352 = vunpack.c.l.b16 %v5577
        %v6353 = vunpack.c.h.b16 %v5577
        %v6354 = vunpack.c.l.b16 %v5578
        %v6355 = vunpack.c.h.b16 %v5578
        %v6356 = vunpack.c.l.b16 %v5579
        %v6357 = vunpack.c.h.b16 %v5579
        %v6358 = vunpack.c.l.b16 %v5580
        %v6359 = vunpack.c.h.b16 %v5580
        %v6360 = vunpack.c.l.b16 %v5581
        %v6361 = vunpack.c.h.b16 %v5581
        %v6362 = vunpack.c.l.b16 %v5582
        %v6363 = vunpack.c.h.b16 %v5582
        %v6364 = vunpack.c.l.b16 %v5583
        %v6365 = vunpack.c.h.b16 %v5583
        %v6366 = vunpack.c.l.b16 %v5584
        %v6367 = vunpack.c.h.b16 %v5584
        %v6368 = vunpack.c.l.b16 %v5585
        %v6369 = vunpack.c.h.b16 %v5585
        %v6370 = vunpack.c.l.b16 %v5586
        %v6371 = vunpack.c.h.b16 %v5586
        %v6372 = vunpack.c.l.b16 %v5587
        %v6373 = vunpack.c.h.b16 %v5587
        %v6374 = vunpack.c.l.b16 %v5588
        %v6375 = vunpack.c.h.b16 %v5588
        %v6376 = vunpack.c.l.b16 %v5589
        %v6377 = vunpack.c.h.b16 %v5589
        %v6378 = vunpack.c.l.b16 %v5590
        %v6379 = vunpack.c.h.b16 %v5590
        %v6380 = vunpack.c.l.b16 %v5591
        %v6381 = vunpack.c.h.b16 %v5591
        %v6382 = vunpack.c.l.b16 %v5592
        %v6383 = vunpack.c.h.b16 %v5592
        %v6384 = vunpack.c.l.b16 %v5593
        %v6385 = vunpack.c.h.b16 %v5593
        %v6386 = vunpack.c.l.b16 %v5594
        %v6387 = vunpack.c.h.b16 %v5594
        %v6388 = vunpack.c.l.b16 %v5595
        %v6389 = vunpack.c.h.b16 %v5595
        %v6390 = vunpack.c.l.b16 %v5596
        %v6391 = vunpack.c.h.b16 %v5596
        %v6392 = vunpack.c.l.b16 %v5597
        %v6393 = vunpack.c.h.b16 %v5597
        %v6394 = vunpack.c.l.b16 %v5598
        %v6395 = vunpack.c.h.b16 %v5598
        %v6396 = vunpack.c.l.b16 %v5599
        %v6397 = vunpack.c.h.b16 %v5599
        %v6398 = vunpack.c.l.b16 %v5600
        %v6399 = vunpack.c.h.b16 %v5600
        %v6400 = vunpack.c.l.b16 %v5601
        %v6401 = vunpack.c.h.b16 %v5601
        %v6402 = vunpack.c.l.b16 %v5602
        %v6403 = vunpack.c.h.b16 %v5602
        %v6404 = vunpack.c.l.b16 %v5603
        %v6405 = vunpack.c.h.b16 %v5603
        %v6406 = vunpack.c.l.b16 %v5604
        %v6407 = vunpack.c.h.b16 %v5604
        %v6408 = vunpack.c.l.b16 %v5605
        %v6409 = vunpack.c.h.b16 %v5605
        %v6410 = vunpack.c.l.b16 %v5606
        %v6411 = vunpack.c.h.b16 %v5606
        %v6412 = vunpack.c.l.b16 %v5607
        %v6413 = vunpack.c.h.b16 %v5607
        %v6414 = vunpack.c.l.b16 %v5608
        %v6415 = vunpack.c.h.b16 %v5608
        %v6416 = vunpack.c.l.b16 %v5609
        %v6417 = vunpack.c.h.b16 %v5609
        %v6418 = vunpack.c.l.b16 %v5610
        %v6419 = vunpack.c.h.b16 %v5610
        %v6420 = vunpack.c.l.b16 %v5611
        %v6421 = vunpack.c.h.b16 %v5611
        %v6422 = vunpack.c.l.b16 %v5612
        %v6423 = vunpack.c.h.b16 %v5612
        %v6424 = vunpack.c.l.b16 %v5613
        %v6425 = vunpack.c.h.b16 %v5613
        %v6426 = vunpack.c.l.b16 %v5614
        %v6427 = vunpack.c.h.b16 %v5614
        %v6428 = vunpack.c.l.b16 %v5615
        %v6429 = vunpack.c.h.b16 %v5615
        %v6430 = vunpack.c.l.b16 %v5616
        %v6431 = vunpack.c.h.b16 %v5616
        %v6432 = vunpack.c.l.b16 %v5617
        %v6433 = vunpack.c.h.b16 %v5617
        %v6434 = vunpack.c.l.b16 %v5618
        %v6435 = vunpack.c.h.b16 %v5618
        %v6436 = vunpack.c.l.b16 %v5619
        %v6437 = vunpack.c.h.b16 %v5619
        %v6438 = vunpack.c.l.b16 %v5620
        %v6439 = vunpack.c.h.b16 %v5620
        %v6440 = vunpack.c.l.b16 %v5621
        %v6441 = vunpack.c.h.b16 %v5621
        %v6442 = vunpack.c.l.b16 %v5622
        %v6443 = vunpack.c.h.b16 %v5622
        %v6444 = vunpack.c.l.b16 %v5623
        %v6445 = vunpack.c.h.b16 %v5623
        %v6446 = vunpack.c.l.b16 %v5624
        %v6447 = vunpack.c.h.b16 %v5624
        %v6448 = vunpack.c.l.b16 %v5625
        %v6449 = vunpack.c.h.b16 %v5625
        %v6450 = vunpack.c.l.b16 %v5626
        %v6451 = vunpack.c.h.b16 %v5626
        %v6452 = vunpack.c.l.b16 %v5627
        %v6453 = vunpack.c.h.b16 %v5627
        %v6454 = vunpack.c.l.b16 %v5628
        %v6455 = vunpack.c.h.b16 %v5628
        %v6456 = vunpack.c.l.b16 %v5629
        %v6457 = vunpack.c.h.b16 %v5629
        %v6458 = vunpack.c.l.b16 %v5630
        %v6459 = vunpack.c.h.b16 %v5630
        %v6460 = vunpack.c.l.b16 %v5631
        %v6461 = vunpack.c.h.b16 %v5631
        %v6462 = vunpack.c.l.b16 %v5632
        %v6463 = vunpack.c.h.b16 %v5632
        %v6464 = vunpack.c.l.b16 %v5633
        %v6465 = vunpack.c.h.b16 %v5633
        %v6466 = vunpack.c.l.b16 %v5634
        %v6467 = vunpack.c.h.b16 %v5634
        %v6468 = vunpack.c.l.b16 %v5635
        %v6469 = vunpack.c.h.b16 %v5635
        %v6470 = vunpack.c.l.b16 %v5636
        %v6471 = vunpack.c.h.b16 %v5636
        %v6472 = vunpack.c.l.b16 %v5637
        %v6473 = vunpack.c.h.b16 %v5637
        %v6474 = vunpack.c.l.b16 %v5638
        %v6475 = vunpack.c.h.b16 %v5638
        %v6476 = vunpack.c.l.b16 %v5639
        %v6477 = vunpack.c.h.b16 %v5639
        %v6478 = vunpack.c.l.b16 %v5640
        %v6479 = vunpack.c.h.b16 %v5640
        %v6480 = vunpack.c.l.b16 %v5641
        %v6481 = vunpack.c.h.b16 %v5641
        %v6482 = vunpack.c.l.b16 %v5642
        %v6483 = vunpack.c.h.b16 %v5642
        %v6484 = vunpack.c.l.b16 %v5643
        %v6485 = vunpack.c.h.b16 %v5643
        %v6486 = vunpack.c.l.b16 %v5644
        %v6487 = vunpack.c.h.b16 %v5644
        %v6488 = vunpack.c.l.b16 %v5645
        %v6489 = vunpack.c.h.b16 %v5645
        %v6490 = vunpack.c.l.b16 %v5646
        %v6491 = vunpack.c.h.b16 %v5646
        %v6492 = vunpack.c.l.b16 %v5647
        %v6493 = vunpack.c.h.b16 %v5647
        %v6494 = vunpack.c.l.b16 %v5648
        %v6495 = vunpack.c.h.b16 %v5648
        %v6496 = vunpack.c.l.b16 %v5649
        %v6497 = vunpack.c.h.b16 %v5649
        %v6498 = vunpack.c.l.b16 %v5650
        %v6499 = vunpack.c.h.b16 %v5650
        %v6500 = vunpack.c.l.b16 %v5651
        %v6501 = vunpack.c.h.b16 %v5651
        %v6502 = vunpack.c.l.b16 %v5652
        %v6503 = vunpack.c.h.b16 %v5652
        %v6504 = vunpack.c.l.b16 %v5653
        %v6505 = vunpack.c.h.b16 %v5653
        %v6506 = vunpack.c.l.b16 %v5654
        %v6507 = vunpack.c.h.b16 %v5654
        %v6508 = vunpack.c.l.b16 %v5655
        %v6509 = vunpack.c.h.b16 %v5655
        %v6510 = vunpack.c.l.b16 %v5656
        %v6511 = vunpack.c.h.b16 %v5656
        %v6512 = vunpack.c.l.b16 %v5657
        %v6513 = vunpack.c.h.b16 %v5657
        %v6514 = vunpack.c.l.b16 %v5658
        %v6515 = vunpack.c.h.b16 %v5658
        %v6516 = vunpack.c.l.b16 %v5659
        %v6517 = vunpack.c.h.b16 %v5659
        %v6518 = vunpack.c.l.b16 %v5660
        %v6519 = vunpack.c.h.b16 %v5660
        %v6520 = vunpack.c.l.b16 %v5661
        %v6521 = vunpack.c.h.b16 %v5661
        %v6522 = vunpack.c.l.b16 %v5662
        %v6523 = vunpack.c.h.b16 %v5662
        %v6524 = vunpack.c.l.b16 %v5663
        %v6525 = vunpack.c.h.b16 %v5663
        %v6526 = vunpack.c.l.b16 %v5664
        %v6527 = vunpack.c.h.b16 %v5664
        %v6528 = vunpack.c.l.b16 %v5665
        %v6529 = vunpack.c.h.b16 %v5665
        %v6530 = vunpack.c.l.b16 %v5666
        %v6531 = vunpack.c.h.b16 %v5666
        %v6532 = vunpack.c.l.b16 %v5667
        %v6533 = vunpack.c.h.b16 %v5667
        %v6534 = vunpack.c.l.b16 %v5668
        %v6535 = vunpack.c.h.b16 %v5668
        %v6536 = vunpack.c.l.b16 %v5669
        %v6537 = vunpack.c.h.b16 %v5669
        %v6538 = vunpack.c.l.b16 %v5670
        %v6539 = vunpack.c.h.b16 %v5670
        %v6540 = vunpack.c.l.b16 %v5671
        %v6541 = vunpack.c.h.b16 %v5671
        %v6542 = vunpack.c.l.b16 %v5672
        %v6543 = vunpack.c.h.b16 %v5672
        %v6544 = vunpack.c.l.b16 %v5673
        %v6545 = vunpack.c.h.b16 %v5673
        %v6546 = vunpack.c.l.b16 %v5674
        %v6547 = vunpack.c.h.b16 %v5674
        %v6548 = vunpack.c.l.b16 %v5675
        %v6549 = vunpack.c.h.b16 %v5675
        %v6550 = vunpack.c.l.b16 %v5676
        %v6551 = vunpack.c.h.b16 %v5676
        %v6552 = vunpack.c.l.b16 %v5677
        %v6553 = vunpack.c.h.b16 %v5677
        %v6554 = vunpack.c.l.b16 %v5678
        %v6555 = vunpack.c.h.b16 %v5678
        %v6556 = vunpack.c.l.b16 %v5679
        %v6557 = vunpack.c.h.b16 %v5679
        %v6558 = vunpack.c.l.b16 %v5680
        %v6559 = vunpack.c.h.b16 %v5680
        %v6560 = vunpack.c.l.b16 %v5681
        %v6561 = vunpack.c.h.b16 %v5681
        %v6562 = vunpack.c.l.b16 %v5682
        %v6563 = vunpack.c.h.b16 %v5682
        %v6564 = vunpack.c.l.b16 %v5683
        %v6565 = vunpack.c.h.b16 %v5683
        %v6566 = vunpack.c.l.b16 %v5684
        %v6567 = vunpack.c.h.b16 %v5684
        %v6568 = vunpack.c.l.b16 %v5685
        %v6569 = vunpack.c.h.b16 %v5685
        %v6570 = vunpack.c.l.b16 %v5686
        %v6571 = vunpack.c.h.b16 %v5686
        %v6572 = vunpack.c.l.b16 %v5687
        %v6573 = vunpack.c.h.b16 %v5687
        %v6574 = vunpack.c.l.b16 %v5688
        %v6575 = vunpack.c.h.b16 %v5688
        %v6576 = vunpack.c.l.b16 %v5689
        %v6577 = vunpack.c.h.b16 %v5689
        %v6578 = vunpack.c.l.b16 %v5690
        %v6579 = vunpack.c.h.b16 %v5690
        %v6580 = vunpack.c.l.b16 %v5691
        %v6581 = vunpack.c.h.b16 %v5691
        %v6582 = vunpack.c.l.b16 %v5692
        %v6583 = vunpack.c.h.b16 %v5692
        %v6584 = vunpack.c.l.b16 %v5693
        %v6585 = vunpack.c.h.b16 %v5693
        %v6586 = vunpack.c.l.b16 %v5694
        %v6587 = vunpack.c.h.b16 %v5694
        %v6588 = vunpack.c.l.b16 %v5695
        %v6589 = vunpack.c.h.b16 %v5695
        %v6590 = vunpack.c.l.b16 %v5696
        %v6591 = vunpack.c.h.b16 %v5696
        %v6592 = vunpack.c.l.b16 %v5697
        %v6593 = vunpack.c.h.b16 %v5697
        %v6594 = vunpack.c.l.b16 %v5698
        %v6595 = vunpack.c.h.b16 %v5698
        %v6596 = vunpack.c.l.b16 %v5699
        %v6597 = vunpack.c.h.b16 %v5699
        %v6598 = vunpack.c.l.b16 %v5700
        %v6599 = vunpack.c.h.b16 %v5700
        %v6600 = vunpack.c.l.b16 %v5701
        %v6601 = vunpack.c.h.b16 %v5701
        %v6602 = vunpack.c.l.b16 %v5702
        %v6603 = vunpack.c.h.b16 %v5702
        %v6604 = vunpack.c.l.b16 %v5703
        %v6605 = vunpack.c.h.b16 %v5703
        %v6606 = vunpack.c.l.b16 %v5704
        %v6607 = vunpack.c.h.b16 %v5704
        %v6608 = vunpack.c.l.b16 %v5705
        %v6609 = vunpack.c.h.b16 %v5705
        %v6610 = vunpack.c.l.b16 %v5706
        %v6611 = vunpack.c.h.b16 %v5706
        %v6612 = vunpack.c.l.b16 %v5707
        %v6613 = vunpack.c.h.b16 %v5707
        %v6614 = vunpack.c.l.b16 %v5708
        %v6615 = vunpack.c.h.b16 %v5708
        %v6616 = vunpack.c.l.b16 %v5709
        %v6617 = vunpack.c.h.b16 %v5709
        %v6618 = vunpack.c.l.b16 %v5710
        %v6619 = vunpack.c.h.b16 %v5710
        %v6620 = vunpack.c.l.b16 %v5711
        %v6621 = vunpack.c.h.b16 %v5711
        %v6622 = vunpack.c.l.b16 %v5712
        %v6623 = vunpack.c.h.b16 %v5712
        %v6624 = vunpack.c.l.b16 %v5713
        %v6625 = vunpack.c.h.b16 %v5713
        %v6626 = vunpack.c.l.b16 %v5714
        %v6627 = vunpack.c.h.b16 %v5714
        %v6628 = vunpack.c.l.b16 %v5715
        %v6629 = vunpack.c.h.b16 %v5715
        %v6630 = vunpack.c.l.b16 %v5716
        %v6631 = vunpack.c.h.b16 %v5716
        %v6632 = vunpack.c.l.b16 %v5717
        %v6633 = vunpack.c.h.b16 %v5717
        %v6634 = vunpack.c.l.b16 %v5718
        %v6635 = vunpack.c.h.b16 %v5718
        %v6636 = vunpack.c.l.b16 %v5719
        %v6637 = vunpack.c.h.b16 %v5719
        %v6638 = vunpack.c.l.b16 %v5720
        %v6639 = vunpack.c.h.b16 %v5720
        %v6640 = vunpack.c.l.b16 %v5721
        %v6641 = vunpack.c.h.b16 %v5721
        %v6642 = vunpack.c.l.b16 %v5722
        %v6643 = vunpack.c.h.b16 %v5722
        %v6644 = vunpack.c.l.b16 %v5723
        %v6645 = vunpack.c.h.b16 %v5723
        %v6646 = vunpack.c.l.b16 %v5724
        %v6647 = vunpack.c.h.b16 %v5724
        %v6648 = vunpack.c.l.b16 %v5725
        %v6649 = vunpack.c.h.b16 %v5725
        %v6650 = vunpack.c.l.b16 %v5726
        %v6651 = vunpack.c.h.b16 %v5726
        %v6652 = vunpack.c.l.b16 %v5727
        %v6653 = vunpack.c.h.b16 %v5727
        %v6654 = vunpack.c.l.b16 %v5728
        %v6655 = vunpack.c.h.b16 %v5728
        %v6656 = vunpack.c.l.b16 %v5729
        %v6657 = vunpack.c.h.b16 %v5729
        %v6658 = vpack.c.b16 %v6094, %v6082
        %v6659 = vpack.c.b16 %v6095, %v6083
        %v6660 = vpack.c.b16 %v6096, %v6084
        %v6661 = vpack.c.b16 %v6097, %v6085
        %v6662 = vpack.c.b16 %v6098, %v6086
        %v6663 = vpack.c.b16 %v6099, %v6087
        %v6664 = vpack.c.b16 %v6100, %v6088
        %v6665 = vpack.c.b16 %v6101, %v6089
        %v6666 = vpack.c.b16 %v6102, %v6090
        %v6667 = vpack.c.b16 %v6103, %v6091
        %v6668 = vpack.c.b16 %v6104, %v6092
        %v6669 = vpack.c.b16 %v6105, %v6093
        %v6670 = vpack.c.b16 %v6118, %v6106
        %v6671 = vpack.c.b16 %v6119, %v6107
        %v6672 = vpack.c.b16 %v6120, %v6108
        %v6673 = vpack.c.b16 %v6121, %v6109
        %v6674 = vpack.c.b16 %v6122, %v6110
        %v6675 = vpack.c.b16 %v6123, %v6111
        %v6676 = vpack.c.b16 %v6124, %v6112
        %v6677 = vpack.c.b16 %v6125, %v6113
        %v6678 = vpack.c.b16 %v6126, %v6114
        %v6679 = vpack.c.b16 %v6127, %v6115
        %v6680 = vpack.c.b16 %v6128, %v6116
        %v6681 = vpack.c.b16 %v6129, %v6117
        %v6682 = vpack.c.b16 %v6142, %v6130
        %v6683 = vpack.c.b16 %v6143, %v6131
        %v6684 = vpack.c.b16 %v6144, %v6132
        %v6685 = vpack.c.b16 %v6145, %v6133
        %v6686 = vpack.c.b16 %v6146, %v6134
        %v6687 = vpack.c.b16 %v6147, %v6135
        %v6688 = vpack.c.b16 %v6148, %v6136
        %v6689 = vpack.c.b16 %v6149, %v6137
        %v6690 = vpack.c.b16 %v6150, %v6138
        %v6691 = vpack.c.b16 %v6151, %v6139
        %v6692 = vpack.c.b16 %v6152, %v6140
        %v6693 = vpack.c.b16 %v6153, %v6141
        %v6694 = vpack.c.b16 %v6166, %v6154
        %v6695 = vpack.c.b16 %v6167, %v6155
        %v6696 = vpack.c.b16 %v6168, %v6156
        %v6697 = vpack.c.b16 %v6169, %v6157
        %v6698 = vpack.c.b16 %v6170, %v6158
        %v6699 = vpack.c.b16 %v6171, %v6159
        %v6700 = vpack.c.b16 %v6172, %v6160
        %v6701 = vpack.c.b16 %v6173, %v6161
        %v6702 = vpack.c.b16 %v6174, %v6162
        %v6703 = vpack.c.b16 %v6175, %v6163
        %v6704 = vpack.c.b16 %v6176, %v6164
        %v6705 = vpack.c.b16 %v6177, %v6165
        %v6706 = vpack.c.b16 %v6190, %v6178
        %v6707 = vpack.c.b16 %v6191, %v6179
        %v6708 = vpack.c.b16 %v6192, %v6180
        %v6709 = vpack.c.b16 %v6193, %v6181
        %v6710 = vpack.c.b16 %v6194, %v6182
        %v6711 = vpack.c.b16 %v6195, %v6183
        %v6712 = vpack.c.b16 %v6196, %v6184
        %v6713 = vpack.c.b16 %v6197, %v6185
        %v6714 = vpack.c.b16 %v6198, %v6186
        %v6715 = vpack.c.b16 %v6199, %v6187
        %v6716 = vpack.c.b16 %v6200, %v6188
        %v6717 = vpack.c.b16 %v6201, %v6189
        %v6718 = vpack.c.b16 %v6214, %v6202
        %v6719 = vpack.c.b16 %v6215, %v6203
        %v6720 = vpack.c.b16 %v6216, %v6204
        %v6721 = vpack.c.b16 %v6217, %v6205
        %v6722 = vpack.c.b16 %v6218, %v6206
        %v6723 = vpack.c.b16 %v6219, %v6207
        %v6724 = vpack.c.b16 %v6220, %v6208
        %v6725 = vpack.c.b16 %v6221, %v6209
        %v6726 = vpack.c.b16 %v6222, %v6210
        %v6727 = vpack.c.b16 %v6223, %v6211
        %v6728 = vpack.c.b16 %v6224, %v6212
        %v6729 = vpack.c.b16 %v6225, %v6213
        %v6730 = vpack.c.b16 %v6238, %v6226
        %v6731 = vpack.c.b16 %v6239, %v6227
        %v6732 = vpack.c.b16 %v6240, %v6228
        %v6733 = vpack.c.b16 %v6241, %v6229
        %v6734 = vpack.c.b16 %v6242, %v6230
        %v6735 = vpack.c.b16 %v6243, %v6231
        %v6736 = vpack.c.b16 %v6244, %v6232
        %v6737 = vpack.c.b16 %v6245, %v6233
        %v6738 = vpack.c.b16 %v6246, %v6234
        %v6739 = vpack.c.b16 %v6247, %v6235
        %v6740 = vpack.c.b16 %v6248, %v6236
        %v6741 = vpack.c.b16 %v6249, %v6237
        %v6742 = vpack.c.b16 %v6262, %v6250
        %v6743 = vpack.c.b16 %v6263, %v6251
        %v6744 = vpack.c.b16 %v6264, %v6252
        %v6745 = vpack.c.b16 %v6265, %v6253
        %v6746 = vpack.c.b16 %v6266, %v6254
        %v6747 = vpack.c.b16 %v6267, %v6255
        %v6748 = vpack.c.b16 %v6268, %v6256
        %v6749 = vpack.c.b16 %v6269, %v6257
        %v6750 = vpack.c.b16 %v6270, %v6258
        %v6751 = vpack.c.b16 %v6271, %v6259
        %v6752 = vpack.c.b16 %v6272, %v6260
        %v6753 = vpack.c.b16 %v6273, %v6261
        %v6754 = vpack.c.b16 %v6286, %v6274
        %v6755 = vpack.c.b16 %v6287, %v6275
        %v6756 = vpack.c.b16 %v6288, %v6276
        %v6757 = vpack.c.b16 %v6289, %v6277
        %v6758 = vpack.c.b16 %v6290, %v6278
        %v6759 = vpack.c.b16 %v6291, %v6279
        %v6760 = vpack.c.b16 %v6292, %v6280
        %v6761 = vpack.c.b16 %v6293, %v6281
        %v6762 = vpack.c.b16 %v6294, %v6282
        %v6763 = vpack.c.b16 %v6295, %v6283
        %v6764 = vpack.c.b16 %v6296, %v6284
        %v6765 = vpack.c.b16 %v6297, %v6285
        %v6766 = vpack.c.b16 %v6310, %v6298
        %v6767 = vpack.c.b16 %v6311, %v6299
        %v6768 = vpack.c.b16 %v6312, %v6300
        %v6769 = vpack.c.b16 %v6313, %v6301
        %v6770 = vpack.c.b16 %v6314, %v6302
        %v6771 = vpack.c.b16 %v6315, %v6303
        %v6772 = vpack.c.b16 %v6316, %v6304
        %v6773 = vpack.c.b16 %v6317, %v6305
        %v6774 = vpack.c.b16 %v6318, %v6306
        %v6775 = vpack.c.b16 %v6319, %v6307
        %v6776 = vpack.c.b16 %v6320, %v6308
        %v6777 = vpack.c.b16 %v6321, %v6309
        %v6778 = vpack.c.b16 %v6334, %v6322
        %v6779 = vpack.c.b16 %v6335, %v6323
        %v6780 = vpack.c.b16 %v6336, %v6324
        %v6781 = vpack.c.b16 %v6337, %v6325
        %v6782 = vpack.c.b16 %v6338, %v6326
        %v6783 = vpack.c.b16 %v6339, %v6327
        %v6784 = vpack.c.b16 %v6340, %v6328
        %v6785 = vpack.c.b16 %v6341, %v6329
        %v6786 = vpack.c.b16 %v6342, %v6330
        %v6787 = vpack.c.b16 %v6343, %v6331
        %v6788 = vpack.c.b16 %v6344, %v6332
        %v6789 = vpack.c.b16 %v6345, %v6333
        %v6790 = vpack.c.b16 %v6358, %v6346
        %v6791 = vpack.c.b16 %v6359, %v6347
        %v6792 = vpack.c.b16 %v6360, %v6348
        %v6793 = vpack.c.b16 %v6361, %v6349
        %v6794 = vpack.c.b16 %v6362, %v6350
        %v6795 = vpack.c.b16 %v6363, %v6351
        %v6796 = vpack.c.b16 %v6364, %v6352
        %v6797 = vpack.c.b16 %v6365, %v6353
        %v6798 = vpack.c.b16 %v6366, %v6354
        %v6799 = vpack.c.b16 %v6367, %v6355
        %v6800 = vpack.c.b16 %v6368, %v6356
        %v6801 = vpack.c.b16 %v6369, %v6357
        %v6802 = vpack.c.b16 %v6382, %v6370
        %v6803 = vpack.c.b16 %v6383, %v6371
        %v6804 = vpack.c.b16 %v6384, %v6372
        %v6805 = vpack.c.b16 %v6385, %v6373
        %v6806 = vpack.c.b16 %v6386, %v6374
        %v6807 = vpack.c.b16 %v6387, %v6375
        %v6808 = vpack.c.b16 %v6388, %v6376
        %v6809 = vpack.c.b16 %v6389, %v6377
        %v6810 = vpack.c.b16 %v6390, %v6378
        %v6811 = vpack.c.b16 %v6391, %v6379
        %v6812 = vpack.c.b16 %v6392, %v6380
        %v6813 = vpack.c.b16 %v6393, %v6381
        %v6814 = vpack.c.b16 %v6406, %v6394
        %v6815 = vpack.c.b16 %v6407, %v6395
        %v6816 = vpack.c.b16 %v6408, %v6396
        %v6817 = vpack.c.b16 %v6409, %v6397
        %v6818 = vpack.c.b16 %v6410, %v6398
        %v6819 = vpack.c.b16 %v6411, %v6399
        %v6820 = vpack.c.b16 %v6412, %v6400
        %v6821 = vpack.c.b16 %v6413, %v6401
        %v6822 = vpack.c.b16 %v6414, %v6402
        %v6823 = vpack.c.b16 %v6415, %v6403
        %v6824 = vpack.c.b16 %v6416, %v6404
        %v6825 = vpack.c.b16 %v6417, %v6405
        %v6826 = vpack.c.b16 %v6430, %v6418
        %v6827 = vpack.c.b16 %v6431, %v6419
        %v6828 = vpack.c.b16 %v6432, %v6420
        %v6829 = vpack.c.b16 %v6433, %v6421
        %v6830 = vpack.c.b16 %v6434, %v6422
        %v6831 = vpack.c.b16 %v6435, %v6423
        %v6832 = vpack.c.b16 %v6436, %v6424
        %v6833 = vpack.c.b16 %v6437, %v6425
        %v6834 = vpack.c.b16 %v6438, %v6426
        %v6835 = vpack.c.b16 %v6439, %v6427
        %v6836 = vpack.c.b16 %v6440, %v6428
        %v6837 = vpack.c.b16 %v6441, %v6429
        %v6838 = vpack.c.b16 %v6454, %v6442
        %v6839 = vpack.c.b16 %v6455, %v6443
        %v6840 = vpack.c.b16 %v6456, %v6444
        %v6841 = vpack.c.b16 %v6457, %v6445
        %v6842 = vpack.c.b16 %v6458, %v6446
        %v6843 = vpack.c.b16 %v6459, %v6447
        %v6844 = vpack.c.b16 %v6460, %v6448
        %v6845 = vpack.c.b16 %v6461, %v6449
        %v6846 = vpack.c.b16 %v6462, %v6450
        %v6847 = vpack.c.b16 %v6463, %v6451
        %v6848 = vpack.c.b16 %v6464, %v6452
        %v6849 = vpack.c.b16 %v6465, %v6453
        %v6850 = vpack.c.b16 %v6478, %v6466
        %v6851 = vpack.c.b16 %v6479, %v6467
        %v6852 = vpack.c.b16 %v6480, %v6468
        %v6853 = vpack.c.b16 %v6481, %v6469
        %v6854 = vpack.c.b16 %v6482, %v6470
        %v6855 = vpack.c.b16 %v6483, %v6471
        %v6856 = vpack.c.b16 %v6484, %v6472
        %v6857 = vpack.c.b16 %v6485, %v6473
        %v6858 = vpack.c.b16 %v6486, %v6474
        %v6859 = vpack.c.b16 %v6487, %v6475
        %v6860 = vpack.c.b16 %v6488, %v6476
        %v6861 = vpack.c.b16 %v6489, %v6477
        %v6862 = vpack.c.b16 %v6502, %v6490
        %v6863 = vpack.c.b16 %v6503, %v6491
        %v6864 = vpack.c.b16 %v6504, %v6492
        %v6865 = vpack.c.b16 %v6505, %v6493
        %v6866 = vpack.c.b16 %v6506, %v6494
        %v6867 = vpack.c.b16 %v6507, %v6495
        %v6868 = vpack.c.b16 %v6508, %v6496
        %v6869 = vpack.c.b16 %v6509, %v6497
        %v6870 = vpack.c.b16 %v6510, %v6498
        %v6871 = vpack.c.b16 %v6511, %v6499
        %v6872 = vpack.c.b16 %v6512, %v6500
        %v6873 = vpack.c.b16 %v6513, %v6501
        %v6874 = vpack.c.b16 %v6526, %v6514
        %v6875 = vpack.c.b16 %v6527, %v6515
        %v6876 = vpack.c.b16 %v6528, %v6516
        %v6877 = vpack.c.b16 %v6529, %v6517
        %v6878 = vpack.c.b16 %v6530, %v6518
        %v6879 = vpack.c.b16 %v6531, %v6519
        %v6880 = vpack.c.b16 %v6532, %v6520
        %v6881 = vpack.c.b16 %v6533, %v6521
        %v6882 = vpack.c.b16 %v6534, %v6522
        %v6883 = vpack.c.b16 %v6535, %v6523
        %v6884 = vpack.c.b16 %v6536, %v6524
        %v6885 = vpack.c.b16 %v6537, %v6525
        %v6886 = vpack.c.b16 %v6550, %v6538
        %v6887 = vpack.c.b16 %v6551, %v6539
        %v6888 = vpack.c.b16 %v6552, %v6540
        %v6889 = vpack.c.b16 %v6553, %v6541
        %v6890 = vpack.c.b16 %v6554, %v6542
        %v6891 = vpack.c.b16 %v6555, %v6543
        %v6892 = vpack.c.b16 %v6556, %v6544
        %v6893 = vpack.c.b16 %v6557, %v6545
        %v6894 = vpack.c.b16 %v6558, %v6546
        %v6895 = vpack.c.b16 %v6559, %v6547
        %v6896 = vpack.c.b16 %v6560, %v6548
        %v6897 = vpack.c.b16 %v6561, %v6549
        %v6898 = vpack.c.b16 %v6574, %v6562
        %v6899 = vpack.c.b16 %v6575, %v6563
        %v6900 = vpack.c.b16 %v6576, %v6564
        %v6901 = vpack.c.b16 %v6577, %v6565
        %v6902 = vpack.c.b16 %v6578, %v6566
        %v6903 = vpack.c.b16 %v6579, %v6567
        %v6904 = vpack.c.b16 %v6580, %v6568
        %v6905 = vpack.c.b16 %v6581, %v6569
        %v6906 = vpack.c.b16 %v6582, %v6570
        %v6907 = vpack.c.b16 %v6583, %v6571
        %v6908 = vpack.c.b16 %v6584, %v6572
        %v6909 = vpack.c.b16 %v6585, %v6573
        %v6910 = vpack.c.b16 %v6598, %v6586
        %v6911 = vpack.c.b16 %v6599, %v6587
        %v6912 = vpack.c.b16 %v6600, %v6588
        %v6913 = vpack.c.b16 %v6601, %v6589
        %v6914 = vpack.c.b16 %v6602, %v6590
        %v6915 = vpack.c.b16 %v6603, %v6591
        %v6916 = vpack.c.b16 %v6604, %v6592
        %v6917 = vpack.c.b16 %v6605, %v6593
        %v6918 = vpack.c.b16 %v6606, %v6594
        %v6919 = vpack.c.b16 %v6607, %v6595
        %v6920 = vpack.c.b16 %v6608, %v6596
        %v6921 = vpack.c.b16 %v6609, %v6597
        %v6922 = vpack.c.b16 %v6622, %v6610
        %v6923 = vpack.c.b16 %v6623, %v6611
        %v6924 = vpack.c.b16 %v6624, %v6612
        %v6925 = vpack.c.b16 %v6625, %v6613
        %v6926 = vpack.c.b16 %v6626, %v6614
        %v6927 = vpack.c.b16 %v6627, %v6615
        %v6928 = vpack.c.b16 %v6628, %v6616
        %v6929 = vpack.c.b16 %v6629, %v6617
        %v6930 = vpack.c.b16 %v6630, %v6618
        %v6931 = vpack.c.b16 %v6631, %v6619
        %v6932 = vpack.c.b16 %v6632, %v6620
        %v6933 = vpack.c.b16 %v6633, %v6621
        %v6934 = vpack.c.b16 %v6646, %v6634
        %v6935 = vpack.c.b16 %v6647, %v6635
        %v6936 = vpack.c.b16 %v6648, %v6636
        %v6937 = vpack.c.b16 %v6649, %v6637
        %v6938 = vpack.c.b16 %v6650, %v6638
        %v6939 = vpack.c.b16 %v6651, %v6639
        %v6940 = vpack.c.b16 %v6652, %v6640
        %v6941 = vpack.c.b16 %v6653, %v6641
        %v6942 = vpack.c.b16 %v6654, %v6642
        %v6943 = vpack.c.b16 %v6655, %v6643
        %v6944 = vpack.c.b16 %v6656, %v6644
        %v6945 = vpack.c.b16 %v6657, %v6645
        %7234 = vmatprep.subr.bf16.mxu0 %v6659
        %7235 = vmatpush1.bf16.msra.mxu0 %v6658
        %7236 = vmatprep.subr.bf16.mxu0 %v6671
        %7237 = vmatpush1.bf16.msra.mxu0 %v6670
        %7238 = vmatprep.subr.bf16.mxu0 %v6683
        %7239 = vmatpush1.bf16.msra.mxu0 %v6682
        %7240 = vmatprep.subr.bf16.mxu0 %v6695
        %7241 = vmatpush1.bf16.msra.mxu0 %v6694
        %7242 = vmatprep.subr.bf16.mxu0 %v6707
        %7243 = vmatpush1.bf16.msra.mxu0 %v6706
        %7244 = vmatprep.subr.bf16.mxu0 %v6719
        %7245 = vmatpush1.bf16.msra.mxu0 %v6718
        %7246 = vmatprep.subr.bf16.mxu0 %v6731
        %7247 = vmatpush1.bf16.msra.mxu0 %v6730
        %7248 = vmatprep.subr.bf16.mxu0 %v6743
        %7249 = vmatpush1.bf16.msra.mxu0 %v6742
        %7250 = vmatprep.subr.bf16.mxu0 %v6755
        %7251 = vmatpush1.bf16.msra.mxu0 %v6754
        %7252 = vmatprep.subr.bf16.mxu0 %v6767
        %7253 = vmatpush1.bf16.msra.mxu0 %v6766
        %7254 = vmatprep.subr.bf16.mxu0 %v6779
        %7255 = vmatpush1.bf16.msra.mxu0 %v6778
        %7256 = vmatprep.subr.bf16.mxu0 %v6791
        %7257 = vmatpush1.bf16.msra.mxu0 %v6790
        %7258 = vmatprep.subr.bf16.mxu0 %v6803
        %7259 = vmatpush1.bf16.msra.mxu0 %v6802
        %7260 = vmatprep.subr.bf16.mxu0 %v6815
        %7261 = vmatpush1.bf16.msra.mxu0 %v6814
        %7262 = vmatprep.subr.bf16.mxu0 %v6827
        %7263 = vmatpush1.bf16.msra.mxu0 %v6826
        %7264 = vmatprep.subr.bf16.mxu0 %v6839
        %7265 = vmatpush1.bf16.msra.mxu0 %v6838
        %7266 = vmatprep.mubr.bf16.mxu0 %v5437
        %7267 = vmatmul.mubr.bf16.gmra.mrb[0].mxu0 %v5436
        %v7268 = vpop.f32.mrb[0].mxu0
        %v7269 = vadd.f32 %v5737, %v7268
        %v7270 = vpop.f32.mrb[0].mxu0
        %v7271 = vadd.f32 %v5741, %v7270
        %v7272 = vpop.f32.mrb[0].mxu0
        %v7273 = vadd.f32 %v5737, %v7272
        %v7274 = vpop.f32.mrb[0].mxu0
        %v7275 = vadd.f32 %v5741, %v7274
        %7276 = vmatprep.mubr.bf16.mxu0 %v5440
        %7277 = vmatmul.mubr.bf16.gmra.mrb[0].mxu0 %v5439
        %v7278 = vpop.f32.mrb[0].mxu0
        %v7279 = vadd.f32 %v5737, %v7278
        %v7280 = vpop.f32.mrb[0].mxu0
        %v7281 = vadd.f32 %v5741, %v7280
        %v7282 = vpop.f32.mrb[0].mxu0
        %v7283 = vadd.f32 %v5737, %v7282
        %v7284 = vpop.f32.mrb[0].mxu0
        %v7285 = vadd.f32 %v5741, %v7284
        %7286 = vdwg.mxu0
        %7287 = vmatprep.subr.bf16.mxu0 %v6851
        %7288 = vmatpush1.bf16.msra.mxu0 %v6850
        %7289 = vmatprep.subr.bf16.mxu0 %v6863
        %7290 = vmatpush1.bf16.msra.mxu0 %v6862
        %7291 = vmatprep.subr.bf16.mxu0 %v6875
        %7292 = vmatpush1.bf16.msra.mxu0 %v6874
        %7293 = vmatprep.subr.bf16.mxu0 %v6887
        %7294 = vmatpush1.bf16.msra.mxu0 %v6886
        %7295 = vmatprep.subr.bf16.mxu0 %v6899
        %7296 = vmatpush1.bf16.msra.mxu0 %v6898
        %7297 = vmatprep.subr.bf16.mxu0 %v6911
        %7298 = vmatpush1.bf16.msra.mxu0 %v6910
        %7299 = vmatprep.subr.bf16.mxu0 %v6923
        %7300 = vmatpush1.bf16.msra.mxu0 %v6922
        %7301 = vmatprep.subr.bf16.mxu0 %v6935
        %7302 = vmatpush1.bf16.msra.mxu0 %v6934
        %7303 = vmatprep.subr.bf16.mxu0 0
        %7304 = vmatpush1.bf16.msra.mxu0 0
        %7305 = vmatprep.subr.bf16.mxu0 0
        %7306 = vmatpush1.bf16.msra.mxu0 0
        %7307 = vmatprep.subr.bf16.mxu0 0
        %7308 = vmatpush1.bf16.msra.mxu0 0
        %7309 = vmatprep.subr.bf16.mxu0 0
        %7310 = vmatpush1.bf16.msra.mxu0 0
        %7311 = vmatprep.subr.bf16.mxu0 0
        %7312 = vmatpush1.bf16.msra.mxu0 0
        %7313 = vmatprep.subr.bf16.mxu0 0
        %7314 = vmatpush1.bf16.msra.mxu0 0
        %7315 = vmatprep.subr.bf16.mxu0 0
        %7316 = vmatpush1.bf16.msra.mxu0 0
        %7317 = vmatprep.subr.bf16.mxu0 0
        %7318 = vmatpush1.bf16.msra.mxu0 0
        %7319 = vmatprep.mubr.bf16.mxu0 0
        %7320 = vmatmul.mubr.bf16.gmra.mrb[0].mxu0 %v5438
        %v7321 = vpop.f32.mrb[0].mxu0
        %v7322 = vadd.f32 %v7269, %v7321
        %v7323 = vpop.f32.mrb[0].mxu0
        %v7324 = vadd.f32 %v7271, %v7323
        %v7325 = vpop.f32.mrb[0].mxu0
        %v7326 = vadd.f32 %v7273, %v7325
        %v7327 = vpop.f32.mrb[0].mxu0
        %v7328 = vadd.f32 %v7275, %v7327
        %7329 = vmatprep.mubr.bf16.mxu0 0
        %7330 = vmatmul.mubr.bf16.gmra.mrb[0].mxu0 %v5441
        %v7331 = vpop.f32.mrb[0].mxu0
        %v7332 = vadd.f32 %v7279, %v7331
        %v7333 = vpop.f32.mrb[0].mxu0
        %v7334 = vadd.f32 %v7281, %v7333
        %v7335 = vpop.f32.mrb[0].mxu0
        %v7336 = vadd.f32 %v7283, %v7335
        %v7337 = vpop.f32.mrb[0].mxu0
        %v7338 = vadd.f32 %v7285, %v7337
        %7339 = vdwg.mxu0
        %7340 = vmatprep.subr.bf16.mxu0 %v6661
        %7341 = vmatpush1.bf16.msra.mxu0 %v6660
        %7342 = vmatprep.subr.bf16.mxu0 %v6673
        %7343 = vmatpush1.bf16.msra.mxu0 %v6672
        %7344 = vmatprep.subr.bf16.mxu0 %v6685
        %7345 = vmatpush1.bf16.msra.mxu0 %v6684
        %7346 = vmatprep.subr.bf16.mxu0 %v6697
        %7347 = vmatpush1.bf16.msra.mxu0 %v6696
        %7348 = vmatprep.subr.bf16.mxu0 %v6709
        %7349 = vmatpush1.bf16.msra.mxu0 %v6708
        %7350 = vmatprep.subr.bf16.mxu0 %v6721
        %7351 = vmatpush1.bf16.msra.mxu0 %v6720
        %7352 = vmatprep.subr.bf16.mxu0 %v6733
        %7353 = vmatpush1.bf16.msra.mxu0 %v6732
        %7354 = vmatprep.subr.bf16.mxu0 %v6745
        %7355 = vmatpush1.bf16.msra.mxu0 %v6744
        %7356 = vmatprep.subr.bf16.mxu0 %v6757
        %7357 = vmatpush1.bf16.msra.mxu0 %v6756
        %7358 = vmatprep.subr.bf16.mxu0 %v6769
        %7359 = vmatpush1.bf16.msra.mxu0 %v6768
        %7360 = vmatprep.subr.bf16.mxu0 %v6781
        %7361 = vmatpush1.bf16.msra.mxu0 %v6780
        %7362 = vmatprep.subr.bf16.mxu0 %v6793
        %7363 = vmatpush1.bf16.msra.mxu0 %v6792
        %7364 = vmatprep.subr.bf16.mxu0 %v6805
        %7365 = vmatpush1.bf16.msra.mxu0 %v6804
        %7366 = vmatprep.subr.bf16.mxu0 %v6817
        %7367 = vmatpush1.bf16.msra.mxu0 %v6816
        %7368 = vmatprep.subr.bf16.mxu0 %v6829
        %7369 = vmatpush1.bf16.msra.mxu0 %v6828
        %7370 = vmatprep.subr.bf16.mxu0 %v6841
        %7371 = vmatpush1.bf16.msra.mxu0 %v6840
        %7372 = vmatprep.mubr.bf16.mxu0 %v5437
        %7373 = vmatmul.mubr.bf16.gmra.mrb[0].mxu0 %v5436
        %v7374 = vpop.f32.mrb[0].mxu0
        %v7375 = vadd.f32 %v5745, %v7374
        %v7376 = vpop.f32.mrb[0].mxu0
        %v7377 = vadd.f32 %v5749, %v7376
        %v7378 = vpop.f32.mrb[0].mxu0
        %v7379 = vadd.f32 %v5745, %v7378
        %v7380 = vpop.f32.mrb[0].mxu0
        %v7381 = vadd.f32 %v5749, %v7380
        %7382 = vmatprep.mubr.bf16.mxu0 %v5440
        %7383 = vmatmul.mubr.bf16.gmra.mrb[0].mxu0 %v5439
        %v7384 = vpop.f32.mrb[0].mxu0
        %v7385 = vadd.f32 %v5745, %v7384
        %v7386 = vpop.f32.mrb[0].mxu0
        %v7387 = vadd.f32 %v5749, %v7386
        %v7388 = vpop.f32.mrb[0].mxu0
        %v7389 = vadd.f32 %v5745, %v7388
        %v7390 = vpop.f32.mrb[0].mxu0
        %v7391 = vadd.f32 %v5749, %v7390
        %7392 = vdwg.mxu0
        %7393 = vmatprep.subr.bf16.mxu0 %v6853
        %7394 = vmatpush1.bf16.msra.mxu0 %v6852
        %7395 = vmatprep.subr.bf16.mxu0 %v6865
        %7396 = vmatpush1.bf16.msra.mxu0 %v6864
        %7397 = vmatprep.subr.bf16.mxu0 %v6877
        %7398 = vmatpush1.bf16.msra.mxu0 %v6876
        %7399 = vmatprep.subr.bf16.mxu0 %v6889
        %7400 = vmatpush1.bf16.msra.mxu0 %v6888
        %7401 = vmatprep.subr.bf16.mxu0 %v6901
        %7402 = vmatpush1.bf16.msra.mxu0 %v6900
        %7403 = vmatprep.subr.bf16.mxu0 %v6913
        %7404 = vmatpush1.bf16.msra.mxu0 %v6912
        %7405 = vmatprep.subr.bf16.mxu0 %v6925
        %7406 = vmatpush1.bf16.msra.mxu0 %v6924
        %7407 = vmatprep.subr.bf16.mxu0 %v6937
        %7408 = vmatpush1.bf16.msra.mxu0 %v6936
        %7409 = vmatprep.subr.bf16.mxu0 0
        %7410 = vmatpush1.bf16.msra.mxu0 0
        %7411 = vmatprep.subr.bf16.mxu0 0
        %7412 = vmatpush1.bf16.msra.mxu0 0
        %7413 = vmatprep.subr.bf16.mxu0 0
        %7414 = vmatpush1.bf16.msra.mxu0 0
        %7415 = vmatprep.subr.bf16.mxu0 0
        %7416 = vmatpush1.bf16.msra.mxu0 0
        %7417 = vmatprep.subr.bf16.mxu0 0
        %7418 = vmatpush1.bf16.msra.mxu0 0
        %7419 = vmatprep.subr.bf16.mxu0 0
        %7420 = vmatpush1.bf16.msra.mxu0 0
        %7421 = vmatprep.subr.bf16.mxu0 0
        %7422 = vmatpush1.bf16.msra.mxu0 0
        %7423 = vmatprep.subr.bf16.mxu0 0
        %7424 = vmatpush1.bf16.msra.mxu0 0
        %7425 = vmatprep.mubr.bf16.mxu0 0
        %7426 = vmatmul.mubr.bf16.gmra.mrb[0].mxu0 %v5438
        %v7427 = vpop.f32.mrb[0].mxu0
        %v7428 = vadd.f32 %v7375, %v7427
        %v7429 = vpop.f32.mrb[0].mxu0
        %v7430 = vadd.f32 %v7377, %v7429
        %v7431 = vpop.f32.mrb[0].mxu0
        %v7432 = vadd.f32 %v7379, %v7431
        %v7433 = vpop.f32.mrb[0].mxu0
        %v7434 = vadd.f32 %v7381, %v7433
        %7435 = vmatprep.mubr.bf16.mxu0 0
        %7436 = vmatmul.mubr.bf16.gmra.mrb[0].mxu0 %v5441
        %v7437 = vpop.f32.mrb[0].mxu0
        %v7438 = vadd.f32 %v7385, %v7437
        %v7439 = vpop.f32.mrb[0].mxu0
        %v7440 = vadd.f32 %v7387, %v7439
        %v7441 = vpop.f32.mrb[0].mxu0
        %v7442 = vadd.f32 %v7389, %v7441
        %v7443 = vpop.f32.mrb[0].mxu0
        %v7444 = vadd.f32 %v7391, %v7443
        %7445 = vdwg.mxu0
        %7446 = vmatprep.subr.bf16.mxu0 %v6663
        %7447 = vmatpush1.bf16.msra.mxu0 %v6662
        %7448 = vmatprep.subr.bf16.mxu0 %v6675
        %7449 = vmatpush1.bf16.msra.mxu0 %v6674
        %7450 = vmatprep.subr.bf16.mxu0 %v6687
        %7451 = vmatpush1.bf16.msra.mxu0 %v6686
        %7452 = vmatprep.subr.bf16.mxu0 %v6699
        %7453 = vmatpush1.bf16.msra.mxu0 %v6698
        %7454 = vmatprep.subr.bf16.mxu0 %v6711
        %7455 = vmatpush1.bf16.msra.mxu0 %v6710
        %7456 = vmatprep.subr.bf16.mxu0 %v6723
        %7457 = vmatpush1.bf16.msra.mxu0 %v6722
        %7458 = vmatprep.subr.bf16.mxu0 %v6735
        %7459 = vmatpush1.bf16.msra.mxu0 %v6734
        %7460 = vmatprep.subr.bf16.mxu0 %v6747
        %7461 = vmatpush1.bf16.msra.mxu0 %v6746
        %7462 = vmatprep.subr.bf16.mxu0 %v6759
        %7463 = vmatpush1.bf16.msra.mxu0 %v6758
        %7464 = vmatprep.subr.bf16.mxu0 %v6771
        %7465 = vmatpush1.bf16.msra.mxu0 %v6770
        %7466 = vmatprep.subr.bf16.mxu0 %v6783
        %7467 = vmatpush1.bf16.msra.mxu0 %v6782
        %7468 = vmatprep.subr.bf16.mxu0 %v6795
        %7469 = vmatpush1.bf16.msra.mxu0 %v6794
        %7470 = vmatprep.subr.bf16.mxu0 %v6807
        %7471 = vmatpush1.bf16.msra.mxu0 %v6806
        %7472 = vmatprep.subr.bf16.mxu0 %v6819
        %7473 = vmatpush1.bf16.msra.mxu0 %v6818
        %7474 = vmatprep.subr.bf16.mxu0 %v6831
        %7475 = vmatpush1.bf16.msra.mxu0 %v6830
        %7476 = vmatprep.subr.bf16.mxu0 %v6843
        %7477 = vmatpush1.bf16.msra.mxu0 %v6842
        %7478 = vmatprep.mubr.bf16.mxu0 %v5437
        %7479 = vmatmul.mubr.bf16.gmra.mrb[0].mxu0 %v5436
        %v7480 = vpop.f32.mrb[0].mxu0
        %v7481 = vadd.f32 %v5753, %v7480
        %v7482 = vpop.f32.mrb[0].mxu0
        %v7483 = vadd.f32 %v5757, %v7482
        %v7484 = vpop.f32.mrb[0].mxu0
        %v7485 = vadd.f32 %v5753, %v7484
        %v7486 = vpop.f32.mrb[0].mxu0
        %v7487 = vadd.f32 %v5757, %v7486
        %7488 = vmatprep.mubr.bf16.mxu0 %v5440
        %7489 = vmatmul.mubr.bf16.gmra.mrb[0].mxu0 %v5439
        %v7490 = vpop.f32.mrb[0].mxu0
        %v7491 = vadd.f32 %v5753, %v7490
        %v7492 = vpop.f32.mrb[0].mxu0
        %v7493 = vadd.f32 %v5757, %v7492
        %v7494 = vpop.f32.mrb[0].mxu0
        %v7495 = vadd.f32 %v5753, %v7494
        %v7496 = vpop.f32.mrb[0].mxu0
        %v7497 = vadd.f32 %v5757, %v7496
        %7498 = vdwg.mxu0
        %7499 = vmatprep.subr.bf16.mxu0 %v6855
        %7500 = vmatpush1.bf16.msra.mxu0 %v6854
        %7501 = vmatprep.subr.bf16.mxu0 %v6867
        %7502 = vmatpush1.bf16.msra.mxu0 %v6866
        %7503 = vmatprep.subr.bf16.mxu0 %v6879
        %7504 = vmatpush1.bf16.msra.mxu0 %v6878
        %7505 = vmatprep.subr.bf16.mxu0 %v6891
        %7506 = vmatpush1.bf16.msra.mxu0 %v6890
        %7507 = vmatprep.subr.bf16.mxu0 %v6903
        %7508 = vmatpush1.bf16.msra.mxu0 %v6902
        %7509 = vmatprep.subr.bf16.mxu0 %v6915
        %7510 = vmatpush1.bf16.msra.mxu0 %v6914
        %7511 = vmatprep.subr.bf16.mxu0 %v6927
        %7512 = vmatpush1.bf16.msra.mxu0 %v6926
        %7513 = vmatprep.subr.bf16.mxu0 %v6939
        %7514 = vmatpush1.bf16.msra.mxu0 %v6938
        %7515 = vmatprep.subr.bf16.mxu0 0
        %7516 = vmatpush1.bf16.msra.mxu0 0
        %7517 = vmatprep.subr.bf16.mxu0 0
        %7518 = vmatpush1.bf16.msra.mxu0 0
        %7519 = vmatprep.subr.bf16.mxu0 0
        %7520 = vmatpush1.bf16.msra.mxu0 0
        %7521 = vmatprep.subr.bf16.mxu0 0
        %7522 = vmatpush1.bf16.msra.mxu0 0
        %7523 = vmatprep.subr.bf16.mxu0 0
        %7524 = vmatpush1.bf16.msra.mxu0 0
        %7525 = vmatprep.subr.bf16.mxu0 0
        %7526 = vmatpush1.bf16.msra.mxu0 0
        %7527 = vmatprep.subr.bf16.mxu0 0
        %7528 = vmatpush1.bf16.msra.mxu0 0
        %7529 = vmatprep.subr.bf16.mxu0 0
        %7530 = vmatpush1.bf16.msra.mxu0 0
        %7531 = vmatprep.mubr.bf16.mxu0 0
        %7532 = vmatmul.mubr.bf16.gmra.mrb[0].mxu0 %v5438
        %v7533 = vpop.f32.mrb[0].mxu0
        %v7534 = vadd.f32 %v7481, %v7533
        %v7535 = vpop.f32.mrb[0].mxu0
        %v7536 = vadd.f32 %v7483, %v7535
        %v7537 = vpop.f32.mrb[0].mxu0
        %v7538 = vadd.f32 %v7485, %v7537
        %v7539 = vpop.f32.mrb[0].mxu0
        %v7540 = vadd.f32 %v7487, %v7539
        %7541 = vmatprep.mubr.bf16.mxu0 0
        %7542 = vmatmul.mubr.bf16.gmra.mrb[0].mxu0 %v5441
        %v7543 = vpop.f32.mrb[0].mxu0
        %v7544 = vadd.f32 %v7491, %v7543
        %v7545 = vpop.f32.mrb[0].mxu0
        %v7546 = vadd.f32 %v7493, %v7545
        %v7547 = vpop.f32.mrb[0].mxu0
        %v7548 = vadd.f32 %v7495, %v7547
        %v7549 = vpop.f32.mrb[0].mxu0
        %v7550 = vadd.f32 %v7497, %v7549
        %7551 = vdwg.mxu0
        %7552 = vmatprep.subr.bf16.mxu0 %v6665
        %7553 = vmatpush1.bf16.msra.mxu0 %v6664
        %7554 = vmatprep.subr.bf16.mxu0 %v6677
        %7555 = vmatpush1.bf16.msra.mxu0 %v6676
        %7556 = vmatprep.subr.bf16.mxu0 %v6689
        %7557 = vmatpush1.bf16.msra.mxu0 %v6688
        %7558 = vmatprep.subr.bf16.mxu0 %v6701
        %7559 = vmatpush1.bf16.msra.mxu0 %v6700
        %7560 = vmatprep.subr.bf16.mxu0 %v6713
        %7561 = vmatpush1.bf16.msra.mxu0 %v6712
        %7562 = vmatprep.subr.bf16.mxu0 %v6725
        %7563 = vmatpush1.bf16.msra.mxu0 %v6724
        %7564 = vmatprep.subr.bf16.mxu0 %v6737
        %7565 = vmatpush1.bf16.msra.mxu0 %v6736
        %7566 = vmatprep.subr.bf16.mxu0 %v6749
        %7567 = vmatpush1.bf16.msra.mxu0 %v6748
        %7568 = vmatprep.subr.bf16.mxu0 %v6761
        %7569 = vmatpush1.bf16.msra.mxu0 %v6760
        %7570 = vmatprep.subr.bf16.mxu0 %v6773
        %7571 = vmatpush1.bf16.msra.mxu0 %v6772
        %7572 = vmatprep.subr.bf16.mxu0 %v6785
        %7573 = vmatpush1.bf16.msra.mxu0 %v6784
        %7574 = vmatprep.subr.bf16.mxu0 %v6797
        %7575 = vmatpush1.bf16.msra.mxu0 %v6796
        %7576 = vmatprep.subr.bf16.mxu0 %v6809
        %7577 = vmatpush1.bf16.msra.mxu0 %v6808
        %7578 = vmatprep.subr.bf16.mxu0 %v6821
        %7579 = vmatpush1.bf16.msra.mxu0 %v6820
        %7580 = vmatprep.subr.bf16.mxu0 %v6833
        %7581 = vmatpush1.bf16.msra.mxu0 %v6832
        %7582 = vmatprep.subr.bf16.mxu0 %v6845
        %7583 = vmatpush1.bf16.msra.mxu0 %v6844
        %7584 = vmatprep.mubr.bf16.mxu0 %v5437
        %7585 = vmatmul.mubr.bf16.gmra.mrb[0].mxu0 %v5436
        %v7586 = vpop.f32.mrb[0].mxu0
        %v7587 = vadd.f32 %v5761, %v7586
        %v7588 = vpop.f32.mrb[0].mxu0
        %v7589 = vadd.f32 %v5765, %v7588
        %v7590 = vpop.f32.mrb[0].mxu0
        %v7591 = vadd.f32 %v5761, %v7590
        %v7592 = vpop.f32.mrb[0].mxu0
        %v7593 = vadd.f32 %v5765, %v7592
        %7594 = vmatprep.mubr.bf16.mxu0 %v5440
        %7595 = vmatmul.mubr.bf16.gmra.mrb[0].mxu0 %v5439
        %v7596 = vpop.f32.mrb[0].mxu0
        %v7597 = vadd.f32 %v5761, %v7596
        %v7598 = vpop.f32.mrb[0].mxu0
        %v7599 = vadd.f32 %v5765, %v7598
        %v7600 = vpop.f32.mrb[0].mxu0
        %v7601 = vadd.f32 %v5761, %v7600
        %v7602 = vpop.f32.mrb[0].mxu0
        %v7603 = vadd.f32 %v5765, %v7602
        %7604 = vdwg.mxu0
        %7605 = vmatprep.subr.bf16.mxu0 %v6857
        %7606 = vmatpush1.bf16.msra.mxu0 %v6856
        %7607 = vmatprep.subr.bf16.mxu0 %v6869
        %7608 = vmatpush1.bf16.msra.mxu0 %v6868
        %7609 = vmatprep.subr.bf16.mxu0 %v6881
        %7610 = vmatpush1.bf16.msra.mxu0 %v6880
        %7611 = vmatprep.subr.bf16.mxu0 %v6893
        %7612 = vmatpush1.bf16.msra.mxu0 %v6892
        %7613 = vmatprep.subr.bf16.mxu0 %v6905
        %7614 = vmatpush1.bf16.msra.mxu0 %v6904
        %7615 = vmatprep.subr.bf16.mxu0 %v6917
        %7616 = vmatpush1.bf16.msra.mxu0 %v6916
        %7617 = vmatprep.subr.bf16.mxu0 %v6929
        %7618 = vmatpush1.bf16.msra.mxu0 %v6928
        %7619 = vmatprep.subr.bf16.mxu0 %v6941
        %7620 = vmatpush1.bf16.msra.mxu0 %v6940
        %7621 = vmatprep.subr.bf16.mxu0 0
        %7622 = vmatpush1.bf16.msra.mxu0 0
        %7623 = vmatprep.subr.bf16.mxu0 0
        %7624 = vmatpush1.bf16.msra.mxu0 0
        %7625 = vmatprep.subr.bf16.mxu0 0
        %7626 = vmatpush1.bf16.msra.mxu0 0
        %7627 = vmatprep.subr.bf16.mxu0 0
        %7628 = vmatpush1.bf16.msra.mxu0 0
        %7629 = vmatprep.subr.bf16.mxu0 0
        %7630 = vmatpush1.bf16.msra.mxu0 0
        %7631 = vmatprep.subr.bf16.mxu0 0
        %7632 = vmatpush1.bf16.msra.mxu0 0
        %7633 = vmatprep.subr.bf16.mxu0 0
        %7634 = vmatpush1.bf16.msra.mxu0 0
        %7635 = vmatprep.subr.bf16.mxu0 0
        %7636 = vmatpush1.bf16.msra.mxu0 0
        %7637 = vmatprep.mubr.bf16.mxu0 0
        %7638 = vmatmul.mubr.bf16.gmra.mrb[0].mxu0 %v5438
        %v7639 = vpop.f32.mrb[0].mxu0
        %v7640 = vadd.f32 %v7587, %v7639
        %v7641 = vpop.f32.mrb[0].mxu0
        %v7642 = vadd.f32 %v7589, %v7641
        %v7643 = vpop.f32.mrb[0].mxu0
        %v7644 = vadd.f32 %v7591, %v7643
        %v7645 = vpop.f32.mrb[0].mxu0
        %v7646 = vadd.f32 %v7593, %v7645
        %7647 = vmatprep.mubr.bf16.mxu0 0
        %7648 = vmatmul.mubr.bf16.gmra.mrb[0].mxu0 %v5441
        %v7649 = vpop.f32.mrb[0].mxu0
        %v7650 = vadd.f32 %v7597, %v7649
        %v7651 = vpop.f32.mrb[0].mxu0
        %v7652 = vadd.f32 %v7599, %v7651
        %v7653 = vpop.f32.mrb[0].mxu0
        %v7654 = vadd.f32 %v7601, %v7653
        %v7655 = vpop.f32.mrb[0].mxu0
        %v7656 = vadd.f32 %v7603, %v7655
        %7657 = vdwg.mxu0
        %7658 = vmatprep.subr.bf16.mxu0 %v6667
        %7659 = vmatpush1.bf16.msra.mxu0 %v6666
        %7660 = vmatprep.subr.bf16.mxu0 %v6679
        %7661 = vmatpush1.bf16.msra.mxu0 %v6678
        %7662 = vmatprep.subr.bf16.mxu0 %v6691
        %7663 = vmatpush1.bf16.msra.mxu0 %v6690
        %7664 = vmatprep.subr.bf16.mxu0 %v6703
        %7665 = vmatpush1.bf16.msra.mxu0 %v6702
        %7666 = vmatprep.subr.bf16.mxu0 %v6715
        %7667 = vmatpush1.bf16.msra.mxu0 %v6714
        %7668 = vmatprep.subr.bf16.mxu0 %v6727
        %7669 = vmatpush1.bf16.msra.mxu0 %v6726
        %7670 = vmatprep.subr.bf16.mxu0 %v6739
        %7671 = vmatpush1.bf16.msra.mxu0 %v6738
        %7672 = vmatprep.subr.bf16.mxu0 %v6751
        %7673 = vmatpush1.bf16.msra.mxu0 %v6750
        %7674 = vmatprep.subr.bf16.mxu0 %v6763
        %7675 = vmatpush1.bf16.msra.mxu0 %v6762
        %7676 = vmatprep.subr.bf16.mxu0 %v6775
        %7677 = vmatpush1.bf16.msra.mxu0 %v6774
        %7678 = vmatprep.subr.bf16.mxu0 %v6787
        %7679 = vmatpush1.bf16.msra.mxu0 %v6786
        %7680 = vmatprep.subr.bf16.mxu0 %v6799
        %7681 = vmatpush1.bf16.msra.mxu0 %v6798
        %7682 = vmatprep.subr.bf16.mxu0 %v6811
        %7683 = vmatpush1.bf16.msra.mxu0 %v6810
        %7684 = vmatprep.subr.bf16.mxu0 %v6823
        %7685 = vmatpush1.bf16.msra.mxu0 %v6822
        %7686 = vmatprep.subr.bf16.mxu0 %v6835
        %7687 = vmatpush1.bf16.msra.mxu0 %v6834
        %7688 = vmatprep.subr.bf16.mxu0 %v6847
        %7689 = vmatpush1.bf16.msra.mxu0 %v6846
        %7690 = vmatprep.mubr.bf16.mxu0 %v5437
        %7691 = vmatmul.mubr.bf16.gmra.mrb[0].mxu0 %v5436
        %v7692 = vpop.f32.mrb[0].mxu0
        %v7693 = vadd.f32 %v5769, %v7692
        %v7694 = vpop.f32.mrb[0].mxu0
        %v7695 = vadd.f32 %v5773, %v7694
        %v7696 = vpop.f32.mrb[0].mxu0
        %v7697 = vadd.f32 %v5769, %v7696
        %v7698 = vpop.f32.mrb[0].mxu0
        %v7699 = vadd.f32 %v5773, %v7698
        %7700 = vmatprep.mubr.bf16.mxu0 %v5440
        %7701 = vmatmul.mubr.bf16.gmra.mrb[0].mxu0 %v5439
        %v7702 = vpop.f32.mrb[0].mxu0
        %v7703 = vadd.f32 %v5769, %v7702
        %v7704 = vpop.f32.mrb[0].mxu0
        %v7705 = vadd.f32 %v5773, %v7704
        %v7706 = vpop.f32.mrb[0].mxu0
        %v7707 = vadd.f32 %v5769, %v7706
        %v7708 = vpop.f32.mrb[0].mxu0
        %v7709 = vadd.f32 %v5773, %v7708
        %7710 = vdwg.mxu0
        %7711 = vmatprep.subr.bf16.mxu0 %v6859
        %7712 = vmatpush1.bf16.msra.mxu0 %v6858
        %7713 = vmatprep.subr.bf16.mxu0 %v6871
        %7714 = vmatpush1.bf16.msra.mxu0 %v6870
        %7715 = vmatprep.subr.bf16.mxu0 %v6883
        %7716 = vmatpush1.bf16.msra.mxu0 %v6882
        %7717 = vmatprep.subr.bf16.mxu0 %v6895
        %7718 = vmatpush1.bf16.msra.mxu0 %v6894
        %7719 = vmatprep.subr.bf16.mxu0 %v6907
        %7720 = vmatpush1.bf16.msra.mxu0 %v6906
        %7721 = vmatprep.subr.bf16.mxu0 %v6919
        %7722 = vmatpush1.bf16.msra.mxu0 %v6918
        %7723 = vmatprep.subr.bf16.mxu0 %v6931
        %7724 = vmatpush1.bf16.msra.mxu0 %v6930
        %7725 = vmatprep.subr.bf16.mxu0 %v6943
        %7726 = vmatpush1.bf16.msra.mxu0 %v6942
        %7727 = vmatprep.subr.bf16.mxu0 0
        %7728 = vmatpush1.bf16.msra.mxu0 0
        %7729 = vmatprep.subr.bf16.mxu0 0
        %7730 = vmatpush1.bf16.msra.mxu0 0
        %7731 = vmatprep.subr.bf16.mxu0 0
        %7732 = vmatpush1.bf16.msra.mxu0 0
        %7733 = vmatprep.subr.bf16.mxu0 0
        %7734 = vmatpush1.bf16.msra.mxu0 0
        %7735 = vmatprep.subr.bf16.mxu0 0
        %7736 = vmatpush1.bf16.msra.mxu0 0
        %7737 = vmatprep.subr.bf16.mxu0 0
        %7738 = vmatpush1.bf16.msra.mxu0 0
        %7739 = vmatprep.subr.bf16.mxu0 0
        %7740 = vmatpush1.bf16.msra.mxu0 0
        %7741 = vmatprep.subr.bf16.mxu0 0
        %7742 = vmatpush1.bf16.msra.mxu0 0
        %7743 = vmatprep.mubr.bf16.mxu0 0
        %7744 = vmatmul.mubr.bf16.gmra.mrb[0].mxu0 %v5438
        %v7745 = vpop.f32.mrb[0].mxu0
        %v7746 = vadd.f32 %v7693, %v7745
        %v7747 = vpop.f32.mrb[0].mxu0
        %v7748 = vadd.f32 %v7695, %v7747
        %v7749 = vpop.f32.mrb[0].mxu0
        %v7750 = vadd.f32 %v7697, %v7749
        %v7751 = vpop.f32.mrb[0].mxu0
        %v7752 = vadd.f32 %v7699, %v7751
        %7753 = vmatprep.mubr.bf16.mxu0 0
        %7754 = vmatmul.mubr.bf16.gmra.mrb[0].mxu0 %v5441
        %v7755 = vpop.f32.mrb[0].mxu0
        %v7756 = vadd.f32 %v7703, %v7755
        %v7757 = vpop.f32.mrb[0].mxu0
        %v7758 = vadd.f32 %v7705, %v7757
        %v7759 = vpop.f32.mrb[0].mxu0
        %v7760 = vadd.f32 %v7707, %v7759
        %v7761 = vpop.f32.mrb[0].mxu0
        %v7762 = vadd.f32 %v7709, %v7761
        %7763 = vdwg.mxu0
        %7764 = vmatprep.subr.bf16.mxu0 %v6669
        %7765 = vmatpush1.bf16.msra.mxu0 %v6668
        %7766 = vmatprep.subr.bf16.mxu0 %v6681
        %7767 = vmatpush1.bf16.msra.mxu0 %v6680
        %7768 = vmatprep.subr.bf16.mxu0 %v6693
        %7769 = vmatpush1.bf16.msra.mxu0 %v6692
        %7770 = vmatprep.subr.bf16.mxu0 %v6705
        %7771 = vmatpush1.bf16.msra.mxu0 %v6704
        %7772 = vmatprep.subr.bf16.mxu0 %v6717
        %7773 = vmatpush1.bf16.msra.mxu0 %v6716
        %7774 = vmatprep.subr.bf16.mxu0 %v6729
        %7775 = vmatpush1.bf16.msra.mxu0 %v6728
        %7776 = vmatprep.subr.bf16.mxu0 %v6741
        %7777 = vmatpush1.bf16.msra.mxu0 %v6740
        %7778 = vmatprep.subr.bf16.mxu0 %v6753
        %7779 = vmatpush1.bf16.msra.mxu0 %v6752
        %7780 = vmatprep.subr.bf16.mxu0 %v6765
        %7781 = vmatpush1.bf16.msra.mxu0 %v6764
        %7782 = vmatprep.subr.bf16.mxu0 %v6777
        %7783 = vmatpush1.bf16.msra.mxu0 %v6776
        %7784 = vmatprep.subr.bf16.mxu0 %v6789
        %7785 = vmatpush1.bf16.msra.mxu0 %v6788
        %7786 = vmatprep.subr.bf16.mxu0 %v6801
        %7787 = vmatpush1.bf16.msra.mxu0 %v6800
        %7788 = vmatprep.subr.bf16.mxu0 %v6813
        %7789 = vmatpush1.bf16.msra.mxu0 %v6812
        %7790 = vmatprep.subr.bf16.mxu0 %v6825
        %7791 = vmatpush1.bf16.msra.mxu0 %v6824
        %7792 = vmatprep.subr.bf16.mxu0 %v6837
        %7793 = vmatpush1.bf16.msra.mxu0 %v6836
        %7794 = vmatprep.subr.bf16.mxu0 %v6849
        %7795 = vmatpush1.bf16.msra.mxu0 %v6848
        %7796 = vmatprep.mubr.bf16.mxu0 %v5437
        %7797 = vmatmul.mubr.bf16.gmra.mrb[0].mxu0 %v5436
        %v7798 = vpop.f32.mrb[0].mxu0
        %v7799 = vadd.f32 %v5777, %v7798
        %v7800 = vpop.f32.mrb[0].mxu0
        %v7801 = vadd.f32 %v5781, %v7800
        %v7802 = vpop.f32.mrb[0].mxu0
        %v7803 = vadd.f32 %v5777, %v7802
        %v7804 = vpop.f32.mrb[0].mxu0
        %v7805 = vadd.f32 %v5781, %v7804
        %7806 = vmatprep.mubr.bf16.mxu0 %v5440
        %7807 = vmatmul.mubr.bf16.gmra.mrb[0].mxu0 %v5439
        %v7808 = vpop.f32.mrb[0].mxu0
        %v7809 = vadd.f32 %v5777, %v7808
        %v7810 = vpop.f32.mrb[0].mxu0
        %v7811 = vadd.f32 %v5781, %v7810
        %v7812 = vpop.f32.mrb[0].mxu0
        %v7813 = vadd.f32 %v5777, %v7812
        %v7814 = vpop.f32.mrb[0].mxu0
        %v7815 = vadd.f32 %v5781, %v7814
        %7816 = vdwg.mxu0
        %7817 = vmatprep.subr.bf16.mxu0 %v6861
        %7818 = vmatpush1.bf16.msra.mxu0 %v6860
        %7819 = vmatprep.subr.bf16.mxu0 %v6873
        %7820 = vmatpush1.bf16.msra.mxu0 %v6872
        %7821 = vmatprep.subr.bf16.mxu0 %v6885
        %7822 = vmatpush1.bf16.msra.mxu0 %v6884
        %7823 = vmatprep.subr.bf16.mxu0 %v6897
        %7824 = vmatpush1.bf16.msra.mxu0 %v6896
        %7825 = vmatprep.subr.bf16.mxu0 %v6909
        %7826 = vmatpush1.bf16.msra.mxu0 %v6908
        %7827 = vmatprep.subr.bf16.mxu0 %v6921
        %7828 = vmatpush1.bf16.msra.mxu0 %v6920
        %7829 = vmatprep.subr.bf16.mxu0 %v6933
        %7830 = vmatpush1.bf16.msra.mxu0 %v6932
        %7831 = vmatprep.subr.bf16.mxu0 %v6945
        %7832 = vmatpush1.bf16.msra.mxu0 %v6944
        %7833 = vmatprep.subr.bf16.mxu0 0
        %7834 = vmatpush1.bf16.msra.mxu0 0
        %7835 = vmatprep.subr.bf16.mxu0 0
        %7836 = vmatpush1.bf16.msra.mxu0 0
        %7837 = vmatprep.subr.bf16.mxu0 0
        %7838 = vmatpush1.bf16.msra.mxu0 0
        %7839 = vmatprep.subr.bf16.mxu0 0
        %7840 = vmatpush1.bf16.msra.mxu0 0
        %7841 = vmatprep.subr.bf16.mxu0 0
        %7842 = vmatpush1.bf16.msra.mxu0 0
        %7843 = vmatprep.subr.bf16.mxu0 0
        %7844 = vmatpush1.bf16.msra.mxu0 0
        %7845 = vmatprep.subr.bf16.mxu0 0
        %7846 = vmatpush1.bf16.msra.mxu0 0
        %7847 = vmatprep.subr.bf16.mxu0 0
        %7848 = vmatpush1.bf16.msra.mxu0 0
        %7849 = vmatprep.mubr.bf16.mxu0 0
        %7850 = vmatmul.mubr.bf16.gmra.mrb[0].mxu0 %v5438
        %v7851 = vpop.f32.mrb[0].mxu0
        %v7852 = vadd.f32 %v7799, %v7851
        %v7853 = vpop.f32.mrb[0].mxu0
        %v7854 = vadd.f32 %v7801, %v7853
        %v7855 = vpop.f32.mrb[0].mxu0
        %v7856 = vadd.f32 %v7803, %v7855
        %v7857 = vpop.f32.mrb[0].mxu0
        %v7858 = vadd.f32 %v7805, %v7857
        %7859 = vmatprep.mubr.bf16.mxu0 0
        %7860 = vmatmul.mubr.bf16.gmra.mrb[0].mxu0 %v5441
        %v7861 = vpop.f32.mrb[0].mxu0
        %v7862 = vadd.f32 %v7809, %v7861
        %v7863 = vpop.f32.mrb[0].mxu0
        %v7864 = vadd.f32 %v7811, %v7863
        %v7865 = vpop.f32.mrb[0].mxu0
        %v7866 = vadd.f32 %v7813, %v7865
        %v7867 = vpop.f32.mrb[0].mxu0
        %v7868 = vadd.f32 %v7815, %v7867
        %7869 = vdwg.mxu0
        %v7870 = vmax.f32 %v7322, 0.0
        %v7871 = vmax.f32 %v7324, 0.0
        %v7872 = vmax.f32 %v7428, 0.0
        %v7873 = vmax.f32 %v7430, 0.0
        %v7874 = vmax.f32 %v7534, 0.0
        %v7875 = vmax.f32 %v7536, 0.0
        %v7876 = vmax.f32 %v7640, 0.0
        %v7877 = vmax.f32 %v7642, 0.0
        %v7878 = vmax.f32 %v7746, 0.0
        %v7879 = vmax.f32 %v7748, 0.0
        %v7880 = vmax.f32 %v7852, 0.0
        %v7881 = vmax.f32 %v7854, 0.0
        %v7882 = vmax.f32 %v7326, 0.0
        %v7883 = vmax.f32 %v7328, 0.0
        %v7884 = vmax.f32 %v7432, 0.0
        %v7885 = vmax.f32 %v7434, 0.0
        %v7886 = vmax.f32 %v7538, 0.0
        %v7887 = vmax.f32 %v7540, 0.0
        %v7888 = vmax.f32 %v7644, 0.0
        %v7889 = vmax.f32 %v7646, 0.0
        %v7890 = vmax.f32 %v7750, 0.0
        %v7891 = vmax.f32 %v7752, 0.0
        %v7892 = vmax.f32 %v7856, 0.0
        %v7893 = vmax.f32 %v7858, 0.0
        %v7894 = vmax.f32 %v7332, 0.0
        %v7895 = vmax.f32 %v7334, 0.0
        %v7896 = vmax.f32 %v7438, 0.0
        %v7897 = vmax.f32 %v7440, 0.0
        %v7898 = vmax.f32 %v7544, 0.0
        %v7899 = vmax.f32 %v7546, 0.0
        %v7900 = vmax.f32 %v7650, 0.0
        %v7901 = vmax.f32 %v7652, 0.0
        %v7902 = vmax.f32 %v7756, 0.0
        %v7903 = vmax.f32 %v7758, 0.0
        %v7904 = vmax.f32 %v7862, 0.0
        %v7905 = vmax.f32 %v7864, 0.0
        %v7906 = vmax.f32 %v7336, 0.0
        %v7907 = vmax.f32 %v7338, 0.0
        %v7908 = vmax.f32 %v7442, 0.0
        %v7909 = vmax.f32 %v7444, 0.0
        %v7910 = vmax.f32 %v7548, 0.0
        %v7911 = vmax.f32 %v7550, 0.0
        %v7912 = vmax.f32 %v7654, 0.0
        %v7913 = vmax.f32 %v7656, 0.0
        %v7914 = vmax.f32 %v7760, 0.0
        %v7915 = vmax.f32 %v7762, 0.0
        %v7916 = vmax.f32 %v7866, 0.0
        %v7917 = vmax.f32 %v7868, 0.0
        %v7918 = vpack.c.bf16 %v7882, %v7870
        %v7919 = vpack.c.bf16 %v7883, %v7871
        %v7920 = vpack.c.bf16 %v7884, %v7872
        %v7921 = vpack.c.bf16 %v7885, %v7873
        %v7922 = vpack.c.bf16 %v7886, %v7874
        %v7923 = vpack.c.bf16 %v7887, %v7875
        %v7924 = vpack.c.bf16 %v7888, %v7876
        %v7925 = vpack.c.bf16 %v7889, %v7877
        %v7926 = vpack.c.bf16 %v7890, %v7878
        %v7927 = vpack.c.bf16 %v7891, %v7879
        %v7928 = vpack.c.bf16 %v7892, %v7880
        %v7929 = vpack.c.bf16 %v7893, %v7881
        %v7930 = vpack.c.bf16 %v7906, %v7894
        %v7931 = vpack.c.bf16 %v7907, %v7895
        %v7932 = vpack.c.bf16 %v7908, %v7896
        %v7933 = vpack.c.bf16 %v7909, %v7897
        %v7934 = vpack.c.bf16 %v7910, %v7898
        %v7935 = vpack.c.bf16 %v7911, %v7899
        %v7936 = vpack.c.bf16 %v7912, %v7900
        %v7937 = vpack.c.bf16 %v7913, %v7901
        %v7938 = vpack.c.bf16 %v7914, %v7902
        %v7939 = vpack.c.bf16 %v7915, %v7903
        %v7940 = vpack.c.bf16 %v7916, %v7904
        %v7941 = vpack.c.bf16 %v7917, %v7905
        %v7942 = vld [vmem:[%s886] sm:$0xff]
        %v7943 = vld [vmem:[%s886 + $0x8] sm:$0xf]
        %v7944 = vld [vmem:[%s886 + $0xc] sm:$0xff]
        %v7945 = vld [vmem:[%s886 + $0x14] sm:$0xf]
        %v7946 = vld [vmem:[%s886 + $0x18] sm:$0xff]
        %v7947 = vld [vmem:[%s886 + $0x20] sm:$0xf]
        %v7948 = vld [vmem:[%s886 + $0x24] sm:$0xff]
        %v7949 = vld [vmem:[%s886 + $0x2c] sm:$0xf]
        %v7950 = vld [vmem:[%s886 + $0x30] sm:$0xff]
        %v7951 = vld [vmem:[%s886 + $0x38] sm:$0xf]
        %v7952 = vld [vmem:[%s886 + $0x3c] sm:$0xff]
        %v7953 = vld [vmem:[%s886 + $0x44] sm:$0xf]
        %v7954 = vld [vmem:[%s886 + $0x48] sm:$0xff]
        %v7955 = vld [vmem:[%s886 + $0x50] sm:$0xf]
        %v7956 = vld [vmem:[%s886 + $0x54] sm:$0xff]
        %v7957 = vld [vmem:[%s886 + $0x5c] sm:$0xf]
        %v7958 = vld [vmem:[%s886 + $0x60] sm:$0xff]
        %v7959 = vld [vmem:[%s886 + $0x68] sm:$0xf]
        %v7960 = vld [vmem:[%s886 + $0x6c] sm:$0xff]
        %v7961 = vld [vmem:[%s886 + $0x74] sm:$0xf]
        %v7962 = vld [vmem:[%s886 + $0x78] sm:$0xff]
        %v7963 = vld [vmem:[%s886 + $0x80] sm:$0xf]
        %v7964 = vld [vmem:[%s886 + $0x84] sm:$0xff]
        %v7965 = vld [vmem:[%s886 + $0x8c] sm:$0xf]
        %v7966 = vld [vmem:[%s886 + $0x90] sm:$0xff]
        %v7967 = vld [vmem:[%s886 + $0x98] sm:$0xf]
        %v7968 = vld [vmem:[%s886 + $0x9c] sm:$0xff]
        %v7969 = vld [vmem:[%s886 + $0xa4] sm:$0xf]
        %v7970 = vld [vmem:[%s886 + $0xa8] sm:$0xff]
        %v7971 = vld [vmem:[%s886 + $0xb0] sm:$0xf]
        %v7972 = vld [vmem:[%s886 + $0xb4] sm:$0xff]
        %v7973 = vld [vmem:[%s886 + $0xbc] sm:$0xf]
        %v7974 = vld [vmem:[%s886 + $0xc0] sm:$0xff]
        %v7975 = vld [vmem:[%s886 + $0xc8] sm:$0xf]
        %v7976 = vld [vmem:[%s886 + $0xcc] sm:$0xff]
        %v7977 = vld [vmem:[%s886 + $0xd4] sm:$0xf]
        %v7978 = vld [vmem:[%s886 + $0xd8] sm:$0xff]
        %v7979 = vld [vmem:[%s886 + $0xe0] sm:$0xf]
        %v7980 = vld [vmem:[%s886 + $0xe4] sm:$0xff]
        %v7981 = vld [vmem:[%s886 + $0xec] sm:$0xf]
        %v7982 = vld [vmem:[%s886 + $0xf0] sm:$0xff]
        %v7983 = vld [vmem:[%s886 + $0xf8] sm:$0xf]
        %v7984 = vld [vmem:[%s886 + $0xfc] sm:$0xff]
        %v7985 = vld [vmem:[%s886 + $0x104] sm:$0xf]
        %v7986 = vld [vmem:[%s886 + $0x108] sm:$0xff]
        %v7987 = vld [vmem:[%s886 + $0x110] sm:$0xf]
        %v7988 = vld [vmem:[%s886 + $0x114] sm:$0xff]
        %v7989 = vld [vmem:[%s886 + $0x11c] sm:$0xf]
        %v7990 = vld [vmem:[%s886 + $0x120] sm:$0xff]
        %v7991 = vld [vmem:[%s886 + $0x128] sm:$0xf]
        %v7992 = vld [vmem:[%s886 + $0x12c] sm:$0xff]
        %v7993 = vld [vmem:[%s886 + $0x134] sm:$0xf]
        %v7994 = vld [vmem:[%s886 + $0x138] sm:$0xff]
        %v7995 = vld [vmem:[%s886 + $0x140] sm:$0xf]
        %v7996 = vld [vmem:[%s886 + $0x144] sm:$0xff]
        %v7997 = vld [vmem:[%s886 + $0x14c] sm:$0xf]
        %v7998 = vld [vmem:[%s886 + $0x150] sm:$0xff]
        %v7999 = vld [vmem:[%s886 + $0x158] sm:$0xf]
        %v8000 = vld [vmem:[%s886 + $0x15c] sm:$0xff]
        %v8001 = vld [vmem:[%s886 + $0x164] sm:$0xf]
        %v8002 = vld [vmem:[%s886 + $0x168] sm:$0xff]
        %v8003 = vld [vmem:[%s886 + $0x170] sm:$0xf]
        %v8004 = vld [vmem:[%s886 + $0x174] sm:$0xff]
        %v8005 = vld [vmem:[%s886 + $0x17c] sm:$0xf]
        %v8006 = vld [vmem:[%s886 + $0x180] sm:$0xff]
        %v8007 = vld [vmem:[%s886 + $0x188] sm:$0xf]
        %v8008 = vld [vmem:[%s886 + $0x18c] sm:$0xff]
        %v8009 = vld [vmem:[%s886 + $0x194] sm:$0xf]
        %v8010 = vld [vmem:[%s886 + $0x198] sm:$0xff]
        %v8011 = vld [vmem:[%s886 + $0x1a0] sm:$0xf]
        %v8012 = vld [vmem:[%s886 + $0x1a4] sm:$0xff]
        %v8013 = vld [vmem:[%s886 + $0x1ac] sm:$0xf]
        %v8014 = vld [vmem:[%s886 + $0x1b0] sm:$0xff]
        %v8015 = vld [vmem:[%s886 + $0x1b8] sm:$0xf]
        %v8016 = vld [vmem:[%s886 + $0x1bc] sm:$0xff]
        %v8017 = vld [vmem:[%s886 + $0x1c4] sm:$0xf]
        %v8018 = vld [vmem:[%s886 + $0x1c8] sm:$0xff]
        %v8019 = vld [vmem:[%s886 + $0x1d0] sm:$0xf]
        %v8020 = vld [vmem:[%s886 + $0x1d4] sm:$0xff]
        %v8021 = vld [vmem:[%s886 + $0x1dc] sm:$0xf]
        %v8022 = vld [vmem:[%s886 + $0x1e0] sm:$0xff]
        %v8023 = vld [vmem:[%s886 + $0x1e8] sm:$0xf]
        %v8024 = vld [vmem:[%s886 + $0x1ec] sm:$0xff]
        %v8025 = vld [vmem:[%s886 + $0x1f4] sm:$0xf]
        %v8026 = vld [vmem:[%s886 + $0x1f8] sm:$0xff]
        %v8027 = vld [vmem:[%s886 + $0x200] sm:$0xf]
        %v8028 = vld [vmem:[%s886 + $0x204] sm:$0xff]
        %v8029 = vld [vmem:[%s886 + $0x20c] sm:$0xf]
        %v8030 = vld [vmem:[%s886 + $0x210] sm:$0xff]
        %v8031 = vld [vmem:[%s886 + $0x218] sm:$0xf]
        %v8032 = vld [vmem:[%s886 + $0x21c] sm:$0xff]
        %v8033 = vld [vmem:[%s886 + $0x224] sm:$0xf]
        %v8034 = vld [vmem:[%s886 + $0x228] sm:$0xff]
        %v8035 = vld [vmem:[%s886 + $0x230] sm:$0xf]
        %v8036 = vld [vmem:[%s886 + $0x234] sm:$0xff]
        %v8037 = vld [vmem:[%s886 + $0x23c] sm:$0xf]
        %v8038 = vld [vmem:[%s886 + $0x240] sm:$0xff]
        %v8039 = vld [vmem:[%s886 + $0x248] sm:$0xf]
        %v8040 = vld [vmem:[%s886 + $0x24c] sm:$0xff]
        %v8041 = vld [vmem:[%s886 + $0x254] sm:$0xf]
        %v8042 = vld [vmem:[%s886 + $0x258] sm:$0xff]
        %v8043 = vld [vmem:[%s886 + $0x260] sm:$0xf]
        %v8044 = vld [vmem:[%s886 + $0x264] sm:$0xff]
        %v8045 = vld [vmem:[%s886 + $0x26c] sm:$0xf]
        %v8046 = vld [vmem:[%s886 + $0x270] sm:$0xff]
        %v8047 = vld [vmem:[%s886 + $0x278] sm:$0xf]
        %v8048 = vld [vmem:[%s886 + $0x27c] sm:$0xff]
        %v8049 = vld [vmem:[%s886 + $0x284] sm:$0xf]
        %v8050 = vld [vmem:[%s886 + $0x288] sm:$0xff]
        %v8051 = vld [vmem:[%s886 + $0x290] sm:$0xf]
        %v8052 = vld [vmem:[%s886 + $0x294] sm:$0xff]
        %v8053 = vld [vmem:[%s886 + $0x29c] sm:$0xf]
        %v8054 = vld [vmem:[%s886 + $0x2a0] sm:$0xff]
        %v8055 = vld [vmem:[%s886 + $0x2a8] sm:$0xf]
        %v8056 = vld [vmem:[%s886 + $0x2ac] sm:$0xff]
        %v8057 = vld [vmem:[%s886 + $0x2b4] sm:$0xf]
        %v8058 = vld [vmem:[%s886 + $0x2b8] sm:$0xff]
        %v8059 = vld [vmem:[%s886 + $0x2c0] sm:$0xf]
        %v8060 = vld [vmem:[%s886 + $0x2c4] sm:$0xff]
        %v8061 = vld [vmem:[%s886 + $0x2cc] sm:$0xf]
        %v8062 = vld [vmem:[%s886 + $0x2d0] sm:$0xff]
        %v8063 = vld [vmem:[%s886 + $0x2d8] sm:$0xf]
        %v8064 = vld [vmem:[%s886 + $0x2dc] sm:$0xff]
        %v8065 = vld [vmem:[%s886 + $0x2e4] sm:$0xf]
        %v8066 = vld [vmem:[%s886 + $0x2e8] sm:$0xff]
        %v8067 = vld [vmem:[%s886 + $0x2f0] sm:$0xf]
        %v8068 = vld [vmem:[%s886 + $0x2f4] sm:$0xff]
        %v8069 = vld [vmem:[%s886 + $0x2fc] sm:$0xf]
        %v8070 = vld [vmem:[%s886 + $0x300] sm:$0xff]
        %v8071 = vld [vmem:[%s886 + $0x308] sm:$0xf]
        %v8072 = vld [vmem:[%s886 + $0x30c] sm:$0xff]
        %v8073 = vld [vmem:[%s886 + $0x314] sm:$0xf]
        %v8074 = vld [vmem:[%s886 + $0x318] sm:$0xff]
        %v8075 = vld [vmem:[%s886 + $0x320] sm:$0xf]
        %v8076 = vld [vmem:[%s886 + $0x324] sm:$0xff]
        %v8077 = vld [vmem:[%s886 + $0x32c] sm:$0xf]
        %v8078 = vld [vmem:[%s886 + $0x330] sm:$0xff]
        %v8079 = vld [vmem:[%s886 + $0x338] sm:$0xf]
        %v8080 = vld [vmem:[%s886 + $0x33c] sm:$0xff]
        %v8081 = vld [vmem:[%s886 + $0x344] sm:$0xf]
        %v8082 = vld [vmem:[%s886 + $0x348] sm:$0xff]
        %v8083 = vld [vmem:[%s886 + $0x350] sm:$0xf]
        %v8084 = vld [vmem:[%s886 + $0x354] sm:$0xff]
        %v8085 = vld [vmem:[%s886 + $0x35c] sm:$0xf]
        %v8086 = vld [vmem:[%s886 + $0x360] sm:$0xff]
        %v8087 = vld [vmem:[%s886 + $0x368] sm:$0xf]
        %v8088 = vld [vmem:[%s886 + $0x36c] sm:$0xff]
        %v8089 = vld [vmem:[%s886 + $0x374] sm:$0xf]
        %v8090 = vld [vmem:[%s886 + $0x378] sm:$0xff]
        %v8091 = vld [vmem:[%s886 + $0x380] sm:$0xf]
        %v8092 = vld [vmem:[%s886 + $0x384] sm:$0xff]
        %v8093 = vld [vmem:[%s886 + $0x38c] sm:$0xf]
        %v8094 = vld [vmem:[%s886 + $0x390] sm:$0xff]
        %v8095 = vld [vmem:[%s886 + $0x398] sm:$0xf]
        %v8096 = vld [vmem:[%s886 + $0x39c] sm:$0xff]
        %v8097 = vld [vmem:[%s886 + $0x3a4] sm:$0xf]
        %v8098 = vld [vmem:[%s886 + $0x3a8] sm:$0xff]
        %v8099 = vld [vmem:[%s886 + $0x3b0] sm:$0xf]
        %v8100 = vld [vmem:[%s886 + $0x3b4] sm:$0xff]
        %v8101 = vld [vmem:[%s886 + $0x3bc] sm:$0xf]
        %v8102 = vld [vmem:[%s886 + $0x3c0] sm:$0xff]
        %v8103 = vld [vmem:[%s886 + $0x3c8] sm:$0xf]
        %v8104 = vld [vmem:[%s886 + $0x3cc] sm:$0xff]
        %v8105 = vld [vmem:[%s886 + $0x3d4] sm:$0xf]
        %v8106 = vld [vmem:[%s886 + $0x3d8] sm:$0xff]
        %v8107 = vld [vmem:[%s886 + $0x3e0] sm:$0xf]
        %v8108 = vld [vmem:[%s886 + $0x3e4] sm:$0xff]
        %v8109 = vld [vmem:[%s886 + $0x3ec] sm:$0xf]
        %v8110 = vld [vmem:[%s886 + $0x3f0] sm:$0xff]
        %v8111 = vld [vmem:[%s886 + $0x3f8] sm:$0xf]
        %v8112 = vld [vmem:[%s886 + $0x3fc] sm:$0xff]
        %v8113 = vld [vmem:[%s886 + $0x404] sm:$0xf]
        %v8114 = vld [vmem:[%s886 + $0x408] sm:$0xff]
        %v8115 = vld [vmem:[%s886 + $0x410] sm:$0xf]
        %v8116 = vld [vmem:[%s886 + $0x414] sm:$0xff]
        %v8117 = vld [vmem:[%s886 + $0x41c] sm:$0xf]
        %v8118 = vld [vmem:[%s886 + $0x420] sm:$0xff]
        %v8119 = vld [vmem:[%s886 + $0x428] sm:$0xf]
        %v8120 = vld [vmem:[%s886 + $0x42c] sm:$0xff]
        %v8121 = vld [vmem:[%s886 + $0x434] sm:$0xf]
        %v8122 = vld [vmem:[%s886 + $0x438] sm:$0xff]
        %v8123 = vld [vmem:[%s886 + $0x440] sm:$0xf]
        %v8124 = vld [vmem:[%s886 + $0x444] sm:$0xff]
        %v8125 = vld [vmem:[%s886 + $0x44c] sm:$0xf]
        %v8126 = vld [vmem:[%s886 + $0x450] sm:$0xff]
        %v8127 = vld [vmem:[%s886 + $0x458] sm:$0xf]
        %v8128 = vld [vmem:[%s886 + $0x45c] sm:$0xff]
        %v8129 = vld [vmem:[%s886 + $0x464] sm:$0xf]
        %v8130 = vld [vmem:[%s886 + $0x468] sm:$0xff]
        %v8131 = vld [vmem:[%s886 + $0x470] sm:$0xf]
        %v8132 = vld [vmem:[%s886 + $0x474] sm:$0xff]
        %v8133 = vld [vmem:[%s886 + $0x47c] sm:$0xf]
        %v8134 = vld [vmem:[%s886 + $0x480] sm:$0xff]
        %v8135 = vld [vmem:[%s886 + $0x488] sm:$0xf]
        %v8136 = vld [vmem:[%s886 + $0x48c] sm:$0xff]
        %v8137 = vld [vmem:[%s886 + $0x494] sm:$0xf]
        %v8138 = vld [vmem:[%s886 + $0x498] sm:$0xff]
        %v8139 = vld [vmem:[%s886 + $0x4a0] sm:$0xf]
        %v8140 = vld [vmem:[%s886 + $0x4a4] sm:$0xff]
        %v8141 = vld [vmem:[%s886 + $0x4ac] sm:$0xf]
        %v8142 = vld [vmem:[%s886 + $0x4b0] sm:$0xff]
        %v8143 = vld [vmem:[%s886 + $0x4b8] sm:$0xf]
        %v8144 = vld [vmem:[%s886 + $0x4bc] sm:$0xff]
        %v8145 = vld [vmem:[%s886 + $0x4c4] sm:$0xf]
        %v8146 = vld [vmem:[%s886 + $0x4c8] sm:$0xff]
        %v8147 = vld [vmem:[%s886 + $0x4d0] sm:$0xf]
        %v8148 = vld [vmem:[%s886 + $0x4d4] sm:$0xff]
        %v8149 = vld [vmem:[%s886 + $0x4dc] sm:$0xf]
        %v8150 = vld [vmem:[%s886 + $0x4e0] sm:$0xff]
        %v8151 = vld [vmem:[%s886 + $0x4e8] sm:$0xf]
        %v8152 = vld [vmem:[%s886 + $0x4ec] sm:$0xff]
        %v8153 = vld [vmem:[%s886 + $0x4f4] sm:$0xf]
        %v8154 = vld [vmem:[%s886 + $0x4f8] sm:$0xff]
        %v8155 = vld [vmem:[%s886 + $0x500] sm:$0xf]
        %v8156 = vld [vmem:[%s886 + $0x504] sm:$0xff]
        %v8157 = vld [vmem:[%s886 + $0x50c] sm:$0xf]
        %v8158 = vld [vmem:[%s886 + $0x510] sm:$0xff]
        %v8159 = vld [vmem:[%s886 + $0x518] sm:$0xf]
        %v8160 = vld [vmem:[%s886 + $0x51c] sm:$0xff]
        %v8161 = vld [vmem:[%s886 + $0x524] sm:$0xf]
        %v8162 = vld [vmem:[%s886 + $0x528] sm:$0xff]
        %v8163 = vld [vmem:[%s886 + $0x530] sm:$0xf]
        %v8164 = vld [vmem:[%s886 + $0x534] sm:$0xff]
        %v8165 = vld [vmem:[%s886 + $0x53c] sm:$0xf]
        %v8166 = vld [vmem:[%s886 + $0x540] sm:$0xff]
        %v8167 = vld [vmem:[%s886 + $0x548] sm:$0xf]
        %v8168 = vld [vmem:[%s886 + $0x54c] sm:$0xff]
        %v8169 = vld [vmem:[%s886 + $0x554] sm:$0xf]
        %v8170 = vld [vmem:[%s886 + $0x558] sm:$0xff]
        %v8171 = vld [vmem:[%s886 + $0x560] sm:$0xf]
        %v8172 = vld [vmem:[%s886 + $0x564] sm:$0xff]
        %v8173 = vld [vmem:[%s886 + $0x56c] sm:$0xf]
        %v8174 = vld [vmem:[%s886 + $0x570] sm:$0xff]
        %v8175 = vld [vmem:[%s886 + $0x578] sm:$0xf]
        %v8176 = vld [vmem:[%s886 + $0x57c] sm:$0xff]
        %v8177 = vld [vmem:[%s886 + $0x584] sm:$0xf]
        %v8178 = vld [vmem:[%s886 + $0x588] sm:$0xff]
        %v8179 = vld [vmem:[%s886 + $0x590] sm:$0xf]
        %v8180 = vld [vmem:[%s886 + $0x594] sm:$0xff]
        %v8181 = vld [vmem:[%s886 + $0x59c] sm:$0xf]
        %v8182 = vld [vmem:[%s886 + $0x5a0] sm:$0xff]
        %v8183 = vld [vmem:[%s886 + $0x5a8] sm:$0xf]
        %v8184 = vld [vmem:[%s886 + $0x5ac] sm:$0xff]
        %v8185 = vld [vmem:[%s886 + $0x5b4] sm:$0xf]
        %v8186 = vld [vmem:[%s886 + $0x5b8] sm:$0xff]
        %v8187 = vld [vmem:[%s886 + $0x5c0] sm:$0xf]
        %v8188 = vld [vmem:[%s886 + $0x5c4] sm:$0xff]
        %v8189 = vld [vmem:[%s886 + $0x5cc] sm:$0xf]
        %v8190 = vld [vmem:[%s886 + $0x5d0] sm:$0xff]
        %v8191 = vld [vmem:[%s886 + $0x5d8] sm:$0xf]
        %v8192 = vld [vmem:[%s886 + $0x5dc] sm:$0xff]
        %v8193 = vld [vmem:[%s886 + $0x5e4] sm:$0xf]
        %v8194 = vld [vmem:[%s886 + $0x5e8] sm:$0xff]
        %v8195 = vld [vmem:[%s886 + $0x5f0] sm:$0xf]
        %v8196 = vld [vmem:[%s886 + $0x5f4] sm:$0xff]
        %v8197 = vld [vmem:[%s886 + $0x5fc] sm:$0xf]
        %v8198 = vld [vmem:[%s886 + $0x600] sm:$0xff]
        %v8199 = vld [vmem:[%s886 + $0x608] sm:$0xf]
        %v8200 = vld [vmem:[%s886 + $0x60c] sm:$0xff]
        %v8201 = vld [vmem:[%s886 + $0x614] sm:$0xf]
        %v8202 = vld [vmem:[%s886 + $0x618] sm:$0xff]
        %v8203 = vld [vmem:[%s886 + $0x620] sm:$0xf]
        %v8204 = vld [vmem:[%s886 + $0x624] sm:$0xff]
        %v8205 = vld [vmem:[%s886 + $0x62c] sm:$0xf]
        %v8206 = vld [vmem:[%s886 + $0x630] sm:$0xff]
        %v8207 = vld [vmem:[%s886 + $0x638] sm:$0xf]
        %v8208 = vld [vmem:[%s886 + $0x63c] sm:$0xff]
        %v8209 = vld [vmem:[%s886 + $0x644] sm:$0xf]
        %v8210 = vld [vmem:[%s886 + $0x648] sm:$0xff]
        %v8211 = vld [vmem:[%s886 + $0x650] sm:$0xf]
        %v8212 = vld [vmem:[%s886 + $0x654] sm:$0xff]
        %v8213 = vld [vmem:[%s886 + $0x65c] sm:$0xf]
        %v8214 = vld [vmem:[%s886 + $0x660] sm:$0xff]
        %v8215 = vld [vmem:[%s886 + $0x668] sm:$0xf]
        %v8216 = vld [vmem:[%s886 + $0x66c] sm:$0xff]
        %v8217 = vld [vmem:[%s886 + $0x674] sm:$0xf]
        %v8218 = vld [vmem:[%s886 + $0x678] sm:$0xff]
        %v8219 = vld [vmem:[%s886 + $0x680] sm:$0xf]
        %v8220 = vld [vmem:[%s886 + $0x684] sm:$0xff]
        %v8221 = vld [vmem:[%s886 + $0x68c] sm:$0xf]
        %v8222 = vld [vmem:[%s886 + $0x690] sm:$0xff]
        %v8223 = vld [vmem:[%s886 + $0x698] sm:$0xf]
        %v8224 = vld [vmem:[%s886 + $0x69c] sm:$0xff]
        %v8225 = vld [vmem:[%s886 + $0x6a4] sm:$0xf]
        %v8226 = vld [vmem:[%s886 + $0x6a8] sm:$0xff]
        %v8227 = vld [vmem:[%s886 + $0x6b0] sm:$0xf]
        %v8228 = vld [vmem:[%s886 + $0x6b4] sm:$0xff]
        %v8229 = vld [vmem:[%s886 + $0x6bc] sm:$0xf]
        %v8230 = vld [vmem:[%s886 + $0x6c0] sm:$0xff]
        %v8231 = vld [vmem:[%s886 + $0x6c8] sm:$0xf]
        %v8232 = vld [vmem:[%s886 + $0x6cc] sm:$0xff]
        %v8233 = vld [vmem:[%s886 + $0x6d4] sm:$0xf]
        %v8234 = vld [vmem:[%s886 + $0x6d8] sm:$0xff]
        %v8235 = vld [vmem:[%s886 + $0x6e0] sm:$0xf]
        %v8236 = vld [vmem:[%s886 + $0x6e4] sm:$0xff]
        %v8237 = vld [vmem:[%s886 + $0x6ec] sm:$0xf]
        %v8238 = vld [vmem:[%s886 + $0x6f0] sm:$0xff]
        %v8239 = vld [vmem:[%s886 + $0x6f8] sm:$0xf]
        %v8240 = vld [vmem:[%s886 + $0x6fc] sm:$0xff]
        %v8241 = vld [vmem:[%s886 + $0x704] sm:$0xf]
        %v8242 = vld [vmem:[%s886 + $0x708] sm:$0xff]
        %v8243 = vld [vmem:[%s886 + $0x710] sm:$0xf]
        %v8244 = vld [vmem:[%s886 + $0x714] sm:$0xff]
        %v8245 = vld [vmem:[%s886 + $0x71c] sm:$0xf]
        %v8246 = vld [vmem:[%s886 + $0x720] sm:$0xff]
        %v8247 = vld [vmem:[%s886 + $0x728] sm:$0xf]
        %v8248 = vld [vmem:[%s886 + $0x72c] sm:$0xff]
        %v8249 = vld [vmem:[%s886 + $0x734] sm:$0xf]
        %v8250 = vld [vmem:[%s886 + $0x738] sm:$0xff]
        %v8251 = vld [vmem:[%s886 + $0x740] sm:$0xf]
        %v8252 = vld [vmem:[%s886 + $0x744] sm:$0xff]
        %v8253 = vld [vmem:[%s886 + $0x74c] sm:$0xf]
        %v8254 = vld [vmem:[%s886 + $0x750] sm:$0xff]
        %v8255 = vld [vmem:[%s886 + $0x758] sm:$0xf]
        %v8256 = vld [vmem:[%s886 + $0x75c] sm:$0xff]
        %v8257 = vld [vmem:[%s886 + $0x764] sm:$0xf]
        %v8258 = vld [vmem:[%s886 + $0x768] sm:$0xff]
        %v8259 = vld [vmem:[%s886 + $0x770] sm:$0xf]
        %v8260 = vld [vmem:[%s886 + $0x774] sm:$0xff]
        %v8261 = vld [vmem:[%s886 + $0x77c] sm:$0xf]
        %v8262 = vld [vmem:[%s886 + $0x780] sm:$0xff]
        %v8263 = vld [vmem:[%s886 + $0x788] sm:$0xf]
        %v8264 = vld [vmem:[%s886 + $0x78c] sm:$0xff]
        %v8265 = vld [vmem:[%s886 + $0x794] sm:$0xf]
        %v8266 = vld [vmem:[%s886 + $0x798] sm:$0xff]
        %v8267 = vld [vmem:[%s886 + $0x7a0] sm:$0xf]
        %v8268 = vld [vmem:[%s886 + $0x7a4] sm:$0xff]
        %v8269 = vld [vmem:[%s886 + $0x7ac] sm:$0xf]
        %v8270 = vld [vmem:[%s886 + $0x7b0] sm:$0xff]
        %v8271 = vld [vmem:[%s886 + $0x7b8] sm:$0xf]
        %v8272 = vld [vmem:[%s886 + $0x7bc] sm:$0xff]
        %v8273 = vld [vmem:[%s886 + $0x7c4] sm:$0xf]
        %v8274 = vld [vmem:[%s886 + $0x7c8] sm:$0xff]
        %v8275 = vld [vmem:[%s886 + $0x7d0] sm:$0xf]
        %v8276 = vld [vmem:[%s886 + $0x7d4] sm:$0xff]
        %v8277 = vld [vmem:[%s886 + $0x7dc] sm:$0xf]
        %v8278 = vld [vmem:[%s886 + $0x7e0] sm:$0xff]
        %v8279 = vld [vmem:[%s886 + $0x7e8] sm:$0xf]
        %v8280 = vld [vmem:[%s886 + $0x7ec] sm:$0xff]
        %v8281 = vld [vmem:[%s886 + $0x7f4] sm:$0xf]
        %v8282 = vld [vmem:[%s886 + $0x7f8] sm:$0xff]
        %v8283 = vld [vmem:[%s886 + $0x800] sm:$0xf]
        %v8284 = vld [vmem:[%s886 + $0x804] sm:$0xff]
        %v8285 = vld [vmem:[%s886 + $0x80c] sm:$0xf]
        %v8286 = vld [vmem:[%s886 + $0x810] sm:$0xff]
        %v8287 = vld [vmem:[%s886 + $0x818] sm:$0xf]
        %v8288 = vld [vmem:[%s886 + $0x81c] sm:$0xff]
        %v8289 = vld [vmem:[%s886 + $0x824] sm:$0xf]
        %v8290 = vld [vmem:[%s886 + $0x828] sm:$0xff]
        %v8291 = vld [vmem:[%s886 + $0x830] sm:$0xf]
        %v8292 = vld [vmem:[%s886 + $0x834] sm:$0xff]
        %v8293 = vld [vmem:[%s886 + $0x83c] sm:$0xf]
        %v8294 = vld [vmem:[%s886 + $0x840] sm:$0xff]
        %v8295 = vld [vmem:[%s886 + $0x848] sm:$0xf]
        %v8296 = vld [vmem:[%s886 + $0x84c] sm:$0xff]
        %v8297 = vld [vmem:[%s886 + $0x854] sm:$0xf]
        %v8298 = vld [vmem:[%s886 + $0x858] sm:$0xff]
        %v8299 = vld [vmem:[%s886 + $0x860] sm:$0xf]
        %v8300 = vld [vmem:[%s886 + $0x864] sm:$0xff]
        %v8301 = vld [vmem:[%s886 + $0x86c] sm:$0xf]
        %v8302 = vld [vmem:[%s886 + $0x870] sm:$0xff]
        %v8303 = vld [vmem:[%s886 + $0x878] sm:$0xf]
        %v8304 = vld [vmem:[%s886 + $0x87c] sm:$0xff]
        %v8305 = vld [vmem:[%s886 + $0x884] sm:$0xf]
        %v8306 = vld [vmem:[%s886 + $0x888] sm:$0xff]
        %v8307 = vld [vmem:[%s886 + $0x890] sm:$0xf]
        %v8308 = vld [vmem:[%s886 + $0x894] sm:$0xff]
        %v8309 = vld [vmem:[%s886 + $0x89c] sm:$0xf]
        %v8310 = vld [vmem:[%s886 + $0x8a0] sm:$0xff]
        %v8311 = vld [vmem:[%s886 + $0x8a8] sm:$0xf]
        %v8312 = vld [vmem:[%s886 + $0x8ac] sm:$0xff]
        %v8313 = vld [vmem:[%s886 + $0x8b4] sm:$0xf]
        %v8314 = vld [vmem:[%s886 + $0x8b8] sm:$0xff]
        %v8315 = vld [vmem:[%s886 + $0x8c0] sm:$0xf]
        %v8316 = vld [vmem:[%s886 + $0x8c4] sm:$0xff]
        %v8317 = vld [vmem:[%s886 + $0x8cc] sm:$0xf]
        %v8318 = vld [vmem:[%s886 + $0x8d0] sm:$0xff]
        %v8319 = vld [vmem:[%s886 + $0x8d8] sm:$0xf]
        %v8320 = vld [vmem:[%s886 + $0x8dc] sm:$0xff]
        %v8321 = vld [vmem:[%s886 + $0x8e4] sm:$0xf]
        %v8322 = vld [vmem:[%s886 + $0x8e8] sm:$0xff]
        %v8323 = vld [vmem:[%s886 + $0x8f0] sm:$0xf]
        %v8324 = vld [vmem:[%s886 + $0x8f4] sm:$0xff]
        %v8325 = vld [vmem:[%s886 + $0x8fc] sm:$0xf]
        %v8326 = vld [vmem:[%s895] sm:$0x7]
        %v8328 = vlaneseq
        %v8329 = vshrl.u32 %v8328, 7
        %v8330 = vsub.s32 0, %v8329
        %v8331 = vrot.slane %v8326, %v8330
        %v8332 = vlaneseq
        %v8333 = vshrl.u32 %v8332, 7
        %v8334 = vsub.s32 1, %v8333
        %v8335 = vrot.slane %v8326, %v8334
        %v8336 = vlaneseq
        %v8337 = vshrl.u32 %v8336, 7
        %v8338 = vsub.s32 2, %v8337
        %v8339 = vrot.slane %v8326, %v8338
        %v8727 = vunpack.c.l.b16 %v7942
        %v8728 = vunpack.c.h.b16 %v7942
        %v8729 = vunpack.c.l.b16 %v7943
        %v8730 = vunpack.c.l.b16 %v7944
        %v8731 = vunpack.c.h.b16 %v7944
        %v8732 = vunpack.c.l.b16 %v7945
        %v8733 = vunpack.c.l.b16 %v7946
        %v8734 = vunpack.c.h.b16 %v7946
        %v8735 = vunpack.c.l.b16 %v7947
        %v8736 = vunpack.c.l.b16 %v7948
        %v8737 = vunpack.c.h.b16 %v7948
        %v8738 = vunpack.c.l.b16 %v7949
        %v8739 = vunpack.c.l.b16 %v7950
        %v8740 = vunpack.c.h.b16 %v7950
        %v8741 = vunpack.c.l.b16 %v7951
        %v8742 = vunpack.c.l.b16 %v7952
        %v8743 = vunpack.c.h.b16 %v7952
        %v8744 = vunpack.c.l.b16 %v7953
        %v8745 = vunpack.c.l.b16 %v7954
        %v8746 = vunpack.c.h.b16 %v7954
        %v8747 = vunpack.c.l.b16 %v7955
        %v8748 = vunpack.c.l.b16 %v7956
        %v8749 = vunpack.c.h.b16 %v7956
        %v8750 = vunpack.c.l.b16 %v7957
        %v8751 = vunpack.c.l.b16 %v7958
        %v8752 = vunpack.c.h.b16 %v7958
        %v8753 = vunpack.c.l.b16 %v7959
        %v8754 = vunpack.c.l.b16 %v7960
        %v8755 = vunpack.c.h.b16 %v7960
        %v8756 = vunpack.c.l.b16 %v7961
        %v8757 = vunpack.c.l.b16 %v7962
        %v8758 = vunpack.c.h.b16 %v7962
        %v8759 = vunpack.c.l.b16 %v7963
        %v8760 = vunpack.c.l.b16 %v7964
        %v8761 = vunpack.c.h.b16 %v7964
        %v8762 = vunpack.c.l.b16 %v7965
        %v8763 = vunpack.c.l.b16 %v7966
        %v8764 = vunpack.c.h.b16 %v7966
        %v8765 = vunpack.c.l.b16 %v7967
        %v8766 = vunpack.c.l.b16 %v7968
        %v8767 = vunpack.c.h.b16 %v7968
        %v8768 = vunpack.c.l.b16 %v7969
        %v8769 = vunpack.c.l.b16 %v7970
        %v8770 = vunpack.c.h.b16 %v7970
        %v8771 = vunpack.c.l.b16 %v7971
        %v8772 = vunpack.c.l.b16 %v7972
        %v8773 = vunpack.c.h.b16 %v7972
        %v8774 = vunpack.c.l.b16 %v7973
        %v8775 = vunpack.c.l.b16 %v7974
        %v8776 = vunpack.c.h.b16 %v7974
        %v8777 = vunpack.c.l.b16 %v7975
        %v8778 = vunpack.c.l.b16 %v7976
        %v8779 = vunpack.c.h.b16 %v7976
        %v8780 = vunpack.c.l.b16 %v7977
        %v8781 = vunpack.c.l.b16 %v7978
        %v8782 = vunpack.c.h.b16 %v7978
        %v8783 = vunpack.c.l.b16 %v7979
        %v8784 = vunpack.c.l.b16 %v7980
        %v8785 = vunpack.c.h.b16 %v7980
        %v8786 = vunpack.c.l.b16 %v7981
        %v8787 = vunpack.c.l.b16 %v7982
        %v8788 = vunpack.c.h.b16 %v7982
        %v8789 = vunpack.c.l.b16 %v7983
        %v8790 = vunpack.c.l.b16 %v7984
        %v8791 = vunpack.c.h.b16 %v7984
        %v8792 = vunpack.c.l.b16 %v7985
        %v8793 = vunpack.c.l.b16 %v7986
        %v8794 = vunpack.c.h.b16 %v7986
        %v8795 = vunpack.c.l.b16 %v7987
        %v8796 = vunpack.c.l.b16 %v7988
        %v8797 = vunpack.c.h.b16 %v7988
        %v8798 = vunpack.c.l.b16 %v7989
        %v8799 = vunpack.c.l.b16 %v7990
        %v8800 = vunpack.c.h.b16 %v7990
        %v8801 = vunpack.c.l.b16 %v7991
        %v8802 = vunpack.c.l.b16 %v7992
        %v8803 = vunpack.c.h.b16 %v7992
        %v8804 = vunpack.c.l.b16 %v7993
        %v8805 = vunpack.c.l.b16 %v7994
        %v8806 = vunpack.c.h.b16 %v7994
        %v8807 = vunpack.c.l.b16 %v7995
        %v8808 = vunpack.c.l.b16 %v7996
        %v8809 = vunpack.c.h.b16 %v7996
        %v8810 = vunpack.c.l.b16 %v7997
        %v8811 = vunpack.c.l.b16 %v7998
        %v8812 = vunpack.c.h.b16 %v7998
        %v8813 = vunpack.c.l.b16 %v7999
        %v8814 = vunpack.c.l.b16 %v8000
        %v8815 = vunpack.c.h.b16 %v8000
        %v8816 = vunpack.c.l.b16 %v8001
        %v8817 = vunpack.c.l.b16 %v8002
        %v8818 = vunpack.c.h.b16 %v8002
        %v8819 = vunpack.c.l.b16 %v8003
        %v8820 = vunpack.c.l.b16 %v8004
        %v8821 = vunpack.c.h.b16 %v8004
        %v8822 = vunpack.c.l.b16 %v8005
        %v8823 = vunpack.c.l.b16 %v8006
        %v8824 = vunpack.c.h.b16 %v8006
        %v8825 = vunpack.c.l.b16 %v8007
        %v8826 = vunpack.c.l.b16 %v8008
        %v8827 = vunpack.c.h.b16 %v8008
        %v8828 = vunpack.c.l.b16 %v8009
        %v8829 = vunpack.c.l.b16 %v8010
        %v8830 = vunpack.c.h.b16 %v8010
        %v8831 = vunpack.c.l.b16 %v8011
        %v8832 = vunpack.c.l.b16 %v8012
        %v8833 = vunpack.c.h.b16 %v8012
        %v8834 = vunpack.c.l.b16 %v8013
        %v8835 = vunpack.c.l.b16 %v8014
        %v8836 = vunpack.c.h.b16 %v8014
        %v8837 = vunpack.c.l.b16 %v8015
        %v8838 = vunpack.c.l.b16 %v8016
        %v8839 = vunpack.c.h.b16 %v8016
        %v8840 = vunpack.c.l.b16 %v8017
        %v8841 = vunpack.c.l.b16 %v8018
        %v8842 = vunpack.c.h.b16 %v8018
        %v8843 = vunpack.c.l.b16 %v8019
        %v8844 = vunpack.c.l.b16 %v8020
        %v8845 = vunpack.c.h.b16 %v8020
        %v8846 = vunpack.c.l.b16 %v8021
        %v8847 = vunpack.c.l.b16 %v8022
        %v8848 = vunpack.c.h.b16 %v8022
        %v8849 = vunpack.c.l.b16 %v8023
        %v8850 = vunpack.c.l.b16 %v8024
        %v8851 = vunpack.c.h.b16 %v8024
        %v8852 = vunpack.c.l.b16 %v8025
        %v8853 = vunpack.c.l.b16 %v8026
        %v8854 = vunpack.c.h.b16 %v8026
        %v8855 = vunpack.c.l.b16 %v8027
        %v8856 = vunpack.c.l.b16 %v8028
        %v8857 = vunpack.c.h.b16 %v8028
        %v8858 = vunpack.c.l.b16 %v8029
        %v8859 = vunpack.c.l.b16 %v8030
        %v8860 = vunpack.c.h.b16 %v8030
        %v8861 = vunpack.c.l.b16 %v8031
        %v8862 = vunpack.c.l.b16 %v8032
        %v8863 = vunpack.c.h.b16 %v8032
        %v8864 = vunpack.c.l.b16 %v8033
        %v8865 = vunpack.c.l.b16 %v8034
        %v8866 = vunpack.c.h.b16 %v8034
        %v8867 = vunpack.c.l.b16 %v8035
        %v8868 = vunpack.c.l.b16 %v8036
        %v8869 = vunpack.c.h.b16 %v8036
        %v8870 = vunpack.c.l.b16 %v8037
        %v8871 = vunpack.c.l.b16 %v8038
        %v8872 = vunpack.c.h.b16 %v8038
        %v8873 = vunpack.c.l.b16 %v8039
        %v8874 = vunpack.c.l.b16 %v8040
        %v8875 = vunpack.c.h.b16 %v8040
        %v8876 = vunpack.c.l.b16 %v8041
        %v8877 = vunpack.c.l.b16 %v8042
        %v8878 = vunpack.c.h.b16 %v8042
        %v8879 = vunpack.c.l.b16 %v8043
        %v8880 = vunpack.c.l.b16 %v8044
        %v8881 = vunpack.c.h.b16 %v8044
        %v8882 = vunpack.c.l.b16 %v8045
        %v8883 = vunpack.c.l.b16 %v8046
        %v8884 = vunpack.c.h.b16 %v8046
        %v8885 = vunpack.c.l.b16 %v8047
        %v8886 = vunpack.c.l.b16 %v8048
        %v8887 = vunpack.c.h.b16 %v8048
        %v8888 = vunpack.c.l.b16 %v8049
        %v8889 = vunpack.c.l.b16 %v8050
        %v8890 = vunpack.c.h.b16 %v8050
        %v8891 = vunpack.c.l.b16 %v8051
        %v8892 = vunpack.c.l.b16 %v8052
        %v8893 = vunpack.c.h.b16 %v8052
        %v8894 = vunpack.c.l.b16 %v8053
        %v8895 = vunpack.c.l.b16 %v8054
        %v8896 = vunpack.c.h.b16 %v8054
        %v8897 = vunpack.c.l.b16 %v8055
        %v8898 = vunpack.c.l.b16 %v8056
        %v8899 = vunpack.c.h.b16 %v8056
        %v8900 = vunpack.c.l.b16 %v8057
        %v8901 = vunpack.c.l.b16 %v8058
        %v8902 = vunpack.c.h.b16 %v8058
        %v8903 = vunpack.c.l.b16 %v8059
        %v8904 = vunpack.c.l.b16 %v8060
        %v8905 = vunpack.c.h.b16 %v8060
        %v8906 = vunpack.c.l.b16 %v8061
        %v8907 = vunpack.c.l.b16 %v8062
        %v8908 = vunpack.c.h.b16 %v8062
        %v8909 = vunpack.c.l.b16 %v8063
        %v8910 = vunpack.c.l.b16 %v8064
        %v8911 = vunpack.c.h.b16 %v8064
        %v8912 = vunpack.c.l.b16 %v8065
        %v8913 = vunpack.c.l.b16 %v8066
        %v8914 = vunpack.c.h.b16 %v8066
        %v8915 = vunpack.c.l.b16 %v8067
        %v8916 = vunpack.c.l.b16 %v8068
        %v8917 = vunpack.c.h.b16 %v8068
        %v8918 = vunpack.c.l.b16 %v8069
        %v8919 = vunpack.c.l.b16 %v8070
        %v8920 = vunpack.c.h.b16 %v8070
        %v8921 = vunpack.c.l.b16 %v8071
        %v8922 = vunpack.c.l.b16 %v8072
        %v8923 = vunpack.c.h.b16 %v8072
        %v8924 = vunpack.c.l.b16 %v8073
        %v8925 = vunpack.c.l.b16 %v8074
        %v8926 = vunpack.c.h.b16 %v8074
        %v8927 = vunpack.c.l.b16 %v8075
        %v8928 = vunpack.c.l.b16 %v8076
        %v8929 = vunpack.c.h.b16 %v8076
        %v8930 = vunpack.c.l.b16 %v8077
        %v8931 = vunpack.c.l.b16 %v8078
        %v8932 = vunpack.c.h.b16 %v8078
        %v8933 = vunpack.c.l.b16 %v8079
        %v8934 = vunpack.c.l.b16 %v8080
        %v8935 = vunpack.c.h.b16 %v8080
        %v8936 = vunpack.c.l.b16 %v8081
        %v8937 = vunpack.c.l.b16 %v8082
        %v8938 = vunpack.c.h.b16 %v8082
        %v8939 = vunpack.c.l.b16 %v8083
        %v8940 = vunpack.c.l.b16 %v8084
        %v8941 = vunpack.c.h.b16 %v8084
        %v8942 = vunpack.c.l.b16 %v8085
        %v8943 = vunpack.c.l.b16 %v8086
        %v8944 = vunpack.c.h.b16 %v8086
        %v8945 = vunpack.c.l.b16 %v8087
        %v8946 = vunpack.c.l.b16 %v8088
        %v8947 = vunpack.c.h.b16 %v8088
        %v8948 = vunpack.c.l.b16 %v8089
        %v8949 = vunpack.c.l.b16 %v8090
        %v8950 = vunpack.c.h.b16 %v8090
        %v8951 = vunpack.c.l.b16 %v8091
        %v8952 = vunpack.c.l.b16 %v8092
        %v8953 = vunpack.c.h.b16 %v8092
        %v8954 = vunpack.c.l.b16 %v8093
        %v8955 = vunpack.c.l.b16 %v8094
        %v8956 = vunpack.c.h.b16 %v8094
        %v8957 = vunpack.c.l.b16 %v8095
        %v8958 = vunpack.c.l.b16 %v8096
        %v8959 = vunpack.c.h.b16 %v8096
        %v8960 = vunpack.c.l.b16 %v8097
        %v8961 = vunpack.c.l.b16 %v8098
        %v8962 = vunpack.c.h.b16 %v8098
        %v8963 = vunpack.c.l.b16 %v8099
        %v8964 = vunpack.c.l.b16 %v8100
        %v8965 = vunpack.c.h.b16 %v8100
        %v8966 = vunpack.c.l.b16 %v8101
        %v8967 = vunpack.c.l.b16 %v8102
        %v8968 = vunpack.c.h.b16 %v8102
        %v8969 = vunpack.c.l.b16 %v8103
        %v8970 = vunpack.c.l.b16 %v8104
        %v8971 = vunpack.c.h.b16 %v8104
        %v8972 = vunpack.c.l.b16 %v8105
        %v8973 = vunpack.c.l.b16 %v8106
        %v8974 = vunpack.c.h.b16 %v8106
        %v8975 = vunpack.c.l.b16 %v8107
        %v8976 = vunpack.c.l.b16 %v8108
        %v8977 = vunpack.c.h.b16 %v8108
        %v8978 = vunpack.c.l.b16 %v8109
        %v8979 = vunpack.c.l.b16 %v8110
        %v8980 = vunpack.c.h.b16 %v8110
        %v8981 = vunpack.c.l.b16 %v8111
        %v8982 = vunpack.c.l.b16 %v8112
        %v8983 = vunpack.c.h.b16 %v8112
        %v8984 = vunpack.c.l.b16 %v8113
        %v8985 = vunpack.c.l.b16 %v8114
        %v8986 = vunpack.c.h.b16 %v8114
        %v8987 = vunpack.c.l.b16 %v8115
        %v8988 = vunpack.c.l.b16 %v8116
        %v8989 = vunpack.c.h.b16 %v8116
        %v8990 = vunpack.c.l.b16 %v8117
        %v8991 = vunpack.c.l.b16 %v8118
        %v8992 = vunpack.c.h.b16 %v8118
        %v8993 = vunpack.c.l.b16 %v8119
        %v8994 = vunpack.c.l.b16 %v8120
        %v8995 = vunpack.c.h.b16 %v8120
        %v8996 = vunpack.c.l.b16 %v8121
        %v8997 = vunpack.c.l.b16 %v8122
        %v8998 = vunpack.c.h.b16 %v8122
        %v8999 = vunpack.c.l.b16 %v8123
        %v9000 = vunpack.c.l.b16 %v8124
        %v9001 = vunpack.c.h.b16 %v8124
        %v9002 = vunpack.c.l.b16 %v8125
        %v9003 = vunpack.c.l.b16 %v8126
        %v9004 = vunpack.c.h.b16 %v8126
        %v9005 = vunpack.c.l.b16 %v8127
        %v9006 = vunpack.c.l.b16 %v8128
        %v9007 = vunpack.c.h.b16 %v8128
        %v9008 = vunpack.c.l.b16 %v8129
        %v9009 = vunpack.c.l.b16 %v8130
        %v9010 = vunpack.c.h.b16 %v8130
        %v9011 = vunpack.c.l.b16 %v8131
        %v9012 = vunpack.c.l.b16 %v8132
        %v9013 = vunpack.c.h.b16 %v8132
        %v9014 = vunpack.c.l.b16 %v8133
        %v9015 = vunpack.c.l.b16 %v8134
        %v9016 = vunpack.c.h.b16 %v8134
        %v9017 = vunpack.c.l.b16 %v8135
        %v9018 = vunpack.c.l.b16 %v8136
        %v9019 = vunpack.c.h.b16 %v8136
        %v9020 = vunpack.c.l.b16 %v8137
        %v9021 = vunpack.c.l.b16 %v8138
        %v9022 = vunpack.c.h.b16 %v8138
        %v9023 = vunpack.c.l.b16 %v8139
        %v9024 = vunpack.c.l.b16 %v8140
        %v9025 = vunpack.c.h.b16 %v8140
        %v9026 = vunpack.c.l.b16 %v8141
        %v9027 = vunpack.c.l.b16 %v8142
        %v9028 = vunpack.c.h.b16 %v8142
        %v9029 = vunpack.c.l.b16 %v8143
        %v9030 = vunpack.c.l.b16 %v8144
        %v9031 = vunpack.c.h.b16 %v8144
        %v9032 = vunpack.c.l.b16 %v8145
        %v9033 = vunpack.c.l.b16 %v8146
        %v9034 = vunpack.c.h.b16 %v8146
        %v9035 = vunpack.c.l.b16 %v8147
        %v9036 = vunpack.c.l.b16 %v8148
        %v9037 = vunpack.c.h.b16 %v8148
        %v9038 = vunpack.c.l.b16 %v8149
        %v9039 = vunpack.c.l.b16 %v8150
        %v9040 = vunpack.c.h.b16 %v8150
        %v9041 = vunpack.c.l.b16 %v8151
        %v9042 = vunpack.c.l.b16 %v8152
        %v9043 = vunpack.c.h.b16 %v8152
        %v9044 = vunpack.c.l.b16 %v8153
        %v9045 = vunpack.c.l.b16 %v8154
        %v9046 = vunpack.c.h.b16 %v8154
        %v9047 = vunpack.c.l.b16 %v8155
        %v9048 = vunpack.c.l.b16 %v8156
        %v9049 = vunpack.c.h.b16 %v8156
        %v9050 = vunpack.c.l.b16 %v8157
        %v9051 = vunpack.c.l.b16 %v8158
        %v9052 = vunpack.c.h.b16 %v8158
        %v9053 = vunpack.c.l.b16 %v8159
        %v9054 = vunpack.c.l.b16 %v8160
        %v9055 = vunpack.c.h.b16 %v8160
        %v9056 = vunpack.c.l.b16 %v8161
        %v9057 = vunpack.c.l.b16 %v8162
        %v9058 = vunpack.c.h.b16 %v8162
        %v9059 = vunpack.c.l.b16 %v8163
        %v9060 = vunpack.c.l.b16 %v8164
        %v9061 = vunpack.c.h.b16 %v8164
        %v9062 = vunpack.c.l.b16 %v8165
        %v9063 = vunpack.c.l.b16 %v8166
        %v9064 = vunpack.c.h.b16 %v8166
        %v9065 = vunpack.c.l.b16 %v8167
        %v9066 = vunpack.c.l.b16 %v8168
        %v9067 = vunpack.c.h.b16 %v8168
        %v9068 = vunpack.c.l.b16 %v8169
        %v9069 = vunpack.c.l.b16 %v8170
        %v9070 = vunpack.c.h.b16 %v8170
        %v9071 = vunpack.c.l.b16 %v8171
        %v9072 = vunpack.c.l.b16 %v8172
        %v9073 = vunpack.c.h.b16 %v8172
        %v9074 = vunpack.c.l.b16 %v8173
        %v9075 = vunpack.c.l.b16 %v8174
        %v9076 = vunpack.c.h.b16 %v8174
        %v9077 = vunpack.c.l.b16 %v8175
        %v9078 = vunpack.c.l.b16 %v8176
        %v9079 = vunpack.c.h.b16 %v8176
        %v9080 = vunpack.c.l.b16 %v8177
        %v9081 = vunpack.c.l.b16 %v8178
        %v9082 = vunpack.c.h.b16 %v8178
        %v9083 = vunpack.c.l.b16 %v8179
        %v9084 = vunpack.c.l.b16 %v8180
        %v9085 = vunpack.c.h.b16 %v8180
        %v9086 = vunpack.c.l.b16 %v8181
        %v9087 = vunpack.c.l.b16 %v8182
        %v9088 = vunpack.c.h.b16 %v8182
        %v9089 = vunpack.c.l.b16 %v8183
        %v9090 = vunpack.c.l.b16 %v8184
        %v9091 = vunpack.c.h.b16 %v8184
        %v9092 = vunpack.c.l.b16 %v8185
        %v9093 = vunpack.c.l.b16 %v8186
        %v9094 = vunpack.c.h.b16 %v8186
        %v9095 = vunpack.c.l.b16 %v8187
        %v9096 = vunpack.c.l.b16 %v8188
        %v9097 = vunpack.c.h.b16 %v8188
        %v9098 = vunpack.c.l.b16 %v8189
        %v9099 = vunpack.c.l.b16 %v8190
        %v9100 = vunpack.c.h.b16 %v8190
        %v9101 = vunpack.c.l.b16 %v8191
        %v9102 = vunpack.c.l.b16 %v8192
        %v9103 = vunpack.c.h.b16 %v8192
        %v9104 = vunpack.c.l.b16 %v8193
        %v9105 = vunpack.c.l.b16 %v8194
        %v9106 = vunpack.c.h.b16 %v8194
        %v9107 = vunpack.c.l.b16 %v8195
        %v9108 = vunpack.c.l.b16 %v8196
        %v9109 = vunpack.c.h.b16 %v8196
        %v9110 = vunpack.c.l.b16 %v8197
        %v9111 = vunpack.c.l.b16 %v8198
        %v9112 = vunpack.c.h.b16 %v8198
        %v9113 = vunpack.c.l.b16 %v8199
        %v9114 = vunpack.c.l.b16 %v8200
        %v9115 = vunpack.c.h.b16 %v8200
        %v9116 = vunpack.c.l.b16 %v8201
        %v9117 = vunpack.c.l.b16 %v8202
        %v9118 = vunpack.c.h.b16 %v8202
        %v9119 = vunpack.c.l.b16 %v8203
        %v9120 = vunpack.c.l.b16 %v8204
        %v9121 = vunpack.c.h.b16 %v8204
        %v9122 = vunpack.c.l.b16 %v8205
        %v9123 = vunpack.c.l.b16 %v8206
        %v9124 = vunpack.c.h.b16 %v8206
        %v9125 = vunpack.c.l.b16 %v8207
        %v9126 = vunpack.c.l.b16 %v8208
        %v9127 = vunpack.c.h.b16 %v8208
        %v9128 = vunpack.c.l.b16 %v8209
        %v9129 = vunpack.c.l.b16 %v8210
        %v9130 = vunpack.c.h.b16 %v8210
        %v9131 = vunpack.c.l.b16 %v8211
        %v9132 = vunpack.c.l.b16 %v8212
        %v9133 = vunpack.c.h.b16 %v8212
        %v9134 = vunpack.c.l.b16 %v8213
        %v9135 = vunpack.c.l.b16 %v8214
        %v9136 = vunpack.c.h.b16 %v8214
        %v9137 = vunpack.c.l.b16 %v8215
        %v9138 = vunpack.c.l.b16 %v8216
        %v9139 = vunpack.c.h.b16 %v8216
        %v9140 = vunpack.c.l.b16 %v8217
        %v9141 = vunpack.c.l.b16 %v8218
        %v9142 = vunpack.c.h.b16 %v8218
        %v9143 = vunpack.c.l.b16 %v8219
        %v9144 = vunpack.c.l.b16 %v8220
        %v9145 = vunpack.c.h.b16 %v8220
        %v9146 = vunpack.c.l.b16 %v8221
        %v9147 = vunpack.c.l.b16 %v8222
        %v9148 = vunpack.c.h.b16 %v8222
        %v9149 = vunpack.c.l.b16 %v8223
        %v9150 = vunpack.c.l.b16 %v8224
        %v9151 = vunpack.c.h.b16 %v8224
        %v9152 = vunpack.c.l.b16 %v8225
        %v9153 = vunpack.c.l.b16 %v8226
        %v9154 = vunpack.c.h.b16 %v8226
        %v9155 = vunpack.c.l.b16 %v8227
        %v9156 = vunpack.c.l.b16 %v8228
        %v9157 = vunpack.c.h.b16 %v8228
        %v9158 = vunpack.c.l.b16 %v8229
        %v9159 = vunpack.c.l.b16 %v8230
        %v9160 = vunpack.c.h.b16 %v8230
        %v9161 = vunpack.c.l.b16 %v8231
        %v9162 = vunpack.c.l.b16 %v8232
        %v9163 = vunpack.c.h.b16 %v8232
        %v9164 = vunpack.c.l.b16 %v8233
        %v9165 = vunpack.c.l.b16 %v8234
        %v9166 = vunpack.c.h.b16 %v8234
        %v9167 = vunpack.c.l.b16 %v8235
        %v9168 = vunpack.c.l.b16 %v8236
        %v9169 = vunpack.c.h.b16 %v8236
        %v9170 = vunpack.c.l.b16 %v8237
        %v9171 = vunpack.c.l.b16 %v8238
        %v9172 = vunpack.c.h.b16 %v8238
        %v9173 = vunpack.c.l.b16 %v8239
        %v9174 = vunpack.c.l.b16 %v8240
        %v9175 = vunpack.c.h.b16 %v8240
        %v9176 = vunpack.c.l.b16 %v8241
        %v9177 = vunpack.c.l.b16 %v8242
        %v9178 = vunpack.c.h.b16 %v8242
        %v9179 = vunpack.c.l.b16 %v8243
        %v9180 = vunpack.c.l.b16 %v8244
        %v9181 = vunpack.c.h.b16 %v8244
        %v9182 = vunpack.c.l.b16 %v8245
        %v9183 = vunpack.c.l.b16 %v8246
        %v9184 = vunpack.c.h.b16 %v8246
        %v9185 = vunpack.c.l.b16 %v8247
        %v9186 = vunpack.c.l.b16 %v8248
        %v9187 = vunpack.c.h.b16 %v8248
        %v9188 = vunpack.c.l.b16 %v8249
        %v9189 = vunpack.c.l.b16 %v8250
        %v9190 = vunpack.c.h.b16 %v8250
        %v9191 = vunpack.c.l.b16 %v8251
        %v9192 = vunpack.c.l.b16 %v8252
        %v9193 = vunpack.c.h.b16 %v8252
        %v9194 = vunpack.c.l.b16 %v8253
        %v9195 = vunpack.c.l.b16 %v8254
        %v9196 = vunpack.c.h.b16 %v8254
        %v9197 = vunpack.c.l.b16 %v8255
        %v9198 = vunpack.c.l.b16 %v8256
        %v9199 = vunpack.c.h.b16 %v8256
        %v9200 = vunpack.c.l.b16 %v8257
        %v9201 = vunpack.c.l.b16 %v8258
        %v9202 = vunpack.c.h.b16 %v8258
        %v9203 = vunpack.c.l.b16 %v8259
        %v9204 = vunpack.c.l.b16 %v8260
        %v9205 = vunpack.c.h.b16 %v8260
        %v9206 = vunpack.c.l.b16 %v8261
        %v9207 = vunpack.c.l.b16 %v8262
        %v9208 = vunpack.c.h.b16 %v8262
        %v9209 = vunpack.c.l.b16 %v8263
        %v9210 = vunpack.c.l.b16 %v8264
        %v9211 = vunpack.c.h.b16 %v8264
        %v9212 = vunpack.c.l.b16 %v8265
        %v9213 = vunpack.c.l.b16 %v8266
        %v9214 = vunpack.c.h.b16 %v8266
        %v9215 = vunpack.c.l.b16 %v8267
        %v9216 = vunpack.c.l.b16 %v8268
        %v9217 = vunpack.c.h.b16 %v8268
        %v9218 = vunpack.c.l.b16 %v8269
        %v9219 = vunpack.c.l.b16 %v8270
        %v9220 = vunpack.c.h.b16 %v8270
        %v9221 = vunpack.c.l.b16 %v8271
        %v9222 = vunpack.c.l.b16 %v8272
        %v9223 = vunpack.c.h.b16 %v8272
        %v9224 = vunpack.c.l.b16 %v8273
        %v9225 = vunpack.c.l.b16 %v8274
        %v9226 = vunpack.c.h.b16 %v8274
        %v9227 = vunpack.c.l.b16 %v8275
        %v9228 = vunpack.c.l.b16 %v8276
        %v9229 = vunpack.c.h.b16 %v8276
        %v9230 = vunpack.c.l.b16 %v8277
        %v9231 = vunpack.c.l.b16 %v8278
        %v9232 = vunpack.c.h.b16 %v8278
        %v9233 = vunpack.c.l.b16 %v8279
        %v9234 = vunpack.c.l.b16 %v8280
        %v9235 = vunpack.c.h.b16 %v8280
        %v9236 = vunpack.c.l.b16 %v8281
        %v9237 = vunpack.c.l.b16 %v8282
        %v9238 = vunpack.c.h.b16 %v8282
        %v9239 = vunpack.c.l.b16 %v8283
        %v9240 = vunpack.c.l.b16 %v8284
        %v9241 = vunpack.c.h.b16 %v8284
        %v9242 = vunpack.c.l.b16 %v8285
        %v9243 = vunpack.c.l.b16 %v8286
        %v9244 = vunpack.c.h.b16 %v8286
        %v9245 = vunpack.c.l.b16 %v8287
        %v9246 = vunpack.c.l.b16 %v8288
        %v9247 = vunpack.c.h.b16 %v8288
        %v9248 = vunpack.c.l.b16 %v8289
        %v9249 = vunpack.c.l.b16 %v8290
        %v9250 = vunpack.c.h.b16 %v8290
        %v9251 = vunpack.c.l.b16 %v8291
        %v9252 = vunpack.c.l.b16 %v8292
        %v9253 = vunpack.c.h.b16 %v8292
        %v9254 = vunpack.c.l.b16 %v8293
        %v9255 = vunpack.c.l.b16 %v8294
        %v9256 = vunpack.c.h.b16 %v8294
        %v9257 = vunpack.c.l.b16 %v8295
        %v9258 = vunpack.c.l.b16 %v8296
        %v9259 = vunpack.c.h.b16 %v8296
        %v9260 = vunpack.c.l.b16 %v8297
        %v9261 = vunpack.c.l.b16 %v8298
        %v9262 = vunpack.c.h.b16 %v8298
        %v9263 = vunpack.c.l.b16 %v8299
        %v9264 = vunpack.c.l.b16 %v8300
        %v9265 = vunpack.c.h.b16 %v8300
        %v9266 = vunpack.c.l.b16 %v8301
        %v9267 = vunpack.c.l.b16 %v8302
        %v9268 = vunpack.c.h.b16 %v8302
        %v9269 = vunpack.c.l.b16 %v8303
        %v9270 = vunpack.c.l.b16 %v8304
        %v9271 = vunpack.c.h.b16 %v8304
        %v9272 = vunpack.c.l.b16 %v8305
        %v9273 = vunpack.c.l.b16 %v8306
        %v9274 = vunpack.c.h.b16 %v8306
        %v9275 = vunpack.c.l.b16 %v8307
        %v9276 = vunpack.c.l.b16 %v8308
        %v9277 = vunpack.c.h.b16 %v8308
        %v9278 = vunpack.c.l.b16 %v8309
        %v9279 = vunpack.c.l.b16 %v8310
        %v9280 = vunpack.c.h.b16 %v8310
        %v9281 = vunpack.c.l.b16 %v8311
        %v9282 = vunpack.c.l.b16 %v8312
        %v9283 = vunpack.c.h.b16 %v8312
        %v9284 = vunpack.c.l.b16 %v8313
        %v9285 = vunpack.c.l.b16 %v8314
        %v9286 = vunpack.c.h.b16 %v8314
        %v9287 = vunpack.c.l.b16 %v8315
        %v9288 = vunpack.c.l.b16 %v8316
        %v9289 = vunpack.c.h.b16 %v8316
        %v9290 = vunpack.c.l.b16 %v8317
        %v9291 = vunpack.c.l.b16 %v8318
        %v9292 = vunpack.c.h.b16 %v8318
        %v9293 = vunpack.c.l.b16 %v8319
        %v9294 = vunpack.c.l.b16 %v8320
        %v9295 = vunpack.c.h.b16 %v8320
        %v9296 = vunpack.c.l.b16 %v8321
        %v9297 = vunpack.c.l.b16 %v8322
        %v9298 = vunpack.c.h.b16 %v8322
        %v9299 = vunpack.c.l.b16 %v8323
        %v9300 = vunpack.c.l.b16 %v8324
        %v9301 = vunpack.c.h.b16 %v8324
        %v9302 = vunpack.c.l.b16 %v8325
        %v9303 = vpack.c.b16 %v8730, %v8727
        %v9304 = vpack.c.b16 %v8731, %v8728
        %v9305 = vpack.c.b16 %v8732, %v8729
        %v9306 = vpack.c.b16 %v8736, %v8733
        %v9307 = vpack.c.b16 %v8737, %v8734
        %v9308 = vpack.c.b16 %v8738, %v8735
        %v9309 = vpack.c.b16 %v8742, %v8739
        %v9310 = vpack.c.b16 %v8743, %v8740
        %v9311 = vpack.c.b16 %v8744, %v8741
        %v9312 = vpack.c.b16 %v8748, %v8745
        %v9313 = vpack.c.b16 %v8749, %v8746
        %v9314 = vpack.c.b16 %v8750, %v8747
        %v9315 = vpack.c.b16 %v8754, %v8751
        %v9316 = vpack.c.b16 %v8755, %v8752
        %v9317 = vpack.c.b16 %v8756, %v8753
        %v9318 = vpack.c.b16 %v8760, %v8757
        %v9319 = vpack.c.b16 %v8761, %v8758
        %v9320 = vpack.c.b16 %v8762, %v8759
        %v9321 = vpack.c.b16 %v8766, %v8763
        %v9322 = vpack.c.b16 %v8767, %v8764
        %v9323 = vpack.c.b16 %v8768, %v8765
        %v9324 = vpack.c.b16 %v8772, %v8769
        %v9325 = vpack.c.b16 %v8773, %v8770
        %v9326 = vpack.c.b16 %v8774, %v8771
        %v9327 = vpack.c.b16 %v8778, %v8775
        %v9328 = vpack.c.b16 %v8779, %v8776
        %v9329 = vpack.c.b16 %v8780, %v8777
        %v9330 = vpack.c.b16 %v8784, %v8781
        %v9331 = vpack.c.b16 %v8785, %v8782
        %v9332 = vpack.c.b16 %v8786, %v8783
        %v9333 = vpack.c.b16 %v8790, %v8787
        %v9334 = vpack.c.b16 %v8791, %v8788
        %v9335 = vpack.c.b16 %v8792, %v8789
        %v9336 = vpack.c.b16 %v8796, %v8793
        %v9337 = vpack.c.b16 %v8797, %v8794
        %v9338 = vpack.c.b16 %v8798, %v8795
        %v9339 = vpack.c.b16 %v8802, %v8799
        %v9340 = vpack.c.b16 %v8803, %v8800
        %v9341 = vpack.c.b16 %v8804, %v8801
        %v9342 = vpack.c.b16 %v8808, %v8805
        %v9343 = vpack.c.b16 %v8809, %v8806
        %v9344 = vpack.c.b16 %v8810, %v8807
        %v9345 = vpack.c.b16 %v8814, %v8811
        %v9346 = vpack.c.b16 %v8815, %v8812
        %v9347 = vpack.c.b16 %v8816, %v8813
        %v9348 = vpack.c.b16 %v8820, %v8817
        %v9349 = vpack.c.b16 %v8821, %v8818
        %v9350 = vpack.c.b16 %v8822, %v8819
        %v9351 = vpack.c.b16 %v8826, %v8823
        %v9352 = vpack.c.b16 %v8827, %v8824
        %v9353 = vpack.c.b16 %v8828, %v8825
        %v9354 = vpack.c.b16 %v8832, %v8829
        %v9355 = vpack.c.b16 %v8833, %v8830
        %v9356 = vpack.c.b16 %v8834, %v8831
        %v9357 = vpack.c.b16 %v8838, %v8835
        %v9358 = vpack.c.b16 %v8839, %v8836
        %v9359 = vpack.c.b16 %v8840, %v8837
        %v9360 = vpack.c.b16 %v8844, %v8841
        %v9361 = vpack.c.b16 %v8845, %v8842
        %v9362 = vpack.c.b16 %v8846, %v8843
        %v9363 = vpack.c.b16 %v8850, %v8847
        %v9364 = vpack.c.b16 %v8851, %v8848
        %v9365 = vpack.c.b16 %v8852, %v8849
        %v9366 = vpack.c.b16 %v8856, %v8853
        %v9367 = vpack.c.b16 %v8857, %v8854
        %v9368 = vpack.c.b16 %v8858, %v8855
        %v9369 = vpack.c.b16 %v8862, %v8859
        %v9370 = vpack.c.b16 %v8863, %v8860
        %v9371 = vpack.c.b16 %v8864, %v8861
        %v9372 = vpack.c.b16 %v8868, %v8865
        %v9373 = vpack.c.b16 %v8869, %v8866
        %v9374 = vpack.c.b16 %v8870, %v8867
        %v9375 = vpack.c.b16 %v8874, %v8871
        %v9376 = vpack.c.b16 %v8875, %v8872
        %v9377 = vpack.c.b16 %v8876, %v8873
        %v9378 = vpack.c.b16 %v8880, %v8877
        %v9379 = vpack.c.b16 %v8881, %v8878
        %v9380 = vpack.c.b16 %v8882, %v8879
        %v9381 = vpack.c.b16 %v8886, %v8883
        %v9382 = vpack.c.b16 %v8887, %v8884
        %v9383 = vpack.c.b16 %v8888, %v8885
        %v9384 = vpack.c.b16 %v8892, %v8889
        %v9385 = vpack.c.b16 %v8893, %v8890
        %v9386 = vpack.c.b16 %v8894, %v8891
        %v9387 = vpack.c.b16 %v8898, %v8895
        %v9388 = vpack.c.b16 %v8899, %v8896
        %v9389 = vpack.c.b16 %v8900, %v8897
        %v9390 = vpack.c.b16 %v8904, %v8901
        %v9391 = vpack.c.b16 %v8905, %v8902
        %v9392 = vpack.c.b16 %v8906, %v8903
        %v9393 = vpack.c.b16 %v8910, %v8907
        %v9394 = vpack.c.b16 %v8911, %v8908
        %v9395 = vpack.c.b16 %v8912, %v8909
        %v9396 = vpack.c.b16 %v8916, %v8913
        %v9397 = vpack.c.b16 %v8917, %v8914
        %v9398 = vpack.c.b16 %v8918, %v8915
        %v9399 = vpack.c.b16 %v8922, %v8919
        %v9400 = vpack.c.b16 %v8923, %v8920
        %v9401 = vpack.c.b16 %v8924, %v8921
        %v9402 = vpack.c.b16 %v8928, %v8925
        %v9403 = vpack.c.b16 %v8929, %v8926
        %v9404 = vpack.c.b16 %v8930, %v8927
        %v9405 = vpack.c.b16 %v8934, %v8931
        %v9406 = vpack.c.b16 %v8935, %v8932
        %v9407 = vpack.c.b16 %v8936, %v8933
        %v9408 = vpack.c.b16 %v8940, %v8937
        %v9409 = vpack.c.b16 %v8941, %v8938
        %v9410 = vpack.c.b16 %v8942, %v8939
        %v9411 = vpack.c.b16 %v8946, %v8943
        %v9412 = vpack.c.b16 %v8947, %v8944
        %v9413 = vpack.c.b16 %v8948, %v8945
        %v9414 = vpack.c.b16 %v8952, %v8949
        %v9415 = vpack.c.b16 %v8953, %v8950
        %v9416 = vpack.c.b16 %v8954, %v8951
        %v9417 = vpack.c.b16 %v8958, %v8955
        %v9418 = vpack.c.b16 %v8959, %v8956
        %v9419 = vpack.c.b16 %v8960, %v8957
        %v9420 = vpack.c.b16 %v8964, %v8961
        %v9421 = vpack.c.b16 %v8965, %v8962
        %v9422 = vpack.c.b16 %v8966, %v8963
        %v9423 = vpack.c.b16 %v8970, %v8967
        %v9424 = vpack.c.b16 %v8971, %v8968
        %v9425 = vpack.c.b16 %v8972, %v8969
        %v9426 = vpack.c.b16 %v8976, %v8973
        %v9427 = vpack.c.b16 %v8977, %v8974
        %v9428 = vpack.c.b16 %v8978, %v8975
        %v9429 = vpack.c.b16 %v8982, %v8979
        %v9430 = vpack.c.b16 %v8983, %v8980
        %v9431 = vpack.c.b16 %v8984, %v8981
        %v9432 = vpack.c.b16 %v8988, %v8985
        %v9433 = vpack.c.b16 %v8989, %v8986
        %v9434 = vpack.c.b16 %v8990, %v8987
        %v9435 = vpack.c.b16 %v8994, %v8991
        %v9436 = vpack.c.b16 %v8995, %v8992
        %v9437 = vpack.c.b16 %v8996, %v8993
        %v9438 = vpack.c.b16 %v9000, %v8997
        %v9439 = vpack.c.b16 %v9001, %v8998
        %v9440 = vpack.c.b16 %v9002, %v8999
        %v9441 = vpack.c.b16 %v9006, %v9003
        %v9442 = vpack.c.b16 %v9007, %v9004
        %v9443 = vpack.c.b16 %v9008, %v9005
        %v9444 = vpack.c.b16 %v9012, %v9009
        %v9445 = vpack.c.b16 %v9013, %v9010
        %v9446 = vpack.c.b16 %v9014, %v9011
        %v9447 = vpack.c.b16 %v9018, %v9015
        %v9448 = vpack.c.b16 %v9019, %v9016
        %v9449 = vpack.c.b16 %v9020, %v9017
        %v9450 = vpack.c.b16 %v9024, %v9021
        %v9451 = vpack.c.b16 %v9025, %v9022
        %v9452 = vpack.c.b16 %v9026, %v9023
        %v9453 = vpack.c.b16 %v9030, %v9027
        %v9454 = vpack.c.b16 %v9031, %v9028
        %v9455 = vpack.c.b16 %v9032, %v9029
        %v9456 = vpack.c.b16 %v9036, %v9033
        %v9457 = vpack.c.b16 %v9037, %v9034
        %v9458 = vpack.c.b16 %v9038, %v9035
        %v9459 = vpack.c.b16 %v9042, %v9039
        %v9460 = vpack.c.b16 %v9043, %v9040
        %v9461 = vpack.c.b16 %v9044, %v9041
        %v9462 = vpack.c.b16 %v9048, %v9045
        %v9463 = vpack.c.b16 %v9049, %v9046
        %v9464 = vpack.c.b16 %v9050, %v9047
        %v9465 = vpack.c.b16 %v9054, %v9051
        %v9466 = vpack.c.b16 %v9055, %v9052
        %v9467 = vpack.c.b16 %v9056, %v9053
        %v9468 = vpack.c.b16 %v9060, %v9057
        %v9469 = vpack.c.b16 %v9061, %v9058
        %v9470 = vpack.c.b16 %v9062, %v9059
        %v9471 = vpack.c.b16 %v9066, %v9063
        %v9472 = vpack.c.b16 %v9067, %v9064
        %v9473 = vpack.c.b16 %v9068, %v9065
        %v9474 = vpack.c.b16 %v9072, %v9069
        %v9475 = vpack.c.b16 %v9073, %v9070
        %v9476 = vpack.c.b16 %v9074, %v9071
        %v9477 = vpack.c.b16 %v9078, %v9075
        %v9478 = vpack.c.b16 %v9079, %v9076
        %v9479 = vpack.c.b16 %v9080, %v9077
        %v9480 = vpack.c.b16 %v9084, %v9081
        %v9481 = vpack.c.b16 %v9085, %v9082
        %v9482 = vpack.c.b16 %v9086, %v9083
        %v9483 = vpack.c.b16 %v9090, %v9087
        %v9484 = vpack.c.b16 %v9091, %v9088
        %v9485 = vpack.c.b16 %v9092, %v9089
        %v9486 = vpack.c.b16 %v9096, %v9093
        %v9487 = vpack.c.b16 %v9097, %v9094
        %v9488 = vpack.c.b16 %v9098, %v9095
        %v9489 = vpack.c.b16 %v9102, %v9099
        %v9490 = vpack.c.b16 %v9103, %v9100
        %v9491 = vpack.c.b16 %v9104, %v9101
        %v9492 = vpack.c.b16 %v9108, %v9105
        %v9493 = vpack.c.b16 %v9109, %v9106
        %v9494 = vpack.c.b16 %v9110, %v9107
        %v9495 = vpack.c.b16 %v9114, %v9111
        %v9496 = vpack.c.b16 %v9115, %v9112
        %v9497 = vpack.c.b16 %v9116, %v9113
        %v9498 = vpack.c.b16 %v9120, %v9117
        %v9499 = vpack.c.b16 %v9121, %v9118
        %v9500 = vpack.c.b16 %v9122, %v9119
        %v9501 = vpack.c.b16 %v9126, %v9123
        %v9502 = vpack.c.b16 %v9127, %v9124
        %v9503 = vpack.c.b16 %v9128, %v9125
        %v9504 = vpack.c.b16 %v9132, %v9129
        %v9505 = vpack.c.b16 %v9133, %v9130
        %v9506 = vpack.c.b16 %v9134, %v9131
        %v9507 = vpack.c.b16 %v9138, %v9135
        %v9508 = vpack.c.b16 %v9139, %v9136
        %v9509 = vpack.c.b16 %v9140, %v9137
        %v9510 = vpack.c.b16 %v9144, %v9141
        %v9511 = vpack.c.b16 %v9145, %v9142
        %v9512 = vpack.c.b16 %v9146, %v9143
        %v9513 = vpack.c.b16 %v9150, %v9147
        %v9514 = vpack.c.b16 %v9151, %v9148
        %v9515 = vpack.c.b16 %v9152, %v9149
        %v9516 = vpack.c.b16 %v9156, %v9153
        %v9517 = vpack.c.b16 %v9157, %v9154
        %v9518 = vpack.c.b16 %v9158, %v9155
        %v9519 = vpack.c.b16 %v9162, %v9159
        %v9520 = vpack.c.b16 %v9163, %v9160
        %v9521 = vpack.c.b16 %v9164, %v9161
        %v9522 = vpack.c.b16 %v9168, %v9165
        %v9523 = vpack.c.b16 %v9169, %v9166
        %v9524 = vpack.c.b16 %v9170, %v9167
        %v9525 = vpack.c.b16 %v9174, %v9171
        %v9526 = vpack.c.b16 %v9175, %v9172
        %v9527 = vpack.c.b16 %v9176, %v9173
        %v9528 = vpack.c.b16 %v9180, %v9177
        %v9529 = vpack.c.b16 %v9181, %v9178
        %v9530 = vpack.c.b16 %v9182, %v9179
        %v9531 = vpack.c.b16 %v9186, %v9183
        %v9532 = vpack.c.b16 %v9187, %v9184
        %v9533 = vpack.c.b16 %v9188, %v9185
        %v9534 = vpack.c.b16 %v9192, %v9189
        %v9535 = vpack.c.b16 %v9193, %v9190
        %v9536 = vpack.c.b16 %v9194, %v9191
        %v9537 = vpack.c.b16 %v9198, %v9195
        %v9538 = vpack.c.b16 %v9199, %v9196
        %v9539 = vpack.c.b16 %v9200, %v9197
        %v9540 = vpack.c.b16 %v9204, %v9201
        %v9541 = vpack.c.b16 %v9205, %v9202
        %v9542 = vpack.c.b16 %v9206, %v9203
        %v9543 = vpack.c.b16 %v9210, %v9207
        %v9544 = vpack.c.b16 %v9211, %v9208
        %v9545 = vpack.c.b16 %v9212, %v9209
        %v9546 = vpack.c.b16 %v9216, %v9213
        %v9547 = vpack.c.b16 %v9217, %v9214
        %v9548 = vpack.c.b16 %v9218, %v9215
        %v9549 = vpack.c.b16 %v9222, %v9219
        %v9550 = vpack.c.b16 %v9223, %v9220
        %v9551 = vpack.c.b16 %v9224, %v9221
        %v9552 = vpack.c.b16 %v9228, %v9225
        %v9553 = vpack.c.b16 %v9229, %v9226
        %v9554 = vpack.c.b16 %v9230, %v9227
        %v9555 = vpack.c.b16 %v9234, %v9231
        %v9556 = vpack.c.b16 %v9235, %v9232
        %v9557 = vpack.c.b16 %v9236, %v9233
        %v9558 = vpack.c.b16 %v9240, %v9237
        %v9559 = vpack.c.b16 %v9241, %v9238
        %v9560 = vpack.c.b16 %v9242, %v9239
        %v9561 = vpack.c.b16 %v9246, %v9243
        %v9562 = vpack.c.b16 %v9247, %v9244
        %v9563 = vpack.c.b16 %v9248, %v9245
        %v9564 = vpack.c.b16 %v9252, %v9249
        %v9565 = vpack.c.b16 %v9253, %v9250
        %v9566 = vpack.c.b16 %v9254, %v9251
        %v9567 = vpack.c.b16 %v9258, %v9255
        %v9568 = vpack.c.b16 %v9259, %v9256
        %v9569 = vpack.c.b16 %v9260, %v9257
        %v9570 = vpack.c.b16 %v9264, %v9261
        %v9571 = vpack.c.b16 %v9265, %v9262
        %v9572 = vpack.c.b16 %v9266, %v9263
        %v9573 = vpack.c.b16 %v9270, %v9267
        %v9574 = vpack.c.b16 %v9271, %v9268
        %v9575 = vpack.c.b16 %v9272, %v9269
        %v9576 = vpack.c.b16 %v9276, %v9273
        %v9577 = vpack.c.b16 %v9277, %v9274
        %v9578 = vpack.c.b16 %v9278, %v9275
        %v9579 = vpack.c.b16 %v9282, %v9279
        %v9580 = vpack.c.b16 %v9283, %v9280
        %v9581 = vpack.c.b16 %v9284, %v9281
        %v9582 = vpack.c.b16 %v9288, %v9285
        %v9583 = vpack.c.b16 %v9289, %v9286
        %v9584 = vpack.c.b16 %v9290, %v9287
        %v9585 = vpack.c.b16 %v9294, %v9291
        %v9586 = vpack.c.b16 %v9295, %v9292
        %v9587 = vpack.c.b16 %v9296, %v9293
        %v9588 = vpack.c.b16 %v9300, %v9297
        %v9589 = vpack.c.b16 %v9301, %v9298
        %v9590 = vpack.c.b16 %v9302, %v9299
        %9879 = vmatprep.subr.bf16.mxu0 %v9304
        %9880 = vmatpush1.bf16.msra.mxu0 %v9303
        %9881 = vmatprep.subr.bf16.mxu0 %v9307
        %9882 = vmatpush1.bf16.msra.mxu0 %v9306
        %9883 = vmatprep.subr.bf16.mxu0 %v9310
        %9884 = vmatpush1.bf16.msra.mxu0 %v9309
        %9885 = vmatprep.subr.bf16.mxu0 %v9313
        %9886 = vmatpush1.bf16.msra.mxu0 %v9312
        %9887 = vmatprep.subr.bf16.mxu0 %v9316
        %9888 = vmatpush1.bf16.msra.mxu0 %v9315
        %9889 = vmatprep.subr.bf16.mxu0 %v9319
        %9890 = vmatpush1.bf16.msra.mxu0 %v9318
        %9891 = vmatprep.subr.bf16.mxu0 %v9322
        %9892 = vmatpush1.bf16.msra.mxu0 %v9321
        %9893 = vmatprep.subr.bf16.mxu0 %v9325
        %9894 = vmatpush1.bf16.msra.mxu0 %v9324
        %9895 = vmatprep.subr.bf16.mxu0 %v9328
        %9896 = vmatpush1.bf16.msra.mxu0 %v9327
        %9897 = vmatprep.subr.bf16.mxu0 %v9331
        %9898 = vmatpush1.bf16.msra.mxu0 %v9330
        %9899 = vmatprep.subr.bf16.mxu0 %v9334
        %9900 = vmatpush1.bf16.msra.mxu0 %v9333
        %9901 = vmatprep.subr.bf16.mxu0 %v9337
        %9902 = vmatpush1.bf16.msra.mxu0 %v9336
        %9903 = vmatprep.subr.bf16.mxu0 %v9340
        %9904 = vmatpush1.bf16.msra.mxu0 %v9339
        %9905 = vmatprep.subr.bf16.mxu0 %v9343
        %9906 = vmatpush1.bf16.msra.mxu0 %v9342
        %9907 = vmatprep.subr.bf16.mxu0 %v9346
        %9908 = vmatpush1.bf16.msra.mxu0 %v9345
        %9909 = vmatprep.subr.bf16.mxu0 %v9349
        %9910 = vmatpush1.bf16.msra.mxu0 %v9348
        %9911 = vmatprep.mubr.bf16.mxu0 %v7919
        %9912 = vmatmul.mubr.bf16.gmra.mrb[0].mxu0 %v7918
        %v9913 = vpop.f32.mrb[0].mxu0
        %v9914 = vadd.f32 %v8331, %v9913
        %v9915 = vpop.f32.mrb[0].mxu0
        %v9916 = vadd.f32 %v8335, %v9915
        %v9917 = vpop.f32.mrb[0].mxu0
        %v9918 = vadd.f32 %v8331, %v9917
        %v9919 = vpop.f32.mrb[0].mxu0
        %v9920 = vadd.f32 %v8335, %v9919
        %9921 = vmatprep.mubr.bf16.mxu0 %v7931
        %9922 = vmatmul.mubr.bf16.gmra.mrb[0].mxu0 %v7930
        %v9923 = vpop.f32.mrb[0].mxu0
        %v9924 = vadd.f32 %v8331, %v9923
        %v9925 = vpop.f32.mrb[0].mxu0
        %v9926 = vadd.f32 %v8335, %v9925
        %v9927 = vpop.f32.mrb[0].mxu0
        %v9928 = vadd.f32 %v8331, %v9927
        %v9929 = vpop.f32.mrb[0].mxu0
        %v9930 = vadd.f32 %v8335, %v9929
        %9931 = vdwg.mxu0
        %9932 = vmatprep.subr.bf16.mxu0 %v9352
        %9933 = vmatpush1.bf16.msra.mxu0 %v9351
        %9934 = vmatprep.subr.bf16.mxu0 %v9355
        %9935 = vmatpush1.bf16.msra.mxu0 %v9354
        %9936 = vmatprep.subr.bf16.mxu0 %v9358
        %9937 = vmatpush1.bf16.msra.mxu0 %v9357
        %9938 = vmatprep.subr.bf16.mxu0 %v9361
        %9939 = vmatpush1.bf16.msra.mxu0 %v9360
        %9940 = vmatprep.subr.bf16.mxu0 %v9364
        %9941 = vmatpush1.bf16.msra.mxu0 %v9363
        %9942 = vmatprep.subr.bf16.mxu0 %v9367
        %9943 = vmatpush1.bf16.msra.mxu0 %v9366
        %9944 = vmatprep.subr.bf16.mxu0 %v9370
        %9945 = vmatpush1.bf16.msra.mxu0 %v9369
        %9946 = vmatprep.subr.bf16.mxu0 %v9373
        %9947 = vmatpush1.bf16.msra.mxu0 %v9372
        %9948 = vmatprep.subr.bf16.mxu0 %v9376
        %9949 = vmatpush1.bf16.msra.mxu0 %v9375
        %9950 = vmatprep.subr.bf16.mxu0 %v9379
        %9951 = vmatpush1.bf16.msra.mxu0 %v9378
        %9952 = vmatprep.subr.bf16.mxu0 %v9382
        %9953 = vmatpush1.bf16.msra.mxu0 %v9381
        %9954 = vmatprep.subr.bf16.mxu0 %v9385
        %9955 = vmatpush1.bf16.msra.mxu0 %v9384
        %9956 = vmatprep.subr.bf16.mxu0 %v9388
        %9957 = vmatpush1.bf16.msra.mxu0 %v9387
        %9958 = vmatprep.subr.bf16.mxu0 %v9391
        %9959 = vmatpush1.bf16.msra.mxu0 %v9390
        %9960 = vmatprep.subr.bf16.mxu0 %v9394
        %9961 = vmatpush1.bf16.msra.mxu0 %v9393
        %9962 = vmatprep.subr.bf16.mxu0 %v9397
        %9963 = vmatpush1.bf16.msra.mxu0 %v9396
        %9964 = vmatprep.mubr.bf16.mxu0 %v7921
        %9965 = vmatmul.mubr.bf16.gmra.mrb[0].mxu0 %v7920
        %v9966 = vpop.f32.mrb[0].mxu0
        %v9967 = vadd.f32 %v9914, %v9966
        %v9968 = vpop.f32.mrb[0].mxu0
        %v9969 = vadd.f32 %v9916, %v9968
        %v9970 = vpop.f32.mrb[0].mxu0
        %v9971 = vadd.f32 %v9918, %v9970
        %v9972 = vpop.f32.mrb[0].mxu0
        %v9973 = vadd.f32 %v9920, %v9972
        %9974 = vmatprep.mubr.bf16.mxu0 %v7933
        %9975 = vmatmul.mubr.bf16.gmra.mrb[0].mxu0 %v7932
        %v9976 = vpop.f32.mrb[0].mxu0
        %v9977 = vadd.f32 %v9924, %v9976
        %v9978 = vpop.f32.mrb[0].mxu0
        %v9979 = vadd.f32 %v9926, %v9978
        %v9980 = vpop.f32.mrb[0].mxu0
        %v9981 = vadd.f32 %v9928, %v9980
        %v9982 = vpop.f32.mrb[0].mxu0
        %v9983 = vadd.f32 %v9930, %v9982
        %9984 = vdwg.mxu0
        %9985 = vmatprep.subr.bf16.mxu0 %v9400
        %9986 = vmatpush1.bf16.msra.mxu0 %v9399
        %9987 = vmatprep.subr.bf16.mxu0 %v9403
        %9988 = vmatpush1.bf16.msra.mxu0 %v9402
        %9989 = vmatprep.subr.bf16.mxu0 %v9406
        %9990 = vmatpush1.bf16.msra.mxu0 %v9405
        %9991 = vmatprep.subr.bf16.mxu0 %v9409
        %9992 = vmatpush1.bf16.msra.mxu0 %v9408
        %9993 = vmatprep.subr.bf16.mxu0 %v9412
        %9994 = vmatpush1.bf16.msra.mxu0 %v9411
        %9995 = vmatprep.subr.bf16.mxu0 %v9415
        %9996 = vmatpush1.bf16.msra.mxu0 %v9414
        %9997 = vmatprep.subr.bf16.mxu0 %v9418
        %9998 = vmatpush1.bf16.msra.mxu0 %v9417
        %9999 = vmatprep.subr.bf16.mxu0 %v9421
        %10000 = vmatpush1.bf16.msra.mxu0 %v9420
        %10001 = vmatprep.subr.bf16.mxu0 %v9424
        %10002 = vmatpush1.bf16.msra.mxu0 %v9423
        %10003 = vmatprep.subr.bf16.mxu0 %v9427
        %10004 = vmatpush1.bf16.msra.mxu0 %v9426
        %10005 = vmatprep.subr.bf16.mxu0 %v9430
        %10006 = vmatpush1.bf16.msra.mxu0 %v9429
        %10007 = vmatprep.subr.bf16.mxu0 %v9433
        %10008 = vmatpush1.bf16.msra.mxu0 %v9432
        %10009 = vmatprep.subr.bf16.mxu0 %v9436
        %10010 = vmatpush1.bf16.msra.mxu0 %v9435
        %10011 = vmatprep.subr.bf16.mxu0 %v9439
        %10012 = vmatpush1.bf16.msra.mxu0 %v9438
        %10013 = vmatprep.subr.bf16.mxu0 %v9442
        %10014 = vmatpush1.bf16.msra.mxu0 %v9441
        %10015 = vmatprep.subr.bf16.mxu0 %v9445
        %10016 = vmatpush1.bf16.msra.mxu0 %v9444
        %10017 = vmatprep.mubr.bf16.mxu0 %v7923
        %10018 = vmatmul.mubr.bf16.gmra.mrb[0].mxu0 %v7922
        %v10019 = vpop.f32.mrb[0].mxu0
        %v10020 = vadd.f32 %v9967, %v10019
        %v10021 = vpop.f32.mrb[0].mxu0
        %v10022 = vadd.f32 %v9969, %v10021
        %v10023 = vpop.f32.mrb[0].mxu0
        %v10024 = vadd.f32 %v9971, %v10023
        %v10025 = vpop.f32.mrb[0].mxu0
        %v10026 = vadd.f32 %v9973, %v10025
        %10027 = vmatprep.mubr.bf16.mxu0 %v7935
        %10028 = vmatmul.mubr.bf16.gmra.mrb[0].mxu0 %v7934
        %v10029 = vpop.f32.mrb[0].mxu0
        %v10030 = vadd.f32 %v9977, %v10029
        %v10031 = vpop.f32.mrb[0].mxu0
        %v10032 = vadd.f32 %v9979, %v10031
        %v10033 = vpop.f32.mrb[0].mxu0
        %v10034 = vadd.f32 %v9981, %v10033
        %v10035 = vpop.f32.mrb[0].mxu0
        %v10036 = vadd.f32 %v9983, %v10035
        %10037 = vdwg.mxu0
        %10038 = vmatprep.subr.bf16.mxu0 %v9448
        %10039 = vmatpush1.bf16.msra.mxu0 %v9447
        %10040 = vmatprep.subr.bf16.mxu0 %v9451
        %10041 = vmatpush1.bf16.msra.mxu0 %v9450
        %10042 = vmatprep.subr.bf16.mxu0 %v9454
        %10043 = vmatpush1.bf16.msra.mxu0 %v9453
        %10044 = vmatprep.subr.bf16.mxu0 %v9457
        %10045 = vmatpush1.bf16.msra.mxu0 %v9456
        %10046 = vmatprep.subr.bf16.mxu0 %v9460
        %10047 = vmatpush1.bf16.msra.mxu0 %v9459
        %10048 = vmatprep.subr.bf16.mxu0 %v9463
        %10049 = vmatpush1.bf16.msra.mxu0 %v9462
        %10050 = vmatprep.subr.bf16.mxu0 %v9466
        %10051 = vmatpush1.bf16.msra.mxu0 %v9465
        %10052 = vmatprep.subr.bf16.mxu0 %v9469
        %10053 = vmatpush1.bf16.msra.mxu0 %v9468
        %10054 = vmatprep.subr.bf16.mxu0 %v9472
        %10055 = vmatpush1.bf16.msra.mxu0 %v9471
        %10056 = vmatprep.subr.bf16.mxu0 %v9475
        %10057 = vmatpush1.bf16.msra.mxu0 %v9474
        %10058 = vmatprep.subr.bf16.mxu0 %v9478
        %10059 = vmatpush1.bf16.msra.mxu0 %v9477
        %10060 = vmatprep.subr.bf16.mxu0 %v9481
        %10061 = vmatpush1.bf16.msra.mxu0 %v9480
        %10062 = vmatprep.subr.bf16.mxu0 %v9484
        %10063 = vmatpush1.bf16.msra.mxu0 %v9483
        %10064 = vmatprep.subr.bf16.mxu0 %v9487
        %10065 = vmatpush1.bf16.msra.mxu0 %v9486
        %10066 = vmatprep.subr.bf16.mxu0 %v9490
        %10067 = vmatpush1.bf16.msra.mxu0 %v9489
        %10068 = vmatprep.subr.bf16.mxu0 %v9493
        %10069 = vmatpush1.bf16.msra.mxu0 %v9492
        %10070 = vmatprep.mubr.bf16.mxu0 %v7925
        %10071 = vmatmul.mubr.bf16.gmra.mrb[0].mxu0 %v7924
        %v10072 = vpop.f32.mrb[0].mxu0
        %v10073 = vadd.f32 %v10020, %v10072
        %v10074 = vpop.f32.mrb[0].mxu0
        %v10075 = vadd.f32 %v10022, %v10074
        %v10076 = vpop.f32.mrb[0].mxu0
        %v10077 = vadd.f32 %v10024, %v10076
        %v10078 = vpop.f32.mrb[0].mxu0
        %v10079 = vadd.f32 %v10026, %v10078
        %10080 = vmatprep.mubr.bf16.mxu0 %v7937
        %10081 = vmatmul.mubr.bf16.gmra.mrb[0].mxu0 %v7936
        %v10082 = vpop.f32.mrb[0].mxu0
        %v10083 = vadd.f32 %v10030, %v10082
        %v10084 = vpop.f32.mrb[0].mxu0
        %v10085 = vadd.f32 %v10032, %v10084
        %v10086 = vpop.f32.mrb[0].mxu0
        %v10087 = vadd.f32 %v10034, %v10086
        %v10088 = vpop.f32.mrb[0].mxu0
        %v10089 = vadd.f32 %v10036, %v10088
        %10090 = vdwg.mxu0
        %10091 = vmatprep.subr.bf16.mxu0 %v9496
        %10092 = vmatpush1.bf16.msra.mxu0 %v9495
        %10093 = vmatprep.subr.bf16.mxu0 %v9499
        %10094 = vmatpush1.bf16.msra.mxu0 %v9498
        %10095 = vmatprep.subr.bf16.mxu0 %v9502
        %10096 = vmatpush1.bf16.msra.mxu0 %v9501
        %10097 = vmatprep.subr.bf16.mxu0 %v9505
        %10098 = vmatpush1.bf16.msra.mxu0 %v9504
        %10099 = vmatprep.subr.bf16.mxu0 %v9508
        %10100 = vmatpush1.bf16.msra.mxu0 %v9507
        %10101 = vmatprep.subr.bf16.mxu0 %v9511
        %10102 = vmatpush1.bf16.msra.mxu0 %v9510
        %10103 = vmatprep.subr.bf16.mxu0 %v9514
        %10104 = vmatpush1.bf16.msra.mxu0 %v9513
        %10105 = vmatprep.subr.bf16.mxu0 %v9517
        %10106 = vmatpush1.bf16.msra.mxu0 %v9516
        %10107 = vmatprep.subr.bf16.mxu0 %v9520
        %10108 = vmatpush1.bf16.msra.mxu0 %v9519
        %10109 = vmatprep.subr.bf16.mxu0 %v9523
        %10110 = vmatpush1.bf16.msra.mxu0 %v9522
        %10111 = vmatprep.subr.bf16.mxu0 %v9526
        %10112 = vmatpush1.bf16.msra.mxu0 %v9525
        %10113 = vmatprep.subr.bf16.mxu0 %v9529
        %10114 = vmatpush1.bf16.msra.mxu0 %v9528
        %10115 = vmatprep.subr.bf16.mxu0 %v9532
        %10116 = vmatpush1.bf16.msra.mxu0 %v9531
        %10117 = vmatprep.subr.bf16.mxu0 %v9535
        %10118 = vmatpush1.bf16.msra.mxu0 %v9534
        %10119 = vmatprep.subr.bf16.mxu0 %v9538
        %10120 = vmatpush1.bf16.msra.mxu0 %v9537
        %10121 = vmatprep.subr.bf16.mxu0 %v9541
        %10122 = vmatpush1.bf16.msra.mxu0 %v9540
        %10123 = vmatprep.mubr.bf16.mxu0 %v7927
        %10124 = vmatmul.mubr.bf16.gmra.mrb[0].mxu0 %v7926
        %v10125 = vpop.f32.mrb[0].mxu0
        %v10126 = vadd.f32 %v10073, %v10125
        %v10127 = vpop.f32.mrb[0].mxu0
        %v10128 = vadd.f32 %v10075, %v10127
        %v10129 = vpop.f32.mrb[0].mxu0
        %v10130 = vadd.f32 %v10077, %v10129
        %v10131 = vpop.f32.mrb[0].mxu0
        %v10132 = vadd.f32 %v10079, %v10131
        %10133 = vmatprep.mubr.bf16.mxu0 %v7939
        %10134 = vmatmul.mubr.bf16.gmra.mrb[0].mxu0 %v7938
        %v10135 = vpop.f32.mrb[0].mxu0
        %v10136 = vadd.f32 %v10083, %v10135
        %v10137 = vpop.f32.mrb[0].mxu0
        %v10138 = vadd.f32 %v10085, %v10137
        %v10139 = vpop.f32.mrb[0].mxu0
        %v10140 = vadd.f32 %v10087, %v10139
        %v10141 = vpop.f32.mrb[0].mxu0
        %v10142 = vadd.f32 %v10089, %v10141
        %10143 = vdwg.mxu0
        %10144 = vmatprep.subr.bf16.mxu0 %v9544
        %10145 = vmatpush1.bf16.msra.mxu0 %v9543
        %10146 = vmatprep.subr.bf16.mxu0 %v9547
        %10147 = vmatpush1.bf16.msra.mxu0 %v9546
        %10148 = vmatprep.subr.bf16.mxu0 %v9550
        %10149 = vmatpush1.bf16.msra.mxu0 %v9549
        %10150 = vmatprep.subr.bf16.mxu0 %v9553
        %10151 = vmatpush1.bf16.msra.mxu0 %v9552
        %10152 = vmatprep.subr.bf16.mxu0 %v9556
        %10153 = vmatpush1.bf16.msra.mxu0 %v9555
        %10154 = vmatprep.subr.bf16.mxu0 %v9559
        %10155 = vmatpush1.bf16.msra.mxu0 %v9558
        %10156 = vmatprep.subr.bf16.mxu0 %v9562
        %10157 = vmatpush1.bf16.msra.mxu0 %v9561
        %10158 = vmatprep.subr.bf16.mxu0 %v9565
        %10159 = vmatpush1.bf16.msra.mxu0 %v9564
        %10160 = vmatprep.subr.bf16.mxu0 %v9568
        %10161 = vmatpush1.bf16.msra.mxu0 %v9567
        %10162 = vmatprep.subr.bf16.mxu0 %v9571
        %10163 = vmatpush1.bf16.msra.mxu0 %v9570
        %10164 = vmatprep.subr.bf16.mxu0 %v9574
        %10165 = vmatpush1.bf16.msra.mxu0 %v9573
        %10166 = vmatprep.subr.bf16.mxu0 %v9577
        %10167 = vmatpush1.bf16.msra.mxu0 %v9576
        %10168 = vmatprep.subr.bf16.mxu0 %v9580
        %10169 = vmatpush1.bf16.msra.mxu0 %v9579
        %10170 = vmatprep.subr.bf16.mxu0 %v9583
        %10171 = vmatpush1.bf16.msra.mxu0 %v9582
        %10172 = vmatprep.subr.bf16.mxu0 %v9586
        %10173 = vmatpush1.bf16.msra.mxu0 %v9585
        %10174 = vmatprep.subr.bf16.mxu0 %v9589
        %10175 = vmatpush1.bf16.msra.mxu0 %v9588
        %10176 = vmatprep.mubr.bf16.mxu0 %v7929
        %10177 = vmatmul.mubr.bf16.gmra.mrb[0].mxu0 %v7928
        %v10178 = vpop.f32.mrb[0].mxu0
        %v10179 = vadd.f32 %v10126, %v10178
        %v10180 = vpop.f32.mrb[0].mxu0
        %v10181 = vadd.f32 %v10128, %v10180
        %v10182 = vpop.f32.mrb[0].mxu0
        %v10183 = vadd.f32 %v10130, %v10182
        %v10184 = vpop.f32.mrb[0].mxu0
        %v10185 = vadd.f32 %v10132, %v10184
        %10186 = vmatprep.mubr.bf16.mxu0 %v7941
        %10187 = vmatmul.mubr.bf16.gmra.mrb[0].mxu0 %v7940
        %v10188 = vpop.f32.mrb[0].mxu0
        %v10189 = vadd.f32 %v10136, %v10188
        %v10190 = vpop.f32.mrb[0].mxu0
        %v10191 = vadd.f32 %v10138, %v10190
        %v10192 = vpop.f32.mrb[0].mxu0
        %v10193 = vadd.f32 %v10140, %v10192
        %v10194 = vpop.f32.mrb[0].mxu0
        %v10195 = vadd.f32 %v10142, %v10194
        %10196 = vdwg.mxu0
        %10197 = vmatprep.subr.bf16.mxu0 0
        %10198 = vmatpush1.bf16.msra.mxu0 %v9305
        %10199 = vmatprep.subr.bf16.mxu0 0
        %10200 = vmatpush1.bf16.msra.mxu0 %v9308
        %10201 = vmatprep.subr.bf16.mxu0 0
        %10202 = vmatpush1.bf16.msra.mxu0 %v9311
        %10203 = vmatprep.subr.bf16.mxu0 0
        %10204 = vmatpush1.bf16.msra.mxu0 %v9314
        %10205 = vmatprep.subr.bf16.mxu0 0
        %10206 = vmatpush1.bf16.msra.mxu0 %v9317
        %10207 = vmatprep.subr.bf16.mxu0 0
        %10208 = vmatpush1.bf16.msra.mxu0 %v9320
        %10209 = vmatprep.subr.bf16.mxu0 0
        %10210 = vmatpush1.bf16.msra.mxu0 %v9323
        %10211 = vmatprep.subr.bf16.mxu0 0
        %10212 = vmatpush1.bf16.msra.mxu0 %v9326
        %10213 = vmatprep.subr.bf16.mxu0 0
        %10214 = vmatpush1.bf16.msra.mxu0 %v9329
        %10215 = vmatprep.subr.bf16.mxu0 0
        %10216 = vmatpush1.bf16.msra.mxu0 %v9332
        %10217 = vmatprep.subr.bf16.mxu0 0
        %10218 = vmatpush1.bf16.msra.mxu0 %v9335
        %10219 = vmatprep.subr.bf16.mxu0 0
        %10220 = vmatpush1.bf16.msra.mxu0 %v9338
        %10221 = vmatprep.subr.bf16.mxu0 0
        %10222 = vmatpush1.bf16.msra.mxu0 %v9341
        %10223 = vmatprep.subr.bf16.mxu0 0
        %10224 = vmatpush1.bf16.msra.mxu0 %v9344
        %10225 = vmatprep.subr.bf16.mxu0 0
        %10226 = vmatpush1.bf16.msra.mxu0 %v9347
        %10227 = vmatprep.subr.bf16.mxu0 0
        %10228 = vmatpush1.bf16.msra.mxu0 %v9350
        %10229 = vmatprep.mubr.bf16.mxu0 %v7919
        %10230 = vmatmul.mubr.bf16.gmra.mrb[0].mxu0 %v7918
        %v10231 = vpop.f32.mrb[0].mxu0
        %v10232 = vadd.f32 %v8339, %v10231
        %v10233 = vpop.f32.mrb[0].mxu0
        %v10234 = vpop.f32.mrb[0].mxu0
        %v10235 = vadd.f32 %v8339, %v10234
        %v10236 = vpop.f32.mrb[0].mxu0
        %10237 = vmatprep.mubr.bf16.mxu0 %v7931
        %10238 = vmatmul.mubr.bf16.gmra.mrb[0].mxu0 %v7930
        %v10239 = vpop.f32.mrb[0].mxu0
        %v10240 = vadd.f32 %v8339, %v10239
        %v10241 = vpop.f32.mrb[0].mxu0
        %v10242 = vpop.f32.mrb[0].mxu0
        %v10243 = vadd.f32 %v8339, %v10242
        %v10244 = vpop.f32.mrb[0].mxu0
        %10245 = vdwg.mxu0
        %10246 = vmatprep.subr.bf16.mxu0 0
        %10247 = vmatpush1.bf16.msra.mxu0 %v9353
        %10248 = vmatprep.subr.bf16.mxu0 0
        %10249 = vmatpush1.bf16.msra.mxu0 %v9356
        %10250 = vmatprep.subr.bf16.mxu0 0
        %10251 = vmatpush1.bf16.msra.mxu0 %v9359
        %10252 = vmatprep.subr.bf16.mxu0 0
        %10253 = vmatpush1.bf16.msra.mxu0 %v9362
        %10254 = vmatprep.subr.bf16.mxu0 0
        %10255 = vmatpush1.bf16.msra.mxu0 %v9365
        %10256 = vmatprep.subr.bf16.mxu0 0
        %10257 = vmatpush1.bf16.msra.mxu0 %v9368
        %10258 = vmatprep.subr.bf16.mxu0 0
        %10259 = vmatpush1.bf16.msra.mxu0 %v9371
        %10260 = vmatprep.subr.bf16.mxu0 0
        %10261 = vmatpush1.bf16.msra.mxu0 %v9374
        %10262 = vmatprep.subr.bf16.mxu0 0
        %10263 = vmatpush1.bf16.msra.mxu0 %v9377
        %10264 = vmatprep.subr.bf16.mxu0 0
        %10265 = vmatpush1.bf16.msra.mxu0 %v9380
        %10266 = vmatprep.subr.bf16.mxu0 0
        %10267 = vmatpush1.bf16.msra.mxu0 %v9383
        %10268 = vmatprep.subr.bf16.mxu0 0
        %10269 = vmatpush1.bf16.msra.mxu0 %v9386
        %10270 = vmatprep.subr.bf16.mxu0 0
        %10271 = vmatpush1.bf16.msra.mxu0 %v9389
        %10272 = vmatprep.subr.bf16.mxu0 0
        %10273 = vmatpush1.bf16.msra.mxu0 %v9392
        %10274 = vmatprep.subr.bf16.mxu0 0
        %10275 = vmatpush1.bf16.msra.mxu0 %v9395
        %10276 = vmatprep.subr.bf16.mxu0 0
        %10277 = vmatpush1.bf16.msra.mxu0 %v9398
        %10278 = vmatprep.mubr.bf16.mxu0 %v7921
        %10279 = vmatmul.mubr.bf16.gmra.mrb[0].mxu0 %v7920
        %v10280 = vpop.f32.mrb[0].mxu0
        %v10281 = vadd.f32 %v10232, %v10280
        %v10282 = vpop.f32.mrb[0].mxu0
        %v10283 = vpop.f32.mrb[0].mxu0
        %v10284 = vadd.f32 %v10235, %v10283
        %v10285 = vpop.f32.mrb[0].mxu0
        %10286 = vmatprep.mubr.bf16.mxu0 %v7933
        %10287 = vmatmul.mubr.bf16.gmra.mrb[0].mxu0 %v7932
        %v10288 = vpop.f32.mrb[0].mxu0
        %v10289 = vadd.f32 %v10240, %v10288
        %v10290 = vpop.f32.mrb[0].mxu0
        %v10291 = vpop.f32.mrb[0].mxu0
        %v10292 = vadd.f32 %v10243, %v10291
        %v10293 = vpop.f32.mrb[0].mxu0
        %10294 = vdwg.mxu0
        %10295 = vmatprep.subr.bf16.mxu0 0
        %10296 = vmatpush1.bf16.msra.mxu0 %v9401
        %10297 = vmatprep.subr.bf16.mxu0 0
        %10298 = vmatpush1.bf16.msra.mxu0 %v9404
        %10299 = vmatprep.subr.bf16.mxu0 0
        %10300 = vmatpush1.bf16.msra.mxu0 %v9407
        %10301 = vmatprep.subr.bf16.mxu0 0
        %10302 = vmatpush1.bf16.msra.mxu0 %v9410
        %10303 = vmatprep.subr.bf16.mxu0 0
        %10304 = vmatpush1.bf16.msra.mxu0 %v9413
        %10305 = vmatprep.subr.bf16.mxu0 0
        %10306 = vmatpush1.bf16.msra.mxu0 %v9416
        %10307 = vmatprep.subr.bf16.mxu0 0
        %10308 = vmatpush1.bf16.msra.mxu0 %v9419
        %10309 = vmatprep.subr.bf16.mxu0 0
        %10310 = vmatpush1.bf16.msra.mxu0 %v9422
        %10311 = vmatprep.subr.bf16.mxu0 0
        %10312 = vmatpush1.bf16.msra.mxu0 %v9425
        %10313 = vmatprep.subr.bf16.mxu0 0
        %10314 = vmatpush1.bf16.msra.mxu0 %v9428
        %10315 = vmatprep.subr.bf16.mxu0 0
        %10316 = vmatpush1.bf16.msra.mxu0 %v9431
        %10317 = vmatprep.subr.bf16.mxu0 0
        %10318 = vmatpush1.bf16.msra.mxu0 %v9434
        %10319 = vmatprep.subr.bf16.mxu0 0
        %10320 = vmatpush1.bf16.msra.mxu0 %v9437
        %10321 = vmatprep.subr.bf16.mxu0 0
        %10322 = vmatpush1.bf16.msra.mxu0 %v9440
        %10323 = vmatprep.subr.bf16.mxu0 0
        %10324 = vmatpush1.bf16.msra.mxu0 %v9443
        %10325 = vmatprep.subr.bf16.mxu0 0
        %10326 = vmatpush1.bf16.msra.mxu0 %v9446
        %10327 = vmatprep.mubr.bf16.mxu0 %v7923
        %10328 = vmatmul.mubr.bf16.gmra.mrb[0].mxu0 %v7922
        %v10329 = vpop.f32.mrb[0].mxu0
        %v10330 = vadd.f32 %v10281, %v10329
        %v10331 = vpop.f32.mrb[0].mxu0
        %v10332 = vpop.f32.mrb[0].mxu0
        %v10333 = vadd.f32 %v10284, %v10332
        %v10334 = vpop.f32.mrb[0].mxu0
        %10335 = vmatprep.mubr.bf16.mxu0 %v7935
        %10336 = vmatmul.mubr.bf16.gmra.mrb[0].mxu0 %v7934
        %v10337 = vpop.f32.mrb[0].mxu0
        %v10338 = vadd.f32 %v10289, %v10337
        %v10339 = vpop.f32.mrb[0].mxu0
        %v10340 = vpop.f32.mrb[0].mxu0
        %v10341 = vadd.f32 %v10292, %v10340
        %v10342 = vpop.f32.mrb[0].mxu0
        %10343 = vdwg.mxu0
        %10344 = vmatprep.subr.bf16.mxu0 0
        %10345 = vmatpush1.bf16.msra.mxu0 %v9449
        %10346 = vmatprep.subr.bf16.mxu0 0
        %10347 = vmatpush1.bf16.msra.mxu0 %v9452
        %10348 = vmatprep.subr.bf16.mxu0 0
        %10349 = vmatpush1.bf16.msra.mxu0 %v9455
        %10350 = vmatprep.subr.bf16.mxu0 0
        %10351 = vmatpush1.bf16.msra.mxu0 %v9458
        %10352 = vmatprep.subr.bf16.mxu0 0
        %10353 = vmatpush1.bf16.msra.mxu0 %v9461
        %10354 = vmatprep.subr.bf16.mxu0 0
        %10355 = vmatpush1.bf16.msra.mxu0 %v9464
        %10356 = vmatprep.subr.bf16.mxu0 0
        %10357 = vmatpush1.bf16.msra.mxu0 %v9467
        %10358 = vmatprep.subr.bf16.mxu0 0
        %10359 = vmatpush1.bf16.msra.mxu0 %v9470
        %10360 = vmatprep.subr.bf16.mxu0 0
        %10361 = vmatpush1.bf16.msra.mxu0 %v9473
        %10362 = vmatprep.subr.bf16.mxu0 0
        %10363 = vmatpush1.bf16.msra.mxu0 %v9476
        %10364 = vmatprep.subr.bf16.mxu0 0
        %10365 = vmatpush1.bf16.msra.mxu0 %v9479
        %10366 = vmatprep.subr.bf16.mxu0 0
        %10367 = vmatpush1.bf16.msra.mxu0 %v9482
        %10368 = vmatprep.subr.bf16.mxu0 0
        %10369 = vmatpush1.bf16.msra.mxu0 %v9485
        %10370 = vmatprep.subr.bf16.mxu0 0
        %10371 = vmatpush1.bf16.msra.mxu0 %v9488
        %10372 = vmatprep.subr.bf16.mxu0 0
        %10373 = vmatpush1.bf16.msra.mxu0 %v9491
        %10374 = vmatprep.subr.bf16.mxu0 0
        %10375 = vmatpush1.bf16.msra.mxu0 %v9494
        %10376 = vmatprep.mubr.bf16.mxu0 %v7925
        %10377 = vmatmul.mubr.bf16.gmra.mrb[0].mxu0 %v7924
        %v10378 = vpop.f32.mrb[0].mxu0
        %v10379 = vadd.f32 %v10330, %v10378
        %v10380 = vpop.f32.mrb[0].mxu0
        %v10381 = vpop.f32.mrb[0].mxu0
        %v10382 = vadd.f32 %v10333, %v10381
        %v10383 = vpop.f32.mrb[0].mxu0
        %10384 = vmatprep.mubr.bf16.mxu0 %v7937
        %10385 = vmatmul.mubr.bf16.gmra.mrb[0].mxu0 %v7936
        %v10386 = vpop.f32.mrb[0].mxu0
        %v10387 = vadd.f32 %v10338, %v10386
        %v10388 = vpop.f32.mrb[0].mxu0
        %v10389 = vpop.f32.mrb[0].mxu0
        %v10390 = vadd.f32 %v10341, %v10389
        %v10391 = vpop.f32.mrb[0].mxu0
        %10392 = vdwg.mxu0
        %10393 = vmatprep.subr.bf16.mxu0 0
        %10394 = vmatpush1.bf16.msra.mxu0 %v9497
        %10395 = vmatprep.subr.bf16.mxu0 0
        %10396 = vmatpush1.bf16.msra.mxu0 %v9500
        %10397 = vmatprep.subr.bf16.mxu0 0
        %10398 = vmatpush1.bf16.msra.mxu0 %v9503
        %10399 = vmatprep.subr.bf16.mxu0 0
        %10400 = vmatpush1.bf16.msra.mxu0 %v9506
        %10401 = vmatprep.subr.bf16.mxu0 0
        %10402 = vmatpush1.bf16.msra.mxu0 %v9509
        %10403 = vmatprep.subr.bf16.mxu0 0
        %10404 = vmatpush1.bf16.msra.mxu0 %v9512
        %10405 = vmatprep.subr.bf16.mxu0 0
        %10406 = vmatpush1.bf16.msra.mxu0 %v9515
        %10407 = vmatprep.subr.bf16.mxu0 0
        %10408 = vmatpush1.bf16.msra.mxu0 %v9518
        %10409 = vmatprep.subr.bf16.mxu0 0
        %10410 = vmatpush1.bf16.msra.mxu0 %v9521
        %10411 = vmatprep.subr.bf16.mxu0 0
        %10412 = vmatpush1.bf16.msra.mxu0 %v9524
        %10413 = vmatprep.subr.bf16.mxu0 0
        %10414 = vmatpush1.bf16.msra.mxu0 %v9527
        %10415 = vmatprep.subr.bf16.mxu0 0
        %10416 = vmatpush1.bf16.msra.mxu0 %v9530
        %10417 = vmatprep.subr.bf16.mxu0 0
        %10418 = vmatpush1.bf16.msra.mxu0 %v9533
        %10419 = vmatprep.subr.bf16.mxu0 0
        %10420 = vmatpush1.bf16.msra.mxu0 %v9536
        %10421 = vmatprep.subr.bf16.mxu0 0
        %10422 = vmatpush1.bf16.msra.mxu0 %v9539
        %10423 = vmatprep.subr.bf16.mxu0 0
        %10424 = vmatpush1.bf16.msra.mxu0 %v9542
        %10425 = vmatprep.mubr.bf16.mxu0 %v7927
        %10426 = vmatmul.mubr.bf16.gmra.mrb[0].mxu0 %v7926
        %v10427 = vpop.f32.mrb[0].mxu0
        %v10428 = vadd.f32 %v10379, %v10427
        %v10429 = vpop.f32.mrb[0].mxu0
        %v10430 = vpop.f32.mrb[0].mxu0
        %v10431 = vadd.f32 %v10382, %v10430
        %v10432 = vpop.f32.mrb[0].mxu0
        %10433 = vmatprep.mubr.bf16.mxu0 %v7939
        %10434 = vmatmul.mubr.bf16.gmra.mrb[0].mxu0 %v7938
        %v10435 = vpop.f32.mrb[0].mxu0
        %v10436 = vadd.f32 %v10387, %v10435
        %v10437 = vpop.f32.mrb[0].mxu0
        %v10438 = vpop.f32.mrb[0].mxu0
        %v10439 = vadd.f32 %v10390, %v10438
        %v10440 = vpop.f32.mrb[0].mxu0
        %10441 = vdwg.mxu0
        %10442 = vmatprep.subr.bf16.mxu0 0
        %10443 = vmatpush1.bf16.msra.mxu0 %v9545
        %10444 = vmatprep.subr.bf16.mxu0 0
        %10445 = vmatpush1.bf16.msra.mxu0 %v9548
        %10446 = vmatprep.subr.bf16.mxu0 0
        %10447 = vmatpush1.bf16.msra.mxu0 %v9551
        %10448 = vmatprep.subr.bf16.mxu0 0
        %10449 = vmatpush1.bf16.msra.mxu0 %v9554
        %10450 = vmatprep.subr.bf16.mxu0 0
        %10451 = vmatpush1.bf16.msra.mxu0 %v9557
        %10452 = vmatprep.subr.bf16.mxu0 0
        %10453 = vmatpush1.bf16.msra.mxu0 %v9560
        %10454 = vmatprep.subr.bf16.mxu0 0
        %10455 = vmatpush1.bf16.msra.mxu0 %v9563
        %10456 = vmatprep.subr.bf16.mxu0 0
        %10457 = vmatpush1.bf16.msra.mxu0 %v9566
        %10458 = vmatprep.subr.bf16.mxu0 0
        %10459 = vmatpush1.bf16.msra.mxu0 %v9569
        %10460 = vmatprep.subr.bf16.mxu0 0
        %10461 = vmatpush1.bf16.msra.mxu0 %v9572
        %10462 = vmatprep.subr.bf16.mxu0 0
        %10463 = vmatpush1.bf16.msra.mxu0 %v9575
        %10464 = vmatprep.subr.bf16.mxu0 0
        %10465 = vmatpush1.bf16.msra.mxu0 %v9578
        %10466 = vmatprep.subr.bf16.mxu0 0
        %10467 = vmatpush1.bf16.msra.mxu0 %v9581
        %10468 = vmatprep.subr.bf16.mxu0 0
        %10469 = vmatpush1.bf16.msra.mxu0 %v9584
        %10470 = vmatprep.subr.bf16.mxu0 0
        %10471 = vmatpush1.bf16.msra.mxu0 %v9587
        %10472 = vmatprep.subr.bf16.mxu0 0
        %10473 = vmatpush1.bf16.msra.mxu0 %v9590
        %10474 = vmatprep.mubr.bf16.mxu0 %v7929
        %10475 = vmatmul.mubr.bf16.gmra.mrb[0].mxu0 %v7928
        %v10476 = vpop.f32.mrb[0].mxu0
        %v10477 = vadd.f32 %v10428, %v10476
        %v10478 = vpop.f32.mrb[0].mxu0
        %v10479 = vpop.f32.mrb[0].mxu0
        %v10480 = vadd.f32 %v10431, %v10479
        %v10481 = vpop.f32.mrb[0].mxu0
        %10482 = vmatprep.mubr.bf16.mxu0 %v7941
        %10483 = vmatmul.mubr.bf16.gmra.mrb[0].mxu0 %v7940
        %v10484 = vpop.f32.mrb[0].mxu0
        %v10485 = vadd.f32 %v10436, %v10484
        %v10486 = vpop.f32.mrb[0].mxu0
        %v10487 = vpop.f32.mrb[0].mxu0
        %v10488 = vadd.f32 %v10439, %v10487
        %v10489 = vpop.f32.mrb[0].mxu0
        %10490 = vdwg.mxu0
        %v10491 = vadd.f32 %v5282, %v10179
        %v10492 = vadd.f32 %v5283, %v10181
        %v10493 = vadd.f32 %v5284, %v10477
        %v10494 = vadd.f32 %v5285, %v10183
        %v10495 = vadd.f32 %v5286, %v10185
        %v10496 = vadd.f32 %v5287, %v10480
        %v10497 = vadd.f32 %v5288, %v10189
        %v10498 = vadd.f32 %v5289, %v10191
        %v10499 = vadd.f32 %v5290, %v10485
        %v10500 = vadd.f32 %v5291, %v10193
        %v10501 = vadd.f32 %v5292, %v10195
        %v10502 = vadd.f32 %v5293, %v10488
        %10503 = vst [vmem:[#allocation2] sm:$0xff] %v10491
        %10504 = vst [vmem:[#allocation2 + $0x8] sm:$0xff] %v10492
        %10505 = vst [vmem:[#allocation2 + $0x10] sm:$0xff] %v10493
        %10506 = vst [vmem:[#allocation2 + $0x18] sm:$0xff] %v10494
        %10507 = vst [vmem:[#allocation2 + $0x20] sm:$0xff] %v10495
        %10508 = vst [vmem:[#allocation2 + $0x28] sm:$0xff] %v10496
        %10509 = vst [vmem:[#allocation2 + $0x30] sm:$0xff] %v10497
        %10510 = vst [vmem:[#allocation2 + $0x38] sm:$0xff] %v10498
        %10511 = vst [vmem:[#allocation2 + $0x40] sm:$0xff] %v10499
        %10512 = vst [vmem:[#allocation2 + $0x48] sm:$0xff] %v10500
        %10513 = vst [vmem:[#allocation2 + $0x50] sm:$0xff] %v10501
        %10514 = vst [vmem:[#allocation2 + $0x58] sm:$0xff] %v10502
        %p10515 = scmp.eq.s32.totalorder %s54, 5
        // Predicated region
        $region153: #{forward.1} parent=87 // pred_check
          %p10516 = pneg %p10515
        $region154: #{forward.1} parent=87 // pred_check_branch
          %10518 = sbr.rel (%p10516) target = $region156
        $region155: #{forward.1} parent=87 // pred_region
          %v10519 = vld [vmem:[#allocation21] sm:$0x7]
          %v10520 = vld [vmem:[#allocation23] sm:$0x7]
          %v10521 = vadd.f32 %v10491, %v10492
          %v10522 = vadd.f32 %v10521, %v10493
          %10523 = vadd.xlane.f32.xlu0 %v10522
          %v10524 = vpop.xlane.xlu0 %10523
          %v10525 = vadd.f32 %v10494, %v10495
          %v10526 = vadd.f32 %v10525, %v10496
          %10527 = vadd.xlane.f32.xlu0 %v10526
          %v10528 = vpop.xlane.xlu0 %10527
          %v10529 = vadd.f32 %v10497, %v10498
          %v10530 = vadd.f32 %v10529, %v10499
          %10531 = vadd.xlane.f32.xlu0 %v10530
          %v10532 = vpop.xlane.xlu0 %10531
          %v10533 = vadd.f32 %v10500, %v10501
          %v10534 = vadd.f32 %v10533, %v10502
          %10535 = vadd.xlane.f32.xlu0 %v10534
          %v10536 = vpop.xlane.xlu0 %10535
          %v10537 = vmul.f32 %v10524, %v1080
          %v10538 = vmul.f32 %v10528, %v1080
          %v10539 = vmul.f32 %v10532, %v1080
          %v10540 = vmul.f32 %v10536, %v1080
          %v10541 = vsub.f32 %v10491, %v10537
          %v10542 = vsub.f32 %v10492, %v10537
          %v10543 = vsub.f32 %v10493, %v10537
          %v10544 = vsub.f32 %v10494, %v10538
          %v10545 = vsub.f32 %v10495, %v10538
          %v10546 = vsub.f32 %v10496, %v10538
          %v10547 = vsub.f32 %v10497, %v10539
          %v10548 = vsub.f32 %v10498, %v10539
          %v10549 = vsub.f32 %v10499, %v10539
          %v10550 = vsub.f32 %v10500, %v10540
          %v10551 = vsub.f32 %v10501, %v10540
          %v10552 = vsub.f32 %v10502, %v10540
          %v10553 = vmul.f32 %v10541, %v10541
          %v10554 = vmul.f32 %v10542, %v10542
          %v10555 = vmul.f32 %v10543, %v10543
          %v10556 = vmul.f32 %v10544, %v10544
          %v10557 = vmul.f32 %v10545, %v10545
          %v10558 = vmul.f32 %v10546, %v10546
          %v10559 = vmul.f32 %v10547, %v10547
          %v10560 = vmul.f32 %v10548, %v10548
          %v10561 = vmul.f32 %v10549, %v10549
          %v10562 = vmul.f32 %v10550, %v10550
          %v10563 = vmul.f32 %v10551, %v10551
          %v10564 = vmul.f32 %v10552, %v10552
          %v10565 = vadd.f32 %v10553, %v10554
          %v10566 = vadd.f32 %v10565, %v10555
          %10567 = vadd.xlane.f32.xlu0 %v10566
          %v10568 = vpop.xlane.xlu0 %10567
          %v10569 = vadd.f32 %v10556, %v10557
          %v10570 = vadd.f32 %v10569, %v10558
          %10571 = vadd.xlane.f32.xlu0 %v10570
          %v10572 = vpop.xlane.xlu0 %10571
          %v10573 = vadd.f32 %v10559, %v10560
          %v10574 = vadd.f32 %v10573, %v10561
          %10575 = vadd.xlane.f32.xlu0 %v10574
          %v10576 = vpop.xlane.xlu0 %10575
          %v10577 = vadd.f32 %v10562, %v10563
          %v10578 = vadd.f32 %v10577, %v10564
          %10579 = vadd.xlane.f32.xlu0 %v10578
          %v10580 = vpop.xlane.xlu0 %10579
          %v10581 = vmul.f32 %v10568, %v1080
          %v10582 = vmul.f32 %v10572, %v1080
          %v10583 = vmul.f32 %v10576, %v1080
          %v10584 = vmul.f32 %v10580, %v1080
          %v10585 = vadd.f32 %v10581, 1e-05
          %v10586 = vadd.f32 %v10582, 1e-05
          %v10587 = vadd.f32 %v10583, 1e-05
          %v10588 = vadd.f32 %v10584, 1e-05
          %v10589 = vrsqrt.pop %v10585
          %v10590 = vrsqrt.pop %v10586
          %v10591 = vrsqrt.pop %v10587
          %v10592 = vrsqrt.pop %v10588
          %v10593 = vmul.f32 %v10541, %v10589
          %v10594 = vmul.f32 %v10542, %v10589
          %v10595 = vmul.f32 %v10543, %v10589
          %v10596 = vmul.f32 %v10544, %v10590
          %v10597 = vmul.f32 %v10545, %v10590
          %v10598 = vmul.f32 %v10546, %v10590
          %v10599 = vmul.f32 %v10547, %v10591
          %v10600 = vmul.f32 %v10548, %v10591
          %v10601 = vmul.f32 %v10549, %v10591
          %v10602 = vmul.f32 %v10550, %v10592
          %v10603 = vmul.f32 %v10551, %v10592
          %v10604 = vmul.f32 %v10552, %v10592
          %v10606 = vlaneseq
          %v10607 = vshrl.u32 %v10606, 7
          %v10608 = vsub.s32 0, %v10607
          %v10609 = vrot.slane %v10519, %v10608
          %v10610 = vlaneseq
          %v10611 = vshrl.u32 %v10610, 7
          %v10612 = vsub.s32 1, %v10611
          %v10613 = vrot.slane %v10519, %v10612
          %v10614 = vlaneseq
          %v10615 = vshrl.u32 %v10614, 7
          %v10616 = vsub.s32 2, %v10615
          %v10617 = vrot.slane %v10519, %v10616
          %v10621 = vmul.f32 %v10593, %v10609
          %v10622 = vmul.f32 %v10594, %v10613
          %v10623 = vmul.f32 %v10595, %v10617
          %v10624 = vmul.f32 %v10596, %v10609
          %v10625 = vmul.f32 %v10597, %v10613
          %v10626 = vmul.f32 %v10598, %v10617
          %v10627 = vmul.f32 %v10599, %v10609
          %v10628 = vmul.f32 %v10600, %v10613
          %v10629 = vmul.f32 %v10601, %v10617
          %v10630 = vmul.f32 %v10602, %v10609
          %v10631 = vmul.f32 %v10603, %v10613
          %v10632 = vmul.f32 %v10604, %v10617
          %v10634 = vlaneseq
          %v10635 = vshrl.u32 %v10634, 7
          %v10636 = vsub.s32 0, %v10635
          %v10637 = vrot.slane %v10520, %v10636
          %v10638 = vlaneseq
          %v10639 = vshrl.u32 %v10638, 7
          %v10640 = vsub.s32 1, %v10639
          %v10641 = vrot.slane %v10520, %v10640
          %v10642 = vlaneseq
          %v10643 = vshrl.u32 %v10642, 7
          %v10644 = vsub.s32 2, %v10643
          %v10645 = vrot.slane %v10520, %v10644
          %v10649 = vadd.f32 %v10621, %v10637
          %v10650 = vadd.f32 %v10622, %v10641
          %v10651 = vadd.f32 %v10623, %v10645
          %v10652 = vadd.f32 %v10624, %v10637
          %v10653 = vadd.f32 %v10625, %v10641
          %v10654 = vadd.f32 %v10626, %v10645
          %v10655 = vadd.f32 %v10627, %v10637
          %v10656 = vadd.f32 %v10628, %v10641
          %v10657 = vadd.f32 %v10629, %v10645
          %v10658 = vadd.f32 %v10630, %v10637
          %v10659 = vadd.f32 %v10631, %v10641
          %v10660 = vadd.f32 %v10632, %v10645
          %v10661 = vpack.c.bf16 %v10652, %v10649
          %v10662 = vpack.c.bf16 %v10653, %v10650
          %v10663 = vpack.c.bf16 %v10654, %v10651
          %v10664 = vpack.c.bf16 %v10658, %v10655
          %v10665 = vpack.c.bf16 %v10659, %v10656
          %v10666 = vpack.c.bf16 %v10660, %v10657
          %v10667 = vld [vmem:[#allocation24] sm:$0xf]
          %v10668 = vld [vmem:[#allocation24 + $0x4] sm:$0xf]
          %v10669 = vld [vmem:[#allocation24 + $0x8] sm:$0xf]
          %v10670 = vld [vmem:[#allocation24 + $0xc] sm:$0xf]
          %v10671 = vld [vmem:[#allocation24 + $0x10] sm:$0xf]
          %v10672 = vld [vmem:[#allocation24 + $0x14] sm:$0xf]
          %v10673 = vld [vmem:[#allocation24 + $0x18] sm:$0xf]
          %v10674 = vld [vmem:[#allocation24 + $0x1c] sm:$0xf]
          %v10675 = vld [vmem:[#allocation24 + $0x20] sm:$0xf]
          %v10676 = vld [vmem:[#allocation24 + $0x24] sm:$0xf]
          %v10677 = vld [vmem:[#allocation24 + $0x28] sm:$0xf]
          %v10678 = vld [vmem:[#allocation24 + $0x2c] sm:$0xf]
          %v10679 = vld [vmem:[#allocation24 + $0x30] sm:$0xf]
          %v10680 = vld [vmem:[#allocation24 + $0x34] sm:$0xf]
          %v10681 = vld [vmem:[#allocation24 + $0x38] sm:$0xf]
          %v10682 = vld [vmem:[#allocation24 + $0x3c] sm:$0xf]
          %v10683 = vld [vmem:[#allocation24 + $0x40] sm:$0xf]
          %v10684 = vld [vmem:[#allocation24 + $0x44] sm:$0xf]
          %v10685 = vld [vmem:[#allocation24 + $0x48] sm:$0xf]
          %v10686 = vld [vmem:[#allocation24 + $0x4c] sm:$0xf]
          %v10687 = vld [vmem:[#allocation24 + $0x50] sm:$0xf]
          %v10688 = vld [vmem:[#allocation24 + $0x54] sm:$0xf]
          %v10689 = vld [vmem:[#allocation24 + $0x58] sm:$0xf]
          %v10690 = vld [vmem:[#allocation24 + $0x5c] sm:$0xf]
          %v10691 = vld [vmem:[#allocation24 + $0x60] sm:$0xf]
          %v10692 = vld [vmem:[#allocation24 + $0x64] sm:$0xf]
          %v10693 = vld [vmem:[#allocation24 + $0x68] sm:$0xf]
          %v10694 = vld [vmem:[#allocation24 + $0x6c] sm:$0xf]
          %v10695 = vld [vmem:[#allocation24 + $0x70] sm:$0xf]
          %v10696 = vld [vmem:[#allocation24 + $0x74] sm:$0xf]
          %v10697 = vld [vmem:[#allocation24 + $0x78] sm:$0xf]
          %v10698 = vld [vmem:[#allocation24 + $0x7c] sm:$0xf]
          %v10699 = vld [vmem:[#allocation24 + $0x80] sm:$0xf]
          %v10700 = vld [vmem:[#allocation24 + $0x84] sm:$0xf]
          %v10701 = vld [vmem:[#allocation24 + $0x88] sm:$0xf]
          %v10702 = vld [vmem:[#allocation24 + $0x8c] sm:$0xf]
          %v10703 = vld [vmem:[#allocation24 + $0x90] sm:$0xf]
          %v10704 = vld [vmem:[#allocation24 + $0x94] sm:$0xf]
          %v10705 = vld [vmem:[#allocation24 + $0x98] sm:$0xf]
          %v10706 = vld [vmem:[#allocation24 + $0x9c] sm:$0xf]
          %v10707 = vld [vmem:[#allocation24 + $0xa0] sm:$0xf]
          %v10708 = vld [vmem:[#allocation24 + $0xa4] sm:$0xf]
          %v10709 = vld [vmem:[#allocation24 + $0xa8] sm:$0xf]
          %v10710 = vld [vmem:[#allocation24 + $0xac] sm:$0xf]
          %v10711 = vld [vmem:[#allocation24 + $0xb0] sm:$0xf]
          %v10712 = vld [vmem:[#allocation24 + $0xb4] sm:$0xf]
          %v10713 = vld [vmem:[#allocation24 + $0xb8] sm:$0xf]
          %v10714 = vld [vmem:[#allocation24 + $0xbc] sm:$0xf]
          %v10715 = vld [vmem:[#allocation26] sm:$0x1]
          %v10717 = vlaneseq
          %v10718 = vshrl.u32 %v10717, 7
          %v10719 = vsub.s32 0, %v10718
          %v10720 = vrot.slane %v10715, %v10719
          %v10770 = vunpack.c.l.b16 %v10667
          %v10771 = vunpack.c.l.b16 %v10668
          %v10772 = vunpack.c.l.b16 %v10669
          %v10773 = vunpack.c.l.b16 %v10670
          %v10774 = vunpack.c.l.b16 %v10671
          %v10775 = vunpack.c.l.b16 %v10672
          %v10776 = vunpack.c.l.b16 %v10673
          %v10777 = vunpack.c.l.b16 %v10674
          %v10778 = vunpack.c.l.b16 %v10675
          %v10779 = vunpack.c.l.b16 %v10676
          %v10780 = vunpack.c.l.b16 %v10677
          %v10781 = vunpack.c.l.b16 %v10678
          %v10782 = vunpack.c.l.b16 %v10679
          %v10783 = vunpack.c.l.b16 %v10680
          %v10784 = vunpack.c.l.b16 %v10681
          %v10785 = vunpack.c.l.b16 %v10682
          %v10786 = vunpack.c.l.b16 %v10683
          %v10787 = vunpack.c.l.b16 %v10684
          %v10788 = vunpack.c.l.b16 %v10685
          %v10789 = vunpack.c.l.b16 %v10686
          %v10790 = vunpack.c.l.b16 %v10687
          %v10791 = vunpack.c.l.b16 %v10688
          %v10792 = vunpack.c.l.b16 %v10689
          %v10793 = vunpack.c.l.b16 %v10690
          %v10794 = vunpack.c.l.b16 %v10691
          %v10795 = vunpack.c.l.b16 %v10692
          %v10796 = vunpack.c.l.b16 %v10693
          %v10797 = vunpack.c.l.b16 %v10694
          %v10798 = vunpack.c.l.b16 %v10695
          %v10799 = vunpack.c.l.b16 %v10696
          %v10800 = vunpack.c.l.b16 %v10697
          %v10801 = vunpack.c.l.b16 %v10698
          %v10802 = vunpack.c.l.b16 %v10699
          %v10803 = vunpack.c.l.b16 %v10700
          %v10804 = vunpack.c.l.b16 %v10701
          %v10805 = vunpack.c.l.b16 %v10702
          %v10806 = vunpack.c.l.b16 %v10703
          %v10807 = vunpack.c.l.b16 %v10704
          %v10808 = vunpack.c.l.b16 %v10705
          %v10809 = vunpack.c.l.b16 %v10706
          %v10810 = vunpack.c.l.b16 %v10707
          %v10811 = vunpack.c.l.b16 %v10708
          %v10812 = vunpack.c.l.b16 %v10709
          %v10813 = vunpack.c.l.b16 %v10710
          %v10814 = vunpack.c.l.b16 %v10711
          %v10815 = vunpack.c.l.b16 %v10712
          %v10816 = vunpack.c.l.b16 %v10713
          %v10817 = vunpack.c.l.b16 %v10714
          %v10818 = vpack.c.b16 %v10771, %v10770
          %v10819 = vpack.c.b16 %v10773, %v10772
          %v10820 = vpack.c.b16 %v10775, %v10774
          %v10821 = vpack.c.b16 %v10777, %v10776
          %v10822 = vpack.c.b16 %v10779, %v10778
          %v10823 = vpack.c.b16 %v10781, %v10780
          %v10824 = vpack.c.b16 %v10783, %v10782
          %v10825 = vpack.c.b16 %v10785, %v10784
          %v10826 = vpack.c.b16 %v10787, %v10786
          %v10827 = vpack.c.b16 %v10789, %v10788
          %v10828 = vpack.c.b16 %v10791, %v10790
          %v10829 = vpack.c.b16 %v10793, %v10792
          %v10830 = vpack.c.b16 %v10795, %v10794
          %v10831 = vpack.c.b16 %v10797, %v10796
          %v10832 = vpack.c.b16 %v10799, %v10798
          %v10833 = vpack.c.b16 %v10801, %v10800
          %v10834 = vpack.c.b16 %v10803, %v10802
          %v10835 = vpack.c.b16 %v10805, %v10804
          %v10836 = vpack.c.b16 %v10807, %v10806
          %v10837 = vpack.c.b16 %v10809, %v10808
          %v10838 = vpack.c.b16 %v10811, %v10810
          %v10839 = vpack.c.b16 %v10813, %v10812
          %v10840 = vpack.c.b16 %v10815, %v10814
          %v10841 = vpack.c.b16 %v10817, %v10816
          %10866 = vmatprep.subr.bf16.mxu0 0
          %10867 = vmatpush1.bf16.msra.mxu0 %v10818
          %10868 = vmatprep.subr.bf16.mxu0 0
          %10869 = vmatpush1.bf16.msra.mxu0 %v10819
          %10870 = vmatprep.subr.bf16.mxu0 0
          %10871 = vmatpush1.bf16.msra.mxu0 %v10820
          %10872 = vmatprep.subr.bf16.mxu0 0
          %10873 = vmatpush1.bf16.msra.mxu0 %v10821
          %10874 = vmatprep.subr.bf16.mxu0 0
          %10875 = vmatpush1.bf16.msra.mxu0 %v10822
          %10876 = vmatprep.subr.bf16.mxu0 0
          %10877 = vmatpush1.bf16.msra.mxu0 %v10823
          %10878 = vmatprep.subr.bf16.mxu0 0
          %10879 = vmatpush1.bf16.msra.mxu0 %v10824
          %10880 = vmatprep.subr.bf16.mxu0 0
          %10881 = vmatpush1.bf16.msra.mxu0 %v10825
          %10882 = vmatprep.subr.bf16.mxu0 0
          %10883 = vmatpush1.bf16.msra.mxu0 %v10826
          %10884 = vmatprep.subr.bf16.mxu0 0
          %10885 = vmatpush1.bf16.msra.mxu0 %v10827
          %10886 = vmatprep.subr.bf16.mxu0 0
          %10887 = vmatpush1.bf16.msra.mxu0 %v10828
          %10888 = vmatprep.subr.bf16.mxu0 0
          %10889 = vmatpush1.bf16.msra.mxu0 %v10829
          %10890 = vmatprep.subr.bf16.mxu0 0
          %10891 = vmatpush1.bf16.msra.mxu0 %v10830
          %10892 = vmatprep.subr.bf16.mxu0 0
          %10893 = vmatpush1.bf16.msra.mxu0 %v10831
          %10894 = vmatprep.subr.bf16.mxu0 0
          %10895 = vmatpush1.bf16.msra.mxu0 %v10832
          %10896 = vmatprep.subr.bf16.mxu0 0
          %10897 = vmatpush1.bf16.msra.mxu0 %v10833
          %10898 = vmatprep.mubr.bf16.mxu0 %v10662
          %10899 = vmatmul.mubr.bf16.gmra.mrb[0].mxu0 %v10661
          %v10900 = vpop.f32.mrb[0].mxu0
          %v10901 = vadd.f32 %v10720, %v10900
          %v10902 = vpop.f32.mrb[0].mxu0
          %v10903 = vpop.f32.mrb[0].mxu0
          %v10904 = vadd.f32 %v10720, %v10903
          %v10905 = vpop.f32.mrb[0].mxu0
          %10906 = vmatprep.mubr.bf16.mxu0 %v10665
          %10907 = vmatmul.mubr.bf16.gmra.mrb[0].mxu0 %v10664
          %v10908 = vpop.f32.mrb[0].mxu0
          %v10909 = vadd.f32 %v10720, %v10908
          %v10910 = vpop.f32.mrb[0].mxu0
          %v10911 = vpop.f32.mrb[0].mxu0
          %v10912 = vadd.f32 %v10720, %v10911
          %v10913 = vpop.f32.mrb[0].mxu0
          %10914 = vdwg.mxu0
          %10915 = vmatprep.subr.bf16.mxu0 0
          %10916 = vmatpush1.bf16.msra.mxu0 %v10834
          %10917 = vmatprep.subr.bf16.mxu0 0
          %10918 = vmatpush1.bf16.msra.mxu0 %v10835
          %10919 = vmatprep.subr.bf16.mxu0 0
          %10920 = vmatpush1.bf16.msra.mxu0 %v10836
          %10921 = vmatprep.subr.bf16.mxu0 0
          %10922 = vmatpush1.bf16.msra.mxu0 %v10837
          %10923 = vmatprep.subr.bf16.mxu0 0
          %10924 = vmatpush1.bf16.msra.mxu0 %v10838
          %10925 = vmatprep.subr.bf16.mxu0 0
          %10926 = vmatpush1.bf16.msra.mxu0 %v10839
          %10927 = vmatprep.subr.bf16.mxu0 0
          %10928 = vmatpush1.bf16.msra.mxu0 %v10840
          %10929 = vmatprep.subr.bf16.mxu0 0
          %10930 = vmatpush1.bf16.msra.mxu0 %v10841
          %10931 = vmatprep.subr.bf16.mxu0 0
          %10932 = vmatpush1.bf16.msra.mxu0 0
          %10933 = vmatprep.subr.bf16.mxu0 0
          %10934 = vmatpush1.bf16.msra.mxu0 0
          %10935 = vmatprep.subr.bf16.mxu0 0
          %10936 = vmatpush1.bf16.msra.mxu0 0
          %10937 = vmatprep.subr.bf16.mxu0 0
          %10938 = vmatpush1.bf16.msra.mxu0 0
          %10939 = vmatprep.subr.bf16.mxu0 0
          %10940 = vmatpush1.bf16.msra.mxu0 0
          %10941 = vmatprep.subr.bf16.mxu0 0
          %10942 = vmatpush1.bf16.msra.mxu0 0
          %10943 = vmatprep.subr.bf16.mxu0 0
          %10944 = vmatpush1.bf16.msra.mxu0 0
          %10945 = vmatprep.subr.bf16.mxu0 0
          %10946 = vmatpush1.bf16.msra.mxu0 0
          %10947 = vmatprep.mubr.bf16.mxu0 0
          %10948 = vmatmul.mubr.bf16.gmra.mrb[0].mxu0 %v10663
          %v10949 = vpop.f32.mrb[0].mxu0
          %v10950 = vadd.f32 %v10901, %v10949
          %v10951 = vpop.f32.mrb[0].mxu0
          %v10952 = vpop.f32.mrb[0].mxu0
          %v10953 = vadd.f32 %v10904, %v10952
          %v10954 = vpop.f32.mrb[0].mxu0
          %10955 = vmatprep.mubr.bf16.mxu0 0
          %10956 = vmatmul.mubr.bf16.gmra.mrb[0].mxu0 %v10666
          %v10957 = vpop.f32.mrb[0].mxu0
          %v10958 = vadd.f32 %v10909, %v10957
          %v10959 = vpop.f32.mrb[0].mxu0
          %v10960 = vpop.f32.mrb[0].mxu0
          %v10961 = vadd.f32 %v10912, %v10960
          %v10962 = vpop.f32.mrb[0].mxu0
          %10963 = vdwg.mxu0
          %10964 = vst [vmem:[#allocation27] sm:$0xff] %v10950
          %10965 = vst [vmem:[#allocation27 + $0x8] sm:$0xff] %v10953
          %10966 = vst [vmem:[#allocation27 + $0x10] sm:$0xff] %v10958
          %10967 = vst [vmem:[#allocation27 + $0x18] sm:$0xff] %v10961
        $region156: #{forward.1} parent=87 // pred_fallthru
          _
        // Predicated region
        $region157: #{forward.1} parent=87 // pred_check
          %p10968 = pneg %p496
        $region158: #{forward.1} parent=87 // pred_check_branch
          %10970 = sbr.rel (%p10968) target = $region160
        $region159: #{forward.1} parent=87 // pred_region
          %s10971 = smul.u32 2, %s53
          %s10973 = ssub.s32 512, 512
          %10974 = vsyncadd [#allocation5], %s10973
          %s10975 = smul.addr %s10971, 2
          %s10976 = smul.addr %s10975, 128
          %s10977 = scalar_lea.hbm %s17, %s10976
          %s10978 = sshll.u32 [#allocation27], 4
          %s10979 = int_to_ptr.vmem [resolvable:$true] %s10978
          %10984 = dma.vmem_to_hbm [thread:$0]  %s10979, 512, %s10977, [#allocation5], 128, 128, 8
        $region160: #{forward.1} parent=87 // pred_fallthru
          _
        // Predicated region
        $region161: #{forward.1} parent=87 // pred_check
          %p10985 = pneg %p496
        $region162: #{forward.1} parent=87 // pred_check_branch
          %10987 = sbr.rel (%p10985) target = $region164
        $region163: #{forward.1} parent=87 // pred_region
          %10988 = dma.done [#allocation5], 512
        $region164: #{forward.1} parent=87 // pred_fallthru
          _
      $region88: #{forward.1} parent=5 // pred_fallthru
        _
      %p10989 = scmp.le.s32.totalorder 2, %s44
      // Predicated region
      $region165: #{forward.1} parent=5 // pred_check
        %p10990 = pneg %p10989
      $region166: #{forward.1} parent=5 // pred_check_branch
        %10992 = sbr.rel (%p10990) target = $region168
      $region167: #{forward.1} parent=5 // pred_region
        %s10993 = ssub.s32 %s44, 2
      $region168: #{forward.1} parent=5 // pred_fallthru
        _
    $region6: #{forward.1} parent=1 // loop_footer
      %s48 = sadd.s32 1, %s44
    $region7: #{forward.1} parent=1 // loop_footer_branch
      %43 = sbr.rel target = $region3
    $region8: #{forward.1} parent=1 // loop_exit
      _
    %10994 = vsyncpa [#allocation4], 1
    %s10995 = scalar_lea.sflag [#allocation4], 1
    %10996 = vsyncpa %s10995, 1
    %10997 = vsyncpa [#allocation7], 1
    %s10998 = scalar_lea.sflag [#allocation7], 1
    %10999 = vsyncpa %s10998, 1
    %11000 = vsyncpa [#allocation10], 1
    %s11001 = scalar_lea.sflag [#allocation10], 1
    %11002 = vsyncpa %s11001, 1
    %11003 = vsyncpa [#allocation13], 1
    %s11004 = scalar_lea.sflag [#allocation13], 1
    %11005 = vsyncpa %s11004, 1
    %11006 = vsyncpa [#allocation16], 1
    %s11007 = scalar_lea.sflag [#allocation16], 1
    %11008 = vsyncpa %s11007, 1
    %11009 = vsyncpa [#allocation19], 1
    %s11010 = scalar_lea.sflag [#allocation19], 1
    %11011 = vsyncpa %s11010, 1
    %11012 = vsyncpa [#allocation22], 1
    %11013 = vsyncpa [#allocation25], 1
    %11014 = vsyncpa [#allocation5], 1
    %s11015 = scalar_lea.sflag [#allocation5], 1
    %11016 = vsyncpa %s11015, 1

</llo_original>
